<compile_context>
chip_gen: v5e
topology: v5e:2x2
jax: 0.10.0
libtpu: 0.0.40
codegen_flags: <defaults>
</compile_context>

<pallas_src>
import jax
import jax.numpy as jnp
from jax import lax
from jax.experimental import pallas as pl
from jax.experimental.pallas import tpu as pltpu

EPS = 1e-5


# ------------------------------ Pallas kernel -------------------------------


def _conv3x3_bn_relu(pad_ref, w_ref, b_ref):
    """3x3 'same' conv + folded-BN bias + ReLU, read from a zero-padded VMEM ref.

    pad_ref: (N, H+2, W+2, Cin)  zero-padded input
    w_ref:   (9, Cin, Cout)      conv weights with BN scale folded in (k = dy*3+dx)
    b_ref:   (1, Cout)           folded bias
    returns: ((N*H*W, Cout) f32 value with rows ordered (n, h, w), (n, h, w, cout))
    """
    n, hp, wp, cin = pad_ref.shape
    h, w = hp - 2, wp - 2
    cout = w_ref.shape[-1]

    acc = jnp.zeros((n * h * w, cout), jnp.float32)
    k = 0
    for dy in range(3):
        for dx in range(3):
            patch = pad_ref[:, dy:dy + h, dx:dx + w, :]            # (n, h, w, cin)
            acc = acc + jnp.dot(patch.reshape(n * h * w, cin), w_ref[k],
                                preferred_element_type=jnp.float32)
            k += 1
    y = jnp.maximum(acc + b_ref[...], 0.0)                         # fused BN + ReLU
    return y, (n, h, w, cout)


def _maxpool2x2_into(y, n, h, w, c, nxt_ref):
    """2x2 stride-2 max-pool on the live value y (N*H*W, C); writes the pooled
    result into the interior of the next layer's zero-padded VMEM scratch.
    Assumes even H and W (true for all stages of a 16x16 input)."""
    h2, w2 = h // 2, w // 2
    # W-pool: adjacent flat rows are (w=2j, w=2j+1)
    yw = jnp.max(y.reshape(n * h * w2, 2, c), axis=1)              # rows (n, h, w2)
    # H-pool: for each (n, h2) group, first w2 rows are h=2j, next w2 are h=2j+1
    yh = yw.reshape(n * h2, 2 * w2, c)
    pooled = jnp.maximum(yh[:, :w2, :], yh[:, w2:, :])             # (n*h2, w2, c)
    # write into the zero-padded buffer of the next conv stage
    nxt_ref[...] = jnp.zeros_like(nxt_ref)
    nxt_ref[:, 1:h2 + 1, 1:w2 + 1, :] = pooled.reshape(n, h2, w2, c)


def _cnn_kernel(xpad_ref, w1_ref, b1_ref, w2_ref, b2_ref, w3_ref, b3_ref,
                w4_ref, b4_ref, fcw_ref, fcb_ref, out_ref,
                pad2_ref, pad3_ref, pad4_ref):
    # Stage 1-3: conv-bn-relu-maxpool, chained through padded VMEM scratches.
    y, (n, h, w, c) = _conv3x3_bn_relu(xpad_ref, w1_ref, b1_ref)
    _maxpool2x2_into(y, n, h, w, c, pad2_ref)

    y, (n, h, w, c) = _conv3x3_bn_relu(pad2_ref, w2_ref, b2_ref)
    _maxpool2x2_into(y, n, h, w, c, pad3_ref)

    y, (n, h, w, c) = _conv3x3_bn_relu(pad3_ref, w3_ref, b3_ref)
    _maxpool2x2_into(y, n, h, w, c, pad4_ref)

    # Stage 4: conv-bn-relu + global average pool + fused Linear classifier.
    y, (n, h, w, c) = _conv3x3_bn_relu(pad4_ref, w4_ref, b4_ref)
    gap = jnp.sum(y.reshape(n, h * w, c), axis=1) * (1.0 / (h * w))    # (n, c)
    out_ref[...] = (jnp.dot(gap, fcw_ref[...], preferred_element_type=jnp.float32)
                    + fcb_ref[...])


# ------------------------------ glue / wrapper -------------------------------


def _fold_layer(p):
    """Fold eval-mode BatchNorm into the conv weights/bias."""
    cout = p["w"].shape[-1]
    cin = p["w"].shape[-2]
    scale = p["gamma"] / jnp.sqrt(p["var"] + EPS)                    # (cout,)
    w = (p["w"] * scale).reshape(9, cin, cout)                       # scale -> weights
    b = (p["beta"] + (p["b"] - p["mean"]) * scale).reshape(1, cout)  # folded bias
    return w, b


@jax.jit
def small_scalogram_cnn(x_nchw, params):
    x = jnp.transpose(x_nchw, (0, 2, 3, 1)).astype(jnp.float32)      # NCHW -> NHWC
    n, h, w, _ = x.shape
    xpad = jnp.pad(x, ((0, 0), (1, 1), (1, 1), (0, 0)))              # pre-pad layer-1 input

    folded = [_fold_layer(p) for p in params["convs"]]
    couts = [f[0].shape[-1] for f in folded]
    num_classes = params["fc_w"].shape[-1]

    args = [xpad]
    for wmat, bias in folded:
        args += [wmat, bias]
    args += [params["fc_w"], params["fc_b"].reshape(1, num_classes)]

    h2, w2 = h // 2, w // 2
    h3, w3 = h2 // 2, w2 // 2
    h4, w4 = h3 // 2, w3 // 2

    return pl.pallas_call(
        _cnn_kernel,
        out_shape=jax.ShapeDtypeStruct((n, num_classes), jnp.float32),
        scratch_shapes=[
            pltpu.VMEM((n, h2 + 2, w2 + 2, couts[0]), jnp.float32),  # padded stage-2 input
            pltpu.VMEM((n, h3 + 2, w3 + 2, couts[1]), jnp.float32),  # padded stage-3 input
            pltpu.VMEM((n, h4 + 2, w4 + 2, couts[2]), jnp.float32),  # padded stage-4 input
        ],
    )(*args)


# --------------------------------- model -------------------------------------


def init_params(key, num_classes):
    chans = [(3, 16), (16, 32), (32, 64), (64, 128)]
    params = {"convs": []}
    for cin, cout in chans:
        key, k1, k2, k3, k4, k5, k6 = jax.random.split(key, 7)
        params["convs"].append(dict(
            w=jax.random.normal(k1, (3, 3, cin, cout), jnp.float32) * 0.1,
            b=jax.random.normal(k2, (cout,), jnp.float32) * 0.1,
            gamma=jax.random.uniform(k3, (cout,), jnp.float32, 0.8, 1.2),
            beta=jax.random.normal(k4, (cout,), jnp.float32) * 0.1,
            mean=jax.random.normal(k5, (cout,), jnp.float32) * 0.1,
            var=jax.random.uniform(k6, (cout,), jnp.float32, 0.5, 1.5),
        ))
    key, k1, k2 = jax.random.split(key, 3)
    params["fc_w"] = jax.random.normal(k1, (128, num_classes), jnp.float32) * 0.1
    params["fc_b"] = jax.random.normal(k2, (num_classes,), jnp.float32) * 0.1
    return params


def reference(x_nchw, params):
    # Pure-JAX reference for validation (eval-mode BN).
    h = jnp.transpose(x_nchw, (0, 2, 3, 1)).astype(jnp.float32)
    for i, p in enumerate(params["convs"]):
        y = lax.conv_general_dilated(
            h, p["w"], (1, 1), "SAME",
            dimension_numbers=("NHWC", "HWIO", "NHWC")) + p["b"]
        s = p["gamma"] / jnp.sqrt(p["var"] + EPS)
        y = jnp.maximum((y - p["mean"]) * s + p["beta"], 0.0)
        if i == 3:
            h = jnp.mean(y, axis=(1, 2))
        else:
            N, H, W, C = y.shape
            h = y.reshape(N, H // 2, 2, W // 2, 2, C).max(axis=(2, 4))
    return h @ params["fc_w"] + params["fc_b"]


if __name__ == "__main__":
    key = jax.random.PRNGKey(0)
    key, kx, kp = jax.random.split(key, 3)

    num_classes = 5
    x = jax.random.normal(kx, (2, 3, 16, 16), jnp.float32)  # NCHW like PyTorch
    params = init_params(kp, num_classes)

    out = jax.block_until_ready(small_scalogram_cnn(x, params))
    ref = jax.block_until_ready(reference(x, params))

    assert out.shape == (2, num_classes), out.shape
    max_err = float(jnp.max(jnp.abs(out - ref)))
    assert max_err < 1e-2, f"mismatch vs reference: {max_err}"

    print("KERNEL_OK")
</pallas_src>

<mosaic_0001>
module attributes {stable_mosaic.version = 11 : i64} {
  func.func @_cnn_kernel(%arg0: memref<2x18x18x3xf32, #tpu.memory_space<vmem>>, %arg1: memref<9x3x16xf32, #tpu.memory_space<vmem>>, %arg2: memref<1x16xf32, #tpu.memory_space<vmem>>, %arg3: memref<9x16x32xf32, #tpu.memory_space<vmem>>, %arg4: memref<1x32xf32, #tpu.memory_space<vmem>>, %arg5: memref<9x32x64xf32, #tpu.memory_space<vmem>>, %arg6: memref<1x64xf32, #tpu.memory_space<vmem>>, %arg7: memref<9x64x128xf32, #tpu.memory_space<vmem>>, %arg8: memref<1x128xf32, #tpu.memory_space<vmem>>, %arg9: memref<128x5xf32, #tpu.memory_space<vmem>>, %arg10: memref<1x5xf32, #tpu.memory_space<vmem>>, %arg11: memref<2x5xf32, #tpu.memory_space<vmem>>, %arg12: memref<2x10x10x16xf32, #tpu.memory_space<vmem>>, %arg13: memref<2x6x6x32xf32, #tpu.memory_space<vmem>>, %arg14: memref<2x4x4x64xf32, #tpu.memory_space<vmem>>) attributes {dimension_semantics = [], scalar_prefetch = 0 : i64, scratch_operands = 3 : i64, tpu.core_type = #tpu.core_type<tc>} {
    %cst = arith.constant 0.000000e+00 : f32
    %0 = vector.broadcast %cst : f32 to vector<512x16xf32>
    %c0 = arith.constant 0 : index
    %c0_0 = arith.constant 0 : index
    %c0_1 = arith.constant 0 : index
    %c0_2 = arith.constant 0 : index
    %1 = vector.load %arg0[%c0, %c0_0, %c0_1, %c0_2] : memref<2x18x18x3xf32, #tpu.memory_space<vmem>>, vector<2x16x16x3xf32>
    %2 = vector.shape_cast %1 : vector<2x16x16x3xf32> to vector<512x3xf32>
    %c0_3 = arith.constant 0 : index
    %c0_4 = arith.constant 0 : index
    %c0_5 = arith.constant 0 : index
    %3 = vector.load %arg1[%c0_3, %c0_4, %c0_5] : memref<9x3x16xf32, #tpu.memory_space<vmem>>, vector<1x3x16xf32>
    %4 = vector.shape_cast %3 : vector<1x3x16xf32> to vector<3x16xf32>
    %cst_6 = arith.constant dense<0.000000e+00> : vector<512x16xf32>
    %5 = tpu.matmul %2, %4, %cst_6 {dimension_numbers = #tpu.dot_dimension_numbers<[1], [0], [0], [1], [0, 0, 1, 1], [], []>} : vector<512x3xf32>, vector<3x16xf32>, vector<512x16xf32> -> vector<512x16xf32>
    %6 = arith.addf %0, %5 : vector<512x16xf32>
    %c0_7 = arith.constant 0 : index
    %c0_8 = arith.constant 0 : index
    %c1 = arith.constant 1 : index
    %c0_9 = arith.constant 0 : index
    %7 = vector.load %arg0[%c0_7, %c0_8, %c1, %c0_9] : memref<2x18x18x3xf32, #tpu.memory_space<vmem>>, vector<2x16x16x3xf32>
    %8 = vector.shape_cast %7 : vector<2x16x16x3xf32> to vector<512x3xf32>
    %c1_10 = arith.constant 1 : index
    %c0_11 = arith.constant 0 : index
    %c0_12 = arith.constant 0 : index
    %9 = vector.load %arg1[%c1_10, %c0_11, %c0_12] : memref<9x3x16xf32, #tpu.memory_space<vmem>>, vector<1x3x16xf32>
    %10 = vector.shape_cast %9 : vector<1x3x16xf32> to vector<3x16xf32>
    %cst_13 = arith.constant dense<0.000000e+00> : vector<512x16xf32>
    %11 = tpu.matmul %8, %10, %cst_13 {dimension_numbers = #tpu.dot_dimension_numbers<[1], [0], [0], [1], [0, 0, 1, 1], [], []>} : vector<512x3xf32>, vector<3x16xf32>, vector<512x16xf32> -> vector<512x16xf32>
    %12 = arith.addf %6, %11 : vector<512x16xf32>
    %c0_14 = arith.constant 0 : index
    %c0_15 = arith.constant 0 : index
    %c2 = arith.constant 2 : index
    %c0_16 = arith.constant 0 : index
    %13 = vector.load %arg0[%c0_14, %c0_15, %c2, %c0_16] : memref<2x18x18x3xf32, #tpu.memory_space<vmem>>, vector<2x16x16x3xf32>
    %14 = vector.shape_cast %13 : vector<2x16x16x3xf32> to vector<512x3xf32>
    %c2_17 = arith.constant 2 : index
    %c0_18 = arith.constant 0 : index
    %c0_19 = arith.constant 0 : index
    %15 = vector.load %arg1[%c2_17, %c0_18, %c0_19] : memref<9x3x16xf32, #tpu.memory_space<vmem>>, vector<1x3x16xf32>
    %16 = vector.shape_cast %15 : vector<1x3x16xf32> to vector<3x16xf32>
    %cst_20 = arith.constant dense<0.000000e+00> : vector<512x16xf32>
    %17 = tpu.matmul %14, %16, %cst_20 {dimension_numbers = #tpu.dot_dimension_numbers<[1], [0], [0], [1], [0, 0, 1, 1], [], []>} : vector<512x3xf32>, vector<3x16xf32>, vector<512x16xf32> -> vector<512x16xf32>
    %18 = arith.addf %12, %17 : vector<512x16xf32>
    %c0_21 = arith.constant 0 : index
    %c1_22 = arith.constant 1 : index
    %c0_23 = arith.constant 0 : index
    %c0_24 = arith.constant 0 : index
    %19 = vector.load %arg0[%c0_21, %c1_22, %c0_23, %c0_24] : memref<2x18x18x3xf32, #tpu.memory_space<vmem>>, vector<2x16x16x3xf32>
    %20 = vector.shape_cast %19 : vector<2x16x16x3xf32> to vector<512x3xf32>
    %c3 = arith.constant 3 : index
    %c0_25 = arith.constant 0 : index
    %c0_26 = arith.constant 0 : index
    %21 = vector.load %arg1[%c3, %c0_25, %c0_26] : memref<9x3x16xf32, #tpu.memory_space<vmem>>, vector<1x3x16xf32>
    %22 = vector.shape_cast %21 : vector<1x3x16xf32> to vector<3x16xf32>
    %cst_27 = arith.constant dense<0.000000e+00> : vector<512x16xf32>
    %23 = tpu.matmul %20, %22, %cst_27 {dimension_numbers = #tpu.dot_dimension_numbers<[1], [0], [0], [1], [0, 0, 1, 1], [], []>} : vector<512x3xf32>, vector<3x16xf32>, vector<512x16xf32> -> vector<512x16xf32>
    %24 = arith.addf %18, %23 : vector<512x16xf32>
    %c0_28 = arith.constant 0 : index
    %c1_29 = arith.constant 1 : index
    %c1_30 = arith.constant 1 : index
    %c0_31 = arith.constant 0 : index
    %25 = vector.load %arg0[%c0_28, %c1_29, %c1_30, %c0_31] : memref<2x18x18x3xf32, #tpu.memory_space<vmem>>, vector<2x16x16x3xf32>
    %26 = vector.shape_cast %25 : vector<2x16x16x3xf32> to vector<512x3xf32>
    %c4 = arith.constant 4 : index
    %c0_32 = arith.constant 0 : index
    %c0_33 = arith.constant 0 : index
    %27 = vector.load %arg1[%c4, %c0_32, %c0_33] : memref<9x3x16xf32, #tpu.memory_space<vmem>>, vector<1x3x16xf32>
    %28 = vector.shape_cast %27 : vector<1x3x16xf32> to vector<3x16xf32>
    %cst_34 = arith.constant dense<0.000000e+00> : vector<512x16xf32>
    %29 = tpu.matmul %26, %28, %cst_34 {dimension_numbers = #tpu.dot_dimension_numbers<[1], [0], [0], [1], [0, 0, 1, 1], [], []>} : vector<512x3xf32>, vector<3x16xf32>, vector<512x16xf32> -> vector<512x16xf32>
    %30 = arith.addf %24, %29 : vector<512x16xf32>
    %c0_35 = arith.constant 0 : index
    %c1_36 = arith.constant 1 : index
    %c2_37 = arith.constant 2 : index
    %c0_38 = arith.constant 0 : index
    %31 = vector.load %arg0[%c0_35, %c1_36, %c2_37, %c0_38] : memref<2x18x18x3xf32, #tpu.memory_space<vmem>>, vector<2x16x16x3xf32>
    %32 = vector.shape_cast %31 : vector<2x16x16x3xf32> to vector<512x3xf32>
    %c5 = arith.constant 5 : index
    %c0_39 = arith.constant 0 : index
    %c0_40 = arith.constant 0 : index
    %33 = vector.load %arg1[%c5, %c0_39, %c0_40] : memref<9x3x16xf32, #tpu.memory_space<vmem>>, vector<1x3x16xf32>
    %34 = vector.shape_cast %33 : vector<1x3x16xf32> to vector<3x16xf32>
    %cst_41 = arith.constant dense<0.000000e+00> : vector<512x16xf32>
    %35 = tpu.matmul %32, %34, %cst_41 {dimension_numbers = #tpu.dot_dimension_numbers<[1], [0], [0], [1], [0, 0, 1, 1], [], []>} : vector<512x3xf32>, vector<3x16xf32>, vector<512x16xf32> -> vector<512x16xf32>
    %36 = arith.addf %30, %35 : vector<512x16xf32>
    %c0_42 = arith.constant 0 : index
    %c2_43 = arith.constant 2 : index
    %c0_44 = arith.constant 0 : index
    %c0_45 = arith.constant 0 : index
    %37 = vector.load %arg0[%c0_42, %c2_43, %c0_44, %c0_45] : memref<2x18x18x3xf32, #tpu.memory_space<vmem>>, vector<2x16x16x3xf32>
    %38 = vector.shape_cast %37 : vector<2x16x16x3xf32> to vector<512x3xf32>
    %c6 = arith.constant 6 : index
    %c0_46 = arith.constant 0 : index
    %c0_47 = arith.constant 0 : index
    %39 = vector.load %arg1[%c6, %c0_46, %c0_47] : memref<9x3x16xf32, #tpu.memory_space<vmem>>, vector<1x3x16xf32>
    %40 = vector.shape_cast %39 : vector<1x3x16xf32> to vector<3x16xf32>
    %cst_48 = arith.constant dense<0.000000e+00> : vector<512x16xf32>
    %41 = tpu.matmul %38, %40, %cst_48 {dimension_numbers = #tpu.dot_dimension_numbers<[1], [0], [0], [1], [0, 0, 1, 1], [], []>} : vector<512x3xf32>, vector<3x16xf32>, vector<512x16xf32> -> vector<512x16xf32>
    %42 = arith.addf %36, %41 : vector<512x16xf32>
    %c0_49 = arith.constant 0 : index
    %c2_50 = arith.constant 2 : index
    %c1_51 = arith.constant 1 : index
    %c0_52 = arith.constant 0 : index
    %43 = vector.load %arg0[%c0_49, %c2_50, %c1_51, %c0_52] : memref<2x18x18x3xf32, #tpu.memory_space<vmem>>, vector<2x16x16x3xf32>
    %44 = vector.shape_cast %43 : vector<2x16x16x3xf32> to vector<512x3xf32>
    %c7 = arith.constant 7 : index
    %c0_53 = arith.constant 0 : index
    %c0_54 = arith.constant 0 : index
    %45 = vector.load %arg1[%c7, %c0_53, %c0_54] : memref<9x3x16xf32, #tpu.memory_space<vmem>>, vector<1x3x16xf32>
    %46 = vector.shape_cast %45 : vector<1x3x16xf32> to vector<3x16xf32>
    %cst_55 = arith.constant dense<0.000000e+00> : vector<512x16xf32>
    %47 = tpu.matmul %44, %46, %cst_55 {dimension_numbers = #tpu.dot_dimension_numbers<[1], [0], [0], [1], [0, 0, 1, 1], [], []>} : vector<512x3xf32>, vector<3x16xf32>, vector<512x16xf32> -> vector<512x16xf32>
    %48 = arith.addf %42, %47 : vector<512x16xf32>
    %c0_56 = arith.constant 0 : index
    %c2_57 = arith.constant 2 : index
    %c2_58 = arith.constant 2 : index
    %c0_59 = arith.constant 0 : index
    %49 = vector.load %arg0[%c0_56, %c2_57, %c2_58, %c0_59] : memref<2x18x18x3xf32, #tpu.memory_space<vmem>>, vector<2x16x16x3xf32>
    %50 = vector.shape_cast %49 : vector<2x16x16x3xf32> to vector<512x3xf32>
    %c8 = arith.constant 8 : index
    %c0_60 = arith.constant 0 : index
    %c0_61 = arith.constant 0 : index
    %51 = vector.load %arg1[%c8, %c0_60, %c0_61] : memref<9x3x16xf32, #tpu.memory_space<vmem>>, vector<1x3x16xf32>
    %52 = vector.shape_cast %51 : vector<1x3x16xf32> to vector<3x16xf32>
    %cst_62 = arith.constant dense<0.000000e+00> : vector<512x16xf32>
    %53 = tpu.matmul %50, %52, %cst_62 {dimension_numbers = #tpu.dot_dimension_numbers<[1], [0], [0], [1], [0, 0, 1, 1], [], []>} : vector<512x3xf32>, vector<3x16xf32>, vector<512x16xf32> -> vector<512x16xf32>
    %54 = arith.addf %48, %53 : vector<512x16xf32>
    %c0_63 = arith.constant 0 : index
    %c0_64 = arith.constant 0 : index
    %55 = vector.load %arg2[%c0_63, %c0_64] : memref<1x16xf32, #tpu.memory_space<vmem>>, vector<1x16xf32>
    %56 = vector.broadcast %55 : vector<1x16xf32> to vector<512x16xf32>
    %57 = arith.addf %54, %56 : vector<512x16xf32>
    %cst_65 = arith.constant 0.000000e+00 : f32
    %58 = vector.broadcast %cst_65 : f32 to vector<512x16xf32>
    %59 = arith.maximumf %57, %58 : vector<512x16xf32>
    %60 = vector.shape_cast %59 : vector<512x16xf32> to vector<256x2x16xf32>
    %cst_66 = arith.constant dense<0xFF800000> : vector<256x16xf32>
    %61 = vector.multi_reduction <maximumf>, %60, %cst_66 [1] : vector<256x2x16xf32> to vector<256x16xf32>
    %62 = vector.shape_cast %61 : vector<256x16xf32> to vector<16x16x16xf32>
    %63 = vector.extract_strided_slice %62 {offsets = [0, 0, 0], sizes = [16, 8, 16], strides = [1, 1, 1]} : vector<16x16x16xf32> to vector<16x8x16xf32>
    %64 = vector.extract_strided_slice %62 {offsets = [0, 8, 0], sizes = [16, 8, 16], strides = [1, 1, 1]} : vector<16x16x16xf32> to vector<16x8x16xf32>
    %65 = arith.maximumf %63, %64 : vector<16x8x16xf32>
    %cst_67 = arith.constant 0.000000e+00 : f32
    %66 = vector.broadcast %cst_67 : f32 to vector<2x10x10x16xf32>
    %c0_68 = arith.constant 0 : index
    %c0_69 = arith.constant 0 : index
    %c0_70 = arith.constant 0 : index
    %c0_71 = arith.constant 0 : index
    %67 = vector.load %arg12[%c0_68, %c0_69, %c0_70, %c0_71] : memref<2x10x10x16xf32, #tpu.memory_space<vmem>>, vector<2x10x10x16xf32>
    tpu.vector_store %arg12[%c0_68, %c0_69, %c0_70, %c0_71], %66 {strides = array<i32>} : memref<2x10x10x16xf32, #tpu.memory_space<vmem>>, vector<2x10x10x16xf32>,
    %68 = vector.shape_cast %65 : vector<16x8x16xf32> to vector<2x8x8x16xf32>
    %c0_72 = arith.constant 0 : index
    %c1_73 = arith.constant 1 : index
    %c1_74 = arith.constant 1 : index
    %c0_75 = arith.constant 0 : index
    %69 = vector.load %arg12[%c0_72, %c1_73, %c1_74, %c0_75] : memref<2x10x10x16xf32, #tpu.memory_space<vmem>>, vector<2x8x8x16xf32>
    tpu.vector_store %arg12[%c0_72, %c1_73, %c1_74, %c0_75], %68 {strides = array<i32>} : memref<2x10x10x16xf32, #tpu.memory_space<vmem>>, vector<2x8x8x16xf32>,
    %cst_76 = arith.constant 0.000000e+00 : f32
    %70 = vector.broadcast %cst_76 : f32 to vector<128x32xf32>
    %c0_77 = arith.constant 0 : index
    %c0_78 = arith.constant 0 : index
    %c0_79 = arith.constant 0 : index
    %c0_80 = arith.constant 0 : index
    %71 = vector.load %arg12[%c0_77, %c0_78, %c0_79, %c0_80] : memref<2x10x10x16xf32, #tpu.memory_space<vmem>>, vector<2x8x8x16xf32>
    %72 = vector.shape_cast %71 : vector<2x8x8x16xf32> to vector<128x16xf32>
    %c0_81 = arith.constant 0 : index
    %c0_82 = arith.constant 0 : index
    %c0_83 = arith.constant 0 : index
    %73 = vector.load %arg3[%c0_81, %c0_82, %c0_83] : memref<9x16x32xf32, #tpu.memory_space<vmem>>, vector<1x16x32xf32>
    %74 = vector.shape_cast %73 : vector<1x16x32xf32> to vector<16x32xf32>
    %cst_84 = arith.constant dense<0.000000e+00> : vector<128x32xf32>
    %75 = tpu.matmul %72, %74, %cst_84 {dimension_numbers = #tpu.dot_dimension_numbers<[1], [0], [0], [1], [0, 0, 1, 1], [], []>} : vector<128x16xf32>, vector<16x32xf32>, vector<128x32xf32> -> vector<128x32xf32>
    %76 = arith.addf %70, %75 : vector<128x32xf32>
    %c0_85 = arith.constant 0 : index
    %c0_86 = arith.constant 0 : index
    %c1_87 = arith.constant 1 : index
    %c0_88 = arith.constant 0 : index
    %77 = vector.load %arg12[%c0_85, %c0_86, %c1_87, %c0_88] : memref<2x10x10x16xf32, #tpu.memory_space<vmem>>, vector<2x8x8x16xf32>
    %78 = vector.shape_cast %77 : vector<2x8x8x16xf32> to vector<128x16xf32>
    %c1_89 = arith.constant 1 : index
    %c0_90 = arith.constant 0 : index
    %c0_91 = arith.constant 0 : index
    %79 = vector.load %arg3[%c1_89, %c0_90, %c0_91] : memref<9x16x32xf32, #tpu.memory_space<vmem>>, vector<1x16x32xf32>
    %80 = vector.shape_cast %79 : vector<1x16x32xf32> to vector<16x32xf32>
    %cst_92 = arith.constant dense<0.000000e+00> : vector<128x32xf32>
    %81 = tpu.matmul %78, %80, %cst_92 {dimension_numbers = #tpu.dot_dimension_numbers<[1], [0], [0], [1], [0, 0, 1, 1], [], []>} : vector<128x16xf32>, vector<16x32xf32>, vector<128x32xf32> -> vector<128x32xf32>
    %82 = arith.addf %76, %81 : vector<128x32xf32>
    %c0_93 = arith.constant 0 : index
    %c0_94 = arith.constant 0 : index
    %c2_95 = arith.constant 2 : index
    %c0_96 = arith.constant 0 : index
    %83 = vector.load %arg12[%c0_93, %c0_94, %c2_95, %c0_96] : memref<2x10x10x16xf32, #tpu.memory_space<vmem>>, vector<2x8x8x16xf32>
    %84 = vector.shape_cast %83 : vector<2x8x8x16xf32> to vector<128x16xf32>
    %c2_97 = arith.constant 2 : index
    %c0_98 = arith.constant 0 : index
    %c0_99 = arith.constant 0 : index
    %85 = vector.load %arg3[%c2_97, %c0_98, %c0_99] : memref<9x16x32xf32, #tpu.memory_space<vmem>>, vector<1x16x32xf32>
    %86 = vector.shape_cast %85 : vector<1x16x32xf32> to vector<16x32xf32>
    %cst_100 = arith.constant dense<0.000000e+00> : vector<128x32xf32>
    %87 = tpu.matmul %84, %86, %cst_100 {dimension_numbers = #tpu.dot_dimension_numbers<[1], [0], [0], [1], [0, 0, 1, 1], [], []>} : vector<128x16xf32>, vector<16x32xf32>, vector<128x32xf32> -> vector<128x32xf32>
    %88 = arith.addf %82, %87 : vector<128x32xf32>
    %c0_101 = arith.constant 0 : index
    %c1_102 = arith.constant 1 : index
    %c0_103 = arith.constant 0 : index
    %c0_104 = arith.constant 0 : index
    %89 = vector.load %arg12[%c0_101, %c1_102, %c0_103, %c0_104] : memref<2x10x10x16xf32, #tpu.memory_space<vmem>>, vector<2x8x8x16xf32>
    %90 = vector.shape_cast %89 : vector<2x8x8x16xf32> to vector<128x16xf32>
    %c3_105 = arith.constant 3 : index
    %c0_106 = arith.constant 0 : index
    %c0_107 = arith.constant 0 : index
    %91 = vector.load %arg3[%c3_105, %c0_106, %c0_107] : memref<9x16x32xf32, #tpu.memory_space<vmem>>, vector<1x16x32xf32>
    %92 = vector.shape_cast %91 : vector<1x16x32xf32> to vector<16x32xf32>
    %cst_108 = arith.constant dense<0.000000e+00> : vector<128x32xf32>
    %93 = tpu.matmul %90, %92, %cst_108 {dimension_numbers = #tpu.dot_dimension_numbers<[1], [0], [0], [1], [0, 0, 1, 1], [], []>} : vector<128x16xf32>, vector<16x32xf32>, vector<128x32xf32> -> vector<128x32xf32>
    %94 = arith.addf %88, %93 : vector<128x32xf32>
    %c0_109 = arith.constant 0 : index
    %c1_110 = arith.constant 1 : index
    %c1_111 = arith.constant 1 : index
    %c0_112 = arith.constant 0 : index
    %95 = vector.load %arg12[%c0_109, %c1_110, %c1_111, %c0_112] : memref<2x10x10x16xf32, #tpu.memory_space<vmem>>, vector<2x8x8x16xf32>
    %96 = vector.shape_cast %95 : vector<2x8x8x16xf32> to vector<128x16xf32>
    %c4_113 = arith.constant 4 : index
    %c0_114 = arith.constant 0 : index
    %c0_115 = arith.constant 0 : index
    %97 = vector.load %arg3[%c4_113, %c0_114, %c0_115] : memref<9x16x32xf32, #tpu.memory_space<vmem>>, vector<1x16x32xf32>
    %98 = vector.shape_cast %97 : vector<1x16x32xf32> to vector<16x32xf32>
    %cst_116 = arith.constant dense<0.000000e+00> : vector<128x32xf32>
    %99 = tpu.matmul %96, %98, %cst_116 {dimension_numbers = #tpu.dot_dimension_numbers<[1], [0], [0], [1], [0, 0, 1, 1], [], []>} : vector<128x16xf32>, vector<16x32xf32>, vector<128x32xf32> -> vector<128x32xf32>
    %100 = arith.addf %94, %99 : vector<128x32xf32>
    %c0_117 = arith.constant 0 : index
    %c1_118 = arith.constant 1 : index
    %c2_119 = arith.constant 2 : index
    %c0_120 = arith.constant 0 : index
    %101 = vector.load %arg12[%c0_117, %c1_118, %c2_119, %c0_120] : memref<2x10x10x16xf32, #tpu.memory_space<vmem>>, vector<2x8x8x16xf32>
    %102 = vector.shape_cast %101 : vector<2x8x8x16xf32> to vector<128x16xf32>
    %c5_121 = arith.constant 5 : index
    %c0_122 = arith.constant 0 : index
    %c0_123 = arith.constant 0 : index
    %103 = vector.load %arg3[%c5_121, %c0_122, %c0_123] : memref<9x16x32xf32, #tpu.memory_space<vmem>>, vector<1x16x32xf32>
    %104 = vector.shape_cast %103 : vector<1x16x32xf32> to vector<16x32xf32>
    %cst_124 = arith.constant dense<0.000000e+00> : vector<128x32xf32>
    %105 = tpu.matmul %102, %104, %cst_124 {dimension_numbers = #tpu.dot_dimension_numbers<[1], [0], [0], [1], [0, 0, 1, 1], [], []>} : vector<128x16xf32>, vector<16x32xf32>, vector<128x32xf32> -> vector<128x32xf32>
    %106 = arith.addf %100, %105 : vector<128x32xf32>
    %c0_125 = arith.constant 0 : index
    %c2_126 = arith.constant 2 : index
    %c0_127 = arith.constant 0 : index
    %c0_128 = arith.constant 0 : index
    %107 = vector.load %arg12[%c0_125, %c2_126, %c0_127, %c0_128] : memref<2x10x10x16xf32, #tpu.memory_space<vmem>>, vector<2x8x8x16xf32>
    %108 = vector.shape_cast %107 : vector<2x8x8x16xf32> to vector<128x16xf32>
    %c6_129 = arith.constant 6 : index
    %c0_130 = arith.constant 0 : index
    %c0_131 = arith.constant 0 : index
    %109 = vector.load %arg3[%c6_129, %c0_130, %c0_131] : memref<9x16x32xf32, #tpu.memory_space<vmem>>, vector<1x16x32xf32>
    %110 = vector.shape_cast %109 : vector<1x16x32xf32> to vector<16x32xf32>
    %cst_132 = arith.constant dense<0.000000e+00> : vector<128x32xf32>
    %111 = tpu.matmul %108, %110, %cst_132 {dimension_numbers = #tpu.dot_dimension_numbers<[1], [0], [0], [1], [0, 0, 1, 1], [], []>} : vector<128x16xf32>, vector<16x32xf32>, vector<128x32xf32> -> vector<128x32xf32>
    %112 = arith.addf %106, %111 : vector<128x32xf32>
    %c0_133 = arith.constant 0 : index
    %c2_134 = arith.constant 2 : index
    %c1_135 = arith.constant 1 : index
    %c0_136 = arith.constant 0 : index
    %113 = vector.load %arg12[%c0_133, %c2_134, %c1_135, %c0_136] : memref<2x10x10x16xf32, #tpu.memory_space<vmem>>, vector<2x8x8x16xf32>
    %114 = vector.shape_cast %113 : vector<2x8x8x16xf32> to vector<128x16xf32>
    %c7_137 = arith.constant 7 : index
    %c0_138 = arith.constant 0 : index
    %c0_139 = arith.constant 0 : index
    %115 = vector.load %arg3[%c7_137, %c0_138, %c0_139] : memref<9x16x32xf32, #tpu.memory_space<vmem>>, vector<1x16x32xf32>
    %116 = vector.shape_cast %115 : vector<1x16x32xf32> to vector<16x32xf32>
    %cst_140 = arith.constant dense<0.000000e+00> : vector<128x32xf32>
    %117 = tpu.matmul %114, %116, %cst_140 {dimension_numbers = #tpu.dot_dimension_numbers<[1], [0], [0], [1], [0, 0, 1, 1], [], []>} : vector<128x16xf32>, vector<16x32xf32>, vector<128x32xf32> -> vector<128x32xf32>
    %118 = arith.addf %112, %117 : vector<128x32xf32>
    %c0_141 = arith.constant 0 : index
    %c2_142 = arith.constant 2 : index
    %c2_143 = arith.constant 2 : index
    %c0_144 = arith.constant 0 : index
    %119 = vector.load %arg12[%c0_141, %c2_142, %c2_143, %c0_144] : memref<2x10x10x16xf32, #tpu.memory_space<vmem>>, vector<2x8x8x16xf32>
    %120 = vector.shape_cast %119 : vector<2x8x8x16xf32> to vector<128x16xf32>
    %c8_145 = arith.constant 8 : index
    %c0_146 = arith.constant 0 : index
    %c0_147 = arith.constant 0 : index
    %121 = vector.load %arg3[%c8_145, %c0_146, %c0_147] : memref<9x16x32xf32, #tpu.memory_space<vmem>>, vector<1x16x32xf32>
    %122 = vector.shape_cast %121 : vector<1x16x32xf32> to vector<16x32xf32>
    %cst_148 = arith.constant dense<0.000000e+00> : vector<128x32xf32>
    %123 = tpu.matmul %120, %122, %cst_148 {dimension_numbers = #tpu.dot_dimension_numbers<[1], [0], [0], [1], [0, 0, 1, 1], [], []>} : vector<128x16xf32>, vector<16x32xf32>, vector<128x32xf32> -> vector<128x32xf32>
    %124 = arith.addf %118, %123 : vector<128x32xf32>
    %c0_149 = arith.constant 0 : index
    %c0_150 = arith.constant 0 : index
    %125 = vector.load %arg4[%c0_149, %c0_150] : memref<1x32xf32, #tpu.memory_space<vmem>>, vector<1x32xf32>
    %126 = vector.broadcast %125 : vector<1x32xf32> to vector<128x32xf32>
    %127 = arith.addf %124, %126 : vector<128x32xf32>
    %cst_151 = arith.constant 0.000000e+00 : f32
    %128 = vector.broadcast %cst_151 : f32 to vector<128x32xf32>
    %129 = arith.maximumf %127, %128 : vector<128x32xf32>
    %130 = vector.shape_cast %129 : vector<128x32xf32> to vector<64x2x32xf32>
    %cst_152 = arith.constant dense<0xFF800000> : vector<64x32xf32>
    %131 = vector.multi_reduction <maximumf>, %130, %cst_152 [1] : vector<64x2x32xf32> to vector<64x32xf32>
    %132 = vector.shape_cast %131 : vector<64x32xf32> to vector<8x8x32xf32>
    %133 = vector.extract_strided_slice %132 {offsets = [0, 0, 0], sizes = [8, 4, 32], strides = [1, 1, 1]} : vector<8x8x32xf32> to vector<8x4x32xf32>
    %134 = vector.extract_strided_slice %132 {offsets = [0, 4, 0], sizes = [8, 4, 32], strides = [1, 1, 1]} : vector<8x8x32xf32> to vector<8x4x32xf32>
    %135 = arith.maximumf %133, %134 : vector<8x4x32xf32>
    %cst_153 = arith.constant 0.000000e+00 : f32
    %136 = vector.broadcast %cst_153 : f32 to vector<2x6x6x32xf32>
    %c0_154 = arith.constant 0 : index
    %c0_155 = arith.constant 0 : index
    %c0_156 = arith.constant 0 : index
    %c0_157 = arith.constant 0 : index
    %137 = vector.load %arg13[%c0_154, %c0_155, %c0_156, %c0_157] : memref<2x6x6x32xf32, #tpu.memory_space<vmem>>, vector<2x6x6x32xf32>
    tpu.vector_store %arg13[%c0_154, %c0_155, %c0_156, %c0_157], %136 {strides = array<i32>} : memref<2x6x6x32xf32, #tpu.memory_space<vmem>>, vector<2x6x6x32xf32>,
    %138 = vector.shape_cast %135 : vector<8x4x32xf32> to vector<2x4x4x32xf32>
    %c0_158 = arith.constant 0 : index
    %c1_159 = arith.constant 1 : index
    %c1_160 = arith.constant 1 : index
    %c0_161 = arith.constant 0 : index
    %139 = vector.load %arg13[%c0_158, %c1_159, %c1_160, %c0_161] : memref<2x6x6x32xf32, #tpu.memory_space<vmem>>, vector<2x4x4x32xf32>
    tpu.vector_store %arg13[%c0_158, %c1_159, %c1_160, %c0_161], %138 {strides = array<i32>} : memref<2x6x6x32xf32, #tpu.memory_space<vmem>>, vector<2x4x4x32xf32>,
    %cst_162 = arith.constant 0.000000e+00 : f32
    %140 = vector.broadcast %cst_162 : f32 to vector<32x64xf32>
    %c0_163 = arith.constant 0 : index
    %c0_164 = arith.constant 0 : index
    %c0_165 = arith.constant 0 : index
    %c0_166 = arith.constant 0 : index
    %141 = vector.load %arg13[%c0_163, %c0_164, %c0_165, %c0_166] : memref<2x6x6x32xf32, #tpu.memory_space<vmem>>, vector<2x4x4x32xf32>
    %142 = vector.shape_cast %141 : vector<2x4x4x32xf32> to vector<32x32xf32>
    %c0_167 = arith.constant 0 : index
    %c0_168 = arith.constant 0 : index
    %c0_169 = arith.constant 0 : index
    %143 = vector.load %arg5[%c0_167, %c0_168, %c0_169] : memref<9x32x64xf32, #tpu.memory_space<vmem>>, vector<1x32x64xf32>
    %144 = vector.shape_cast %143 : vector<1x32x64xf32> to vector<32x64xf32>
    %cst_170 = arith.constant dense<0.000000e+00> : vector<32x64xf32>
    %145 = tpu.matmul %142, %144, %cst_170 {dimension_numbers = #tpu.dot_dimension_numbers<[1], [0], [0], [1], [0, 0, 1, 1], [], []>} : vector<32x32xf32>, vector<32x64xf32>, vector<32x64xf32> -> vector<32x64xf32>
    %146 = arith.addf %140, %145 : vector<32x64xf32>
    %c0_171 = arith.constant 0 : index
    %c0_172 = arith.constant 0 : index
    %c1_173 = arith.constant 1 : index
    %c0_174 = arith.constant 0 : index
    %147 = vector.load %arg13[%c0_171, %c0_172, %c1_173, %c0_174] : memref<2x6x6x32xf32, #tpu.memory_space<vmem>>, vector<2x4x4x32xf32>
    %148 = vector.shape_cast %147 : vector<2x4x4x32xf32> to vector<32x32xf32>
    %c1_175 = arith.constant 1 : index
    %c0_176 = arith.constant 0 : index
    %c0_177 = arith.constant 0 : index
    %149 = vector.load %arg5[%c1_175, %c0_176, %c0_177] : memref<9x32x64xf32, #tpu.memory_space<vmem>>, vector<1x32x64xf32>
    %150 = vector.shape_cast %149 : vector<1x32x64xf32> to vector<32x64xf32>
    %cst_178 = arith.constant dense<0.000000e+00> : vector<32x64xf32>
    %151 = tpu.matmul %148, %150, %cst_178 {dimension_numbers = #tpu.dot_dimension_numbers<[1], [0], [0], [1], [0, 0, 1, 1], [], []>} : vector<32x32xf32>, vector<32x64xf32>, vector<32x64xf32> -> vector<32x64xf32>
    %152 = arith.addf %146, %151 : vector<32x64xf32>
    %c0_179 = arith.constant 0 : index
    %c0_180 = arith.constant 0 : index
    %c2_181 = arith.constant 2 : index
    %c0_182 = arith.constant 0 : index
    %153 = vector.load %arg13[%c0_179, %c0_180, %c2_181, %c0_182] : memref<2x6x6x32xf32, #tpu.memory_space<vmem>>, vector<2x4x4x32xf32>
    %154 = vector.shape_cast %153 : vector<2x4x4x32xf32> to vector<32x32xf32>
    %c2_183 = arith.constant 2 : index
    %c0_184 = arith.constant 0 : index
    %c0_185 = arith.constant 0 : index
    %155 = vector.load %arg5[%c2_183, %c0_184, %c0_185] : memref<9x32x64xf32, #tpu.memory_space<vmem>>, vector<1x32x64xf32>
    %156 = vector.shape_cast %155 : vector<1x32x64xf32> to vector<32x64xf32>
    %cst_186 = arith.constant dense<0.000000e+00> : vector<32x64xf32>
    %157 = tpu.matmul %154, %156, %cst_186 {dimension_numbers = #tpu.dot_dimension_numbers<[1], [0], [0], [1], [0, 0, 1, 1], [], []>} : vector<32x32xf32>, vector<32x64xf32>, vector<32x64xf32> -> vector<32x64xf32>
    %158 = arith.addf %152, %157 : vector<32x64xf32>
    %c0_187 = arith.constant 0 : index
    %c1_188 = arith.constant 1 : index
    %c0_189 = arith.constant 0 : index
    %c0_190 = arith.constant 0 : index
    %159 = vector.load %arg13[%c0_187, %c1_188, %c0_189, %c0_190] : memref<2x6x6x32xf32, #tpu.memory_space<vmem>>, vector<2x4x4x32xf32>
    %160 = vector.shape_cast %159 : vector<2x4x4x32xf32> to vector<32x32xf32>
    %c3_191 = arith.constant 3 : index
    %c0_192 = arith.constant 0 : index
    %c0_193 = arith.constant 0 : index
    %161 = vector.load %arg5[%c3_191, %c0_192, %c0_193] : memref<9x32x64xf32, #tpu.memory_space<vmem>>, vector<1x32x64xf32>
    %162 = vector.shape_cast %161 : vector<1x32x64xf32> to vector<32x64xf32>
    %cst_194 = arith.constant dense<0.000000e+00> : vector<32x64xf32>
    %163 = tpu.matmul %160, %162, %cst_194 {dimension_numbers = #tpu.dot_dimension_numbers<[1], [0], [0], [1], [0, 0, 1, 1], [], []>} : vector<32x32xf32>, vector<32x64xf32>, vector<32x64xf32> -> vector<32x64xf32>
    %164 = arith.addf %158, %163 : vector<32x64xf32>
    %c0_195 = arith.constant 0 : index
    %c1_196 = arith.constant 1 : index
    %c1_197 = arith.constant 1 : index
    %c0_198 = arith.constant 0 : index
    %165 = vector.load %arg13[%c0_195, %c1_196, %c1_197, %c0_198] : memref<2x6x6x32xf32, #tpu.memory_space<vmem>>, vector<2x4x4x32xf32>
    %166 = vector.shape_cast %165 : vector<2x4x4x32xf32> to vector<32x32xf32>
    %c4_199 = arith.constant 4 : index
    %c0_200 = arith.constant 0 : index
    %c0_201 = arith.constant 0 : index
    %167 = vector.load %arg5[%c4_199, %c0_200, %c0_201] : memref<9x32x64xf32, #tpu.memory_space<vmem>>, vector<1x32x64xf32>
    %168 = vector.shape_cast %167 : vector<1x32x64xf32> to vector<32x64xf32>
    %cst_202 = arith.constant dense<0.000000e+00> : vector<32x64xf32>
    %169 = tpu.matmul %166, %168, %cst_202 {dimension_numbers = #tpu.dot_dimension_numbers<[1], [0], [0], [1], [0, 0, 1, 1], [], []>} : vector<32x32xf32>, vector<32x64xf32>, vector<32x64xf32> -> vector<32x64xf32>
    %170 = arith.addf %164, %169 : vector<32x64xf32>
    %c0_203 = arith.constant 0 : index
    %c1_204 = arith.constant 1 : index
    %c2_205 = arith.constant 2 : index
    %c0_206 = arith.constant 0 : index
    %171 = vector.load %arg13[%c0_203, %c1_204, %c2_205, %c0_206] : memref<2x6x6x32xf32, #tpu.memory_space<vmem>>, vector<2x4x4x32xf32>
    %172 = vector.shape_cast %171 : vector<2x4x4x32xf32> to vector<32x32xf32>
    %c5_207 = arith.constant 5 : index
    %c0_208 = arith.constant 0 : index
    %c0_209 = arith.constant 0 : index
    %173 = vector.load %arg5[%c5_207, %c0_208, %c0_209] : memref<9x32x64xf32, #tpu.memory_space<vmem>>, vector<1x32x64xf32>
    %174 = vector.shape_cast %173 : vector<1x32x64xf32> to vector<32x64xf32>
    %cst_210 = arith.constant dense<0.000000e+00> : vector<32x64xf32>
    %175 = tpu.matmul %172, %174, %cst_210 {dimension_numbers = #tpu.dot_dimension_numbers<[1], [0], [0], [1], [0, 0, 1, 1], [], []>} : vector<32x32xf32>, vector<32x64xf32>, vector<32x64xf32> -> vector<32x64xf32>
    %176 = arith.addf %170, %175 : vector<32x64xf32>
    %c0_211 = arith.constant 0 : index
    %c2_212 = arith.constant 2 : index
    %c0_213 = arith.constant 0 : index
    %c0_214 = arith.constant 0 : index
    %177 = vector.load %arg13[%c0_211, %c2_212, %c0_213, %c0_214] : memref<2x6x6x32xf32, #tpu.memory_space<vmem>>, vector<2x4x4x32xf32>
    %178 = vector.shape_cast %177 : vector<2x4x4x32xf32> to vector<32x32xf32>
    %c6_215 = arith.constant 6 : index
    %c0_216 = arith.constant 0 : index
    %c0_217 = arith.constant 0 : index
    %179 = vector.load %arg5[%c6_215, %c0_216, %c0_217] : memref<9x32x64xf32, #tpu.memory_space<vmem>>, vector<1x32x64xf32>
    %180 = vector.shape_cast %179 : vector<1x32x64xf32> to vector<32x64xf32>
    %cst_218 = arith.constant dense<0.000000e+00> : vector<32x64xf32>
    %181 = tpu.matmul %178, %180, %cst_218 {dimension_numbers = #tpu.dot_dimension_numbers<[1], [0], [0], [1], [0, 0, 1, 1], [], []>} : vector<32x32xf32>, vector<32x64xf32>, vector<32x64xf32> -> vector<32x64xf32>
    %182 = arith.addf %176, %181 : vector<32x64xf32>
    %c0_219 = arith.constant 0 : index
    %c2_220 = arith.constant 2 : index
    %c1_221 = arith.constant 1 : index
    %c0_222 = arith.constant 0 : index
    %183 = vector.load %arg13[%c0_219, %c2_220, %c1_221, %c0_222] : memref<2x6x6x32xf32, #tpu.memory_space<vmem>>, vector<2x4x4x32xf32>
    %184 = vector.shape_cast %183 : vector<2x4x4x32xf32> to vector<32x32xf32>
    %c7_223 = arith.constant 7 : index
    %c0_224 = arith.constant 0 : index
    %c0_225 = arith.constant 0 : index
    %185 = vector.load %arg5[%c7_223, %c0_224, %c0_225] : memref<9x32x64xf32, #tpu.memory_space<vmem>>, vector<1x32x64xf32>
    %186 = vector.shape_cast %185 : vector<1x32x64xf32> to vector<32x64xf32>
    %cst_226 = arith.constant dense<0.000000e+00> : vector<32x64xf32>
    %187 = tpu.matmul %184, %186, %cst_226 {dimension_numbers = #tpu.dot_dimension_numbers<[1], [0], [0], [1], [0, 0, 1, 1], [], []>} : vector<32x32xf32>, vector<32x64xf32>, vector<32x64xf32> -> vector<32x64xf32>
    %188 = arith.addf %182, %187 : vector<32x64xf32>
    %c0_227 = arith.constant 0 : index
    %c2_228 = arith.constant 2 : index
    %c2_229 = arith.constant 2 : index
    %c0_230 = arith.constant 0 : index
    %189 = vector.load %arg13[%c0_227, %c2_228, %c2_229, %c0_230] : memref<2x6x6x32xf32, #tpu.memory_space<vmem>>, vector<2x4x4x32xf32>
    %190 = vector.shape_cast %189 : vector<2x4x4x32xf32> to vector<32x32xf32>
    %c8_231 = arith.constant 8 : index
    %c0_232 = arith.constant 0 : index
    %c0_233 = arith.constant 0 : index
    %191 = vector.load %arg5[%c8_231, %c0_232, %c0_233] : memref<9x32x64xf32, #tpu.memory_space<vmem>>, vector<1x32x64xf32>
    %192 = vector.shape_cast %191 : vector<1x32x64xf32> to vector<32x64xf32>
    %cst_234 = arith.constant dense<0.000000e+00> : vector<32x64xf32>
    %193 = tpu.matmul %190, %192, %cst_234 {dimension_numbers = #tpu.dot_dimension_numbers<[1], [0], [0], [1], [0, 0, 1, 1], [], []>} : vector<32x32xf32>, vector<32x64xf32>, vector<32x64xf32> -> vector<32x64xf32>
    %194 = arith.addf %188, %193 : vector<32x64xf32>
    %c0_235 = arith.constant 0 : index
    %c0_236 = arith.constant 0 : index
    %195 = vector.load %arg6[%c0_235, %c0_236] : memref<1x64xf32, #tpu.memory_space<vmem>>, vector<1x64xf32>
    %196 = vector.broadcast %195 : vector<1x64xf32> to vector<32x64xf32>
    %197 = arith.addf %194, %196 : vector<32x64xf32>
    %cst_237 = arith.constant 0.000000e+00 : f32
    %198 = vector.broadcast %cst_237 : f32 to vector<32x64xf32>
    %199 = arith.maximumf %197, %198 : vector<32x64xf32>
    %200 = vector.shape_cast %199 : vector<32x64xf32> to vector<16x2x64xf32>
    %cst_238 = arith.constant dense<0xFF800000> : vector<16x64xf32>
    %201 = vector.multi_reduction <maximumf>, %200, %cst_238 [1] : vector<16x2x64xf32> to vector<16x64xf32>
    %202 = vector.shape_cast %201 : vector<16x64xf32> to vector<4x4x64xf32>
    %203 = vector.extract_strided_slice %202 {offsets = [0, 0, 0], sizes = [4, 2, 64], strides = [1, 1, 1]} : vector<4x4x64xf32> to vector<4x2x64xf32>
    %204 = vector.extract_strided_slice %202 {offsets = [0, 2, 0], sizes = [4, 2, 64], strides = [1, 1, 1]} : vector<4x4x64xf32> to vector<4x2x64xf32>
    %205 = arith.maximumf %203, %204 : vector<4x2x64xf32>
    %cst_239 = arith.constant 0.000000e+00 : f32
    %206 = vector.broadcast %cst_239 : f32 to vector<2x4x4x64xf32>
    %c0_240 = arith.constant 0 : index
    %c0_241 = arith.constant 0 : index
    %c0_242 = arith.constant 0 : index
    %c0_243 = arith.constant 0 : index
    %207 = vector.load %arg14[%c0_240, %c0_241, %c0_242, %c0_243] : memref<2x4x4x64xf32, #tpu.memory_space<vmem>>, vector<2x4x4x64xf32>
    tpu.vector_store %arg14[%c0_240, %c0_241, %c0_242, %c0_243], %206 {strides = array<i32>} : memref<2x4x4x64xf32, #tpu.memory_space<vmem>>, vector<2x4x4x64xf32>,
    %208 = vector.shape_cast %205 : vector<4x2x64xf32> to vector<2x2x2x64xf32>
    %c0_244 = arith.constant 0 : index
    %c1_245 = arith.constant 1 : index
    %c1_246 = arith.constant 1 : index
    %c0_247 = arith.constant 0 : index
    %209 = vector.load %arg14[%c0_244, %c1_245, %c1_246, %c0_247] : memref<2x4x4x64xf32, #tpu.memory_space<vmem>>, vector<2x2x2x64xf32>
    tpu.vector_store %arg14[%c0_244, %c1_245, %c1_246, %c0_247], %208 {strides = array<i32>} : memref<2x4x4x64xf32, #tpu.memory_space<vmem>>, vector<2x2x2x64xf32>,
    %cst_248 = arith.constant 0.000000e+00 : f32
    %210 = vector.broadcast %cst_248 : f32 to vector<8x128xf32>
    %c0_249 = arith.constant 0 : index
    %c0_250 = arith.constant 0 : index
    %c0_251 = arith.constant 0 : index
    %c0_252 = arith.constant 0 : index
    %211 = vector.load %arg14[%c0_249, %c0_250, %c0_251, %c0_252] : memref<2x4x4x64xf32, #tpu.memory_space<vmem>>, vector<2x2x2x64xf32>
    %212 = vector.shape_cast %211 : vector<2x2x2x64xf32> to vector<8x64xf32>
    %c0_253 = arith.constant 0 : index
    %c0_254 = arith.constant 0 : index
    %c0_255 = arith.constant 0 : index
    %213 = vector.load %arg7[%c0_253, %c0_254, %c0_255] : memref<9x64x128xf32, #tpu.memory_space<vmem>>, vector<1x64x128xf32>
    %214 = vector.shape_cast %213 : vector<1x64x128xf32> to vector<64x128xf32>
    %cst_256 = arith.constant dense<0.000000e+00> : vector<8x128xf32>
    %215 = tpu.matmul %212, %214, %cst_256 {dimension_numbers = #tpu.dot_dimension_numbers<[1], [0], [0], [1], [0, 0, 1, 1], [], []>} : vector<8x64xf32>, vector<64x128xf32>, vector<8x128xf32> -> vector<8x128xf32>
    %216 = arith.addf %210, %215 : vector<8x128xf32>
    %c0_257 = arith.constant 0 : index
    %c0_258 = arith.constant 0 : index
    %c1_259 = arith.constant 1 : index
    %c0_260 = arith.constant 0 : index
    %217 = vector.load %arg14[%c0_257, %c0_258, %c1_259, %c0_260] : memref<2x4x4x64xf32, #tpu.memory_space<vmem>>, vector<2x2x2x64xf32>
    %218 = vector.shape_cast %217 : vector<2x2x2x64xf32> to vector<8x64xf32>
    %c1_261 = arith.constant 1 : index
    %c0_262 = arith.constant 0 : index
    %c0_263 = arith.constant 0 : index
    %219 = vector.load %arg7[%c1_261, %c0_262, %c0_263] : memref<9x64x128xf32, #tpu.memory_space<vmem>>, vector<1x64x128xf32>
    %220 = vector.shape_cast %219 : vector<1x64x128xf32> to vector<64x128xf32>
    %cst_264 = arith.constant dense<0.000000e+00> : vector<8x128xf32>
    %221 = tpu.matmul %218, %220, %cst_264 {dimension_numbers = #tpu.dot_dimension_numbers<[1], [0], [0], [1], [0, 0, 1, 1], [], []>} : vector<8x64xf32>, vector<64x128xf32>, vector<8x128xf32> -> vector<8x128xf32>
    %222 = arith.addf %216, %221 : vector<8x128xf32>
    %c0_265 = arith.constant 0 : index
    %c0_266 = arith.constant 0 : index
    %c2_267 = arith.constant 2 : index
    %c0_268 = arith.constant 0 : index
    %223 = vector.load %arg14[%c0_265, %c0_266, %c2_267, %c0_268] : memref<2x4x4x64xf32, #tpu.memory_space<vmem>>, vector<2x2x2x64xf32>
    %224 = vector.shape_cast %223 : vector<2x2x2x64xf32> to vector<8x64xf32>
    %c2_269 = arith.constant 2 : index
    %c0_270 = arith.constant 0 : index
    %c0_271 = arith.constant 0 : index
    %225 = vector.load %arg7[%c2_269, %c0_270, %c0_271] : memref<9x64x128xf32, #tpu.memory_space<vmem>>, vector<1x64x128xf32>
    %226 = vector.shape_cast %225 : vector<1x64x128xf32> to vector<64x128xf32>
    %cst_272 = arith.constant dense<0.000000e+00> : vector<8x128xf32>
    %227 = tpu.matmul %224, %226, %cst_272 {dimension_numbers = #tpu.dot_dimension_numbers<[1], [0], [0], [1], [0, 0, 1, 1], [], []>} : vector<8x64xf32>, vector<64x128xf32>, vector<8x128xf32> -> vector<8x128xf32>
    %228 = arith.addf %222, %227 : vector<8x128xf32>
    %c0_273 = arith.constant 0 : index
    %c1_274 = arith.constant 1 : index
    %c0_275 = arith.constant 0 : index
    %c0_276 = arith.constant 0 : index
    %229 = vector.load %arg14[%c0_273, %c1_274, %c0_275, %c0_276] : memref<2x4x4x64xf32, #tpu.memory_space<vmem>>, vector<2x2x2x64xf32>
    %230 = vector.shape_cast %229 : vector<2x2x2x64xf32> to vector<8x64xf32>
    %c3_277 = arith.constant 3 : index
    %c0_278 = arith.constant 0 : index
    %c0_279 = arith.constant 0 : index
    %231 = vector.load %arg7[%c3_277, %c0_278, %c0_279] : memref<9x64x128xf32, #tpu.memory_space<vmem>>, vector<1x64x128xf32>
    %232 = vector.shape_cast %231 : vector<1x64x128xf32> to vector<64x128xf32>
    %cst_280 = arith.constant dense<0.000000e+00> : vector<8x128xf32>
    %233 = tpu.matmul %230, %232, %cst_280 {dimension_numbers = #tpu.dot_dimension_numbers<[1], [0], [0], [1], [0, 0, 1, 1], [], []>} : vector<8x64xf32>, vector<64x128xf32>, vector<8x128xf32> -> vector<8x128xf32>
    %234 = arith.addf %228, %233 : vector<8x128xf32>
    %c0_281 = arith.constant 0 : index
    %c1_282 = arith.constant 1 : index
    %c1_283 = arith.constant 1 : index
    %c0_284 = arith.constant 0 : index
    %235 = vector.load %arg14[%c0_281, %c1_282, %c1_283, %c0_284] : memref<2x4x4x64xf32, #tpu.memory_space<vmem>>, vector<2x2x2x64xf32>
    %236 = vector.shape_cast %235 : vector<2x2x2x64xf32> to vector<8x64xf32>
    %c4_285 = arith.constant 4 : index
    %c0_286 = arith.constant 0 : index
    %c0_287 = arith.constant 0 : index
    %237 = vector.load %arg7[%c4_285, %c0_286, %c0_287] : memref<9x64x128xf32, #tpu.memory_space<vmem>>, vector<1x64x128xf32>
    %238 = vector.shape_cast %237 : vector<1x64x128xf32> to vector<64x128xf32>
    %cst_288 = arith.constant dense<0.000000e+00> : vector<8x128xf32>
    %239 = tpu.matmul %236, %238, %cst_288 {dimension_numbers = #tpu.dot_dimension_numbers<[1], [0], [0], [1], [0, 0, 1, 1], [], []>} : vector<8x64xf32>, vector<64x128xf32>, vector<8x128xf32> -> vector<8x128xf32>
    %240 = arith.addf %234, %239 : vector<8x128xf32>
    %c0_289 = arith.constant 0 : index
    %c1_290 = arith.constant 1 : index
    %c2_291 = arith.constant 2 : index
    %c0_292 = arith.constant 0 : index
    %241 = vector.load %arg14[%c0_289, %c1_290, %c2_291, %c0_292] : memref<2x4x4x64xf32, #tpu.memory_space<vmem>>, vector<2x2x2x64xf32>
    %242 = vector.shape_cast %241 : vector<2x2x2x64xf32> to vector<8x64xf32>
    %c5_293 = arith.constant 5 : index
    %c0_294 = arith.constant 0 : index
    %c0_295 = arith.constant 0 : index
    %243 = vector.load %arg7[%c5_293, %c0_294, %c0_295] : memref<9x64x128xf32, #tpu.memory_space<vmem>>, vector<1x64x128xf32>
    %244 = vector.shape_cast %243 : vector<1x64x128xf32> to vector<64x128xf32>
    %cst_296 = arith.constant dense<0.000000e+00> : vector<8x128xf32>
    %245 = tpu.matmul %242, %244, %cst_296 {dimension_numbers = #tpu.dot_dimension_numbers<[1], [0], [0], [1], [0, 0, 1, 1], [], []>} : vector<8x64xf32>, vector<64x128xf32>, vector<8x128xf32> -> vector<8x128xf32>
    %246 = arith.addf %240, %245 : vector<8x128xf32>
    %c0_297 = arith.constant 0 : index
    %c2_298 = arith.constant 2 : index
    %c0_299 = arith.constant 0 : index
    %c0_300 = arith.constant 0 : index
    %247 = vector.load %arg14[%c0_297, %c2_298, %c0_299, %c0_300] : memref<2x4x4x64xf32, #tpu.memory_space<vmem>>, vector<2x2x2x64xf32>
    %248 = vector.shape_cast %247 : vector<2x2x2x64xf32> to vector<8x64xf32>
    %c6_301 = arith.constant 6 : index
    %c0_302 = arith.constant 0 : index
    %c0_303 = arith.constant 0 : index
    %249 = vector.load %arg7[%c6_301, %c0_302, %c0_303] : memref<9x64x128xf32, #tpu.memory_space<vmem>>, vector<1x64x128xf32>
    %250 = vector.shape_cast %249 : vector<1x64x128xf32> to vector<64x128xf32>
    %cst_304 = arith.constant dense<0.000000e+00> : vector<8x128xf32>
    %251 = tpu.matmul %248, %250, %cst_304 {dimension_numbers = #tpu.dot_dimension_numbers<[1], [0], [0], [1], [0, 0, 1, 1], [], []>} : vector<8x64xf32>, vector<64x128xf32>, vector<8x128xf32> -> vector<8x128xf32>
    %252 = arith.addf %246, %251 : vector<8x128xf32>
    %c0_305 = arith.constant 0 : index
    %c2_306 = arith.constant 2 : index
    %c1_307 = arith.constant 1 : index
    %c0_308 = arith.constant 0 : index
    %253 = vector.load %arg14[%c0_305, %c2_306, %c1_307, %c0_308] : memref<2x4x4x64xf32, #tpu.memory_space<vmem>>, vector<2x2x2x64xf32>
    %254 = vector.shape_cast %253 : vector<2x2x2x64xf32> to vector<8x64xf32>
    %c7_309 = arith.constant 7 : index
    %c0_310 = arith.constant 0 : index
    %c0_311 = arith.constant 0 : index
    %255 = vector.load %arg7[%c7_309, %c0_310, %c0_311] : memref<9x64x128xf32, #tpu.memory_space<vmem>>, vector<1x64x128xf32>
    %256 = vector.shape_cast %255 : vector<1x64x128xf32> to vector<64x128xf32>
    %cst_312 = arith.constant dense<0.000000e+00> : vector<8x128xf32>
    %257 = tpu.matmul %254, %256, %cst_312 {dimension_numbers = #tpu.dot_dimension_numbers<[1], [0], [0], [1], [0, 0, 1, 1], [], []>} : vector<8x64xf32>, vector<64x128xf32>, vector<8x128xf32> -> vector<8x128xf32>
    %258 = arith.addf %252, %257 : vector<8x128xf32>
    %c0_313 = arith.constant 0 : index
    %c2_314 = arith.constant 2 : index
    %c2_315 = arith.constant 2 : index
    %c0_316 = arith.constant 0 : index
    %259 = vector.load %arg14[%c0_313, %c2_314, %c2_315, %c0_316] : memref<2x4x4x64xf32, #tpu.memory_space<vmem>>, vector<2x2x2x64xf32>
    %260 = vector.shape_cast %259 : vector<2x2x2x64xf32> to vector<8x64xf32>
    %c8_317 = arith.constant 8 : index
    %c0_318 = arith.constant 0 : index
    %c0_319 = arith.constant 0 : index
    %261 = vector.load %arg7[%c8_317, %c0_318, %c0_319] : memref<9x64x128xf32, #tpu.memory_space<vmem>>, vector<1x64x128xf32>
    %262 = vector.shape_cast %261 : vector<1x64x128xf32> to vector<64x128xf32>
    %cst_320 = arith.constant dense<0.000000e+00> : vector<8x128xf32>
    %263 = tpu.matmul %260, %262, %cst_320 {dimension_numbers = #tpu.dot_dimension_numbers<[1], [0], [0], [1], [0, 0, 1, 1], [], []>} : vector<8x64xf32>, vector<64x128xf32>, vector<8x128xf32> -> vector<8x128xf32>
    %264 = arith.addf %258, %263 : vector<8x128xf32>
    %c0_321 = arith.constant 0 : index
    %c0_322 = arith.constant 0 : index
    %265 = vector.load %arg8[%c0_321, %c0_322] : memref<1x128xf32, #tpu.memory_space<vmem>>, vector<1x128xf32>
    %266 = vector.broadcast %265 : vector<1x128xf32> to vector<8x128xf32>
    %267 = arith.addf %264, %266 : vector<8x128xf32>
    %cst_323 = arith.constant 0.000000e+00 : f32
    %268 = vector.broadcast %cst_323 : f32 to vector<8x128xf32>
    %269 = arith.maximumf %267, %268 : vector<8x128xf32>
    %270 = vector.shape_cast %269 : vector<8x128xf32> to vector<2x4x128xf32>
    %cst_324 = arith.constant dense<0.000000e+00> : vector<2x128xf32>
    %271 = vector.multi_reduction <add>, %270, %cst_324 [1] : vector<2x4x128xf32> to vector<2x128xf32>
    %cst_325 = arith.constant 2.500000e-01 : f32
    %272 = vector.broadcast %cst_325 : f32 to vector<2x128xf32>
    %273 = arith.mulf %271, %272 : vector<2x128xf32>
    %c0_326 = arith.constant 0 : index
    %c0_327 = arith.constant 0 : index
    %274 = vector.load %arg9[%c0_326, %c0_327] : memref<128x5xf32, #tpu.memory_space<vmem>>, vector<128x5xf32>
    %cst_328 = arith.constant dense<0.000000e+00> : vector<2x5xf32>
    %275 = tpu.matmul %273, %274, %cst_328 {dimension_numbers = #tpu.dot_dimension_numbers<[1], [0], [0], [1], [0, 0, 1, 1], [], []>} : vector<2x128xf32>, vector<128x5xf32>, vector<2x5xf32> -> vector<2x5xf32>
    %c0_329 = arith.constant 0 : index
    %c0_330 = arith.constant 0 : index
    %276 = vector.load %arg10[%c0_329, %c0_330] : memref<1x5xf32, #tpu.memory_space<vmem>>, vector<1x5xf32>
    %277 = vector.broadcast %276 : vector<1x5xf32> to vector<2x5xf32>
    %278 = arith.addf %275, %277 : vector<2x5xf32>
    %c0_331 = arith.constant 0 : index
    %c0_332 = arith.constant 0 : index
    %279 = vector.load %arg11[%c0_331, %c0_332] : memref<2x5xf32, #tpu.memory_space<vmem>>, vector<2x5xf32>
    tpu.vector_store %arg11[%c0_331, %c0_332], %278 {strides = array<i32>} : memref<2x5xf32, #tpu.memory_space<vmem>>, vector<2x5xf32>,
    return
  }
}

</mosaic_0001>

<llo_original>
// kernel: small_scalogram_cnn.1
$region0: #{small_scalogram_cnn.1}
  #allocation0 [shape = 'u32[]', space=smem, size = 0x4, offset = 0x4, fixed_abs, tag = 'smem constant byte address 0x4 - core index']
  #allocation1 [shape = 'u32[72,128]{1,0:T(1,128)}', space=vmem, size = 0x9000, scoped, tag = 'internal scratch']
  #allocation2 [shape = 'f32[2,10,10,16]{3,2,1,0:T(8,128)}', space=vmem, size = 0x28000, scoped, tag = 'scratch operand']
  #allocation3 [shape = 'f32[2,6,6,32]{3,2,1,0:T(8,128)}', space=vmem, size = 0xc000, scoped, tag = 'scratch operand']
  #allocation4 [shape = 'f32[2,4,4,64]{3,2,1,0:T(4,128)}', space=vmem, size = 0x4000, scoped, tag = 'scratch operand']
  %s0 = inlined_call_operand.vmem [shape: f32[2,18,18,3], index: 0, kind: input, shape index: {}]
  %s1 = inlined_call_operand.vmem [shape: f32[9,3,16], index: 1, kind: input, shape index: {}]
  %s2 = inlined_call_operand.vmem [shape: f32[1,16], index: 2, kind: input, shape index: {}]
  %s3 = inlined_call_operand.vmem [shape: f32[9,16,32], index: 3, kind: input, shape index: {}]
  %s4 = inlined_call_operand.vmem [shape: f32[1,32], index: 4, kind: input, shape index: {}]
  %s5 = inlined_call_operand.vmem [shape: f32[9,32,64], index: 5, kind: input, shape index: {}]
  %s6 = inlined_call_operand.vmem [shape: f32[1,64], index: 6, kind: input, shape index: {}]
  %s7 = inlined_call_operand.vmem [shape: f32[9,64,128], index: 7, kind: input, shape index: {}]
  %s8 = inlined_call_operand.vmem [shape: f32[1,128], index: 8, kind: input, shape index: {}]
  %s9 = inlined_call_operand.vmem [shape: f32[128,5], index: 9, kind: input, shape index: {}]
  %s10 = inlined_call_operand.vmem [shape: f32[1,5], index: 10, kind: input, shape index: {}]
  %s11 = inlined_call_operand.hbm [shape: f32[2,5], index: 11, kind: output, shape index: {}]
  %s12 = sld [smem:[#allocation0]]
  $region54: #{small_scalogram_cnn.1} parent=0
    _
  %s14 = ssub.s32 1, %s12
  %s15 = scalar_select 0, %s14, %s12
  $region1: #{small_scalogram_cnn.1} parent=0
    #allocation5 [shape = 'u8[1024]{0}', space=vmem, size = 0x400, scoped, tag = 'output window, operand 0, single buffered']
    #allocation6 [shape = 's32[1]{0}', space=sflag, size = 0x4, scoped, tag = 'scoped memory for small_scalogram_cnn.1']
    %16 = vsyncpa [#allocation6], 0
    // Predicated region
    $region2: #{small_scalogram_cnn.1} parent=1 // pred_check
      _
    $region3: #{small_scalogram_cnn.1} parent=1 // pred_check_branch
      %18 = sbr.rel (0) target = $region5
    $region4: #{small_scalogram_cnn.1} parent=1 // pred_region
      _
    $region5: #{small_scalogram_cnn.1} parent=1 // pred_fallthru
      _
    // Predicated region
    $region6: #{small_scalogram_cnn.1} parent=1 // pred_check
      _
    $region7: #{small_scalogram_cnn.1} parent=1 // pred_check_branch
      %20 = sbr.rel (0) target = $region9
    $region8: #{small_scalogram_cnn.1} parent=1 // pred_region
      _
    $region9: #{small_scalogram_cnn.1} parent=1 // pred_fallthru
      _
    // Predicated region
    $region10: #{small_scalogram_cnn.1} parent=1 // pred_check
      _
    $region11: #{small_scalogram_cnn.1} parent=1 // pred_check_branch
      %22 = sbr.rel (0) target = $region13
    $region12: #{small_scalogram_cnn.1} parent=1 // pred_region
      _
    $region13: #{small_scalogram_cnn.1} parent=1 // pred_fallthru
      _
    // Predicated region
    $region14: #{small_scalogram_cnn.1} parent=1 // pred_check
      _
    $region15: #{small_scalogram_cnn.1} parent=1 // pred_check_branch
      %24 = sbr.rel (0) target = $region17
    $region16: #{small_scalogram_cnn.1} parent=1 // pred_region
      _
    $region17: #{small_scalogram_cnn.1} parent=1 // pred_fallthru
      _
    // Predicated region
    $region18: #{small_scalogram_cnn.1} parent=1 // pred_check
      _
    $region19: #{small_scalogram_cnn.1} parent=1 // pred_check_branch
      %26 = sbr.rel (0) target = $region21
    $region20: #{small_scalogram_cnn.1} parent=1 // pred_region
      _
    $region21: #{small_scalogram_cnn.1} parent=1 // pred_fallthru
      _
    // Predicated region
    $region22: #{small_scalogram_cnn.1} parent=1 // pred_check
      _
    $region23: #{small_scalogram_cnn.1} parent=1 // pred_check_branch
      %28 = sbr.rel (0) target = $region25
    $region24: #{small_scalogram_cnn.1} parent=1 // pred_region
      _
    $region25: #{small_scalogram_cnn.1} parent=1 // pred_fallthru
      _
    // Predicated region
    $region26: #{small_scalogram_cnn.1} parent=1 // pred_check
      _
    $region27: #{small_scalogram_cnn.1} parent=1 // pred_check_branch
      %30 = sbr.rel (0) target = $region29
    $region28: #{small_scalogram_cnn.1} parent=1 // pred_region
      _
    $region29: #{small_scalogram_cnn.1} parent=1 // pred_fallthru
      _
    // Predicated region
    $region30: #{small_scalogram_cnn.1} parent=1 // pred_check
      _
    $region31: #{small_scalogram_cnn.1} parent=1 // pred_check_branch
      %32 = sbr.rel (0) target = $region33
    $region32: #{small_scalogram_cnn.1} parent=1 // pred_region
      _
    $region33: #{small_scalogram_cnn.1} parent=1 // pred_fallthru
      _
    // Predicated region
    $region34: #{small_scalogram_cnn.1} parent=1 // pred_check
      _
    $region35: #{small_scalogram_cnn.1} parent=1 // pred_check_branch
      %34 = sbr.rel (0) target = $region37
    $region36: #{small_scalogram_cnn.1} parent=1 // pred_region
      _
    $region37: #{small_scalogram_cnn.1} parent=1 // pred_fallthru
      _
    // Predicated region
    $region38: #{small_scalogram_cnn.1} parent=1 // pred_check
      _
    $region39: #{small_scalogram_cnn.1} parent=1 // pred_check_branch
      %36 = sbr.rel (0) target = $region41
    $region40: #{small_scalogram_cnn.1} parent=1 // pred_region
      _
    $region41: #{small_scalogram_cnn.1} parent=1 // pred_fallthru
      _
    // Predicated region
    $region42: #{small_scalogram_cnn.1} parent=1 // pred_check
      _
    $region43: #{small_scalogram_cnn.1} parent=1 // pred_check_branch
      %38 = sbr.rel (0) target = $region45
    $region44: #{small_scalogram_cnn.1} parent=1 // pred_region
      _
    $region45: #{small_scalogram_cnn.1} parent=1 // pred_fallthru
      _
    %v39 = vld [vmem:[%s0] sm:$0xff]
    %v40 = vld [vmem:[%s0 + $0x8] sm:$0xff]
    %v41 = vld [vmem:[%s0 + $0x18] sm:$0xff]
    %v42 = vld [vmem:[%s0 + $0x20] sm:$0xff]
    %v43 = vld [vmem:[%s0 + $0x30] sm:$0xff]
    %v44 = vld [vmem:[%s0 + $0x38] sm:$0xff]
    %v45 = vld [vmem:[%s0 + $0x48] sm:$0xff]
    %v46 = vld [vmem:[%s0 + $0x50] sm:$0xff]
    %v47 = vld [vmem:[%s0 + $0x60] sm:$0xff]
    %v48 = vld [vmem:[%s0 + $0x68] sm:$0xff]
    %v49 = vld [vmem:[%s0 + $0x78] sm:$0xff]
    %v50 = vld [vmem:[%s0 + $0x80] sm:$0xff]
    %v51 = vld [vmem:[%s0 + $0x90] sm:$0xff]
    %v52 = vld [vmem:[%s0 + $0x98] sm:$0xff]
    %v53 = vld [vmem:[%s0 + $0xa8] sm:$0xff]
    %v54 = vld [vmem:[%s0 + $0xb0] sm:$0xff]
    %v55 = vld [vmem:[%s0 + $0xc0] sm:$0xff]
    %v56 = vld [vmem:[%s0 + $0xc8] sm:$0xff]
    %v57 = vld [vmem:[%s0 + $0xd8] sm:$0xff]
    %v58 = vld [vmem:[%s0 + $0xe0] sm:$0xff]
    %v59 = vld [vmem:[%s0 + $0xf0] sm:$0xff]
    %v60 = vld [vmem:[%s0 + $0xf8] sm:$0xff]
    %v61 = vld [vmem:[%s0 + $0x108] sm:$0xff]
    %v62 = vld [vmem:[%s0 + $0x110] sm:$0xff]
    %v63 = vld [vmem:[%s0 + $0x120] sm:$0xff]
    %v64 = vld [vmem:[%s0 + $0x128] sm:$0xff]
    %v65 = vld [vmem:[%s0 + $0x138] sm:$0xff]
    %v66 = vld [vmem:[%s0 + $0x140] sm:$0xff]
    %v67 = vld [vmem:[%s0 + $0x150] sm:$0xff]
    %v68 = vld [vmem:[%s0 + $0x158] sm:$0xff]
    %v69 = vld [vmem:[%s0 + $0x168] sm:$0xff]
    %v70 = vld [vmem:[%s0 + $0x170] sm:$0xff]
    %v71 = vld [vmem:[%s0 + $0x1b0] sm:$0xff]
    %v72 = vld [vmem:[%s0 + $0x1b8] sm:$0xff]
    %v73 = vld [vmem:[%s0 + $0x1c8] sm:$0xff]
    %v74 = vld [vmem:[%s0 + $0x1d0] sm:$0xff]
    %v75 = vld [vmem:[%s0 + $0x1e0] sm:$0xff]
    %v76 = vld [vmem:[%s0 + $0x1e8] sm:$0xff]
    %v77 = vld [vmem:[%s0 + $0x1f8] sm:$0xff]
    %v78 = vld [vmem:[%s0 + $0x200] sm:$0xff]
    %v79 = vld [vmem:[%s0 + $0x210] sm:$0xff]
    %v80 = vld [vmem:[%s0 + $0x218] sm:$0xff]
    %v81 = vld [vmem:[%s0 + $0x228] sm:$0xff]
    %v82 = vld [vmem:[%s0 + $0x230] sm:$0xff]
    %v83 = vld [vmem:[%s0 + $0x240] sm:$0xff]
    %v84 = vld [vmem:[%s0 + $0x248] sm:$0xff]
    %v85 = vld [vmem:[%s0 + $0x258] sm:$0xff]
    %v86 = vld [vmem:[%s0 + $0x260] sm:$0xff]
    %v87 = vld [vmem:[%s0 + $0x270] sm:$0xff]
    %v88 = vld [vmem:[%s0 + $0x278] sm:$0xff]
    %v89 = vld [vmem:[%s0 + $0x288] sm:$0xff]
    %v90 = vld [vmem:[%s0 + $0x290] sm:$0xff]
    %v91 = vld [vmem:[%s0 + $0x2a0] sm:$0xff]
    %v92 = vld [vmem:[%s0 + $0x2a8] sm:$0xff]
    %v93 = vld [vmem:[%s0 + $0x2b8] sm:$0xff]
    %v94 = vld [vmem:[%s0 + $0x2c0] sm:$0xff]
    %v95 = vld [vmem:[%s0 + $0x2d0] sm:$0xff]
    %v96 = vld [vmem:[%s0 + $0x2d8] sm:$0xff]
    %v97 = vld [vmem:[%s0 + $0x2e8] sm:$0xff]
    %v98 = vld [vmem:[%s0 + $0x2f0] sm:$0xff]
    %v99 = vld [vmem:[%s0 + $0x300] sm:$0xff]
    %v100 = vld [vmem:[%s0 + $0x308] sm:$0xff]
    %v101 = vld [vmem:[%s0 + $0x318] sm:$0xff]
    %v102 = vld [vmem:[%s0 + $0x320] sm:$0xff]
    %v103 = vld [vmem:[%s1] sm:$0x7]
    %v104 = vld [vmem:[%s0 + $0x1] sm:$0xff]
    %v105 = vld [vmem:[%s0 + $0x9] sm:$0xff]
    %v106 = vld [vmem:[%s0 + $0x19] sm:$0xff]
    %v107 = vld [vmem:[%s0 + $0x21] sm:$0xff]
    %v108 = vld [vmem:[%s0 + $0x31] sm:$0xff]
    %v109 = vld [vmem:[%s0 + $0x39] sm:$0xff]
    %v110 = vld [vmem:[%s0 + $0x49] sm:$0xff]
    %v111 = vld [vmem:[%s0 + $0x51] sm:$0xff]
    %v112 = vld [vmem:[%s0 + $0x61] sm:$0xff]
    %v113 = vld [vmem:[%s0 + $0x69] sm:$0xff]
    %v114 = vld [vmem:[%s0 + $0x79] sm:$0xff]
    %v115 = vld [vmem:[%s0 + $0x81] sm:$0xff]
    %v116 = vld [vmem:[%s0 + $0x91] sm:$0xff]
    %v117 = vld [vmem:[%s0 + $0x99] sm:$0xff]
    %v118 = vld [vmem:[%s0 + $0xa9] sm:$0xff]
    %v119 = vld [vmem:[%s0 + $0xb1] sm:$0xff]
    %v120 = vld [vmem:[%s0 + $0xc1] sm:$0xff]
    %v121 = vld [vmem:[%s0 + $0xc9] sm:$0xff]
    %v122 = vld [vmem:[%s0 + $0xd9] sm:$0xff]
    %v123 = vld [vmem:[%s0 + $0xe1] sm:$0xff]
    %v124 = vld [vmem:[%s0 + $0xf1] sm:$0xff]
    %v125 = vld [vmem:[%s0 + $0xf9] sm:$0xff]
    %v126 = vld [vmem:[%s0 + $0x109] sm:$0xff]
    %v127 = vld [vmem:[%s0 + $0x111] sm:$0xff]
    %v128 = vld [vmem:[%s0 + $0x121] sm:$0xff]
    %v129 = vld [vmem:[%s0 + $0x129] sm:$0xff]
    %v130 = vld [vmem:[%s0 + $0x139] sm:$0xff]
    %v131 = vld [vmem:[%s0 + $0x141] sm:$0xff]
    %v132 = vld [vmem:[%s0 + $0x151] sm:$0xff]
    %v133 = vld [vmem:[%s0 + $0x159] sm:$0xff]
    %v134 = vld [vmem:[%s0 + $0x169] sm:$0xff]
    %v135 = vld [vmem:[%s0 + $0x171] sm:$0xff]
    %v136 = vld [vmem:[%s0 + $0x1b1] sm:$0xff]
    %v137 = vld [vmem:[%s0 + $0x1b9] sm:$0xff]
    %v138 = vld [vmem:[%s0 + $0x1c9] sm:$0xff]
    %v139 = vld [vmem:[%s0 + $0x1d1] sm:$0xff]
    %v140 = vld [vmem:[%s0 + $0x1e1] sm:$0xff]
    %v141 = vld [vmem:[%s0 + $0x1e9] sm:$0xff]
    %v142 = vld [vmem:[%s0 + $0x1f9] sm:$0xff]
    %v143 = vld [vmem:[%s0 + $0x201] sm:$0xff]
    %v144 = vld [vmem:[%s0 + $0x211] sm:$0xff]
    %v145 = vld [vmem:[%s0 + $0x219] sm:$0xff]
    %v146 = vld [vmem:[%s0 + $0x229] sm:$0xff]
    %v147 = vld [vmem:[%s0 + $0x231] sm:$0xff]
    %v148 = vld [vmem:[%s0 + $0x241] sm:$0xff]
    %v149 = vld [vmem:[%s0 + $0x249] sm:$0xff]
    %v150 = vld [vmem:[%s0 + $0x259] sm:$0xff]
    %v151 = vld [vmem:[%s0 + $0x261] sm:$0xff]
    %v152 = vld [vmem:[%s0 + $0x271] sm:$0xff]
    %v153 = vld [vmem:[%s0 + $0x279] sm:$0xff]
    %v154 = vld [vmem:[%s0 + $0x289] sm:$0xff]
    %v155 = vld [vmem:[%s0 + $0x291] sm:$0xff]
    %v156 = vld [vmem:[%s0 + $0x2a1] sm:$0xff]
    %v157 = vld [vmem:[%s0 + $0x2a9] sm:$0xff]
    %v158 = vld [vmem:[%s0 + $0x2b9] sm:$0xff]
    %v159 = vld [vmem:[%s0 + $0x2c1] sm:$0xff]
    %v160 = vld [vmem:[%s0 + $0x2d1] sm:$0xff]
    %v161 = vld [vmem:[%s0 + $0x2d9] sm:$0xff]
    %v162 = vld [vmem:[%s0 + $0x2e9] sm:$0xff]
    %v163 = vld [vmem:[%s0 + $0x2f1] sm:$0xff]
    %v164 = vld [vmem:[%s0 + $0x301] sm:$0xff]
    %v165 = vld [vmem:[%s0 + $0x309] sm:$0xff]
    %v166 = vld [vmem:[%s0 + $0x319] sm:$0xff]
    %v167 = vld [vmem:[%s0 + $0x321] sm:$0xff]
    %s168 = scalar_lea.vmem %s1, 4
    %v169 = vld [vmem:[%s168] sm:$0x7]
    %vm170 = vcmask 23552
    %v172 = vsel %vm170, %v104, 0
    %v175 = vsel %vm170, %v105, 0
    %v178 = vsel %vm170, %v106, 0
    %v181 = vsel %vm170, %v107, 0
    %v184 = vsel %vm170, %v108, 0
    %v187 = vsel %vm170, %v109, 0
    %v190 = vsel %vm170, %v110, 0
    %v193 = vsel %vm170, %v111, 0
    %v196 = vsel %vm170, %v112, 0
    %v199 = vsel %vm170, %v113, 0
    %v202 = vsel %vm170, %v114, 0
    %v205 = vsel %vm170, %v115, 0
    %v208 = vsel %vm170, %v116, 0
    %v211 = vsel %vm170, %v117, 0
    %v214 = vsel %vm170, %v118, 0
    %v217 = vsel %vm170, %v119, 0
    %v220 = vsel %vm170, %v120, 0
    %v223 = vsel %vm170, %v121, 0
    %v226 = vsel %vm170, %v122, 0
    %v229 = vsel %vm170, %v123, 0
    %v232 = vsel %vm170, %v124, 0
    %v235 = vsel %vm170, %v125, 0
    %v238 = vsel %vm170, %v126, 0
    %v241 = vsel %vm170, %v127, 0
    %v244 = vsel %vm170, %v128, 0
    %v247 = vsel %vm170, %v129, 0
    %v250 = vsel %vm170, %v130, 0
    %v253 = vsel %vm170, %v131, 0
    %v256 = vsel %vm170, %v132, 0
    %v259 = vsel %vm170, %v133, 0
    %v262 = vsel %vm170, %v134, 0
    %v265 = vsel %vm170, %v135, 0
    %v268 = vsel %vm170, %v136, 0
    %v271 = vsel %vm170, %v137, 0
    %v274 = vsel %vm170, %v138, 0
    %v277 = vsel %vm170, %v139, 0
    %v280 = vsel %vm170, %v140, 0
    %v283 = vsel %vm170, %v141, 0
    %v286 = vsel %vm170, %v142, 0
    %v289 = vsel %vm170, %v143, 0
    %v292 = vsel %vm170, %v144, 0
    %v295 = vsel %vm170, %v145, 0
    %v298 = vsel %vm170, %v146, 0
    %v301 = vsel %vm170, %v147, 0
    %v304 = vsel %vm170, %v148, 0
    %v307 = vsel %vm170, %v149, 0
    %v310 = vsel %vm170, %v150, 0
    %v313 = vsel %vm170, %v151, 0
    %v316 = vsel %vm170, %v152, 0
    %v319 = vsel %vm170, %v153, 0
    %v322 = vsel %vm170, %v154, 0
    %v325 = vsel %vm170, %v155, 0
    %v328 = vsel %vm170, %v156, 0
    %v331 = vsel %vm170, %v157, 0
    %v334 = vsel %vm170, %v158, 0
    %v337 = vsel %vm170, %v159, 0
    %v340 = vsel %vm170, %v160, 0
    %v343 = vsel %vm170, %v161, 0
    %v346 = vsel %vm170, %v162, 0
    %v349 = vsel %vm170, %v163, 0
    %v352 = vsel %vm170, %v164, 0
    %v355 = vsel %vm170, %v165, 0
    %v358 = vsel %vm170, %v166, 0
    %v361 = vsel %vm170, %v167, 0
    %vm363 = vcmask 1042432
    %v365 = vsel %vm363, %v169, 0
    %367 = vmatpush.msra.mxu0 0.0
    %368 = vmatpush.msra.mxu0 0.0
    %369 = vmatpush.msra.mxu0 0.0
    %370 = vmatpush.msra.mxu0 0.0
    %371 = vmatpush.msra.mxu0 0.0
    %372 = vmatpush.msra.mxu0 0.0
    %373 = vmatpush.msra.mxu0 0.0
    %374 = vmatpush.msra.mxu0 0.0
    %375 = vmatpush.msra.mxu0 0.0
    %376 = vmatpush.msra.mxu0 0.0
    %377 = vmatpush.msra.mxu0 0.0
    %378 = vmatpush.msra.mxu0 0.0
    %379 = vmatpush.msra.mxu0 0.0
    %380 = vmatpush.msra.mxu0 0.0
    %381 = vmatpush.msra.mxu0 0.0
    %382 = vmatpush.msra.mxu0 %v365
    %383 = vmatmul.f32.gmra.mxu0 %v172
    %v384 = vpop.f32.mrf.mxu0
    %v385 = vadd.f32 0.0, %v384
    %386 = vmatmul.f32.gmra.mxu0 %v175
    %v387 = vpop.f32.mrf.mxu0
    %v388 = vadd.f32 0.0, %v387
    %389 = vmatmul.f32.gmra.mxu0 %v178
    %v390 = vpop.f32.mrf.mxu0
    %v391 = vadd.f32 0.0, %v390
    %392 = vmatmul.f32.gmra.mxu0 %v181
    %v393 = vpop.f32.mrf.mxu0
    %v394 = vadd.f32 0.0, %v393
    %395 = vmatmul.f32.gmra.mxu0 %v184
    %v396 = vpop.f32.mrf.mxu0
    %v397 = vadd.f32 0.0, %v396
    %398 = vmatmul.f32.gmra.mxu0 %v187
    %v399 = vpop.f32.mrf.mxu0
    %v400 = vadd.f32 0.0, %v399
    %401 = vmatmul.f32.gmra.mxu0 %v190
    %v402 = vpop.f32.mrf.mxu0
    %v403 = vadd.f32 0.0, %v402
    %404 = vmatmul.f32.gmra.mxu0 %v193
    %v405 = vpop.f32.mrf.mxu0
    %v406 = vadd.f32 0.0, %v405
    %407 = vmatmul.f32.gmra.mxu0 %v196
    %v408 = vpop.f32.mrf.mxu0
    %v409 = vadd.f32 0.0, %v408
    %410 = vmatmul.f32.gmra.mxu0 %v199
    %v411 = vpop.f32.mrf.mxu0
    %v412 = vadd.f32 0.0, %v411
    %413 = vmatmul.f32.gmra.mxu0 %v202
    %v414 = vpop.f32.mrf.mxu0
    %v415 = vadd.f32 0.0, %v414
    %416 = vmatmul.f32.gmra.mxu0 %v205
    %v417 = vpop.f32.mrf.mxu0
    %v418 = vadd.f32 0.0, %v417
    %419 = vmatmul.f32.gmra.mxu0 %v208
    %v420 = vpop.f32.mrf.mxu0
    %v421 = vadd.f32 0.0, %v420
    %422 = vmatmul.f32.gmra.mxu0 %v211
    %v423 = vpop.f32.mrf.mxu0
    %v424 = vadd.f32 0.0, %v423
    %425 = vmatmul.f32.gmra.mxu0 %v214
    %v426 = vpop.f32.mrf.mxu0
    %v427 = vadd.f32 0.0, %v426
    %428 = vmatmul.f32.gmra.mxu0 %v217
    %v429 = vpop.f32.mrf.mxu0
    %v430 = vadd.f32 0.0, %v429
    %431 = vmatmul.f32.gmra.mxu0 %v220
    %v432 = vpop.f32.mrf.mxu0
    %v433 = vadd.f32 0.0, %v432
    %434 = vmatmul.f32.gmra.mxu0 %v223
    %v435 = vpop.f32.mrf.mxu0
    %v436 = vadd.f32 0.0, %v435
    %437 = vmatmul.f32.gmra.mxu0 %v226
    %v438 = vpop.f32.mrf.mxu0
    %v439 = vadd.f32 0.0, %v438
    %440 = vmatmul.f32.gmra.mxu0 %v229
    %v441 = vpop.f32.mrf.mxu0
    %v442 = vadd.f32 0.0, %v441
    %443 = vmatmul.f32.gmra.mxu0 %v232
    %v444 = vpop.f32.mrf.mxu0
    %v445 = vadd.f32 0.0, %v444
    %446 = vmatmul.f32.gmra.mxu0 %v235
    %v447 = vpop.f32.mrf.mxu0
    %v448 = vadd.f32 0.0, %v447
    %449 = vmatmul.f32.gmra.mxu0 %v238
    %v450 = vpop.f32.mrf.mxu0
    %v451 = vadd.f32 0.0, %v450
    %452 = vmatmul.f32.gmra.mxu0 %v241
    %v453 = vpop.f32.mrf.mxu0
    %v454 = vadd.f32 0.0, %v453
    %455 = vmatmul.f32.gmra.mxu0 %v244
    %v456 = vpop.f32.mrf.mxu0
    %v457 = vadd.f32 0.0, %v456
    %458 = vmatmul.f32.gmra.mxu0 %v247
    %v459 = vpop.f32.mrf.mxu0
    %v460 = vadd.f32 0.0, %v459
    %461 = vmatmul.f32.gmra.mxu0 %v250
    %v462 = vpop.f32.mrf.mxu0
    %v463 = vadd.f32 0.0, %v462
    %464 = vmatmul.f32.gmra.mxu0 %v253
    %v465 = vpop.f32.mrf.mxu0
    %v466 = vadd.f32 0.0, %v465
    %467 = vmatmul.f32.gmra.mxu0 %v256
    %v468 = vpop.f32.mrf.mxu0
    %v469 = vadd.f32 0.0, %v468
    %470 = vmatmul.f32.gmra.mxu0 %v259
    %v471 = vpop.f32.mrf.mxu0
    %v472 = vadd.f32 0.0, %v471
    %473 = vmatmul.f32.gmra.mxu0 %v262
    %v474 = vpop.f32.mrf.mxu0
    %v475 = vadd.f32 0.0, %v474
    %476 = vmatmul.f32.gmra.mxu0 %v265
    %v477 = vpop.f32.mrf.mxu0
    %v478 = vadd.f32 0.0, %v477
    %479 = vmatmul.f32.gmra.mxu0 %v268
    %v480 = vpop.f32.mrf.mxu0
    %v481 = vadd.f32 0.0, %v480
    %482 = vmatmul.f32.gmra.mxu0 %v271
    %v483 = vpop.f32.mrf.mxu0
    %v484 = vadd.f32 0.0, %v483
    %485 = vmatmul.f32.gmra.mxu0 %v274
    %v486 = vpop.f32.mrf.mxu0
    %v487 = vadd.f32 0.0, %v486
    %488 = vmatmul.f32.gmra.mxu0 %v277
    %v489 = vpop.f32.mrf.mxu0
    %v490 = vadd.f32 0.0, %v489
    %491 = vmatmul.f32.gmra.mxu0 %v280
    %v492 = vpop.f32.mrf.mxu0
    %v493 = vadd.f32 0.0, %v492
    %494 = vmatmul.f32.gmra.mxu0 %v283
    %v495 = vpop.f32.mrf.mxu0
    %v496 = vadd.f32 0.0, %v495
    %497 = vmatmul.f32.gmra.mxu0 %v286
    %v498 = vpop.f32.mrf.mxu0
    %v499 = vadd.f32 0.0, %v498
    %500 = vmatmul.f32.gmra.mxu0 %v289
    %v501 = vpop.f32.mrf.mxu0
    %v502 = vadd.f32 0.0, %v501
    %503 = vmatmul.f32.gmra.mxu0 %v292
    %v504 = vpop.f32.mrf.mxu0
    %v505 = vadd.f32 0.0, %v504
    %506 = vmatmul.f32.gmra.mxu0 %v295
    %v507 = vpop.f32.mrf.mxu0
    %v508 = vadd.f32 0.0, %v507
    %509 = vmatmul.f32.gmra.mxu0 %v298
    %v510 = vpop.f32.mrf.mxu0
    %v511 = vadd.f32 0.0, %v510
    %512 = vmatmul.f32.gmra.mxu0 %v301
    %v513 = vpop.f32.mrf.mxu0
    %v514 = vadd.f32 0.0, %v513
    %515 = vmatmul.f32.gmra.mxu0 %v304
    %v516 = vpop.f32.mrf.mxu0
    %v517 = vadd.f32 0.0, %v516
    %518 = vmatmul.f32.gmra.mxu0 %v307
    %v519 = vpop.f32.mrf.mxu0
    %v520 = vadd.f32 0.0, %v519
    %521 = vmatmul.f32.gmra.mxu0 %v310
    %v522 = vpop.f32.mrf.mxu0
    %v523 = vadd.f32 0.0, %v522
    %524 = vmatmul.f32.gmra.mxu0 %v313
    %v525 = vpop.f32.mrf.mxu0
    %v526 = vadd.f32 0.0, %v525
    %527 = vmatmul.f32.gmra.mxu0 %v316
    %v528 = vpop.f32.mrf.mxu0
    %v529 = vadd.f32 0.0, %v528
    %530 = vmatmul.f32.gmra.mxu0 %v319
    %v531 = vpop.f32.mrf.mxu0
    %v532 = vadd.f32 0.0, %v531
    %533 = vmatmul.f32.gmra.mxu0 %v322
    %v534 = vpop.f32.mrf.mxu0
    %v535 = vadd.f32 0.0, %v534
    %536 = vmatmul.f32.gmra.mxu0 %v325
    %v537 = vpop.f32.mrf.mxu0
    %v538 = vadd.f32 0.0, %v537
    %539 = vmatmul.f32.gmra.mxu0 %v328
    %v540 = vpop.f32.mrf.mxu0
    %v541 = vadd.f32 0.0, %v540
    %542 = vmatmul.f32.gmra.mxu0 %v331
    %v543 = vpop.f32.mrf.mxu0
    %v544 = vadd.f32 0.0, %v543
    %545 = vmatmul.f32.gmra.mxu0 %v334
    %v546 = vpop.f32.mrf.mxu0
    %v547 = vadd.f32 0.0, %v546
    %548 = vmatmul.f32.gmra.mxu0 %v337
    %v549 = vpop.f32.mrf.mxu0
    %v550 = vadd.f32 0.0, %v549
    %551 = vmatmul.f32.gmra.mxu0 %v340
    %v552 = vpop.f32.mrf.mxu0
    %v553 = vadd.f32 0.0, %v552
    %554 = vmatmul.f32.gmra.mxu0 %v343
    %v555 = vpop.f32.mrf.mxu0
    %v556 = vadd.f32 0.0, %v555
    %557 = vmatmul.f32.gmra.mxu0 %v346
    %v558 = vpop.f32.mrf.mxu0
    %v559 = vadd.f32 0.0, %v558
    %560 = vmatmul.f32.gmra.mxu0 %v349
    %v561 = vpop.f32.mrf.mxu0
    %v562 = vadd.f32 0.0, %v561
    %563 = vmatmul.f32.gmra.mxu0 %v352
    %v564 = vpop.f32.mrf.mxu0
    %v565 = vadd.f32 0.0, %v564
    %566 = vmatmul.f32.gmra.mxu0 %v355
    %v567 = vpop.f32.mrf.mxu0
    %v568 = vadd.f32 0.0, %v567
    %569 = vmatmul.f32.gmra.mxu0 %v358
    %v570 = vpop.f32.mrf.mxu0
    %v571 = vadd.f32 0.0, %v570
    %572 = vmatmul.f32.gmra.mxu0 %v361
    %v573 = vpop.f32.mrf.mxu0
    %v574 = vadd.f32 0.0, %v573
    %575 = vdwg.mxu0
    %v577 = vsel %vm170, %v39, 0
    %v580 = vsel %vm170, %v40, 0
    %v583 = vsel %vm170, %v41, 0
    %v586 = vsel %vm170, %v42, 0
    %v589 = vsel %vm170, %v43, 0
    %v592 = vsel %vm170, %v44, 0
    %v595 = vsel %vm170, %v45, 0
    %v598 = vsel %vm170, %v46, 0
    %v601 = vsel %vm170, %v47, 0
    %v604 = vsel %vm170, %v48, 0
    %v607 = vsel %vm170, %v49, 0
    %v610 = vsel %vm170, %v50, 0
    %v613 = vsel %vm170, %v51, 0
    %v616 = vsel %vm170, %v52, 0
    %v619 = vsel %vm170, %v53, 0
    %v622 = vsel %vm170, %v54, 0
    %v625 = vsel %vm170, %v55, 0
    %v628 = vsel %vm170, %v56, 0
    %v631 = vsel %vm170, %v57, 0
    %v634 = vsel %vm170, %v58, 0
    %v637 = vsel %vm170, %v59, 0
    %v640 = vsel %vm170, %v60, 0
    %v643 = vsel %vm170, %v61, 0
    %v646 = vsel %vm170, %v62, 0
    %v649 = vsel %vm170, %v63, 0
    %v652 = vsel %vm170, %v64, 0
    %v655 = vsel %vm170, %v65, 0
    %v658 = vsel %vm170, %v66, 0
    %v661 = vsel %vm170, %v67, 0
    %v664 = vsel %vm170, %v68, 0
    %v667 = vsel %vm170, %v69, 0
    %v670 = vsel %vm170, %v70, 0
    %v673 = vsel %vm170, %v71, 0
    %v676 = vsel %vm170, %v72, 0
    %v679 = vsel %vm170, %v73, 0
    %v682 = vsel %vm170, %v74, 0
    %v685 = vsel %vm170, %v75, 0
    %v688 = vsel %vm170, %v76, 0
    %v691 = vsel %vm170, %v77, 0
    %v694 = vsel %vm170, %v78, 0
    %v697 = vsel %vm170, %v79, 0
    %v700 = vsel %vm170, %v80, 0
    %v703 = vsel %vm170, %v81, 0
    %v706 = vsel %vm170, %v82, 0
    %v709 = vsel %vm170, %v83, 0
    %v712 = vsel %vm170, %v84, 0
    %v715 = vsel %vm170, %v85, 0
    %v718 = vsel %vm170, %v86, 0
    %v721 = vsel %vm170, %v87, 0
    %v724 = vsel %vm170, %v88, 0
    %v727 = vsel %vm170, %v89, 0
    %v730 = vsel %vm170, %v90, 0
    %v733 = vsel %vm170, %v91, 0
    %v736 = vsel %vm170, %v92, 0
    %v739 = vsel %vm170, %v93, 0
    %v742 = vsel %vm170, %v94, 0
    %v745 = vsel %vm170, %v95, 0
    %v748 = vsel %vm170, %v96, 0
    %v751 = vsel %vm170, %v97, 0
    %v754 = vsel %vm170, %v98, 0
    %v757 = vsel %vm170, %v99, 0
    %v760 = vsel %vm170, %v100, 0
    %v763 = vsel %vm170, %v101, 0
    %v766 = vsel %vm170, %v102, 0
    %v769 = vsel %vm363, %v103, 0
    %771 = vmatpush.msra.mxu0 0.0
    %772 = vmatpush.msra.mxu0 0.0
    %773 = vmatpush.msra.mxu0 0.0
    %774 = vmatpush.msra.mxu0 0.0
    %775 = vmatpush.msra.mxu0 0.0
    %776 = vmatpush.msra.mxu0 0.0
    %777 = vmatpush.msra.mxu0 0.0
    %778 = vmatpush.msra.mxu0 0.0
    %779 = vmatpush.msra.mxu0 0.0
    %780 = vmatpush.msra.mxu0 0.0
    %781 = vmatpush.msra.mxu0 0.0
    %782 = vmatpush.msra.mxu0 0.0
    %783 = vmatpush.msra.mxu0 0.0
    %784 = vmatpush.msra.mxu0 0.0
    %785 = vmatpush.msra.mxu0 0.0
    %786 = vmatpush.msra.mxu0 %v769
    %787 = vmatmul.f32.gmra.mxu0 %v577
    %v788 = vpop.f32.mrf.mxu0
    %v789 = vadd.f32 %v385, %v788
    %790 = vmatmul.f32.gmra.mxu0 %v580
    %v791 = vpop.f32.mrf.mxu0
    %v792 = vadd.f32 %v388, %v791
    %793 = vmatmul.f32.gmra.mxu0 %v583
    %v794 = vpop.f32.mrf.mxu0
    %v795 = vadd.f32 %v391, %v794
    %796 = vmatmul.f32.gmra.mxu0 %v586
    %v797 = vpop.f32.mrf.mxu0
    %v798 = vadd.f32 %v394, %v797
    %799 = vmatmul.f32.gmra.mxu0 %v589
    %v800 = vpop.f32.mrf.mxu0
    %v801 = vadd.f32 %v397, %v800
    %802 = vmatmul.f32.gmra.mxu0 %v592
    %v803 = vpop.f32.mrf.mxu0
    %v804 = vadd.f32 %v400, %v803
    %805 = vmatmul.f32.gmra.mxu0 %v595
    %v806 = vpop.f32.mrf.mxu0
    %v807 = vadd.f32 %v403, %v806
    %808 = vmatmul.f32.gmra.mxu0 %v598
    %v809 = vpop.f32.mrf.mxu0
    %v810 = vadd.f32 %v406, %v809
    %811 = vmatmul.f32.gmra.mxu0 %v601
    %v812 = vpop.f32.mrf.mxu0
    %v813 = vadd.f32 %v409, %v812
    %814 = vmatmul.f32.gmra.mxu0 %v604
    %v815 = vpop.f32.mrf.mxu0
    %v816 = vadd.f32 %v412, %v815
    %817 = vmatmul.f32.gmra.mxu0 %v607
    %v818 = vpop.f32.mrf.mxu0
    %v819 = vadd.f32 %v415, %v818
    %820 = vmatmul.f32.gmra.mxu0 %v610
    %v821 = vpop.f32.mrf.mxu0
    %v822 = vadd.f32 %v418, %v821
    %823 = vmatmul.f32.gmra.mxu0 %v613
    %v824 = vpop.f32.mrf.mxu0
    %v825 = vadd.f32 %v421, %v824
    %826 = vmatmul.f32.gmra.mxu0 %v616
    %v827 = vpop.f32.mrf.mxu0
    %v828 = vadd.f32 %v424, %v827
    %829 = vmatmul.f32.gmra.mxu0 %v619
    %v830 = vpop.f32.mrf.mxu0
    %v831 = vadd.f32 %v427, %v830
    %832 = vmatmul.f32.gmra.mxu0 %v622
    %v833 = vpop.f32.mrf.mxu0
    %v834 = vadd.f32 %v430, %v833
    %835 = vmatmul.f32.gmra.mxu0 %v625
    %v836 = vpop.f32.mrf.mxu0
    %v837 = vadd.f32 %v433, %v836
    %838 = vmatmul.f32.gmra.mxu0 %v628
    %v839 = vpop.f32.mrf.mxu0
    %v840 = vadd.f32 %v436, %v839
    %841 = vmatmul.f32.gmra.mxu0 %v631
    %v842 = vpop.f32.mrf.mxu0
    %v843 = vadd.f32 %v439, %v842
    %844 = vmatmul.f32.gmra.mxu0 %v634
    %v845 = vpop.f32.mrf.mxu0
    %v846 = vadd.f32 %v442, %v845
    %847 = vmatmul.f32.gmra.mxu0 %v637
    %v848 = vpop.f32.mrf.mxu0
    %v849 = vadd.f32 %v445, %v848
    %850 = vmatmul.f32.gmra.mxu0 %v640
    %v851 = vpop.f32.mrf.mxu0
    %v852 = vadd.f32 %v448, %v851
    %853 = vmatmul.f32.gmra.mxu0 %v643
    %v854 = vpop.f32.mrf.mxu0
    %v855 = vadd.f32 %v451, %v854
    %856 = vmatmul.f32.gmra.mxu0 %v646
    %v857 = vpop.f32.mrf.mxu0
    %v858 = vadd.f32 %v454, %v857
    %859 = vmatmul.f32.gmra.mxu0 %v649
    %v860 = vpop.f32.mrf.mxu0
    %v861 = vadd.f32 %v457, %v860
    %862 = vmatmul.f32.gmra.mxu0 %v652
    %v863 = vpop.f32.mrf.mxu0
    %v864 = vadd.f32 %v460, %v863
    %865 = vmatmul.f32.gmra.mxu0 %v655
    %v866 = vpop.f32.mrf.mxu0
    %v867 = vadd.f32 %v463, %v866
    %868 = vmatmul.f32.gmra.mxu0 %v658
    %v869 = vpop.f32.mrf.mxu0
    %v870 = vadd.f32 %v466, %v869
    %871 = vmatmul.f32.gmra.mxu0 %v661
    %v872 = vpop.f32.mrf.mxu0
    %v873 = vadd.f32 %v469, %v872
    %874 = vmatmul.f32.gmra.mxu0 %v664
    %v875 = vpop.f32.mrf.mxu0
    %v876 = vadd.f32 %v472, %v875
    %877 = vmatmul.f32.gmra.mxu0 %v667
    %v878 = vpop.f32.mrf.mxu0
    %v879 = vadd.f32 %v475, %v878
    %880 = vmatmul.f32.gmra.mxu0 %v670
    %v881 = vpop.f32.mrf.mxu0
    %v882 = vadd.f32 %v478, %v881
    %883 = vmatmul.f32.gmra.mxu0 %v673
    %v884 = vpop.f32.mrf.mxu0
    %v885 = vadd.f32 %v481, %v884
    %886 = vmatmul.f32.gmra.mxu0 %v676
    %v887 = vpop.f32.mrf.mxu0
    %v888 = vadd.f32 %v484, %v887
    %889 = vmatmul.f32.gmra.mxu0 %v679
    %v890 = vpop.f32.mrf.mxu0
    %v891 = vadd.f32 %v487, %v890
    %892 = vmatmul.f32.gmra.mxu0 %v682
    %v893 = vpop.f32.mrf.mxu0
    %v894 = vadd.f32 %v490, %v893
    %895 = vmatmul.f32.gmra.mxu0 %v685
    %v896 = vpop.f32.mrf.mxu0
    %v897 = vadd.f32 %v493, %v896
    %898 = vmatmul.f32.gmra.mxu0 %v688
    %v899 = vpop.f32.mrf.mxu0
    %v900 = vadd.f32 %v496, %v899
    %901 = vmatmul.f32.gmra.mxu0 %v691
    %v902 = vpop.f32.mrf.mxu0
    %v903 = vadd.f32 %v499, %v902
    %904 = vmatmul.f32.gmra.mxu0 %v694
    %v905 = vpop.f32.mrf.mxu0
    %v906 = vadd.f32 %v502, %v905
    %907 = vmatmul.f32.gmra.mxu0 %v697
    %v908 = vpop.f32.mrf.mxu0
    %v909 = vadd.f32 %v505, %v908
    %910 = vmatmul.f32.gmra.mxu0 %v700
    %v911 = vpop.f32.mrf.mxu0
    %v912 = vadd.f32 %v508, %v911
    %913 = vmatmul.f32.gmra.mxu0 %v703
    %v914 = vpop.f32.mrf.mxu0
    %v915 = vadd.f32 %v511, %v914
    %916 = vmatmul.f32.gmra.mxu0 %v706
    %v917 = vpop.f32.mrf.mxu0
    %v918 = vadd.f32 %v514, %v917
    %919 = vmatmul.f32.gmra.mxu0 %v709
    %v920 = vpop.f32.mrf.mxu0
    %v921 = vadd.f32 %v517, %v920
    %922 = vmatmul.f32.gmra.mxu0 %v712
    %v923 = vpop.f32.mrf.mxu0
    %v924 = vadd.f32 %v520, %v923
    %925 = vmatmul.f32.gmra.mxu0 %v715
    %v926 = vpop.f32.mrf.mxu0
    %v927 = vadd.f32 %v523, %v926
    %928 = vmatmul.f32.gmra.mxu0 %v718
    %v929 = vpop.f32.mrf.mxu0
    %v930 = vadd.f32 %v526, %v929
    %931 = vmatmul.f32.gmra.mxu0 %v721
    %v932 = vpop.f32.mrf.mxu0
    %v933 = vadd.f32 %v529, %v932
    %934 = vmatmul.f32.gmra.mxu0 %v724
    %v935 = vpop.f32.mrf.mxu0
    %v936 = vadd.f32 %v532, %v935
    %937 = vmatmul.f32.gmra.mxu0 %v727
    %v938 = vpop.f32.mrf.mxu0
    %v939 = vadd.f32 %v535, %v938
    %940 = vmatmul.f32.gmra.mxu0 %v730
    %v941 = vpop.f32.mrf.mxu0
    %v942 = vadd.f32 %v538, %v941
    %943 = vmatmul.f32.gmra.mxu0 %v733
    %v944 = vpop.f32.mrf.mxu0
    %v945 = vadd.f32 %v541, %v944
    %946 = vmatmul.f32.gmra.mxu0 %v736
    %v947 = vpop.f32.mrf.mxu0
    %v948 = vadd.f32 %v544, %v947
    %949 = vmatmul.f32.gmra.mxu0 %v739
    %v950 = vpop.f32.mrf.mxu0
    %v951 = vadd.f32 %v547, %v950
    %952 = vmatmul.f32.gmra.mxu0 %v742
    %v953 = vpop.f32.mrf.mxu0
    %v954 = vadd.f32 %v550, %v953
    %955 = vmatmul.f32.gmra.mxu0 %v745
    %v956 = vpop.f32.mrf.mxu0
    %v957 = vadd.f32 %v553, %v956
    %958 = vmatmul.f32.gmra.mxu0 %v748
    %v959 = vpop.f32.mrf.mxu0
    %v960 = vadd.f32 %v556, %v959
    %961 = vmatmul.f32.gmra.mxu0 %v751
    %v962 = vpop.f32.mrf.mxu0
    %v963 = vadd.f32 %v559, %v962
    %964 = vmatmul.f32.gmra.mxu0 %v754
    %v965 = vpop.f32.mrf.mxu0
    %v966 = vadd.f32 %v562, %v965
    %967 = vmatmul.f32.gmra.mxu0 %v757
    %v968 = vpop.f32.mrf.mxu0
    %v969 = vadd.f32 %v565, %v968
    %970 = vmatmul.f32.gmra.mxu0 %v760
    %v971 = vpop.f32.mrf.mxu0
    %v972 = vadd.f32 %v568, %v971
    %973 = vmatmul.f32.gmra.mxu0 %v763
    %v974 = vpop.f32.mrf.mxu0
    %v975 = vadd.f32 %v571, %v974
    %976 = vmatmul.f32.gmra.mxu0 %v766
    %v977 = vpop.f32.mrf.mxu0
    %v978 = vadd.f32 %v574, %v977
    %979 = vdwg.mxu0
    %v980 = vld [vmem:[%s0 + $0x2] sm:$0xff]
    %v981 = vld [vmem:[%s0 + $0xa] sm:$0xff]
    %v982 = vld [vmem:[%s0 + $0x1a] sm:$0xff]
    %v983 = vld [vmem:[%s0 + $0x22] sm:$0xff]
    %v984 = vld [vmem:[%s0 + $0x32] sm:$0xff]
    %v985 = vld [vmem:[%s0 + $0x3a] sm:$0xff]
    %v986 = vld [vmem:[%s0 + $0x4a] sm:$0xff]
    %v987 = vld [vmem:[%s0 + $0x52] sm:$0xff]
    %v988 = vld [vmem:[%s0 + $0x62] sm:$0xff]
    %v989 = vld [vmem:[%s0 + $0x6a] sm:$0xff]
    %v990 = vld [vmem:[%s0 + $0x7a] sm:$0xff]
    %v991 = vld [vmem:[%s0 + $0x82] sm:$0xff]
    %v992 = vld [vmem:[%s0 + $0x92] sm:$0xff]
    %v993 = vld [vmem:[%s0 + $0x9a] sm:$0xff]
    %v994 = vld [vmem:[%s0 + $0xaa] sm:$0xff]
    %v995 = vld [vmem:[%s0 + $0xb2] sm:$0xff]
    %v996 = vld [vmem:[%s0 + $0xc2] sm:$0xff]
    %v997 = vld [vmem:[%s0 + $0xca] sm:$0xff]
    %v998 = vld [vmem:[%s0 + $0xda] sm:$0xff]
    %v999 = vld [vmem:[%s0 + $0xe2] sm:$0xff]
    %v1000 = vld [vmem:[%s0 + $0xf2] sm:$0xff]
    %v1001 = vld [vmem:[%s0 + $0xfa] sm:$0xff]
    %v1002 = vld [vmem:[%s0 + $0x10a] sm:$0xff]
    %v1003 = vld [vmem:[%s0 + $0x112] sm:$0xff]
    %v1004 = vld [vmem:[%s0 + $0x122] sm:$0xff]
    %v1005 = vld [vmem:[%s0 + $0x12a] sm:$0xff]
    %v1006 = vld [vmem:[%s0 + $0x13a] sm:$0xff]
    %v1007 = vld [vmem:[%s0 + $0x142] sm:$0xff]
    %v1008 = vld [vmem:[%s0 + $0x152] sm:$0xff]
    %v1009 = vld [vmem:[%s0 + $0x15a] sm:$0xff]
    %v1010 = vld [vmem:[%s0 + $0x16a] sm:$0xff]
    %v1011 = vld [vmem:[%s0 + $0x172] sm:$0xff]
    %v1012 = vld [vmem:[%s0 + $0x1b2] sm:$0xff]
    %v1013 = vld [vmem:[%s0 + $0x1ba] sm:$0xff]
    %v1014 = vld [vmem:[%s0 + $0x1ca] sm:$0xff]
    %v1015 = vld [vmem:[%s0 + $0x1d2] sm:$0xff]
    %v1016 = vld [vmem:[%s0 + $0x1e2] sm:$0xff]
    %v1017 = vld [vmem:[%s0 + $0x1ea] sm:$0xff]
    %v1018 = vld [vmem:[%s0 + $0x1fa] sm:$0xff]
    %v1019 = vld [vmem:[%s0 + $0x202] sm:$0xff]
    %v1020 = vld [vmem:[%s0 + $0x212] sm:$0xff]
    %v1021 = vld [vmem:[%s0 + $0x21a] sm:$0xff]
    %v1022 = vld [vmem:[%s0 + $0x22a] sm:$0xff]
    %v1023 = vld [vmem:[%s0 + $0x232] sm:$0xff]
    %v1024 = vld [vmem:[%s0 + $0x242] sm:$0xff]
    %v1025 = vld [vmem:[%s0 + $0x24a] sm:$0xff]
    %v1026 = vld [vmem:[%s0 + $0x25a] sm:$0xff]
    %v1027 = vld [vmem:[%s0 + $0x262] sm:$0xff]
    %v1028 = vld [vmem:[%s0 + $0x272] sm:$0xff]
    %v1029 = vld [vmem:[%s0 + $0x27a] sm:$0xff]
    %v1030 = vld [vmem:[%s0 + $0x28a] sm:$0xff]
    %v1031 = vld [vmem:[%s0 + $0x292] sm:$0xff]
    %v1032 = vld [vmem:[%s0 + $0x2a2] sm:$0xff]
    %v1033 = vld [vmem:[%s0 + $0x2aa] sm:$0xff]
    %v1034 = vld [vmem:[%s0 + $0x2ba] sm:$0xff]
    %v1035 = vld [vmem:[%s0 + $0x2c2] sm:$0xff]
    %v1036 = vld [vmem:[%s0 + $0x2d2] sm:$0xff]
    %v1037 = vld [vmem:[%s0 + $0x2da] sm:$0xff]
    %v1038 = vld [vmem:[%s0 + $0x2ea] sm:$0xff]
    %v1039 = vld [vmem:[%s0 + $0x2f2] sm:$0xff]
    %v1040 = vld [vmem:[%s0 + $0x302] sm:$0xff]
    %v1041 = vld [vmem:[%s0 + $0x30a] sm:$0xff]
    %v1042 = vld [vmem:[%s0 + $0x31a] sm:$0xff]
    %v1043 = vld [vmem:[%s0 + $0x322] sm:$0xff]
    %s1044 = scalar_lea.vmem %s1, 8
    %v1045 = vld [vmem:[%s1044] sm:$0x7]
    %v1047 = vsel %vm170, %v980, 0
    %v1050 = vsel %vm170, %v981, 0
    %v1053 = vsel %vm170, %v982, 0
    %v1056 = vsel %vm170, %v983, 0
    %v1059 = vsel %vm170, %v984, 0
    %v1062 = vsel %vm170, %v985, 0
    %v1065 = vsel %vm170, %v986, 0
    %v1068 = vsel %vm170, %v987, 0
    %v1071 = vsel %vm170, %v988, 0
    %v1074 = vsel %vm170, %v989, 0
    %v1077 = vsel %vm170, %v990, 0
    %v1080 = vsel %vm170, %v991, 0
    %v1083 = vsel %vm170, %v992, 0
    %v1086 = vsel %vm170, %v993, 0
    %v1089 = vsel %vm170, %v994, 0
    %v1092 = vsel %vm170, %v995, 0
    %v1095 = vsel %vm170, %v996, 0
    %v1098 = vsel %vm170, %v997, 0
    %v1101 = vsel %vm170, %v998, 0
    %v1104 = vsel %vm170, %v999, 0
    %v1107 = vsel %vm170, %v1000, 0
    %v1110 = vsel %vm170, %v1001, 0
    %v1113 = vsel %vm170, %v1002, 0
    %v1116 = vsel %vm170, %v1003, 0
    %v1119 = vsel %vm170, %v1004, 0
    %v1122 = vsel %vm170, %v1005, 0
    %v1125 = vsel %vm170, %v1006, 0
    %v1128 = vsel %vm170, %v1007, 0
    %v1131 = vsel %vm170, %v1008, 0
    %v1134 = vsel %vm170, %v1009, 0
    %v1137 = vsel %vm170, %v1010, 0
    %v1140 = vsel %vm170, %v1011, 0
    %v1143 = vsel %vm170, %v1012, 0
    %v1146 = vsel %vm170, %v1013, 0
    %v1149 = vsel %vm170, %v1014, 0
    %v1152 = vsel %vm170, %v1015, 0
    %v1155 = vsel %vm170, %v1016, 0
    %v1158 = vsel %vm170, %v1017, 0
    %v1161 = vsel %vm170, %v1018, 0
    %v1164 = vsel %vm170, %v1019, 0
    %v1167 = vsel %vm170, %v1020, 0
    %v1170 = vsel %vm170, %v1021, 0
    %v1173 = vsel %vm170, %v1022, 0
    %v1176 = vsel %vm170, %v1023, 0
    %v1179 = vsel %vm170, %v1024, 0
    %v1182 = vsel %vm170, %v1025, 0
    %v1185 = vsel %vm170, %v1026, 0
    %v1188 = vsel %vm170, %v1027, 0
    %v1191 = vsel %vm170, %v1028, 0
    %v1194 = vsel %vm170, %v1029, 0
    %v1197 = vsel %vm170, %v1030, 0
    %v1200 = vsel %vm170, %v1031, 0
    %v1203 = vsel %vm170, %v1032, 0
    %v1206 = vsel %vm170, %v1033, 0
    %v1209 = vsel %vm170, %v1034, 0
    %v1212 = vsel %vm170, %v1035, 0
    %v1215 = vsel %vm170, %v1036, 0
    %v1218 = vsel %vm170, %v1037, 0
    %v1221 = vsel %vm170, %v1038, 0
    %v1224 = vsel %vm170, %v1039, 0
    %v1227 = vsel %vm170, %v1040, 0
    %v1230 = vsel %vm170, %v1041, 0
    %v1233 = vsel %vm170, %v1042, 0
    %v1236 = vsel %vm170, %v1043, 0
    %v1239 = vsel %vm363, %v1045, 0
    %1241 = vmatpush.msra.mxu0 0.0
    %1242 = vmatpush.msra.mxu0 0.0
    %1243 = vmatpush.msra.mxu0 0.0
    %1244 = vmatpush.msra.mxu0 0.0
    %1245 = vmatpush.msra.mxu0 0.0
    %1246 = vmatpush.msra.mxu0 0.0
    %1247 = vmatpush.msra.mxu0 0.0
    %1248 = vmatpush.msra.mxu0 0.0
    %1249 = vmatpush.msra.mxu0 0.0
    %1250 = vmatpush.msra.mxu0 0.0
    %1251 = vmatpush.msra.mxu0 0.0
    %1252 = vmatpush.msra.mxu0 0.0
    %1253 = vmatpush.msra.mxu0 0.0
    %1254 = vmatpush.msra.mxu0 0.0
    %1255 = vmatpush.msra.mxu0 0.0
    %1256 = vmatpush.msra.mxu0 %v1239
    %1257 = vmatmul.f32.gmra.mxu0 %v1047
    %v1258 = vpop.f32.mrf.mxu0
    %v1259 = vadd.f32 0.0, %v1258
    %1260 = vmatmul.f32.gmra.mxu0 %v1050
    %v1261 = vpop.f32.mrf.mxu0
    %v1262 = vadd.f32 0.0, %v1261
    %1263 = vmatmul.f32.gmra.mxu0 %v1053
    %v1264 = vpop.f32.mrf.mxu0
    %v1265 = vadd.f32 0.0, %v1264
    %1266 = vmatmul.f32.gmra.mxu0 %v1056
    %v1267 = vpop.f32.mrf.mxu0
    %v1268 = vadd.f32 0.0, %v1267
    %1269 = vmatmul.f32.gmra.mxu0 %v1059
    %v1270 = vpop.f32.mrf.mxu0
    %v1271 = vadd.f32 0.0, %v1270
    %1272 = vmatmul.f32.gmra.mxu0 %v1062
    %v1273 = vpop.f32.mrf.mxu0
    %v1274 = vadd.f32 0.0, %v1273
    %1275 = vmatmul.f32.gmra.mxu0 %v1065
    %v1276 = vpop.f32.mrf.mxu0
    %v1277 = vadd.f32 0.0, %v1276
    %1278 = vmatmul.f32.gmra.mxu0 %v1068
    %v1279 = vpop.f32.mrf.mxu0
    %v1280 = vadd.f32 0.0, %v1279
    %1281 = vmatmul.f32.gmra.mxu0 %v1071
    %v1282 = vpop.f32.mrf.mxu0
    %v1283 = vadd.f32 0.0, %v1282
    %1284 = vmatmul.f32.gmra.mxu0 %v1074
    %v1285 = vpop.f32.mrf.mxu0
    %v1286 = vadd.f32 0.0, %v1285
    %1287 = vmatmul.f32.gmra.mxu0 %v1077
    %v1288 = vpop.f32.mrf.mxu0
    %v1289 = vadd.f32 0.0, %v1288
    %1290 = vmatmul.f32.gmra.mxu0 %v1080
    %v1291 = vpop.f32.mrf.mxu0
    %v1292 = vadd.f32 0.0, %v1291
    %1293 = vmatmul.f32.gmra.mxu0 %v1083
    %v1294 = vpop.f32.mrf.mxu0
    %v1295 = vadd.f32 0.0, %v1294
    %1296 = vmatmul.f32.gmra.mxu0 %v1086
    %v1297 = vpop.f32.mrf.mxu0
    %v1298 = vadd.f32 0.0, %v1297
    %1299 = vmatmul.f32.gmra.mxu0 %v1089
    %v1300 = vpop.f32.mrf.mxu0
    %v1301 = vadd.f32 0.0, %v1300
    %1302 = vmatmul.f32.gmra.mxu0 %v1092
    %v1303 = vpop.f32.mrf.mxu0
    %v1304 = vadd.f32 0.0, %v1303
    %1305 = vmatmul.f32.gmra.mxu0 %v1095
    %v1306 = vpop.f32.mrf.mxu0
    %v1307 = vadd.f32 0.0, %v1306
    %1308 = vmatmul.f32.gmra.mxu0 %v1098
    %v1309 = vpop.f32.mrf.mxu0
    %v1310 = vadd.f32 0.0, %v1309
    %1311 = vmatmul.f32.gmra.mxu0 %v1101
    %v1312 = vpop.f32.mrf.mxu0
    %v1313 = vadd.f32 0.0, %v1312
    %1314 = vmatmul.f32.gmra.mxu0 %v1104
    %v1315 = vpop.f32.mrf.mxu0
    %v1316 = vadd.f32 0.0, %v1315
    %1317 = vmatmul.f32.gmra.mxu0 %v1107
    %v1318 = vpop.f32.mrf.mxu0
    %v1319 = vadd.f32 0.0, %v1318
    %1320 = vmatmul.f32.gmra.mxu0 %v1110
    %v1321 = vpop.f32.mrf.mxu0
    %v1322 = vadd.f32 0.0, %v1321
    %1323 = vmatmul.f32.gmra.mxu0 %v1113
    %v1324 = vpop.f32.mrf.mxu0
    %v1325 = vadd.f32 0.0, %v1324
    %1326 = vmatmul.f32.gmra.mxu0 %v1116
    %v1327 = vpop.f32.mrf.mxu0
    %v1328 = vadd.f32 0.0, %v1327
    %1329 = vmatmul.f32.gmra.mxu0 %v1119
    %v1330 = vpop.f32.mrf.mxu0
    %v1331 = vadd.f32 0.0, %v1330
    %1332 = vmatmul.f32.gmra.mxu0 %v1122
    %v1333 = vpop.f32.mrf.mxu0
    %v1334 = vadd.f32 0.0, %v1333
    %1335 = vmatmul.f32.gmra.mxu0 %v1125
    %v1336 = vpop.f32.mrf.mxu0
    %v1337 = vadd.f32 0.0, %v1336
    %1338 = vmatmul.f32.gmra.mxu0 %v1128
    %v1339 = vpop.f32.mrf.mxu0
    %v1340 = vadd.f32 0.0, %v1339
    %1341 = vmatmul.f32.gmra.mxu0 %v1131
    %v1342 = vpop.f32.mrf.mxu0
    %v1343 = vadd.f32 0.0, %v1342
    %1344 = vmatmul.f32.gmra.mxu0 %v1134
    %v1345 = vpop.f32.mrf.mxu0
    %v1346 = vadd.f32 0.0, %v1345
    %1347 = vmatmul.f32.gmra.mxu0 %v1137
    %v1348 = vpop.f32.mrf.mxu0
    %v1349 = vadd.f32 0.0, %v1348
    %1350 = vmatmul.f32.gmra.mxu0 %v1140
    %v1351 = vpop.f32.mrf.mxu0
    %v1352 = vadd.f32 0.0, %v1351
    %1353 = vmatmul.f32.gmra.mxu0 %v1143
    %v1354 = vpop.f32.mrf.mxu0
    %v1355 = vadd.f32 0.0, %v1354
    %1356 = vmatmul.f32.gmra.mxu0 %v1146
    %v1357 = vpop.f32.mrf.mxu0
    %v1358 = vadd.f32 0.0, %v1357
    %1359 = vmatmul.f32.gmra.mxu0 %v1149
    %v1360 = vpop.f32.mrf.mxu0
    %v1361 = vadd.f32 0.0, %v1360
    %1362 = vmatmul.f32.gmra.mxu0 %v1152
    %v1363 = vpop.f32.mrf.mxu0
    %v1364 = vadd.f32 0.0, %v1363
    %1365 = vmatmul.f32.gmra.mxu0 %v1155
    %v1366 = vpop.f32.mrf.mxu0
    %v1367 = vadd.f32 0.0, %v1366
    %1368 = vmatmul.f32.gmra.mxu0 %v1158
    %v1369 = vpop.f32.mrf.mxu0
    %v1370 = vadd.f32 0.0, %v1369
    %1371 = vmatmul.f32.gmra.mxu0 %v1161
    %v1372 = vpop.f32.mrf.mxu0
    %v1373 = vadd.f32 0.0, %v1372
    %1374 = vmatmul.f32.gmra.mxu0 %v1164
    %v1375 = vpop.f32.mrf.mxu0
    %v1376 = vadd.f32 0.0, %v1375
    %1377 = vmatmul.f32.gmra.mxu0 %v1167
    %v1378 = vpop.f32.mrf.mxu0
    %v1379 = vadd.f32 0.0, %v1378
    %1380 = vmatmul.f32.gmra.mxu0 %v1170
    %v1381 = vpop.f32.mrf.mxu0
    %v1382 = vadd.f32 0.0, %v1381
    %1383 = vmatmul.f32.gmra.mxu0 %v1173
    %v1384 = vpop.f32.mrf.mxu0
    %v1385 = vadd.f32 0.0, %v1384
    %1386 = vmatmul.f32.gmra.mxu0 %v1176
    %v1387 = vpop.f32.mrf.mxu0
    %v1388 = vadd.f32 0.0, %v1387
    %1389 = vmatmul.f32.gmra.mxu0 %v1179
    %v1390 = vpop.f32.mrf.mxu0
    %v1391 = vadd.f32 0.0, %v1390
    %1392 = vmatmul.f32.gmra.mxu0 %v1182
    %v1393 = vpop.f32.mrf.mxu0
    %v1394 = vadd.f32 0.0, %v1393
    %1395 = vmatmul.f32.gmra.mxu0 %v1185
    %v1396 = vpop.f32.mrf.mxu0
    %v1397 = vadd.f32 0.0, %v1396
    %1398 = vmatmul.f32.gmra.mxu0 %v1188
    %v1399 = vpop.f32.mrf.mxu0
    %v1400 = vadd.f32 0.0, %v1399
    %1401 = vmatmul.f32.gmra.mxu0 %v1191
    %v1402 = vpop.f32.mrf.mxu0
    %v1403 = vadd.f32 0.0, %v1402
    %1404 = vmatmul.f32.gmra.mxu0 %v1194
    %v1405 = vpop.f32.mrf.mxu0
    %v1406 = vadd.f32 0.0, %v1405
    %1407 = vmatmul.f32.gmra.mxu0 %v1197
    %v1408 = vpop.f32.mrf.mxu0
    %v1409 = vadd.f32 0.0, %v1408
    %1410 = vmatmul.f32.gmra.mxu0 %v1200
    %v1411 = vpop.f32.mrf.mxu0
    %v1412 = vadd.f32 0.0, %v1411
    %1413 = vmatmul.f32.gmra.mxu0 %v1203
    %v1414 = vpop.f32.mrf.mxu0
    %v1415 = vadd.f32 0.0, %v1414
    %1416 = vmatmul.f32.gmra.mxu0 %v1206
    %v1417 = vpop.f32.mrf.mxu0
    %v1418 = vadd.f32 0.0, %v1417
    %1419 = vmatmul.f32.gmra.mxu0 %v1209
    %v1420 = vpop.f32.mrf.mxu0
    %v1421 = vadd.f32 0.0, %v1420
    %1422 = vmatmul.f32.gmra.mxu0 %v1212
    %v1423 = vpop.f32.mrf.mxu0
    %v1424 = vadd.f32 0.0, %v1423
    %1425 = vmatmul.f32.gmra.mxu0 %v1215
    %v1426 = vpop.f32.mrf.mxu0
    %v1427 = vadd.f32 0.0, %v1426
    %1428 = vmatmul.f32.gmra.mxu0 %v1218
    %v1429 = vpop.f32.mrf.mxu0
    %v1430 = vadd.f32 0.0, %v1429
    %1431 = vmatmul.f32.gmra.mxu0 %v1221
    %v1432 = vpop.f32.mrf.mxu0
    %v1433 = vadd.f32 0.0, %v1432
    %1434 = vmatmul.f32.gmra.mxu0 %v1224
    %v1435 = vpop.f32.mrf.mxu0
    %v1436 = vadd.f32 0.0, %v1435
    %1437 = vmatmul.f32.gmra.mxu0 %v1227
    %v1438 = vpop.f32.mrf.mxu0
    %v1439 = vadd.f32 0.0, %v1438
    %1440 = vmatmul.f32.gmra.mxu0 %v1230
    %v1441 = vpop.f32.mrf.mxu0
    %v1442 = vadd.f32 0.0, %v1441
    %1443 = vmatmul.f32.gmra.mxu0 %v1233
    %v1444 = vpop.f32.mrf.mxu0
    %v1445 = vadd.f32 0.0, %v1444
    %1446 = vmatmul.f32.gmra.mxu0 %v1236
    %v1447 = vpop.f32.mrf.mxu0
    %v1448 = vadd.f32 0.0, %v1447
    %1449 = vdwg.mxu0
    %v1450 = vadd.f32 %v789, %v1259
    %v1451 = vadd.f32 %v792, %v1262
    %v1452 = vadd.f32 %v795, %v1265
    %v1453 = vadd.f32 %v798, %v1268
    %v1454 = vadd.f32 %v801, %v1271
    %v1455 = vadd.f32 %v804, %v1274
    %v1456 = vadd.f32 %v807, %v1277
    %v1457 = vadd.f32 %v810, %v1280
    %v1458 = vadd.f32 %v813, %v1283
    %v1459 = vadd.f32 %v816, %v1286
    %v1460 = vadd.f32 %v819, %v1289
    %v1461 = vadd.f32 %v822, %v1292
    %v1462 = vadd.f32 %v825, %v1295
    %v1463 = vadd.f32 %v828, %v1298
    %v1464 = vadd.f32 %v831, %v1301
    %v1465 = vadd.f32 %v834, %v1304
    %v1466 = vadd.f32 %v837, %v1307
    %v1467 = vadd.f32 %v840, %v1310
    %v1468 = vadd.f32 %v843, %v1313
    %v1469 = vadd.f32 %v846, %v1316
    %v1470 = vadd.f32 %v849, %v1319
    %v1471 = vadd.f32 %v852, %v1322
    %v1472 = vadd.f32 %v855, %v1325
    %v1473 = vadd.f32 %v858, %v1328
    %v1474 = vadd.f32 %v861, %v1331
    %v1475 = vadd.f32 %v864, %v1334
    %v1476 = vadd.f32 %v867, %v1337
    %v1477 = vadd.f32 %v870, %v1340
    %v1478 = vadd.f32 %v873, %v1343
    %v1479 = vadd.f32 %v876, %v1346
    %v1480 = vadd.f32 %v879, %v1349
    %v1481 = vadd.f32 %v882, %v1352
    %v1482 = vadd.f32 %v885, %v1355
    %v1483 = vadd.f32 %v888, %v1358
    %v1484 = vadd.f32 %v891, %v1361
    %v1485 = vadd.f32 %v894, %v1364
    %v1486 = vadd.f32 %v897, %v1367
    %v1487 = vadd.f32 %v900, %v1370
    %v1488 = vadd.f32 %v903, %v1373
    %v1489 = vadd.f32 %v906, %v1376
    %v1490 = vadd.f32 %v909, %v1379
    %v1491 = vadd.f32 %v912, %v1382
    %v1492 = vadd.f32 %v915, %v1385
    %v1493 = vadd.f32 %v918, %v1388
    %v1494 = vadd.f32 %v921, %v1391
    %v1495 = vadd.f32 %v924, %v1394
    %v1496 = vadd.f32 %v927, %v1397
    %v1497 = vadd.f32 %v930, %v1400
    %v1498 = vadd.f32 %v933, %v1403
    %v1499 = vadd.f32 %v936, %v1406
    %v1500 = vadd.f32 %v939, %v1409
    %v1501 = vadd.f32 %v942, %v1412
    %v1502 = vadd.f32 %v945, %v1415
    %v1503 = vadd.f32 %v948, %v1418
    %v1504 = vadd.f32 %v951, %v1421
    %v1505 = vadd.f32 %v954, %v1424
    %v1506 = vadd.f32 %v957, %v1427
    %v1507 = vadd.f32 %v960, %v1430
    %v1508 = vadd.f32 %v963, %v1433
    %v1509 = vadd.f32 %v966, %v1436
    %v1510 = vadd.f32 %v969, %v1439
    %v1511 = vadd.f32 %v972, %v1442
    %v1512 = vadd.f32 %v975, %v1445
    %v1513 = vadd.f32 %v978, %v1448
    %s1514 = scalar_lea.vmem %s0, 24
    %v1515 = vld [vmem:[%s1514] sm:$0xff]
    %v1516 = vld [vmem:[%s1514 + $0x8] sm:$0xff]
    %v1517 = vld [vmem:[%s1514 + $0x18] sm:$0xff]
    %v1518 = vld [vmem:[%s1514 + $0x20] sm:$0xff]
    %v1519 = vld [vmem:[%s1514 + $0x30] sm:$0xff]
    %v1520 = vld [vmem:[%s1514 + $0x38] sm:$0xff]
    %v1521 = vld [vmem:[%s1514 + $0x48] sm:$0xff]
    %v1522 = vld [vmem:[%s1514 + $0x50] sm:$0xff]
    %v1523 = vld [vmem:[%s1514 + $0x60] sm:$0xff]
    %v1524 = vld [vmem:[%s1514 + $0x68] sm:$0xff]
    %v1525 = vld [vmem:[%s1514 + $0x78] sm:$0xff]
    %v1526 = vld [vmem:[%s1514 + $0x80] sm:$0xff]
    %v1527 = vld [vmem:[%s1514 + $0x90] sm:$0xff]
    %v1528 = vld [vmem:[%s1514 + $0x98] sm:$0xff]
    %v1529 = vld [vmem:[%s1514 + $0xa8] sm:$0xff]
    %v1530 = vld [vmem:[%s1514 + $0xb0] sm:$0xff]
    %v1531 = vld [vmem:[%s1514 + $0xc0] sm:$0xff]
    %v1532 = vld [vmem:[%s1514 + $0xc8] sm:$0xff]
    %v1533 = vld [vmem:[%s1514 + $0xd8] sm:$0xff]
    %v1534 = vld [vmem:[%s1514 + $0xe0] sm:$0xff]
    %v1535 = vld [vmem:[%s1514 + $0xf0] sm:$0xff]
    %v1536 = vld [vmem:[%s1514 + $0xf8] sm:$0xff]
    %v1537 = vld [vmem:[%s1514 + $0x108] sm:$0xff]
    %v1538 = vld [vmem:[%s1514 + $0x110] sm:$0xff]
    %v1539 = vld [vmem:[%s1514 + $0x120] sm:$0xff]
    %v1540 = vld [vmem:[%s1514 + $0x128] sm:$0xff]
    %v1541 = vld [vmem:[%s1514 + $0x138] sm:$0xff]
    %v1542 = vld [vmem:[%s1514 + $0x140] sm:$0xff]
    %v1543 = vld [vmem:[%s1514 + $0x150] sm:$0xff]
    %v1544 = vld [vmem:[%s1514 + $0x158] sm:$0xff]
    %v1545 = vld [vmem:[%s1514 + $0x168] sm:$0xff]
    %v1546 = vld [vmem:[%s1514 + $0x170] sm:$0xff]
    %v1547 = vld [vmem:[%s1514 + $0x1b0] sm:$0xff]
    %v1548 = vld [vmem:[%s1514 + $0x1b8] sm:$0xff]
    %v1549 = vld [vmem:[%s1514 + $0x1c8] sm:$0xff]
    %v1550 = vld [vmem:[%s1514 + $0x1d0] sm:$0xff]
    %v1551 = vld [vmem:[%s1514 + $0x1e0] sm:$0xff]
    %v1552 = vld [vmem:[%s1514 + $0x1e8] sm:$0xff]
    %v1553 = vld [vmem:[%s1514 + $0x1f8] sm:$0xff]
    %v1554 = vld [vmem:[%s1514 + $0x200] sm:$0xff]
    %v1555 = vld [vmem:[%s1514 + $0x210] sm:$0xff]
    %v1556 = vld [vmem:[%s1514 + $0x218] sm:$0xff]
    %v1557 = vld [vmem:[%s1514 + $0x228] sm:$0xff]
    %v1558 = vld [vmem:[%s1514 + $0x230] sm:$0xff]
    %v1559 = vld [vmem:[%s1514 + $0x240] sm:$0xff]
    %v1560 = vld [vmem:[%s1514 + $0x248] sm:$0xff]
    %v1561 = vld [vmem:[%s1514 + $0x258] sm:$0xff]
    %v1562 = vld [vmem:[%s1514 + $0x260] sm:$0xff]
    %v1563 = vld [vmem:[%s1514 + $0x270] sm:$0xff]
    %v1564 = vld [vmem:[%s1514 + $0x278] sm:$0xff]
    %v1565 = vld [vmem:[%s1514 + $0x288] sm:$0xff]
    %v1566 = vld [vmem:[%s1514 + $0x290] sm:$0xff]
    %v1567 = vld [vmem:[%s1514 + $0x2a0] sm:$0xff]
    %v1568 = vld [vmem:[%s1514 + $0x2a8] sm:$0xff]
    %v1569 = vld [vmem:[%s1514 + $0x2b8] sm:$0xff]
    %v1570 = vld [vmem:[%s1514 + $0x2c0] sm:$0xff]
    %v1571 = vld [vmem:[%s1514 + $0x2d0] sm:$0xff]
    %v1572 = vld [vmem:[%s1514 + $0x2d8] sm:$0xff]
    %v1573 = vld [vmem:[%s1514 + $0x2e8] sm:$0xff]
    %v1574 = vld [vmem:[%s1514 + $0x2f0] sm:$0xff]
    %v1575 = vld [vmem:[%s1514 + $0x300] sm:$0xff]
    %v1576 = vld [vmem:[%s1514 + $0x308] sm:$0xff]
    %v1577 = vld [vmem:[%s1514 + $0x318] sm:$0xff]
    %v1578 = vld [vmem:[%s1514 + $0x320] sm:$0xff]
    %s1579 = scalar_lea.vmem %s1, 12
    %v1580 = vld [vmem:[%s1579] sm:$0x7]
    %v1582 = vsel %vm170, %v1515, 0
    %v1585 = vsel %vm170, %v1516, 0
    %v1588 = vsel %vm170, %v1517, 0
    %v1591 = vsel %vm170, %v1518, 0
    %v1594 = vsel %vm170, %v1519, 0
    %v1597 = vsel %vm170, %v1520, 0
    %v1600 = vsel %vm170, %v1521, 0
    %v1603 = vsel %vm170, %v1522, 0
    %v1606 = vsel %vm170, %v1523, 0
    %v1609 = vsel %vm170, %v1524, 0
    %v1612 = vsel %vm170, %v1525, 0
    %v1615 = vsel %vm170, %v1526, 0
    %v1618 = vsel %vm170, %v1527, 0
    %v1621 = vsel %vm170, %v1528, 0
    %v1624 = vsel %vm170, %v1529, 0
    %v1627 = vsel %vm170, %v1530, 0
    %v1630 = vsel %vm170, %v1531, 0
    %v1633 = vsel %vm170, %v1532, 0
    %v1636 = vsel %vm170, %v1533, 0
    %v1639 = vsel %vm170, %v1534, 0
    %v1642 = vsel %vm170, %v1535, 0
    %v1645 = vsel %vm170, %v1536, 0
    %v1648 = vsel %vm170, %v1537, 0
    %v1651 = vsel %vm170, %v1538, 0
    %v1654 = vsel %vm170, %v1539, 0
    %v1657 = vsel %vm170, %v1540, 0
    %v1660 = vsel %vm170, %v1541, 0
    %v1663 = vsel %vm170, %v1542, 0
    %v1666 = vsel %vm170, %v1543, 0
    %v1669 = vsel %vm170, %v1544, 0
    %v1672 = vsel %vm170, %v1545, 0
    %v1675 = vsel %vm170, %v1546, 0
    %v1678 = vsel %vm170, %v1547, 0
    %v1681 = vsel %vm170, %v1548, 0
    %v1684 = vsel %vm170, %v1549, 0
    %v1687 = vsel %vm170, %v1550, 0
    %v1690 = vsel %vm170, %v1551, 0
    %v1693 = vsel %vm170, %v1552, 0
    %v1696 = vsel %vm170, %v1553, 0
    %v1699 = vsel %vm170, %v1554, 0
    %v1702 = vsel %vm170, %v1555, 0
    %v1705 = vsel %vm170, %v1556, 0
    %v1708 = vsel %vm170, %v1557, 0
    %v1711 = vsel %vm170, %v1558, 0
    %v1714 = vsel %vm170, %v1559, 0
    %v1717 = vsel %vm170, %v1560, 0
    %v1720 = vsel %vm170, %v1561, 0
    %v1723 = vsel %vm170, %v1562, 0
    %v1726 = vsel %vm170, %v1563, 0
    %v1729 = vsel %vm170, %v1564, 0
    %v1732 = vsel %vm170, %v1565, 0
    %v1735 = vsel %vm170, %v1566, 0
    %v1738 = vsel %vm170, %v1567, 0
    %v1741 = vsel %vm170, %v1568, 0
    %v1744 = vsel %vm170, %v1569, 0
    %v1747 = vsel %vm170, %v1570, 0
    %v1750 = vsel %vm170, %v1571, 0
    %v1753 = vsel %vm170, %v1572, 0
    %v1756 = vsel %vm170, %v1573, 0
    %v1759 = vsel %vm170, %v1574, 0
    %v1762 = vsel %vm170, %v1575, 0
    %v1765 = vsel %vm170, %v1576, 0
    %v1768 = vsel %vm170, %v1577, 0
    %v1771 = vsel %vm170, %v1578, 0
    %v1774 = vsel %vm363, %v1580, 0
    %1776 = vmatpush.msra.mxu0 0.0
    %1777 = vmatpush.msra.mxu0 0.0
    %1778 = vmatpush.msra.mxu0 0.0
    %1779 = vmatpush.msra.mxu0 0.0
    %1780 = vmatpush.msra.mxu0 0.0
    %1781 = vmatpush.msra.mxu0 0.0
    %1782 = vmatpush.msra.mxu0 0.0
    %1783 = vmatpush.msra.mxu0 0.0
    %1784 = vmatpush.msra.mxu0 0.0
    %1785 = vmatpush.msra.mxu0 0.0
    %1786 = vmatpush.msra.mxu0 0.0
    %1787 = vmatpush.msra.mxu0 0.0
    %1788 = vmatpush.msra.mxu0 0.0
    %1789 = vmatpush.msra.mxu0 0.0
    %1790 = vmatpush.msra.mxu0 0.0
    %1791 = vmatpush.msra.mxu0 %v1774
    %1792 = vmatmul.f32.gmra.mxu0 %v1582
    %v1793 = vpop.f32.mrf.mxu0
    %v1794 = vadd.f32 0.0, %v1793
    %1795 = vmatmul.f32.gmra.mxu0 %v1585
    %v1796 = vpop.f32.mrf.mxu0
    %v1797 = vadd.f32 0.0, %v1796
    %1798 = vmatmul.f32.gmra.mxu0 %v1588
    %v1799 = vpop.f32.mrf.mxu0
    %v1800 = vadd.f32 0.0, %v1799
    %1801 = vmatmul.f32.gmra.mxu0 %v1591
    %v1802 = vpop.f32.mrf.mxu0
    %v1803 = vadd.f32 0.0, %v1802
    %1804 = vmatmul.f32.gmra.mxu0 %v1594
    %v1805 = vpop.f32.mrf.mxu0
    %v1806 = vadd.f32 0.0, %v1805
    %1807 = vmatmul.f32.gmra.mxu0 %v1597
    %v1808 = vpop.f32.mrf.mxu0
    %v1809 = vadd.f32 0.0, %v1808
    %1810 = vmatmul.f32.gmra.mxu0 %v1600
    %v1811 = vpop.f32.mrf.mxu0
    %v1812 = vadd.f32 0.0, %v1811
    %1813 = vmatmul.f32.gmra.mxu0 %v1603
    %v1814 = vpop.f32.mrf.mxu0
    %v1815 = vadd.f32 0.0, %v1814
    %1816 = vmatmul.f32.gmra.mxu0 %v1606
    %v1817 = vpop.f32.mrf.mxu0
    %v1818 = vadd.f32 0.0, %v1817
    %1819 = vmatmul.f32.gmra.mxu0 %v1609
    %v1820 = vpop.f32.mrf.mxu0
    %v1821 = vadd.f32 0.0, %v1820
    %1822 = vmatmul.f32.gmra.mxu0 %v1612
    %v1823 = vpop.f32.mrf.mxu0
    %v1824 = vadd.f32 0.0, %v1823
    %1825 = vmatmul.f32.gmra.mxu0 %v1615
    %v1826 = vpop.f32.mrf.mxu0
    %v1827 = vadd.f32 0.0, %v1826
    %1828 = vmatmul.f32.gmra.mxu0 %v1618
    %v1829 = vpop.f32.mrf.mxu0
    %v1830 = vadd.f32 0.0, %v1829
    %1831 = vmatmul.f32.gmra.mxu0 %v1621
    %v1832 = vpop.f32.mrf.mxu0
    %v1833 = vadd.f32 0.0, %v1832
    %1834 = vmatmul.f32.gmra.mxu0 %v1624
    %v1835 = vpop.f32.mrf.mxu0
    %v1836 = vadd.f32 0.0, %v1835
    %1837 = vmatmul.f32.gmra.mxu0 %v1627
    %v1838 = vpop.f32.mrf.mxu0
    %v1839 = vadd.f32 0.0, %v1838
    %1840 = vmatmul.f32.gmra.mxu0 %v1630
    %v1841 = vpop.f32.mrf.mxu0
    %v1842 = vadd.f32 0.0, %v1841
    %1843 = vmatmul.f32.gmra.mxu0 %v1633
    %v1844 = vpop.f32.mrf.mxu0
    %v1845 = vadd.f32 0.0, %v1844
    %1846 = vmatmul.f32.gmra.mxu0 %v1636
    %v1847 = vpop.f32.mrf.mxu0
    %v1848 = vadd.f32 0.0, %v1847
    %1849 = vmatmul.f32.gmra.mxu0 %v1639
    %v1850 = vpop.f32.mrf.mxu0
    %v1851 = vadd.f32 0.0, %v1850
    %1852 = vmatmul.f32.gmra.mxu0 %v1642
    %v1853 = vpop.f32.mrf.mxu0
    %v1854 = vadd.f32 0.0, %v1853
    %1855 = vmatmul.f32.gmra.mxu0 %v1645
    %v1856 = vpop.f32.mrf.mxu0
    %v1857 = vadd.f32 0.0, %v1856
    %1858 = vmatmul.f32.gmra.mxu0 %v1648
    %v1859 = vpop.f32.mrf.mxu0
    %v1860 = vadd.f32 0.0, %v1859
    %1861 = vmatmul.f32.gmra.mxu0 %v1651
    %v1862 = vpop.f32.mrf.mxu0
    %v1863 = vadd.f32 0.0, %v1862
    %1864 = vmatmul.f32.gmra.mxu0 %v1654
    %v1865 = vpop.f32.mrf.mxu0
    %v1866 = vadd.f32 0.0, %v1865
    %1867 = vmatmul.f32.gmra.mxu0 %v1657
    %v1868 = vpop.f32.mrf.mxu0
    %v1869 = vadd.f32 0.0, %v1868
    %1870 = vmatmul.f32.gmra.mxu0 %v1660
    %v1871 = vpop.f32.mrf.mxu0
    %v1872 = vadd.f32 0.0, %v1871
    %1873 = vmatmul.f32.gmra.mxu0 %v1663
    %v1874 = vpop.f32.mrf.mxu0
    %v1875 = vadd.f32 0.0, %v1874
    %1876 = vmatmul.f32.gmra.mxu0 %v1666
    %v1877 = vpop.f32.mrf.mxu0
    %v1878 = vadd.f32 0.0, %v1877
    %1879 = vmatmul.f32.gmra.mxu0 %v1669
    %v1880 = vpop.f32.mrf.mxu0
    %v1881 = vadd.f32 0.0, %v1880
    %1882 = vmatmul.f32.gmra.mxu0 %v1672
    %v1883 = vpop.f32.mrf.mxu0
    %v1884 = vadd.f32 0.0, %v1883
    %1885 = vmatmul.f32.gmra.mxu0 %v1675
    %v1886 = vpop.f32.mrf.mxu0
    %v1887 = vadd.f32 0.0, %v1886
    %1888 = vmatmul.f32.gmra.mxu0 %v1678
    %v1889 = vpop.f32.mrf.mxu0
    %v1890 = vadd.f32 0.0, %v1889
    %1891 = vmatmul.f32.gmra.mxu0 %v1681
    %v1892 = vpop.f32.mrf.mxu0
    %v1893 = vadd.f32 0.0, %v1892
    %1894 = vmatmul.f32.gmra.mxu0 %v1684
    %v1895 = vpop.f32.mrf.mxu0
    %v1896 = vadd.f32 0.0, %v1895
    %1897 = vmatmul.f32.gmra.mxu0 %v1687
    %v1898 = vpop.f32.mrf.mxu0
    %v1899 = vadd.f32 0.0, %v1898
    %1900 = vmatmul.f32.gmra.mxu0 %v1690
    %v1901 = vpop.f32.mrf.mxu0
    %v1902 = vadd.f32 0.0, %v1901
    %1903 = vmatmul.f32.gmra.mxu0 %v1693
    %v1904 = vpop.f32.mrf.mxu0
    %v1905 = vadd.f32 0.0, %v1904
    %1906 = vmatmul.f32.gmra.mxu0 %v1696
    %v1907 = vpop.f32.mrf.mxu0
    %v1908 = vadd.f32 0.0, %v1907
    %1909 = vmatmul.f32.gmra.mxu0 %v1699
    %v1910 = vpop.f32.mrf.mxu0
    %v1911 = vadd.f32 0.0, %v1910
    %1912 = vmatmul.f32.gmra.mxu0 %v1702
    %v1913 = vpop.f32.mrf.mxu0
    %v1914 = vadd.f32 0.0, %v1913
    %1915 = vmatmul.f32.gmra.mxu0 %v1705
    %v1916 = vpop.f32.mrf.mxu0
    %v1917 = vadd.f32 0.0, %v1916
    %1918 = vmatmul.f32.gmra.mxu0 %v1708
    %v1919 = vpop.f32.mrf.mxu0
    %v1920 = vadd.f32 0.0, %v1919
    %1921 = vmatmul.f32.gmra.mxu0 %v1711
    %v1922 = vpop.f32.mrf.mxu0
    %v1923 = vadd.f32 0.0, %v1922
    %1924 = vmatmul.f32.gmra.mxu0 %v1714
    %v1925 = vpop.f32.mrf.mxu0
    %v1926 = vadd.f32 0.0, %v1925
    %1927 = vmatmul.f32.gmra.mxu0 %v1717
    %v1928 = vpop.f32.mrf.mxu0
    %v1929 = vadd.f32 0.0, %v1928
    %1930 = vmatmul.f32.gmra.mxu0 %v1720
    %v1931 = vpop.f32.mrf.mxu0
    %v1932 = vadd.f32 0.0, %v1931
    %1933 = vmatmul.f32.gmra.mxu0 %v1723
    %v1934 = vpop.f32.mrf.mxu0
    %v1935 = vadd.f32 0.0, %v1934
    %1936 = vmatmul.f32.gmra.mxu0 %v1726
    %v1937 = vpop.f32.mrf.mxu0
    %v1938 = vadd.f32 0.0, %v1937
    %1939 = vmatmul.f32.gmra.mxu0 %v1729
    %v1940 = vpop.f32.mrf.mxu0
    %v1941 = vadd.f32 0.0, %v1940
    %1942 = vmatmul.f32.gmra.mxu0 %v1732
    %v1943 = vpop.f32.mrf.mxu0
    %v1944 = vadd.f32 0.0, %v1943
    %1945 = vmatmul.f32.gmra.mxu0 %v1735
    %v1946 = vpop.f32.mrf.mxu0
    %v1947 = vadd.f32 0.0, %v1946
    %1948 = vmatmul.f32.gmra.mxu0 %v1738
    %v1949 = vpop.f32.mrf.mxu0
    %v1950 = vadd.f32 0.0, %v1949
    %1951 = vmatmul.f32.gmra.mxu0 %v1741
    %v1952 = vpop.f32.mrf.mxu0
    %v1953 = vadd.f32 0.0, %v1952
    %1954 = vmatmul.f32.gmra.mxu0 %v1744
    %v1955 = vpop.f32.mrf.mxu0
    %v1956 = vadd.f32 0.0, %v1955
    %1957 = vmatmul.f32.gmra.mxu0 %v1747
    %v1958 = vpop.f32.mrf.mxu0
    %v1959 = vadd.f32 0.0, %v1958
    %1960 = vmatmul.f32.gmra.mxu0 %v1750
    %v1961 = vpop.f32.mrf.mxu0
    %v1962 = vadd.f32 0.0, %v1961
    %1963 = vmatmul.f32.gmra.mxu0 %v1753
    %v1964 = vpop.f32.mrf.mxu0
    %v1965 = vadd.f32 0.0, %v1964
    %1966 = vmatmul.f32.gmra.mxu0 %v1756
    %v1967 = vpop.f32.mrf.mxu0
    %v1968 = vadd.f32 0.0, %v1967
    %1969 = vmatmul.f32.gmra.mxu0 %v1759
    %v1970 = vpop.f32.mrf.mxu0
    %v1971 = vadd.f32 0.0, %v1970
    %1972 = vmatmul.f32.gmra.mxu0 %v1762
    %v1973 = vpop.f32.mrf.mxu0
    %v1974 = vadd.f32 0.0, %v1973
    %1975 = vmatmul.f32.gmra.mxu0 %v1765
    %v1976 = vpop.f32.mrf.mxu0
    %v1977 = vadd.f32 0.0, %v1976
    %1978 = vmatmul.f32.gmra.mxu0 %v1768
    %v1979 = vpop.f32.mrf.mxu0
    %v1980 = vadd.f32 0.0, %v1979
    %1981 = vmatmul.f32.gmra.mxu0 %v1771
    %v1982 = vpop.f32.mrf.mxu0
    %v1983 = vadd.f32 0.0, %v1982
    %1984 = vdwg.mxu0
    %v1985 = vadd.f32 %v1450, %v1794
    %v1986 = vadd.f32 %v1451, %v1797
    %v1987 = vadd.f32 %v1452, %v1800
    %v1988 = vadd.f32 %v1453, %v1803
    %v1989 = vadd.f32 %v1454, %v1806
    %v1990 = vadd.f32 %v1455, %v1809
    %v1991 = vadd.f32 %v1456, %v1812
    %v1992 = vadd.f32 %v1457, %v1815
    %v1993 = vadd.f32 %v1458, %v1818
    %v1994 = vadd.f32 %v1459, %v1821
    %v1995 = vadd.f32 %v1460, %v1824
    %v1996 = vadd.f32 %v1461, %v1827
    %v1997 = vadd.f32 %v1462, %v1830
    %v1998 = vadd.f32 %v1463, %v1833
    %v1999 = vadd.f32 %v1464, %v1836
    %v2000 = vadd.f32 %v1465, %v1839
    %v2001 = vadd.f32 %v1466, %v1842
    %v2002 = vadd.f32 %v1467, %v1845
    %v2003 = vadd.f32 %v1468, %v1848
    %v2004 = vadd.f32 %v1469, %v1851
    %v2005 = vadd.f32 %v1470, %v1854
    %v2006 = vadd.f32 %v1471, %v1857
    %v2007 = vadd.f32 %v1472, %v1860
    %v2008 = vadd.f32 %v1473, %v1863
    %v2009 = vadd.f32 %v1474, %v1866
    %v2010 = vadd.f32 %v1475, %v1869
    %v2011 = vadd.f32 %v1476, %v1872
    %v2012 = vadd.f32 %v1477, %v1875
    %v2013 = vadd.f32 %v1478, %v1878
    %v2014 = vadd.f32 %v1479, %v1881
    %v2015 = vadd.f32 %v1480, %v1884
    %v2016 = vadd.f32 %v1481, %v1887
    %v2017 = vadd.f32 %v1482, %v1890
    %v2018 = vadd.f32 %v1483, %v1893
    %v2019 = vadd.f32 %v1484, %v1896
    %v2020 = vadd.f32 %v1485, %v1899
    %v2021 = vadd.f32 %v1486, %v1902
    %v2022 = vadd.f32 %v1487, %v1905
    %v2023 = vadd.f32 %v1488, %v1908
    %v2024 = vadd.f32 %v1489, %v1911
    %v2025 = vadd.f32 %v1490, %v1914
    %v2026 = vadd.f32 %v1491, %v1917
    %v2027 = vadd.f32 %v1492, %v1920
    %v2028 = vadd.f32 %v1493, %v1923
    %v2029 = vadd.f32 %v1494, %v1926
    %v2030 = vadd.f32 %v1495, %v1929
    %v2031 = vadd.f32 %v1496, %v1932
    %v2032 = vadd.f32 %v1497, %v1935
    %v2033 = vadd.f32 %v1498, %v1938
    %v2034 = vadd.f32 %v1499, %v1941
    %v2035 = vadd.f32 %v1500, %v1944
    %v2036 = vadd.f32 %v1501, %v1947
    %v2037 = vadd.f32 %v1502, %v1950
    %v2038 = vadd.f32 %v1503, %v1953
    %v2039 = vadd.f32 %v1504, %v1956
    %v2040 = vadd.f32 %v1505, %v1959
    %v2041 = vadd.f32 %v1506, %v1962
    %v2042 = vadd.f32 %v1507, %v1965
    %v2043 = vadd.f32 %v1508, %v1968
    %v2044 = vadd.f32 %v1509, %v1971
    %v2045 = vadd.f32 %v1510, %v1974
    %v2046 = vadd.f32 %v1511, %v1977
    %v2047 = vadd.f32 %v1512, %v1980
    %v2048 = vadd.f32 %v1513, %v1983
    %v2049 = vld [vmem:[%s1514 + $0x1] sm:$0xff]
    %v2050 = vld [vmem:[%s1514 + $0x9] sm:$0xff]
    %v2051 = vld [vmem:[%s1514 + $0x19] sm:$0xff]
    %v2052 = vld [vmem:[%s1514 + $0x21] sm:$0xff]
    %v2053 = vld [vmem:[%s1514 + $0x31] sm:$0xff]
    %v2054 = vld [vmem:[%s1514 + $0x39] sm:$0xff]
    %v2055 = vld [vmem:[%s1514 + $0x49] sm:$0xff]
    %v2056 = vld [vmem:[%s1514 + $0x51] sm:$0xff]
    %v2057 = vld [vmem:[%s1514 + $0x61] sm:$0xff]
    %v2058 = vld [vmem:[%s1514 + $0x69] sm:$0xff]
    %v2059 = vld [vmem:[%s1514 + $0x79] sm:$0xff]
    %v2060 = vld [vmem:[%s1514 + $0x81] sm:$0xff]
    %v2061 = vld [vmem:[%s1514 + $0x91] sm:$0xff]
    %v2062 = vld [vmem:[%s1514 + $0x99] sm:$0xff]
    %v2063 = vld [vmem:[%s1514 + $0xa9] sm:$0xff]
    %v2064 = vld [vmem:[%s1514 + $0xb1] sm:$0xff]
    %v2065 = vld [vmem:[%s1514 + $0xc1] sm:$0xff]
    %v2066 = vld [vmem:[%s1514 + $0xc9] sm:$0xff]
    %v2067 = vld [vmem:[%s1514 + $0xd9] sm:$0xff]
    %v2068 = vld [vmem:[%s1514 + $0xe1] sm:$0xff]
    %v2069 = vld [vmem:[%s1514 + $0xf1] sm:$0xff]
    %v2070 = vld [vmem:[%s1514 + $0xf9] sm:$0xff]
    %v2071 = vld [vmem:[%s1514 + $0x109] sm:$0xff]
    %v2072 = vld [vmem:[%s1514 + $0x111] sm:$0xff]
    %v2073 = vld [vmem:[%s1514 + $0x121] sm:$0xff]
    %v2074 = vld [vmem:[%s1514 + $0x129] sm:$0xff]
    %v2075 = vld [vmem:[%s1514 + $0x139] sm:$0xff]
    %v2076 = vld [vmem:[%s1514 + $0x141] sm:$0xff]
    %v2077 = vld [vmem:[%s1514 + $0x151] sm:$0xff]
    %v2078 = vld [vmem:[%s1514 + $0x159] sm:$0xff]
    %v2079 = vld [vmem:[%s1514 + $0x169] sm:$0xff]
    %v2080 = vld [vmem:[%s1514 + $0x171] sm:$0xff]
    %v2081 = vld [vmem:[%s1514 + $0x1b1] sm:$0xff]
    %v2082 = vld [vmem:[%s1514 + $0x1b9] sm:$0xff]
    %v2083 = vld [vmem:[%s1514 + $0x1c9] sm:$0xff]
    %v2084 = vld [vmem:[%s1514 + $0x1d1] sm:$0xff]
    %v2085 = vld [vmem:[%s1514 + $0x1e1] sm:$0xff]
    %v2086 = vld [vmem:[%s1514 + $0x1e9] sm:$0xff]
    %v2087 = vld [vmem:[%s1514 + $0x1f9] sm:$0xff]
    %v2088 = vld [vmem:[%s1514 + $0x201] sm:$0xff]
    %v2089 = vld [vmem:[%s1514 + $0x211] sm:$0xff]
    %v2090 = vld [vmem:[%s1514 + $0x219] sm:$0xff]
    %v2091 = vld [vmem:[%s1514 + $0x229] sm:$0xff]
    %v2092 = vld [vmem:[%s1514 + $0x231] sm:$0xff]
    %v2093 = vld [vmem:[%s1514 + $0x241] sm:$0xff]
    %v2094 = vld [vmem:[%s1514 + $0x249] sm:$0xff]
    %v2095 = vld [vmem:[%s1514 + $0x259] sm:$0xff]
    %v2096 = vld [vmem:[%s1514 + $0x261] sm:$0xff]
    %v2097 = vld [vmem:[%s1514 + $0x271] sm:$0xff]
    %v2098 = vld [vmem:[%s1514 + $0x279] sm:$0xff]
    %v2099 = vld [vmem:[%s1514 + $0x289] sm:$0xff]
    %v2100 = vld [vmem:[%s1514 + $0x291] sm:$0xff]
    %v2101 = vld [vmem:[%s1514 + $0x2a1] sm:$0xff]
    %v2102 = vld [vmem:[%s1514 + $0x2a9] sm:$0xff]
    %v2103 = vld [vmem:[%s1514 + $0x2b9] sm:$0xff]
    %v2104 = vld [vmem:[%s1514 + $0x2c1] sm:$0xff]
    %v2105 = vld [vmem:[%s1514 + $0x2d1] sm:$0xff]
    %v2106 = vld [vmem:[%s1514 + $0x2d9] sm:$0xff]
    %v2107 = vld [vmem:[%s1514 + $0x2e9] sm:$0xff]
    %v2108 = vld [vmem:[%s1514 + $0x2f1] sm:$0xff]
    %v2109 = vld [vmem:[%s1514 + $0x301] sm:$0xff]
    %v2110 = vld [vmem:[%s1514 + $0x309] sm:$0xff]
    %v2111 = vld [vmem:[%s1514 + $0x319] sm:$0xff]
    %v2112 = vld [vmem:[%s1514 + $0x321] sm:$0xff]
    %s2113 = scalar_lea.vmem %s1, 16
    %v2114 = vld [vmem:[%s2113] sm:$0x7]
    %v2116 = vsel %vm170, %v2049, 0
    %v2119 = vsel %vm170, %v2050, 0
    %v2122 = vsel %vm170, %v2051, 0
    %v2125 = vsel %vm170, %v2052, 0
    %v2128 = vsel %vm170, %v2053, 0
    %v2131 = vsel %vm170, %v2054, 0
    %v2134 = vsel %vm170, %v2055, 0
    %v2137 = vsel %vm170, %v2056, 0
    %v2140 = vsel %vm170, %v2057, 0
    %v2143 = vsel %vm170, %v2058, 0
    %v2146 = vsel %vm170, %v2059, 0
    %v2149 = vsel %vm170, %v2060, 0
    %v2152 = vsel %vm170, %v2061, 0
    %v2155 = vsel %vm170, %v2062, 0
    %v2158 = vsel %vm170, %v2063, 0
    %v2161 = vsel %vm170, %v2064, 0
    %v2164 = vsel %vm170, %v2065, 0
    %v2167 = vsel %vm170, %v2066, 0
    %v2170 = vsel %vm170, %v2067, 0
    %v2173 = vsel %vm170, %v2068, 0
    %v2176 = vsel %vm170, %v2069, 0
    %v2179 = vsel %vm170, %v2070, 0
    %v2182 = vsel %vm170, %v2071, 0
    %v2185 = vsel %vm170, %v2072, 0
    %v2188 = vsel %vm170, %v2073, 0
    %v2191 = vsel %vm170, %v2074, 0
    %v2194 = vsel %vm170, %v2075, 0
    %v2197 = vsel %vm170, %v2076, 0
    %v2200 = vsel %vm170, %v2077, 0
    %v2203 = vsel %vm170, %v2078, 0
    %v2206 = vsel %vm170, %v2079, 0
    %v2209 = vsel %vm170, %v2080, 0
    %v2212 = vsel %vm170, %v2081, 0
    %v2215 = vsel %vm170, %v2082, 0
    %v2218 = vsel %vm170, %v2083, 0
    %v2221 = vsel %vm170, %v2084, 0
    %v2224 = vsel %vm170, %v2085, 0
    %v2227 = vsel %vm170, %v2086, 0
    %v2230 = vsel %vm170, %v2087, 0
    %v2233 = vsel %vm170, %v2088, 0
    %v2236 = vsel %vm170, %v2089, 0
    %v2239 = vsel %vm170, %v2090, 0
    %v2242 = vsel %vm170, %v2091, 0
    %v2245 = vsel %vm170, %v2092, 0
    %v2248 = vsel %vm170, %v2093, 0
    %v2251 = vsel %vm170, %v2094, 0
    %v2254 = vsel %vm170, %v2095, 0
    %v2257 = vsel %vm170, %v2096, 0
    %v2260 = vsel %vm170, %v2097, 0
    %v2263 = vsel %vm170, %v2098, 0
    %v2266 = vsel %vm170, %v2099, 0
    %v2269 = vsel %vm170, %v2100, 0
    %v2272 = vsel %vm170, %v2101, 0
    %v2275 = vsel %vm170, %v2102, 0
    %v2278 = vsel %vm170, %v2103, 0
    %v2281 = vsel %vm170, %v2104, 0
    %v2284 = vsel %vm170, %v2105, 0
    %v2287 = vsel %vm170, %v2106, 0
    %v2290 = vsel %vm170, %v2107, 0
    %v2293 = vsel %vm170, %v2108, 0
    %v2296 = vsel %vm170, %v2109, 0
    %v2299 = vsel %vm170, %v2110, 0
    %v2302 = vsel %vm170, %v2111, 0
    %v2305 = vsel %vm170, %v2112, 0
    %v2308 = vsel %vm363, %v2114, 0
    %2310 = vmatpush.msra.mxu0 0.0
    %2311 = vmatpush.msra.mxu0 0.0
    %2312 = vmatpush.msra.mxu0 0.0
    %2313 = vmatpush.msra.mxu0 0.0
    %2314 = vmatpush.msra.mxu0 0.0
    %2315 = vmatpush.msra.mxu0 0.0
    %2316 = vmatpush.msra.mxu0 0.0
    %2317 = vmatpush.msra.mxu0 0.0
    %2318 = vmatpush.msra.mxu0 0.0
    %2319 = vmatpush.msra.mxu0 0.0
    %2320 = vmatpush.msra.mxu0 0.0
    %2321 = vmatpush.msra.mxu0 0.0
    %2322 = vmatpush.msra.mxu0 0.0
    %2323 = vmatpush.msra.mxu0 0.0
    %2324 = vmatpush.msra.mxu0 0.0
    %2325 = vmatpush.msra.mxu0 %v2308
    %2326 = vmatmul.f32.gmra.mxu0 %v2116
    %v2327 = vpop.f32.mrf.mxu0
    %v2328 = vadd.f32 0.0, %v2327
    %2329 = vmatmul.f32.gmra.mxu0 %v2119
    %v2330 = vpop.f32.mrf.mxu0
    %v2331 = vadd.f32 0.0, %v2330
    %2332 = vmatmul.f32.gmra.mxu0 %v2122
    %v2333 = vpop.f32.mrf.mxu0
    %v2334 = vadd.f32 0.0, %v2333
    %2335 = vmatmul.f32.gmra.mxu0 %v2125
    %v2336 = vpop.f32.mrf.mxu0
    %v2337 = vadd.f32 0.0, %v2336
    %2338 = vmatmul.f32.gmra.mxu0 %v2128
    %v2339 = vpop.f32.mrf.mxu0
    %v2340 = vadd.f32 0.0, %v2339
    %2341 = vmatmul.f32.gmra.mxu0 %v2131
    %v2342 = vpop.f32.mrf.mxu0
    %v2343 = vadd.f32 0.0, %v2342
    %2344 = vmatmul.f32.gmra.mxu0 %v2134
    %v2345 = vpop.f32.mrf.mxu0
    %v2346 = vadd.f32 0.0, %v2345
    %2347 = vmatmul.f32.gmra.mxu0 %v2137
    %v2348 = vpop.f32.mrf.mxu0
    %v2349 = vadd.f32 0.0, %v2348
    %2350 = vmatmul.f32.gmra.mxu0 %v2140
    %v2351 = vpop.f32.mrf.mxu0
    %v2352 = vadd.f32 0.0, %v2351
    %2353 = vmatmul.f32.gmra.mxu0 %v2143
    %v2354 = vpop.f32.mrf.mxu0
    %v2355 = vadd.f32 0.0, %v2354
    %2356 = vmatmul.f32.gmra.mxu0 %v2146
    %v2357 = vpop.f32.mrf.mxu0
    %v2358 = vadd.f32 0.0, %v2357
    %2359 = vmatmul.f32.gmra.mxu0 %v2149
    %v2360 = vpop.f32.mrf.mxu0
    %v2361 = vadd.f32 0.0, %v2360
    %2362 = vmatmul.f32.gmra.mxu0 %v2152
    %v2363 = vpop.f32.mrf.mxu0
    %v2364 = vadd.f32 0.0, %v2363
    %2365 = vmatmul.f32.gmra.mxu0 %v2155
    %v2366 = vpop.f32.mrf.mxu0
    %v2367 = vadd.f32 0.0, %v2366
    %2368 = vmatmul.f32.gmra.mxu0 %v2158
    %v2369 = vpop.f32.mrf.mxu0
    %v2370 = vadd.f32 0.0, %v2369
    %2371 = vmatmul.f32.gmra.mxu0 %v2161
    %v2372 = vpop.f32.mrf.mxu0
    %v2373 = vadd.f32 0.0, %v2372
    %2374 = vmatmul.f32.gmra.mxu0 %v2164
    %v2375 = vpop.f32.mrf.mxu0
    %v2376 = vadd.f32 0.0, %v2375
    %2377 = vmatmul.f32.gmra.mxu0 %v2167
    %v2378 = vpop.f32.mrf.mxu0
    %v2379 = vadd.f32 0.0, %v2378
    %2380 = vmatmul.f32.gmra.mxu0 %v2170
    %v2381 = vpop.f32.mrf.mxu0
    %v2382 = vadd.f32 0.0, %v2381
    %2383 = vmatmul.f32.gmra.mxu0 %v2173
    %v2384 = vpop.f32.mrf.mxu0
    %v2385 = vadd.f32 0.0, %v2384
    %2386 = vmatmul.f32.gmra.mxu0 %v2176
    %v2387 = vpop.f32.mrf.mxu0
    %v2388 = vadd.f32 0.0, %v2387
    %2389 = vmatmul.f32.gmra.mxu0 %v2179
    %v2390 = vpop.f32.mrf.mxu0
    %v2391 = vadd.f32 0.0, %v2390
    %2392 = vmatmul.f32.gmra.mxu0 %v2182
    %v2393 = vpop.f32.mrf.mxu0
    %v2394 = vadd.f32 0.0, %v2393
    %2395 = vmatmul.f32.gmra.mxu0 %v2185
    %v2396 = vpop.f32.mrf.mxu0
    %v2397 = vadd.f32 0.0, %v2396
    %2398 = vmatmul.f32.gmra.mxu0 %v2188
    %v2399 = vpop.f32.mrf.mxu0
    %v2400 = vadd.f32 0.0, %v2399
    %2401 = vmatmul.f32.gmra.mxu0 %v2191
    %v2402 = vpop.f32.mrf.mxu0
    %v2403 = vadd.f32 0.0, %v2402
    %2404 = vmatmul.f32.gmra.mxu0 %v2194
    %v2405 = vpop.f32.mrf.mxu0
    %v2406 = vadd.f32 0.0, %v2405
    %2407 = vmatmul.f32.gmra.mxu0 %v2197
    %v2408 = vpop.f32.mrf.mxu0
    %v2409 = vadd.f32 0.0, %v2408
    %2410 = vmatmul.f32.gmra.mxu0 %v2200
    %v2411 = vpop.f32.mrf.mxu0
    %v2412 = vadd.f32 0.0, %v2411
    %2413 = vmatmul.f32.gmra.mxu0 %v2203
    %v2414 = vpop.f32.mrf.mxu0
    %v2415 = vadd.f32 0.0, %v2414
    %2416 = vmatmul.f32.gmra.mxu0 %v2206
    %v2417 = vpop.f32.mrf.mxu0
    %v2418 = vadd.f32 0.0, %v2417
    %2419 = vmatmul.f32.gmra.mxu0 %v2209
    %v2420 = vpop.f32.mrf.mxu0
    %v2421 = vadd.f32 0.0, %v2420
    %2422 = vmatmul.f32.gmra.mxu0 %v2212
    %v2423 = vpop.f32.mrf.mxu0
    %v2424 = vadd.f32 0.0, %v2423
    %2425 = vmatmul.f32.gmra.mxu0 %v2215
    %v2426 = vpop.f32.mrf.mxu0
    %v2427 = vadd.f32 0.0, %v2426
    %2428 = vmatmul.f32.gmra.mxu0 %v2218
    %v2429 = vpop.f32.mrf.mxu0
    %v2430 = vadd.f32 0.0, %v2429
    %2431 = vmatmul.f32.gmra.mxu0 %v2221
    %v2432 = vpop.f32.mrf.mxu0
    %v2433 = vadd.f32 0.0, %v2432
    %2434 = vmatmul.f32.gmra.mxu0 %v2224
    %v2435 = vpop.f32.mrf.mxu0
    %v2436 = vadd.f32 0.0, %v2435
    %2437 = vmatmul.f32.gmra.mxu0 %v2227
    %v2438 = vpop.f32.mrf.mxu0
    %v2439 = vadd.f32 0.0, %v2438
    %2440 = vmatmul.f32.gmra.mxu0 %v2230
    %v2441 = vpop.f32.mrf.mxu0
    %v2442 = vadd.f32 0.0, %v2441
    %2443 = vmatmul.f32.gmra.mxu0 %v2233
    %v2444 = vpop.f32.mrf.mxu0
    %v2445 = vadd.f32 0.0, %v2444
    %2446 = vmatmul.f32.gmra.mxu0 %v2236
    %v2447 = vpop.f32.mrf.mxu0
    %v2448 = vadd.f32 0.0, %v2447
    %2449 = vmatmul.f32.gmra.mxu0 %v2239
    %v2450 = vpop.f32.mrf.mxu0
    %v2451 = vadd.f32 0.0, %v2450
    %2452 = vmatmul.f32.gmra.mxu0 %v2242
    %v2453 = vpop.f32.mrf.mxu0
    %v2454 = vadd.f32 0.0, %v2453
    %2455 = vmatmul.f32.gmra.mxu0 %v2245
    %v2456 = vpop.f32.mrf.mxu0
    %v2457 = vadd.f32 0.0, %v2456
    %2458 = vmatmul.f32.gmra.mxu0 %v2248
    %v2459 = vpop.f32.mrf.mxu0
    %v2460 = vadd.f32 0.0, %v2459
    %2461 = vmatmul.f32.gmra.mxu0 %v2251
    %v2462 = vpop.f32.mrf.mxu0
    %v2463 = vadd.f32 0.0, %v2462
    %2464 = vmatmul.f32.gmra.mxu0 %v2254
    %v2465 = vpop.f32.mrf.mxu0
    %v2466 = vadd.f32 0.0, %v2465
    %2467 = vmatmul.f32.gmra.mxu0 %v2257
    %v2468 = vpop.f32.mrf.mxu0
    %v2469 = vadd.f32 0.0, %v2468
    %2470 = vmatmul.f32.gmra.mxu0 %v2260
    %v2471 = vpop.f32.mrf.mxu0
    %v2472 = vadd.f32 0.0, %v2471
    %2473 = vmatmul.f32.gmra.mxu0 %v2263
    %v2474 = vpop.f32.mrf.mxu0
    %v2475 = vadd.f32 0.0, %v2474
    %2476 = vmatmul.f32.gmra.mxu0 %v2266
    %v2477 = vpop.f32.mrf.mxu0
    %v2478 = vadd.f32 0.0, %v2477
    %2479 = vmatmul.f32.gmra.mxu0 %v2269
    %v2480 = vpop.f32.mrf.mxu0
    %v2481 = vadd.f32 0.0, %v2480
    %2482 = vmatmul.f32.gmra.mxu0 %v2272
    %v2483 = vpop.f32.mrf.mxu0
    %v2484 = vadd.f32 0.0, %v2483
    %2485 = vmatmul.f32.gmra.mxu0 %v2275
    %v2486 = vpop.f32.mrf.mxu0
    %v2487 = vadd.f32 0.0, %v2486
    %2488 = vmatmul.f32.gmra.mxu0 %v2278
    %v2489 = vpop.f32.mrf.mxu0
    %v2490 = vadd.f32 0.0, %v2489
    %2491 = vmatmul.f32.gmra.mxu0 %v2281
    %v2492 = vpop.f32.mrf.mxu0
    %v2493 = vadd.f32 0.0, %v2492
    %2494 = vmatmul.f32.gmra.mxu0 %v2284
    %v2495 = vpop.f32.mrf.mxu0
    %v2496 = vadd.f32 0.0, %v2495
    %2497 = vmatmul.f32.gmra.mxu0 %v2287
    %v2498 = vpop.f32.mrf.mxu0
    %v2499 = vadd.f32 0.0, %v2498
    %2500 = vmatmul.f32.gmra.mxu0 %v2290
    %v2501 = vpop.f32.mrf.mxu0
    %v2502 = vadd.f32 0.0, %v2501
    %2503 = vmatmul.f32.gmra.mxu0 %v2293
    %v2504 = vpop.f32.mrf.mxu0
    %v2505 = vadd.f32 0.0, %v2504
    %2506 = vmatmul.f32.gmra.mxu0 %v2296
    %v2507 = vpop.f32.mrf.mxu0
    %v2508 = vadd.f32 0.0, %v2507
    %2509 = vmatmul.f32.gmra.mxu0 %v2299
    %v2510 = vpop.f32.mrf.mxu0
    %v2511 = vadd.f32 0.0, %v2510
    %2512 = vmatmul.f32.gmra.mxu0 %v2302
    %v2513 = vpop.f32.mrf.mxu0
    %v2514 = vadd.f32 0.0, %v2513
    %2515 = vmatmul.f32.gmra.mxu0 %v2305
    %v2516 = vpop.f32.mrf.mxu0
    %v2517 = vadd.f32 0.0, %v2516
    %2518 = vdwg.mxu0
    %v2519 = vadd.f32 %v1985, %v2328
    %v2520 = vadd.f32 %v1986, %v2331
    %v2521 = vadd.f32 %v1987, %v2334
    %v2522 = vadd.f32 %v1988, %v2337
    %v2523 = vadd.f32 %v1989, %v2340
    %v2524 = vadd.f32 %v1990, %v2343
    %v2525 = vadd.f32 %v1991, %v2346
    %v2526 = vadd.f32 %v1992, %v2349
    %v2527 = vadd.f32 %v1993, %v2352
    %v2528 = vadd.f32 %v1994, %v2355
    %v2529 = vadd.f32 %v1995, %v2358
    %v2530 = vadd.f32 %v1996, %v2361
    %v2531 = vadd.f32 %v1997, %v2364
    %v2532 = vadd.f32 %v1998, %v2367
    %v2533 = vadd.f32 %v1999, %v2370
    %v2534 = vadd.f32 %v2000, %v2373
    %v2535 = vadd.f32 %v2001, %v2376
    %v2536 = vadd.f32 %v2002, %v2379
    %v2537 = vadd.f32 %v2003, %v2382
    %v2538 = vadd.f32 %v2004, %v2385
    %v2539 = vadd.f32 %v2005, %v2388
    %v2540 = vadd.f32 %v2006, %v2391
    %v2541 = vadd.f32 %v2007, %v2394
    %v2542 = vadd.f32 %v2008, %v2397
    %v2543 = vadd.f32 %v2009, %v2400
    %v2544 = vadd.f32 %v2010, %v2403
    %v2545 = vadd.f32 %v2011, %v2406
    %v2546 = vadd.f32 %v2012, %v2409
    %v2547 = vadd.f32 %v2013, %v2412
    %v2548 = vadd.f32 %v2014, %v2415
    %v2549 = vadd.f32 %v2015, %v2418
    %v2550 = vadd.f32 %v2016, %v2421
    %v2551 = vadd.f32 %v2017, %v2424
    %v2552 = vadd.f32 %v2018, %v2427
    %v2553 = vadd.f32 %v2019, %v2430
    %v2554 = vadd.f32 %v2020, %v2433
    %v2555 = vadd.f32 %v2021, %v2436
    %v2556 = vadd.f32 %v2022, %v2439
    %v2557 = vadd.f32 %v2023, %v2442
    %v2558 = vadd.f32 %v2024, %v2445
    %v2559 = vadd.f32 %v2025, %v2448
    %v2560 = vadd.f32 %v2026, %v2451
    %v2561 = vadd.f32 %v2027, %v2454
    %v2562 = vadd.f32 %v2028, %v2457
    %v2563 = vadd.f32 %v2029, %v2460
    %v2564 = vadd.f32 %v2030, %v2463
    %v2565 = vadd.f32 %v2031, %v2466
    %v2566 = vadd.f32 %v2032, %v2469
    %v2567 = vadd.f32 %v2033, %v2472
    %v2568 = vadd.f32 %v2034, %v2475
    %v2569 = vadd.f32 %v2035, %v2478
    %v2570 = vadd.f32 %v2036, %v2481
    %v2571 = vadd.f32 %v2037, %v2484
    %v2572 = vadd.f32 %v2038, %v2487
    %v2573 = vadd.f32 %v2039, %v2490
    %v2574 = vadd.f32 %v2040, %v2493
    %v2575 = vadd.f32 %v2041, %v2496
    %v2576 = vadd.f32 %v2042, %v2499
    %v2577 = vadd.f32 %v2043, %v2502
    %v2578 = vadd.f32 %v2044, %v2505
    %v2579 = vadd.f32 %v2045, %v2508
    %v2580 = vadd.f32 %v2046, %v2511
    %v2581 = vadd.f32 %v2047, %v2514
    %v2582 = vadd.f32 %v2048, %v2517
    %v2583 = vld [vmem:[%s1514 + $0x2] sm:$0xff]
    %v2584 = vld [vmem:[%s1514 + $0xa] sm:$0xff]
    %v2585 = vld [vmem:[%s1514 + $0x1a] sm:$0xff]
    %v2586 = vld [vmem:[%s1514 + $0x22] sm:$0xff]
    %v2587 = vld [vmem:[%s1514 + $0x32] sm:$0xff]
    %v2588 = vld [vmem:[%s1514 + $0x3a] sm:$0xff]
    %v2589 = vld [vmem:[%s1514 + $0x4a] sm:$0xff]
    %v2590 = vld [vmem:[%s1514 + $0x52] sm:$0xff]
    %v2591 = vld [vmem:[%s1514 + $0x62] sm:$0xff]
    %v2592 = vld [vmem:[%s1514 + $0x6a] sm:$0xff]
    %v2593 = vld [vmem:[%s1514 + $0x7a] sm:$0xff]
    %v2594 = vld [vmem:[%s1514 + $0x82] sm:$0xff]
    %v2595 = vld [vmem:[%s1514 + $0x92] sm:$0xff]
    %v2596 = vld [vmem:[%s1514 + $0x9a] sm:$0xff]
    %v2597 = vld [vmem:[%s1514 + $0xaa] sm:$0xff]
    %v2598 = vld [vmem:[%s1514 + $0xb2] sm:$0xff]
    %v2599 = vld [vmem:[%s1514 + $0xc2] sm:$0xff]
    %v2600 = vld [vmem:[%s1514 + $0xca] sm:$0xff]
    %v2601 = vld [vmem:[%s1514 + $0xda] sm:$0xff]
    %v2602 = vld [vmem:[%s1514 + $0xe2] sm:$0xff]
    %v2603 = vld [vmem:[%s1514 + $0xf2] sm:$0xff]
    %v2604 = vld [vmem:[%s1514 + $0xfa] sm:$0xff]
    %v2605 = vld [vmem:[%s1514 + $0x10a] sm:$0xff]
    %v2606 = vld [vmem:[%s1514 + $0x112] sm:$0xff]
    %v2607 = vld [vmem:[%s1514 + $0x122] sm:$0xff]
    %v2608 = vld [vmem:[%s1514 + $0x12a] sm:$0xff]
    %v2609 = vld [vmem:[%s1514 + $0x13a] sm:$0xff]
    %v2610 = vld [vmem:[%s1514 + $0x142] sm:$0xff]
    %v2611 = vld [vmem:[%s1514 + $0x152] sm:$0xff]
    %v2612 = vld [vmem:[%s1514 + $0x15a] sm:$0xff]
    %v2613 = vld [vmem:[%s1514 + $0x16a] sm:$0xff]
    %v2614 = vld [vmem:[%s1514 + $0x172] sm:$0xff]
    %v2615 = vld [vmem:[%s1514 + $0x1b2] sm:$0xff]
    %v2616 = vld [vmem:[%s1514 + $0x1ba] sm:$0xff]
    %v2617 = vld [vmem:[%s1514 + $0x1ca] sm:$0xff]
    %v2618 = vld [vmem:[%s1514 + $0x1d2] sm:$0xff]
    %v2619 = vld [vmem:[%s1514 + $0x1e2] sm:$0xff]
    %v2620 = vld [vmem:[%s1514 + $0x1ea] sm:$0xff]
    %v2621 = vld [vmem:[%s1514 + $0x1fa] sm:$0xff]
    %v2622 = vld [vmem:[%s1514 + $0x202] sm:$0xff]
    %v2623 = vld [vmem:[%s1514 + $0x212] sm:$0xff]
    %v2624 = vld [vmem:[%s1514 + $0x21a] sm:$0xff]
    %v2625 = vld [vmem:[%s1514 + $0x22a] sm:$0xff]
    %v2626 = vld [vmem:[%s1514 + $0x232] sm:$0xff]
    %v2627 = vld [vmem:[%s1514 + $0x242] sm:$0xff]
    %v2628 = vld [vmem:[%s1514 + $0x24a] sm:$0xff]
    %v2629 = vld [vmem:[%s1514 + $0x25a] sm:$0xff]
    %v2630 = vld [vmem:[%s1514 + $0x262] sm:$0xff]
    %v2631 = vld [vmem:[%s1514 + $0x272] sm:$0xff]
    %v2632 = vld [vmem:[%s1514 + $0x27a] sm:$0xff]
    %v2633 = vld [vmem:[%s1514 + $0x28a] sm:$0xff]
    %v2634 = vld [vmem:[%s1514 + $0x292] sm:$0xff]
    %v2635 = vld [vmem:[%s1514 + $0x2a2] sm:$0xff]
    %v2636 = vld [vmem:[%s1514 + $0x2aa] sm:$0xff]
    %v2637 = vld [vmem:[%s1514 + $0x2ba] sm:$0xff]
    %v2638 = vld [vmem:[%s1514 + $0x2c2] sm:$0xff]
    %v2639 = vld [vmem:[%s1514 + $0x2d2] sm:$0xff]
    %v2640 = vld [vmem:[%s1514 + $0x2da] sm:$0xff]
    %v2641 = vld [vmem:[%s1514 + $0x2ea] sm:$0xff]
    %v2642 = vld [vmem:[%s1514 + $0x2f2] sm:$0xff]
    %v2643 = vld [vmem:[%s1514 + $0x302] sm:$0xff]
    %v2644 = vld [vmem:[%s1514 + $0x30a] sm:$0xff]
    %v2645 = vld [vmem:[%s1514 + $0x31a] sm:$0xff]
    %v2646 = vld [vmem:[%s1514 + $0x322] sm:$0xff]
    %s2647 = scalar_lea.vmem %s1, 20
    %v2648 = vld [vmem:[%s2647] sm:$0x7]
    %v2650 = vsel %vm170, %v2583, 0
    %v2653 = vsel %vm170, %v2584, 0
    %v2656 = vsel %vm170, %v2585, 0
    %v2659 = vsel %vm170, %v2586, 0
    %v2662 = vsel %vm170, %v2587, 0
    %v2665 = vsel %vm170, %v2588, 0
    %v2668 = vsel %vm170, %v2589, 0
    %v2671 = vsel %vm170, %v2590, 0
    %v2674 = vsel %vm170, %v2591, 0
    %v2677 = vsel %vm170, %v2592, 0
    %v2680 = vsel %vm170, %v2593, 0
    %v2683 = vsel %vm170, %v2594, 0
    %v2686 = vsel %vm170, %v2595, 0
    %v2689 = vsel %vm170, %v2596, 0
    %v2692 = vsel %vm170, %v2597, 0
    %v2695 = vsel %vm170, %v2598, 0
    %v2698 = vsel %vm170, %v2599, 0
    %v2701 = vsel %vm170, %v2600, 0
    %v2704 = vsel %vm170, %v2601, 0
    %v2707 = vsel %vm170, %v2602, 0
    %v2710 = vsel %vm170, %v2603, 0
    %v2713 = vsel %vm170, %v2604, 0
    %v2716 = vsel %vm170, %v2605, 0
    %v2719 = vsel %vm170, %v2606, 0
    %v2722 = vsel %vm170, %v2607, 0
    %v2725 = vsel %vm170, %v2608, 0
    %v2728 = vsel %vm170, %v2609, 0
    %v2731 = vsel %vm170, %v2610, 0
    %v2734 = vsel %vm170, %v2611, 0
    %v2737 = vsel %vm170, %v2612, 0
    %v2740 = vsel %vm170, %v2613, 0
    %v2743 = vsel %vm170, %v2614, 0
    %v2746 = vsel %vm170, %v2615, 0
    %v2749 = vsel %vm170, %v2616, 0
    %v2752 = vsel %vm170, %v2617, 0
    %v2755 = vsel %vm170, %v2618, 0
    %v2758 = vsel %vm170, %v2619, 0
    %v2761 = vsel %vm170, %v2620, 0
    %v2764 = vsel %vm170, %v2621, 0
    %v2767 = vsel %vm170, %v2622, 0
    %v2770 = vsel %vm170, %v2623, 0
    %v2773 = vsel %vm170, %v2624, 0
    %v2776 = vsel %vm170, %v2625, 0
    %v2779 = vsel %vm170, %v2626, 0
    %v2782 = vsel %vm170, %v2627, 0
    %v2785 = vsel %vm170, %v2628, 0
    %v2788 = vsel %vm170, %v2629, 0
    %v2791 = vsel %vm170, %v2630, 0
    %v2794 = vsel %vm170, %v2631, 0
    %v2797 = vsel %vm170, %v2632, 0
    %v2800 = vsel %vm170, %v2633, 0
    %v2803 = vsel %vm170, %v2634, 0
    %v2806 = vsel %vm170, %v2635, 0
    %v2809 = vsel %vm170, %v2636, 0
    %v2812 = vsel %vm170, %v2637, 0
    %v2815 = vsel %vm170, %v2638, 0
    %v2818 = vsel %vm170, %v2639, 0
    %v2821 = vsel %vm170, %v2640, 0
    %v2824 = vsel %vm170, %v2641, 0
    %v2827 = vsel %vm170, %v2642, 0
    %v2830 = vsel %vm170, %v2643, 0
    %v2833 = vsel %vm170, %v2644, 0
    %v2836 = vsel %vm170, %v2645, 0
    %v2839 = vsel %vm170, %v2646, 0
    %v2842 = vsel %vm363, %v2648, 0
    %2844 = vmatpush.msra.mxu0 0.0
    %2845 = vmatpush.msra.mxu0 0.0
    %2846 = vmatpush.msra.mxu0 0.0
    %2847 = vmatpush.msra.mxu0 0.0
    %2848 = vmatpush.msra.mxu0 0.0
    %2849 = vmatpush.msra.mxu0 0.0
    %2850 = vmatpush.msra.mxu0 0.0
    %2851 = vmatpush.msra.mxu0 0.0
    %2852 = vmatpush.msra.mxu0 0.0
    %2853 = vmatpush.msra.mxu0 0.0
    %2854 = vmatpush.msra.mxu0 0.0
    %2855 = vmatpush.msra.mxu0 0.0
    %2856 = vmatpush.msra.mxu0 0.0
    %2857 = vmatpush.msra.mxu0 0.0
    %2858 = vmatpush.msra.mxu0 0.0
    %2859 = vmatpush.msra.mxu0 %v2842
    %2860 = vmatmul.f32.gmra.mxu0 %v2650
    %v2861 = vpop.f32.mrf.mxu0
    %v2862 = vadd.f32 0.0, %v2861
    %2863 = vmatmul.f32.gmra.mxu0 %v2653
    %v2864 = vpop.f32.mrf.mxu0
    %v2865 = vadd.f32 0.0, %v2864
    %2866 = vmatmul.f32.gmra.mxu0 %v2656
    %v2867 = vpop.f32.mrf.mxu0
    %v2868 = vadd.f32 0.0, %v2867
    %2869 = vmatmul.f32.gmra.mxu0 %v2659
    %v2870 = vpop.f32.mrf.mxu0
    %v2871 = vadd.f32 0.0, %v2870
    %2872 = vmatmul.f32.gmra.mxu0 %v2662
    %v2873 = vpop.f32.mrf.mxu0
    %v2874 = vadd.f32 0.0, %v2873
    %2875 = vmatmul.f32.gmra.mxu0 %v2665
    %v2876 = vpop.f32.mrf.mxu0
    %v2877 = vadd.f32 0.0, %v2876
    %2878 = vmatmul.f32.gmra.mxu0 %v2668
    %v2879 = vpop.f32.mrf.mxu0
    %v2880 = vadd.f32 0.0, %v2879
    %2881 = vmatmul.f32.gmra.mxu0 %v2671
    %v2882 = vpop.f32.mrf.mxu0
    %v2883 = vadd.f32 0.0, %v2882
    %2884 = vmatmul.f32.gmra.mxu0 %v2674
    %v2885 = vpop.f32.mrf.mxu0
    %v2886 = vadd.f32 0.0, %v2885
    %2887 = vmatmul.f32.gmra.mxu0 %v2677
    %v2888 = vpop.f32.mrf.mxu0
    %v2889 = vadd.f32 0.0, %v2888
    %2890 = vmatmul.f32.gmra.mxu0 %v2680
    %v2891 = vpop.f32.mrf.mxu0
    %v2892 = vadd.f32 0.0, %v2891
    %2893 = vmatmul.f32.gmra.mxu0 %v2683
    %v2894 = vpop.f32.mrf.mxu0
    %v2895 = vadd.f32 0.0, %v2894
    %2896 = vmatmul.f32.gmra.mxu0 %v2686
    %v2897 = vpop.f32.mrf.mxu0
    %v2898 = vadd.f32 0.0, %v2897
    %2899 = vmatmul.f32.gmra.mxu0 %v2689
    %v2900 = vpop.f32.mrf.mxu0
    %v2901 = vadd.f32 0.0, %v2900
    %2902 = vmatmul.f32.gmra.mxu0 %v2692
    %v2903 = vpop.f32.mrf.mxu0
    %v2904 = vadd.f32 0.0, %v2903
    %2905 = vmatmul.f32.gmra.mxu0 %v2695
    %v2906 = vpop.f32.mrf.mxu0
    %v2907 = vadd.f32 0.0, %v2906
    %2908 = vmatmul.f32.gmra.mxu0 %v2698
    %v2909 = vpop.f32.mrf.mxu0
    %v2910 = vadd.f32 0.0, %v2909
    %2911 = vmatmul.f32.gmra.mxu0 %v2701
    %v2912 = vpop.f32.mrf.mxu0
    %v2913 = vadd.f32 0.0, %v2912
    %2914 = vmatmul.f32.gmra.mxu0 %v2704
    %v2915 = vpop.f32.mrf.mxu0
    %v2916 = vadd.f32 0.0, %v2915
    %2917 = vmatmul.f32.gmra.mxu0 %v2707
    %v2918 = vpop.f32.mrf.mxu0
    %v2919 = vadd.f32 0.0, %v2918
    %2920 = vmatmul.f32.gmra.mxu0 %v2710
    %v2921 = vpop.f32.mrf.mxu0
    %v2922 = vadd.f32 0.0, %v2921
    %2923 = vmatmul.f32.gmra.mxu0 %v2713
    %v2924 = vpop.f32.mrf.mxu0
    %v2925 = vadd.f32 0.0, %v2924
    %2926 = vmatmul.f32.gmra.mxu0 %v2716
    %v2927 = vpop.f32.mrf.mxu0
    %v2928 = vadd.f32 0.0, %v2927
    %2929 = vmatmul.f32.gmra.mxu0 %v2719
    %v2930 = vpop.f32.mrf.mxu0
    %v2931 = vadd.f32 0.0, %v2930
    %2932 = vmatmul.f32.gmra.mxu0 %v2722
    %v2933 = vpop.f32.mrf.mxu0
    %v2934 = vadd.f32 0.0, %v2933
    %2935 = vmatmul.f32.gmra.mxu0 %v2725
    %v2936 = vpop.f32.mrf.mxu0
    %v2937 = vadd.f32 0.0, %v2936
    %2938 = vmatmul.f32.gmra.mxu0 %v2728
    %v2939 = vpop.f32.mrf.mxu0
    %v2940 = vadd.f32 0.0, %v2939
    %2941 = vmatmul.f32.gmra.mxu0 %v2731
    %v2942 = vpop.f32.mrf.mxu0
    %v2943 = vadd.f32 0.0, %v2942
    %2944 = vmatmul.f32.gmra.mxu0 %v2734
    %v2945 = vpop.f32.mrf.mxu0
    %v2946 = vadd.f32 0.0, %v2945
    %2947 = vmatmul.f32.gmra.mxu0 %v2737
    %v2948 = vpop.f32.mrf.mxu0
    %v2949 = vadd.f32 0.0, %v2948
    %2950 = vmatmul.f32.gmra.mxu0 %v2740
    %v2951 = vpop.f32.mrf.mxu0
    %v2952 = vadd.f32 0.0, %v2951
    %2953 = vmatmul.f32.gmra.mxu0 %v2743
    %v2954 = vpop.f32.mrf.mxu0
    %v2955 = vadd.f32 0.0, %v2954
    %2956 = vmatmul.f32.gmra.mxu0 %v2746
    %v2957 = vpop.f32.mrf.mxu0
    %v2958 = vadd.f32 0.0, %v2957
    %2959 = vmatmul.f32.gmra.mxu0 %v2749
    %v2960 = vpop.f32.mrf.mxu0
    %v2961 = vadd.f32 0.0, %v2960
    %2962 = vmatmul.f32.gmra.mxu0 %v2752
    %v2963 = vpop.f32.mrf.mxu0
    %v2964 = vadd.f32 0.0, %v2963
    %2965 = vmatmul.f32.gmra.mxu0 %v2755
    %v2966 = vpop.f32.mrf.mxu0
    %v2967 = vadd.f32 0.0, %v2966
    %2968 = vmatmul.f32.gmra.mxu0 %v2758
    %v2969 = vpop.f32.mrf.mxu0
    %v2970 = vadd.f32 0.0, %v2969
    %2971 = vmatmul.f32.gmra.mxu0 %v2761
    %v2972 = vpop.f32.mrf.mxu0
    %v2973 = vadd.f32 0.0, %v2972
    %2974 = vmatmul.f32.gmra.mxu0 %v2764
    %v2975 = vpop.f32.mrf.mxu0
    %v2976 = vadd.f32 0.0, %v2975
    %2977 = vmatmul.f32.gmra.mxu0 %v2767
    %v2978 = vpop.f32.mrf.mxu0
    %v2979 = vadd.f32 0.0, %v2978
    %2980 = vmatmul.f32.gmra.mxu0 %v2770
    %v2981 = vpop.f32.mrf.mxu0
    %v2982 = vadd.f32 0.0, %v2981
    %2983 = vmatmul.f32.gmra.mxu0 %v2773
    %v2984 = vpop.f32.mrf.mxu0
    %v2985 = vadd.f32 0.0, %v2984
    %2986 = vmatmul.f32.gmra.mxu0 %v2776
    %v2987 = vpop.f32.mrf.mxu0
    %v2988 = vadd.f32 0.0, %v2987
    %2989 = vmatmul.f32.gmra.mxu0 %v2779
    %v2990 = vpop.f32.mrf.mxu0
    %v2991 = vadd.f32 0.0, %v2990
    %2992 = vmatmul.f32.gmra.mxu0 %v2782
    %v2993 = vpop.f32.mrf.mxu0
    %v2994 = vadd.f32 0.0, %v2993
    %2995 = vmatmul.f32.gmra.mxu0 %v2785
    %v2996 = vpop.f32.mrf.mxu0
    %v2997 = vadd.f32 0.0, %v2996
    %2998 = vmatmul.f32.gmra.mxu0 %v2788
    %v2999 = vpop.f32.mrf.mxu0
    %v3000 = vadd.f32 0.0, %v2999
    %3001 = vmatmul.f32.gmra.mxu0 %v2791
    %v3002 = vpop.f32.mrf.mxu0
    %v3003 = vadd.f32 0.0, %v3002
    %3004 = vmatmul.f32.gmra.mxu0 %v2794
    %v3005 = vpop.f32.mrf.mxu0
    %v3006 = vadd.f32 0.0, %v3005
    %3007 = vmatmul.f32.gmra.mxu0 %v2797
    %v3008 = vpop.f32.mrf.mxu0
    %v3009 = vadd.f32 0.0, %v3008
    %3010 = vmatmul.f32.gmra.mxu0 %v2800
    %v3011 = vpop.f32.mrf.mxu0
    %v3012 = vadd.f32 0.0, %v3011
    %3013 = vmatmul.f32.gmra.mxu0 %v2803
    %v3014 = vpop.f32.mrf.mxu0
    %v3015 = vadd.f32 0.0, %v3014
    %3016 = vmatmul.f32.gmra.mxu0 %v2806
    %v3017 = vpop.f32.mrf.mxu0
    %v3018 = vadd.f32 0.0, %v3017
    %3019 = vmatmul.f32.gmra.mxu0 %v2809
    %v3020 = vpop.f32.mrf.mxu0
    %v3021 = vadd.f32 0.0, %v3020
    %3022 = vmatmul.f32.gmra.mxu0 %v2812
    %v3023 = vpop.f32.mrf.mxu0
    %v3024 = vadd.f32 0.0, %v3023
    %3025 = vmatmul.f32.gmra.mxu0 %v2815
    %v3026 = vpop.f32.mrf.mxu0
    %v3027 = vadd.f32 0.0, %v3026
    %3028 = vmatmul.f32.gmra.mxu0 %v2818
    %v3029 = vpop.f32.mrf.mxu0
    %v3030 = vadd.f32 0.0, %v3029
    %3031 = vmatmul.f32.gmra.mxu0 %v2821
    %v3032 = vpop.f32.mrf.mxu0
    %v3033 = vadd.f32 0.0, %v3032
    %3034 = vmatmul.f32.gmra.mxu0 %v2824
    %v3035 = vpop.f32.mrf.mxu0
    %v3036 = vadd.f32 0.0, %v3035
    %3037 = vmatmul.f32.gmra.mxu0 %v2827
    %v3038 = vpop.f32.mrf.mxu0
    %v3039 = vadd.f32 0.0, %v3038
    %3040 = vmatmul.f32.gmra.mxu0 %v2830
    %v3041 = vpop.f32.mrf.mxu0
    %v3042 = vadd.f32 0.0, %v3041
    %3043 = vmatmul.f32.gmra.mxu0 %v2833
    %v3044 = vpop.f32.mrf.mxu0
    %v3045 = vadd.f32 0.0, %v3044
    %3046 = vmatmul.f32.gmra.mxu0 %v2836
    %v3047 = vpop.f32.mrf.mxu0
    %v3048 = vadd.f32 0.0, %v3047
    %3049 = vmatmul.f32.gmra.mxu0 %v2839
    %v3050 = vpop.f32.mrf.mxu0
    %v3051 = vadd.f32 0.0, %v3050
    %3052 = vdwg.mxu0
    %v3053 = vadd.f32 %v2519, %v2862
    %v3054 = vadd.f32 %v2520, %v2865
    %v3055 = vadd.f32 %v2521, %v2868
    %v3056 = vadd.f32 %v2522, %v2871
    %v3057 = vadd.f32 %v2523, %v2874
    %v3058 = vadd.f32 %v2524, %v2877
    %v3059 = vadd.f32 %v2525, %v2880
    %v3060 = vadd.f32 %v2526, %v2883
    %v3061 = vadd.f32 %v2527, %v2886
    %v3062 = vadd.f32 %v2528, %v2889
    %v3063 = vadd.f32 %v2529, %v2892
    %v3064 = vadd.f32 %v2530, %v2895
    %v3065 = vadd.f32 %v2531, %v2898
    %v3066 = vadd.f32 %v2532, %v2901
    %v3067 = vadd.f32 %v2533, %v2904
    %v3068 = vadd.f32 %v2534, %v2907
    %v3069 = vadd.f32 %v2535, %v2910
    %v3070 = vadd.f32 %v2536, %v2913
    %v3071 = vadd.f32 %v2537, %v2916
    %v3072 = vadd.f32 %v2538, %v2919
    %v3073 = vadd.f32 %v2539, %v2922
    %v3074 = vadd.f32 %v2540, %v2925
    %v3075 = vadd.f32 %v2541, %v2928
    %v3076 = vadd.f32 %v2542, %v2931
    %v3077 = vadd.f32 %v2543, %v2934
    %v3078 = vadd.f32 %v2544, %v2937
    %v3079 = vadd.f32 %v2545, %v2940
    %v3080 = vadd.f32 %v2546, %v2943
    %v3081 = vadd.f32 %v2547, %v2946
    %v3082 = vadd.f32 %v2548, %v2949
    %v3083 = vadd.f32 %v2549, %v2952
    %v3084 = vadd.f32 %v2550, %v2955
    %v3085 = vadd.f32 %v2551, %v2958
    %v3086 = vadd.f32 %v2552, %v2961
    %v3087 = vadd.f32 %v2553, %v2964
    %v3088 = vadd.f32 %v2554, %v2967
    %v3089 = vadd.f32 %v2555, %v2970
    %v3090 = vadd.f32 %v2556, %v2973
    %v3091 = vadd.f32 %v2557, %v2976
    %v3092 = vadd.f32 %v2558, %v2979
    %v3093 = vadd.f32 %v2559, %v2982
    %v3094 = vadd.f32 %v2560, %v2985
    %v3095 = vadd.f32 %v2561, %v2988
    %v3096 = vadd.f32 %v2562, %v2991
    %v3097 = vadd.f32 %v2563, %v2994
    %v3098 = vadd.f32 %v2564, %v2997
    %v3099 = vadd.f32 %v2565, %v3000
    %v3100 = vadd.f32 %v2566, %v3003
    %v3101 = vadd.f32 %v2567, %v3006
    %v3102 = vadd.f32 %v2568, %v3009
    %v3103 = vadd.f32 %v2569, %v3012
    %v3104 = vadd.f32 %v2570, %v3015
    %v3105 = vadd.f32 %v2571, %v3018
    %v3106 = vadd.f32 %v2572, %v3021
    %v3107 = vadd.f32 %v2573, %v3024
    %v3108 = vadd.f32 %v2574, %v3027
    %v3109 = vadd.f32 %v2575, %v3030
    %v3110 = vadd.f32 %v2576, %v3033
    %v3111 = vadd.f32 %v2577, %v3036
    %v3112 = vadd.f32 %v2578, %v3039
    %v3113 = vadd.f32 %v2579, %v3042
    %v3114 = vadd.f32 %v2580, %v3045
    %v3115 = vadd.f32 %v2581, %v3048
    %v3116 = vadd.f32 %v2582, %v3051
    %s3117 = scalar_lea.vmem %s0, 48
    %v3118 = vld [vmem:[%s3117] sm:$0xff]
    %v3119 = vld [vmem:[%s3117 + $0x8] sm:$0xff]
    %v3120 = vld [vmem:[%s3117 + $0x18] sm:$0xff]
    %v3121 = vld [vmem:[%s3117 + $0x20] sm:$0xff]
    %v3122 = vld [vmem:[%s3117 + $0x30] sm:$0xff]
    %v3123 = vld [vmem:[%s3117 + $0x38] sm:$0xff]
    %v3124 = vld [vmem:[%s3117 + $0x48] sm:$0xff]
    %v3125 = vld [vmem:[%s3117 + $0x50] sm:$0xff]
    %v3126 = vld [vmem:[%s3117 + $0x60] sm:$0xff]
    %v3127 = vld [vmem:[%s3117 + $0x68] sm:$0xff]
    %v3128 = vld [vmem:[%s3117 + $0x78] sm:$0xff]
    %v3129 = vld [vmem:[%s3117 + $0x80] sm:$0xff]
    %v3130 = vld [vmem:[%s3117 + $0x90] sm:$0xff]
    %v3131 = vld [vmem:[%s3117 + $0x98] sm:$0xff]
    %v3132 = vld [vmem:[%s3117 + $0xa8] sm:$0xff]
    %v3133 = vld [vmem:[%s3117 + $0xb0] sm:$0xff]
    %v3134 = vld [vmem:[%s3117 + $0xc0] sm:$0xff]
    %v3135 = vld [vmem:[%s3117 + $0xc8] sm:$0xff]
    %v3136 = vld [vmem:[%s3117 + $0xd8] sm:$0xff]
    %v3137 = vld [vmem:[%s3117 + $0xe0] sm:$0xff]
    %v3138 = vld [vmem:[%s3117 + $0xf0] sm:$0xff]
    %v3139 = vld [vmem:[%s3117 + $0xf8] sm:$0xff]
    %v3140 = vld [vmem:[%s3117 + $0x108] sm:$0xff]
    %v3141 = vld [vmem:[%s3117 + $0x110] sm:$0xff]
    %v3142 = vld [vmem:[%s3117 + $0x120] sm:$0xff]
    %v3143 = vld [vmem:[%s3117 + $0x128] sm:$0xff]
    %v3144 = vld [vmem:[%s3117 + $0x138] sm:$0xff]
    %v3145 = vld [vmem:[%s3117 + $0x140] sm:$0xff]
    %v3146 = vld [vmem:[%s3117 + $0x150] sm:$0xff]
    %v3147 = vld [vmem:[%s3117 + $0x158] sm:$0xff]
    %v3148 = vld [vmem:[%s3117 + $0x168] sm:$0xff]
    %v3149 = vld [vmem:[%s3117 + $0x170] sm:$0xff]
    %v3150 = vld [vmem:[%s3117 + $0x1b0] sm:$0xff]
    %v3151 = vld [vmem:[%s3117 + $0x1b8] sm:$0xff]
    %v3152 = vld [vmem:[%s3117 + $0x1c8] sm:$0xff]
    %v3153 = vld [vmem:[%s3117 + $0x1d0] sm:$0xff]
    %v3154 = vld [vmem:[%s3117 + $0x1e0] sm:$0xff]
    %v3155 = vld [vmem:[%s3117 + $0x1e8] sm:$0xff]
    %v3156 = vld [vmem:[%s3117 + $0x1f8] sm:$0xff]
    %v3157 = vld [vmem:[%s3117 + $0x200] sm:$0xff]
    %v3158 = vld [vmem:[%s3117 + $0x210] sm:$0xff]
    %v3159 = vld [vmem:[%s3117 + $0x218] sm:$0xff]
    %v3160 = vld [vmem:[%s3117 + $0x228] sm:$0xff]
    %v3161 = vld [vmem:[%s3117 + $0x230] sm:$0xff]
    %v3162 = vld [vmem:[%s3117 + $0x240] sm:$0xff]
    %v3163 = vld [vmem:[%s3117 + $0x248] sm:$0xff]
    %v3164 = vld [vmem:[%s3117 + $0x258] sm:$0xff]
    %v3165 = vld [vmem:[%s3117 + $0x260] sm:$0xff]
    %v3166 = vld [vmem:[%s3117 + $0x270] sm:$0xff]
    %v3167 = vld [vmem:[%s3117 + $0x278] sm:$0xff]
    %v3168 = vld [vmem:[%s3117 + $0x288] sm:$0xff]
    %v3169 = vld [vmem:[%s3117 + $0x290] sm:$0xff]
    %v3170 = vld [vmem:[%s3117 + $0x2a0] sm:$0xff]
    %v3171 = vld [vmem:[%s3117 + $0x2a8] sm:$0xff]
    %v3172 = vld [vmem:[%s3117 + $0x2b8] sm:$0xff]
    %v3173 = vld [vmem:[%s3117 + $0x2c0] sm:$0xff]
    %v3174 = vld [vmem:[%s3117 + $0x2d0] sm:$0xff]
    %v3175 = vld [vmem:[%s3117 + $0x2d8] sm:$0xff]
    %v3176 = vld [vmem:[%s3117 + $0x2e8] sm:$0xff]
    %v3177 = vld [vmem:[%s3117 + $0x2f0] sm:$0xff]
    %v3178 = vld [vmem:[%s3117 + $0x300] sm:$0xff]
    %v3179 = vld [vmem:[%s3117 + $0x308] sm:$0xff]
    %v3180 = vld [vmem:[%s3117 + $0x318] sm:$0xff]
    %v3181 = vld [vmem:[%s3117 + $0x320] sm:$0xff]
    %s3182 = scalar_lea.vmem %s1, 24
    %v3183 = vld [vmem:[%s3182] sm:$0x7]
    %v3185 = vsel %vm170, %v3118, 0
    %v3188 = vsel %vm170, %v3119, 0
    %v3191 = vsel %vm170, %v3120, 0
    %v3194 = vsel %vm170, %v3121, 0
    %v3197 = vsel %vm170, %v3122, 0
    %v3200 = vsel %vm170, %v3123, 0
    %v3203 = vsel %vm170, %v3124, 0
    %v3206 = vsel %vm170, %v3125, 0
    %v3209 = vsel %vm170, %v3126, 0
    %v3212 = vsel %vm170, %v3127, 0
    %v3215 = vsel %vm170, %v3128, 0
    %v3218 = vsel %vm170, %v3129, 0
    %v3221 = vsel %vm170, %v3130, 0
    %v3224 = vsel %vm170, %v3131, 0
    %v3227 = vsel %vm170, %v3132, 0
    %v3230 = vsel %vm170, %v3133, 0
    %v3233 = vsel %vm170, %v3134, 0
    %v3236 = vsel %vm170, %v3135, 0
    %v3239 = vsel %vm170, %v3136, 0
    %v3242 = vsel %vm170, %v3137, 0
    %v3245 = vsel %vm170, %v3138, 0
    %v3248 = vsel %vm170, %v3139, 0
    %v3251 = vsel %vm170, %v3140, 0
    %v3254 = vsel %vm170, %v3141, 0
    %v3257 = vsel %vm170, %v3142, 0
    %v3260 = vsel %vm170, %v3143, 0
    %v3263 = vsel %vm170, %v3144, 0
    %v3266 = vsel %vm170, %v3145, 0
    %v3269 = vsel %vm170, %v3146, 0
    %v3272 = vsel %vm170, %v3147, 0
    %v3275 = vsel %vm170, %v3148, 0
    %v3278 = vsel %vm170, %v3149, 0
    %v3281 = vsel %vm170, %v3150, 0
    %v3284 = vsel %vm170, %v3151, 0
    %v3287 = vsel %vm170, %v3152, 0
    %v3290 = vsel %vm170, %v3153, 0
    %v3293 = vsel %vm170, %v3154, 0
    %v3296 = vsel %vm170, %v3155, 0
    %v3299 = vsel %vm170, %v3156, 0
    %v3302 = vsel %vm170, %v3157, 0
    %v3305 = vsel %vm170, %v3158, 0
    %v3308 = vsel %vm170, %v3159, 0
    %v3311 = vsel %vm170, %v3160, 0
    %v3314 = vsel %vm170, %v3161, 0
    %v3317 = vsel %vm170, %v3162, 0
    %v3320 = vsel %vm170, %v3163, 0
    %v3323 = vsel %vm170, %v3164, 0
    %v3326 = vsel %vm170, %v3165, 0
    %v3329 = vsel %vm170, %v3166, 0
    %v3332 = vsel %vm170, %v3167, 0
    %v3335 = vsel %vm170, %v3168, 0
    %v3338 = vsel %vm170, %v3169, 0
    %v3341 = vsel %vm170, %v3170, 0
    %v3344 = vsel %vm170, %v3171, 0
    %v3347 = vsel %vm170, %v3172, 0
    %v3350 = vsel %vm170, %v3173, 0
    %v3353 = vsel %vm170, %v3174, 0
    %v3356 = vsel %vm170, %v3175, 0
    %v3359 = vsel %vm170, %v3176, 0
    %v3362 = vsel %vm170, %v3177, 0
    %v3365 = vsel %vm170, %v3178, 0
    %v3368 = vsel %vm170, %v3179, 0
    %v3371 = vsel %vm170, %v3180, 0
    %v3374 = vsel %vm170, %v3181, 0
    %v3377 = vsel %vm363, %v3183, 0
    %3379 = vmatpush.msra.mxu0 0.0
    %3380 = vmatpush.msra.mxu0 0.0
    %3381 = vmatpush.msra.mxu0 0.0
    %3382 = vmatpush.msra.mxu0 0.0
    %3383 = vmatpush.msra.mxu0 0.0
    %3384 = vmatpush.msra.mxu0 0.0
    %3385 = vmatpush.msra.mxu0 0.0
    %3386 = vmatpush.msra.mxu0 0.0
    %3387 = vmatpush.msra.mxu0 0.0
    %3388 = vmatpush.msra.mxu0 0.0
    %3389 = vmatpush.msra.mxu0 0.0
    %3390 = vmatpush.msra.mxu0 0.0
    %3391 = vmatpush.msra.mxu0 0.0
    %3392 = vmatpush.msra.mxu0 0.0
    %3393 = vmatpush.msra.mxu0 0.0
    %3394 = vmatpush.msra.mxu0 %v3377
    %3395 = vmatmul.f32.gmra.mxu0 %v3185
    %v3396 = vpop.f32.mrf.mxu0
    %v3397 = vadd.f32 0.0, %v3396
    %3398 = vmatmul.f32.gmra.mxu0 %v3188
    %v3399 = vpop.f32.mrf.mxu0
    %v3400 = vadd.f32 0.0, %v3399
    %3401 = vmatmul.f32.gmra.mxu0 %v3191
    %v3402 = vpop.f32.mrf.mxu0
    %v3403 = vadd.f32 0.0, %v3402
    %3404 = vmatmul.f32.gmra.mxu0 %v3194
    %v3405 = vpop.f32.mrf.mxu0
    %v3406 = vadd.f32 0.0, %v3405
    %3407 = vmatmul.f32.gmra.mxu0 %v3197
    %v3408 = vpop.f32.mrf.mxu0
    %v3409 = vadd.f32 0.0, %v3408
    %3410 = vmatmul.f32.gmra.mxu0 %v3200
    %v3411 = vpop.f32.mrf.mxu0
    %v3412 = vadd.f32 0.0, %v3411
    %3413 = vmatmul.f32.gmra.mxu0 %v3203
    %v3414 = vpop.f32.mrf.mxu0
    %v3415 = vadd.f32 0.0, %v3414
    %3416 = vmatmul.f32.gmra.mxu0 %v3206
    %v3417 = vpop.f32.mrf.mxu0
    %v3418 = vadd.f32 0.0, %v3417
    %3419 = vmatmul.f32.gmra.mxu0 %v3209
    %v3420 = vpop.f32.mrf.mxu0
    %v3421 = vadd.f32 0.0, %v3420
    %3422 = vmatmul.f32.gmra.mxu0 %v3212
    %v3423 = vpop.f32.mrf.mxu0
    %v3424 = vadd.f32 0.0, %v3423
    %3425 = vmatmul.f32.gmra.mxu0 %v3215
    %v3426 = vpop.f32.mrf.mxu0
    %v3427 = vadd.f32 0.0, %v3426
    %3428 = vmatmul.f32.gmra.mxu0 %v3218
    %v3429 = vpop.f32.mrf.mxu0
    %v3430 = vadd.f32 0.0, %v3429
    %3431 = vmatmul.f32.gmra.mxu0 %v3221
    %v3432 = vpop.f32.mrf.mxu0
    %v3433 = vadd.f32 0.0, %v3432
    %3434 = vmatmul.f32.gmra.mxu0 %v3224
    %v3435 = vpop.f32.mrf.mxu0
    %v3436 = vadd.f32 0.0, %v3435
    %3437 = vmatmul.f32.gmra.mxu0 %v3227
    %v3438 = vpop.f32.mrf.mxu0
    %v3439 = vadd.f32 0.0, %v3438
    %3440 = vmatmul.f32.gmra.mxu0 %v3230
    %v3441 = vpop.f32.mrf.mxu0
    %v3442 = vadd.f32 0.0, %v3441
    %3443 = vmatmul.f32.gmra.mxu0 %v3233
    %v3444 = vpop.f32.mrf.mxu0
    %v3445 = vadd.f32 0.0, %v3444
    %3446 = vmatmul.f32.gmra.mxu0 %v3236
    %v3447 = vpop.f32.mrf.mxu0
    %v3448 = vadd.f32 0.0, %v3447
    %3449 = vmatmul.f32.gmra.mxu0 %v3239
    %v3450 = vpop.f32.mrf.mxu0
    %v3451 = vadd.f32 0.0, %v3450
    %3452 = vmatmul.f32.gmra.mxu0 %v3242
    %v3453 = vpop.f32.mrf.mxu0
    %v3454 = vadd.f32 0.0, %v3453
    %3455 = vmatmul.f32.gmra.mxu0 %v3245
    %v3456 = vpop.f32.mrf.mxu0
    %v3457 = vadd.f32 0.0, %v3456
    %3458 = vmatmul.f32.gmra.mxu0 %v3248
    %v3459 = vpop.f32.mrf.mxu0
    %v3460 = vadd.f32 0.0, %v3459
    %3461 = vmatmul.f32.gmra.mxu0 %v3251
    %v3462 = vpop.f32.mrf.mxu0
    %v3463 = vadd.f32 0.0, %v3462
    %3464 = vmatmul.f32.gmra.mxu0 %v3254
    %v3465 = vpop.f32.mrf.mxu0
    %v3466 = vadd.f32 0.0, %v3465
    %3467 = vmatmul.f32.gmra.mxu0 %v3257
    %v3468 = vpop.f32.mrf.mxu0
    %v3469 = vadd.f32 0.0, %v3468
    %3470 = vmatmul.f32.gmra.mxu0 %v3260
    %v3471 = vpop.f32.mrf.mxu0
    %v3472 = vadd.f32 0.0, %v3471
    %3473 = vmatmul.f32.gmra.mxu0 %v3263
    %v3474 = vpop.f32.mrf.mxu0
    %v3475 = vadd.f32 0.0, %v3474
    %3476 = vmatmul.f32.gmra.mxu0 %v3266
    %v3477 = vpop.f32.mrf.mxu0
    %v3478 = vadd.f32 0.0, %v3477
    %3479 = vmatmul.f32.gmra.mxu0 %v3269
    %v3480 = vpop.f32.mrf.mxu0
    %v3481 = vadd.f32 0.0, %v3480
    %3482 = vmatmul.f32.gmra.mxu0 %v3272
    %v3483 = vpop.f32.mrf.mxu0
    %v3484 = vadd.f32 0.0, %v3483
    %3485 = vmatmul.f32.gmra.mxu0 %v3275
    %v3486 = vpop.f32.mrf.mxu0
    %v3487 = vadd.f32 0.0, %v3486
    %3488 = vmatmul.f32.gmra.mxu0 %v3278
    %v3489 = vpop.f32.mrf.mxu0
    %v3490 = vadd.f32 0.0, %v3489
    %3491 = vmatmul.f32.gmra.mxu0 %v3281
    %v3492 = vpop.f32.mrf.mxu0
    %v3493 = vadd.f32 0.0, %v3492
    %3494 = vmatmul.f32.gmra.mxu0 %v3284
    %v3495 = vpop.f32.mrf.mxu0
    %v3496 = vadd.f32 0.0, %v3495
    %3497 = vmatmul.f32.gmra.mxu0 %v3287
    %v3498 = vpop.f32.mrf.mxu0
    %v3499 = vadd.f32 0.0, %v3498
    %3500 = vmatmul.f32.gmra.mxu0 %v3290
    %v3501 = vpop.f32.mrf.mxu0
    %v3502 = vadd.f32 0.0, %v3501
    %3503 = vmatmul.f32.gmra.mxu0 %v3293
    %v3504 = vpop.f32.mrf.mxu0
    %v3505 = vadd.f32 0.0, %v3504
    %3506 = vmatmul.f32.gmra.mxu0 %v3296
    %v3507 = vpop.f32.mrf.mxu0
    %v3508 = vadd.f32 0.0, %v3507
    %3509 = vmatmul.f32.gmra.mxu0 %v3299
    %v3510 = vpop.f32.mrf.mxu0
    %v3511 = vadd.f32 0.0, %v3510
    %3512 = vmatmul.f32.gmra.mxu0 %v3302
    %v3513 = vpop.f32.mrf.mxu0
    %v3514 = vadd.f32 0.0, %v3513
    %3515 = vmatmul.f32.gmra.mxu0 %v3305
    %v3516 = vpop.f32.mrf.mxu0
    %v3517 = vadd.f32 0.0, %v3516
    %3518 = vmatmul.f32.gmra.mxu0 %v3308
    %v3519 = vpop.f32.mrf.mxu0
    %v3520 = vadd.f32 0.0, %v3519
    %3521 = vmatmul.f32.gmra.mxu0 %v3311
    %v3522 = vpop.f32.mrf.mxu0
    %v3523 = vadd.f32 0.0, %v3522
    %3524 = vmatmul.f32.gmra.mxu0 %v3314
    %v3525 = vpop.f32.mrf.mxu0
    %v3526 = vadd.f32 0.0, %v3525
    %3527 = vmatmul.f32.gmra.mxu0 %v3317
    %v3528 = vpop.f32.mrf.mxu0
    %v3529 = vadd.f32 0.0, %v3528
    %3530 = vmatmul.f32.gmra.mxu0 %v3320
    %v3531 = vpop.f32.mrf.mxu0
    %v3532 = vadd.f32 0.0, %v3531
    %3533 = vmatmul.f32.gmra.mxu0 %v3323
    %v3534 = vpop.f32.mrf.mxu0
    %v3535 = vadd.f32 0.0, %v3534
    %3536 = vmatmul.f32.gmra.mxu0 %v3326
    %v3537 = vpop.f32.mrf.mxu0
    %v3538 = vadd.f32 0.0, %v3537
    %3539 = vmatmul.f32.gmra.mxu0 %v3329
    %v3540 = vpop.f32.mrf.mxu0
    %v3541 = vadd.f32 0.0, %v3540
    %3542 = vmatmul.f32.gmra.mxu0 %v3332
    %v3543 = vpop.f32.mrf.mxu0
    %v3544 = vadd.f32 0.0, %v3543
    %3545 = vmatmul.f32.gmra.mxu0 %v3335
    %v3546 = vpop.f32.mrf.mxu0
    %v3547 = vadd.f32 0.0, %v3546
    %3548 = vmatmul.f32.gmra.mxu0 %v3338
    %v3549 = vpop.f32.mrf.mxu0
    %v3550 = vadd.f32 0.0, %v3549
    %3551 = vmatmul.f32.gmra.mxu0 %v3341
    %v3552 = vpop.f32.mrf.mxu0
    %v3553 = vadd.f32 0.0, %v3552
    %3554 = vmatmul.f32.gmra.mxu0 %v3344
    %v3555 = vpop.f32.mrf.mxu0
    %v3556 = vadd.f32 0.0, %v3555
    %3557 = vmatmul.f32.gmra.mxu0 %v3347
    %v3558 = vpop.f32.mrf.mxu0
    %v3559 = vadd.f32 0.0, %v3558
    %3560 = vmatmul.f32.gmra.mxu0 %v3350
    %v3561 = vpop.f32.mrf.mxu0
    %v3562 = vadd.f32 0.0, %v3561
    %3563 = vmatmul.f32.gmra.mxu0 %v3353
    %v3564 = vpop.f32.mrf.mxu0
    %v3565 = vadd.f32 0.0, %v3564
    %3566 = vmatmul.f32.gmra.mxu0 %v3356
    %v3567 = vpop.f32.mrf.mxu0
    %v3568 = vadd.f32 0.0, %v3567
    %3569 = vmatmul.f32.gmra.mxu0 %v3359
    %v3570 = vpop.f32.mrf.mxu0
    %v3571 = vadd.f32 0.0, %v3570
    %3572 = vmatmul.f32.gmra.mxu0 %v3362
    %v3573 = vpop.f32.mrf.mxu0
    %v3574 = vadd.f32 0.0, %v3573
    %3575 = vmatmul.f32.gmra.mxu0 %v3365
    %v3576 = vpop.f32.mrf.mxu0
    %v3577 = vadd.f32 0.0, %v3576
    %3578 = vmatmul.f32.gmra.mxu0 %v3368
    %v3579 = vpop.f32.mrf.mxu0
    %v3580 = vadd.f32 0.0, %v3579
    %3581 = vmatmul.f32.gmra.mxu0 %v3371
    %v3582 = vpop.f32.mrf.mxu0
    %v3583 = vadd.f32 0.0, %v3582
    %3584 = vmatmul.f32.gmra.mxu0 %v3374
    %v3585 = vpop.f32.mrf.mxu0
    %v3586 = vadd.f32 0.0, %v3585
    %3587 = vdwg.mxu0
    %v3588 = vadd.f32 %v3053, %v3397
    %v3589 = vadd.f32 %v3054, %v3400
    %v3590 = vadd.f32 %v3055, %v3403
    %v3591 = vadd.f32 %v3056, %v3406
    %v3592 = vadd.f32 %v3057, %v3409
    %v3593 = vadd.f32 %v3058, %v3412
    %v3594 = vadd.f32 %v3059, %v3415
    %v3595 = vadd.f32 %v3060, %v3418
    %v3596 = vadd.f32 %v3061, %v3421
    %v3597 = vadd.f32 %v3062, %v3424
    %v3598 = vadd.f32 %v3063, %v3427
    %v3599 = vadd.f32 %v3064, %v3430
    %v3600 = vadd.f32 %v3065, %v3433
    %v3601 = vadd.f32 %v3066, %v3436
    %v3602 = vadd.f32 %v3067, %v3439
    %v3603 = vadd.f32 %v3068, %v3442
    %v3604 = vadd.f32 %v3069, %v3445
    %v3605 = vadd.f32 %v3070, %v3448
    %v3606 = vadd.f32 %v3071, %v3451
    %v3607 = vadd.f32 %v3072, %v3454
    %v3608 = vadd.f32 %v3073, %v3457
    %v3609 = vadd.f32 %v3074, %v3460
    %v3610 = vadd.f32 %v3075, %v3463
    %v3611 = vadd.f32 %v3076, %v3466
    %v3612 = vadd.f32 %v3077, %v3469
    %v3613 = vadd.f32 %v3078, %v3472
    %v3614 = vadd.f32 %v3079, %v3475
    %v3615 = vadd.f32 %v3080, %v3478
    %v3616 = vadd.f32 %v3081, %v3481
    %v3617 = vadd.f32 %v3082, %v3484
    %v3618 = vadd.f32 %v3083, %v3487
    %v3619 = vadd.f32 %v3084, %v3490
    %v3620 = vadd.f32 %v3085, %v3493
    %v3621 = vadd.f32 %v3086, %v3496
    %v3622 = vadd.f32 %v3087, %v3499
    %v3623 = vadd.f32 %v3088, %v3502
    %v3624 = vadd.f32 %v3089, %v3505
    %v3625 = vadd.f32 %v3090, %v3508
    %v3626 = vadd.f32 %v3091, %v3511
    %v3627 = vadd.f32 %v3092, %v3514
    %v3628 = vadd.f32 %v3093, %v3517
    %v3629 = vadd.f32 %v3094, %v3520
    %v3630 = vadd.f32 %v3095, %v3523
    %v3631 = vadd.f32 %v3096, %v3526
    %v3632 = vadd.f32 %v3097, %v3529
    %v3633 = vadd.f32 %v3098, %v3532
    %v3634 = vadd.f32 %v3099, %v3535
    %v3635 = vadd.f32 %v3100, %v3538
    %v3636 = vadd.f32 %v3101, %v3541
    %v3637 = vadd.f32 %v3102, %v3544
    %v3638 = vadd.f32 %v3103, %v3547
    %v3639 = vadd.f32 %v3104, %v3550
    %v3640 = vadd.f32 %v3105, %v3553
    %v3641 = vadd.f32 %v3106, %v3556
    %v3642 = vadd.f32 %v3107, %v3559
    %v3643 = vadd.f32 %v3108, %v3562
    %v3644 = vadd.f32 %v3109, %v3565
    %v3645 = vadd.f32 %v3110, %v3568
    %v3646 = vadd.f32 %v3111, %v3571
    %v3647 = vadd.f32 %v3112, %v3574
    %v3648 = vadd.f32 %v3113, %v3577
    %v3649 = vadd.f32 %v3114, %v3580
    %v3650 = vadd.f32 %v3115, %v3583
    %v3651 = vadd.f32 %v3116, %v3586
    %v3652 = vld [vmem:[%s3117 + $0x1] sm:$0xff]
    %v3653 = vld [vmem:[%s3117 + $0x9] sm:$0xff]
    %v3654 = vld [vmem:[%s3117 + $0x19] sm:$0xff]
    %v3655 = vld [vmem:[%s3117 + $0x21] sm:$0xff]
    %v3656 = vld [vmem:[%s3117 + $0x31] sm:$0xff]
    %v3657 = vld [vmem:[%s3117 + $0x39] sm:$0xff]
    %v3658 = vld [vmem:[%s3117 + $0x49] sm:$0xff]
    %v3659 = vld [vmem:[%s3117 + $0x51] sm:$0xff]
    %v3660 = vld [vmem:[%s3117 + $0x61] sm:$0xff]
    %v3661 = vld [vmem:[%s3117 + $0x69] sm:$0xff]
    %v3662 = vld [vmem:[%s3117 + $0x79] sm:$0xff]
    %v3663 = vld [vmem:[%s3117 + $0x81] sm:$0xff]
    %v3664 = vld [vmem:[%s3117 + $0x91] sm:$0xff]
    %v3665 = vld [vmem:[%s3117 + $0x99] sm:$0xff]
    %v3666 = vld [vmem:[%s3117 + $0xa9] sm:$0xff]
    %v3667 = vld [vmem:[%s3117 + $0xb1] sm:$0xff]
    %v3668 = vld [vmem:[%s3117 + $0xc1] sm:$0xff]
    %v3669 = vld [vmem:[%s3117 + $0xc9] sm:$0xff]
    %v3670 = vld [vmem:[%s3117 + $0xd9] sm:$0xff]
    %v3671 = vld [vmem:[%s3117 + $0xe1] sm:$0xff]
    %v3672 = vld [vmem:[%s3117 + $0xf1] sm:$0xff]
    %v3673 = vld [vmem:[%s3117 + $0xf9] sm:$0xff]
    %v3674 = vld [vmem:[%s3117 + $0x109] sm:$0xff]
    %v3675 = vld [vmem:[%s3117 + $0x111] sm:$0xff]
    %v3676 = vld [vmem:[%s3117 + $0x121] sm:$0xff]
    %v3677 = vld [vmem:[%s3117 + $0x129] sm:$0xff]
    %v3678 = vld [vmem:[%s3117 + $0x139] sm:$0xff]
    %v3679 = vld [vmem:[%s3117 + $0x141] sm:$0xff]
    %v3680 = vld [vmem:[%s3117 + $0x151] sm:$0xff]
    %v3681 = vld [vmem:[%s3117 + $0x159] sm:$0xff]
    %v3682 = vld [vmem:[%s3117 + $0x169] sm:$0xff]
    %v3683 = vld [vmem:[%s3117 + $0x171] sm:$0xff]
    %v3684 = vld [vmem:[%s3117 + $0x1b1] sm:$0xff]
    %v3685 = vld [vmem:[%s3117 + $0x1b9] sm:$0xff]
    %v3686 = vld [vmem:[%s3117 + $0x1c9] sm:$0xff]
    %v3687 = vld [vmem:[%s3117 + $0x1d1] sm:$0xff]
    %v3688 = vld [vmem:[%s3117 + $0x1e1] sm:$0xff]
    %v3689 = vld [vmem:[%s3117 + $0x1e9] sm:$0xff]
    %v3690 = vld [vmem:[%s3117 + $0x1f9] sm:$0xff]
    %v3691 = vld [vmem:[%s3117 + $0x201] sm:$0xff]
    %v3692 = vld [vmem:[%s3117 + $0x211] sm:$0xff]
    %v3693 = vld [vmem:[%s3117 + $0x219] sm:$0xff]
    %v3694 = vld [vmem:[%s3117 + $0x229] sm:$0xff]
    %v3695 = vld [vmem:[%s3117 + $0x231] sm:$0xff]
    %v3696 = vld [vmem:[%s3117 + $0x241] sm:$0xff]
    %v3697 = vld [vmem:[%s3117 + $0x249] sm:$0xff]
    %v3698 = vld [vmem:[%s3117 + $0x259] sm:$0xff]
    %v3699 = vld [vmem:[%s3117 + $0x261] sm:$0xff]
    %v3700 = vld [vmem:[%s3117 + $0x271] sm:$0xff]
    %v3701 = vld [vmem:[%s3117 + $0x279] sm:$0xff]
    %v3702 = vld [vmem:[%s3117 + $0x289] sm:$0xff]
    %v3703 = vld [vmem:[%s3117 + $0x291] sm:$0xff]
    %v3704 = vld [vmem:[%s3117 + $0x2a1] sm:$0xff]
    %v3705 = vld [vmem:[%s3117 + $0x2a9] sm:$0xff]
    %v3706 = vld [vmem:[%s3117 + $0x2b9] sm:$0xff]
    %v3707 = vld [vmem:[%s3117 + $0x2c1] sm:$0xff]
    %v3708 = vld [vmem:[%s3117 + $0x2d1] sm:$0xff]
    %v3709 = vld [vmem:[%s3117 + $0x2d9] sm:$0xff]
    %v3710 = vld [vmem:[%s3117 + $0x2e9] sm:$0xff]
    %v3711 = vld [vmem:[%s3117 + $0x2f1] sm:$0xff]
    %v3712 = vld [vmem:[%s3117 + $0x301] sm:$0xff]
    %v3713 = vld [vmem:[%s3117 + $0x309] sm:$0xff]
    %v3714 = vld [vmem:[%s3117 + $0x319] sm:$0xff]
    %v3715 = vld [vmem:[%s3117 + $0x321] sm:$0xff]
    %s3716 = scalar_lea.vmem %s1, 28
    %v3717 = vld [vmem:[%s3716] sm:$0x7]
    %v3719 = vsel %vm170, %v3652, 0
    %v3722 = vsel %vm170, %v3653, 0
    %v3725 = vsel %vm170, %v3654, 0
    %v3728 = vsel %vm170, %v3655, 0
    %v3731 = vsel %vm170, %v3656, 0
    %v3734 = vsel %vm170, %v3657, 0
    %v3737 = vsel %vm170, %v3658, 0
    %v3740 = vsel %vm170, %v3659, 0
    %v3743 = vsel %vm170, %v3660, 0
    %v3746 = vsel %vm170, %v3661, 0
    %v3749 = vsel %vm170, %v3662, 0
    %v3752 = vsel %vm170, %v3663, 0
    %v3755 = vsel %vm170, %v3664, 0
    %v3758 = vsel %vm170, %v3665, 0
    %v3761 = vsel %vm170, %v3666, 0
    %v3764 = vsel %vm170, %v3667, 0
    %v3767 = vsel %vm170, %v3668, 0
    %v3770 = vsel %vm170, %v3669, 0
    %v3773 = vsel %vm170, %v3670, 0
    %v3776 = vsel %vm170, %v3671, 0
    %v3779 = vsel %vm170, %v3672, 0
    %v3782 = vsel %vm170, %v3673, 0
    %v3785 = vsel %vm170, %v3674, 0
    %v3788 = vsel %vm170, %v3675, 0
    %v3791 = vsel %vm170, %v3676, 0
    %v3794 = vsel %vm170, %v3677, 0
    %v3797 = vsel %vm170, %v3678, 0
    %v3800 = vsel %vm170, %v3679, 0
    %v3803 = vsel %vm170, %v3680, 0
    %v3806 = vsel %vm170, %v3681, 0
    %v3809 = vsel %vm170, %v3682, 0
    %v3812 = vsel %vm170, %v3683, 0
    %v3815 = vsel %vm170, %v3684, 0
    %v3818 = vsel %vm170, %v3685, 0
    %v3821 = vsel %vm170, %v3686, 0
    %v3824 = vsel %vm170, %v3687, 0
    %v3827 = vsel %vm170, %v3688, 0
    %v3830 = vsel %vm170, %v3689, 0
    %v3833 = vsel %vm170, %v3690, 0
    %v3836 = vsel %vm170, %v3691, 0
    %v3839 = vsel %vm170, %v3692, 0
    %v3842 = vsel %vm170, %v3693, 0
    %v3845 = vsel %vm170, %v3694, 0
    %v3848 = vsel %vm170, %v3695, 0
    %v3851 = vsel %vm170, %v3696, 0
    %v3854 = vsel %vm170, %v3697, 0
    %v3857 = vsel %vm170, %v3698, 0
    %v3860 = vsel %vm170, %v3699, 0
    %v3863 = vsel %vm170, %v3700, 0
    %v3866 = vsel %vm170, %v3701, 0
    %v3869 = vsel %vm170, %v3702, 0
    %v3872 = vsel %vm170, %v3703, 0
    %v3875 = vsel %vm170, %v3704, 0
    %v3878 = vsel %vm170, %v3705, 0
    %v3881 = vsel %vm170, %v3706, 0
    %v3884 = vsel %vm170, %v3707, 0
    %v3887 = vsel %vm170, %v3708, 0
    %v3890 = vsel %vm170, %v3709, 0
    %v3893 = vsel %vm170, %v3710, 0
    %v3896 = vsel %vm170, %v3711, 0
    %v3899 = vsel %vm170, %v3712, 0
    %v3902 = vsel %vm170, %v3713, 0
    %v3905 = vsel %vm170, %v3714, 0
    %v3908 = vsel %vm170, %v3715, 0
    %v3911 = vsel %vm363, %v3717, 0
    %3913 = vmatpush.msra.mxu0 0.0
    %3914 = vmatpush.msra.mxu0 0.0
    %3915 = vmatpush.msra.mxu0 0.0
    %3916 = vmatpush.msra.mxu0 0.0
    %3917 = vmatpush.msra.mxu0 0.0
    %3918 = vmatpush.msra.mxu0 0.0
    %3919 = vmatpush.msra.mxu0 0.0
    %3920 = vmatpush.msra.mxu0 0.0
    %3921 = vmatpush.msra.mxu0 0.0
    %3922 = vmatpush.msra.mxu0 0.0
    %3923 = vmatpush.msra.mxu0 0.0
    %3924 = vmatpush.msra.mxu0 0.0
    %3925 = vmatpush.msra.mxu0 0.0
    %3926 = vmatpush.msra.mxu0 0.0
    %3927 = vmatpush.msra.mxu0 0.0
    %3928 = vmatpush.msra.mxu0 %v3911
    %3929 = vmatmul.f32.gmra.mxu0 %v3719
    %v3930 = vpop.f32.mrf.mxu0
    %v3931 = vadd.f32 0.0, %v3930
    %3932 = vmatmul.f32.gmra.mxu0 %v3722
    %v3933 = vpop.f32.mrf.mxu0
    %v3934 = vadd.f32 0.0, %v3933
    %3935 = vmatmul.f32.gmra.mxu0 %v3725
    %v3936 = vpop.f32.mrf.mxu0
    %v3937 = vadd.f32 0.0, %v3936
    %3938 = vmatmul.f32.gmra.mxu0 %v3728
    %v3939 = vpop.f32.mrf.mxu0
    %v3940 = vadd.f32 0.0, %v3939
    %3941 = vmatmul.f32.gmra.mxu0 %v3731
    %v3942 = vpop.f32.mrf.mxu0
    %v3943 = vadd.f32 0.0, %v3942
    %3944 = vmatmul.f32.gmra.mxu0 %v3734
    %v3945 = vpop.f32.mrf.mxu0
    %v3946 = vadd.f32 0.0, %v3945
    %3947 = vmatmul.f32.gmra.mxu0 %v3737
    %v3948 = vpop.f32.mrf.mxu0
    %v3949 = vadd.f32 0.0, %v3948
    %3950 = vmatmul.f32.gmra.mxu0 %v3740
    %v3951 = vpop.f32.mrf.mxu0
    %v3952 = vadd.f32 0.0, %v3951
    %3953 = vmatmul.f32.gmra.mxu0 %v3743
    %v3954 = vpop.f32.mrf.mxu0
    %v3955 = vadd.f32 0.0, %v3954
    %3956 = vmatmul.f32.gmra.mxu0 %v3746
    %v3957 = vpop.f32.mrf.mxu0
    %v3958 = vadd.f32 0.0, %v3957
    %3959 = vmatmul.f32.gmra.mxu0 %v3749
    %v3960 = vpop.f32.mrf.mxu0
    %v3961 = vadd.f32 0.0, %v3960
    %3962 = vmatmul.f32.gmra.mxu0 %v3752
    %v3963 = vpop.f32.mrf.mxu0
    %v3964 = vadd.f32 0.0, %v3963
    %3965 = vmatmul.f32.gmra.mxu0 %v3755
    %v3966 = vpop.f32.mrf.mxu0
    %v3967 = vadd.f32 0.0, %v3966
    %3968 = vmatmul.f32.gmra.mxu0 %v3758
    %v3969 = vpop.f32.mrf.mxu0
    %v3970 = vadd.f32 0.0, %v3969
    %3971 = vmatmul.f32.gmra.mxu0 %v3761
    %v3972 = vpop.f32.mrf.mxu0
    %v3973 = vadd.f32 0.0, %v3972
    %3974 = vmatmul.f32.gmra.mxu0 %v3764
    %v3975 = vpop.f32.mrf.mxu0
    %v3976 = vadd.f32 0.0, %v3975
    %3977 = vmatmul.f32.gmra.mxu0 %v3767
    %v3978 = vpop.f32.mrf.mxu0
    %v3979 = vadd.f32 0.0, %v3978
    %3980 = vmatmul.f32.gmra.mxu0 %v3770
    %v3981 = vpop.f32.mrf.mxu0
    %v3982 = vadd.f32 0.0, %v3981
    %3983 = vmatmul.f32.gmra.mxu0 %v3773
    %v3984 = vpop.f32.mrf.mxu0
    %v3985 = vadd.f32 0.0, %v3984
    %3986 = vmatmul.f32.gmra.mxu0 %v3776
    %v3987 = vpop.f32.mrf.mxu0
    %v3988 = vadd.f32 0.0, %v3987
    %3989 = vmatmul.f32.gmra.mxu0 %v3779
    %v3990 = vpop.f32.mrf.mxu0
    %v3991 = vadd.f32 0.0, %v3990
    %3992 = vmatmul.f32.gmra.mxu0 %v3782
    %v3993 = vpop.f32.mrf.mxu0
    %v3994 = vadd.f32 0.0, %v3993
    %3995 = vmatmul.f32.gmra.mxu0 %v3785
    %v3996 = vpop.f32.mrf.mxu0
    %v3997 = vadd.f32 0.0, %v3996
    %3998 = vmatmul.f32.gmra.mxu0 %v3788
    %v3999 = vpop.f32.mrf.mxu0
    %v4000 = vadd.f32 0.0, %v3999
    %4001 = vmatmul.f32.gmra.mxu0 %v3791
    %v4002 = vpop.f32.mrf.mxu0
    %v4003 = vadd.f32 0.0, %v4002
    %4004 = vmatmul.f32.gmra.mxu0 %v3794
    %v4005 = vpop.f32.mrf.mxu0
    %v4006 = vadd.f32 0.0, %v4005
    %4007 = vmatmul.f32.gmra.mxu0 %v3797
    %v4008 = vpop.f32.mrf.mxu0
    %v4009 = vadd.f32 0.0, %v4008
    %4010 = vmatmul.f32.gmra.mxu0 %v3800
    %v4011 = vpop.f32.mrf.mxu0
    %v4012 = vadd.f32 0.0, %v4011
    %4013 = vmatmul.f32.gmra.mxu0 %v3803
    %v4014 = vpop.f32.mrf.mxu0
    %v4015 = vadd.f32 0.0, %v4014
    %4016 = vmatmul.f32.gmra.mxu0 %v3806
    %v4017 = vpop.f32.mrf.mxu0
    %v4018 = vadd.f32 0.0, %v4017
    %4019 = vmatmul.f32.gmra.mxu0 %v3809
    %v4020 = vpop.f32.mrf.mxu0
    %v4021 = vadd.f32 0.0, %v4020
    %4022 = vmatmul.f32.gmra.mxu0 %v3812
    %v4023 = vpop.f32.mrf.mxu0
    %v4024 = vadd.f32 0.0, %v4023
    %4025 = vmatmul.f32.gmra.mxu0 %v3815
    %v4026 = vpop.f32.mrf.mxu0
    %v4027 = vadd.f32 0.0, %v4026
    %4028 = vmatmul.f32.gmra.mxu0 %v3818
    %v4029 = vpop.f32.mrf.mxu0
    %v4030 = vadd.f32 0.0, %v4029
    %4031 = vmatmul.f32.gmra.mxu0 %v3821
    %v4032 = vpop.f32.mrf.mxu0
    %v4033 = vadd.f32 0.0, %v4032
    %4034 = vmatmul.f32.gmra.mxu0 %v3824
    %v4035 = vpop.f32.mrf.mxu0
    %v4036 = vadd.f32 0.0, %v4035
    %4037 = vmatmul.f32.gmra.mxu0 %v3827
    %v4038 = vpop.f32.mrf.mxu0
    %v4039 = vadd.f32 0.0, %v4038
    %4040 = vmatmul.f32.gmra.mxu0 %v3830
    %v4041 = vpop.f32.mrf.mxu0
    %v4042 = vadd.f32 0.0, %v4041
    %4043 = vmatmul.f32.gmra.mxu0 %v3833
    %v4044 = vpop.f32.mrf.mxu0
    %v4045 = vadd.f32 0.0, %v4044
    %4046 = vmatmul.f32.gmra.mxu0 %v3836
    %v4047 = vpop.f32.mrf.mxu0
    %v4048 = vadd.f32 0.0, %v4047
    %4049 = vmatmul.f32.gmra.mxu0 %v3839
    %v4050 = vpop.f32.mrf.mxu0
    %v4051 = vadd.f32 0.0, %v4050
    %4052 = vmatmul.f32.gmra.mxu0 %v3842
    %v4053 = vpop.f32.mrf.mxu0
    %v4054 = vadd.f32 0.0, %v4053
    %4055 = vmatmul.f32.gmra.mxu0 %v3845
    %v4056 = vpop.f32.mrf.mxu0
    %v4057 = vadd.f32 0.0, %v4056
    %4058 = vmatmul.f32.gmra.mxu0 %v3848
    %v4059 = vpop.f32.mrf.mxu0
    %v4060 = vadd.f32 0.0, %v4059
    %4061 = vmatmul.f32.gmra.mxu0 %v3851
    %v4062 = vpop.f32.mrf.mxu0
    %v4063 = vadd.f32 0.0, %v4062
    %4064 = vmatmul.f32.gmra.mxu0 %v3854
    %v4065 = vpop.f32.mrf.mxu0
    %v4066 = vadd.f32 0.0, %v4065
    %4067 = vmatmul.f32.gmra.mxu0 %v3857
    %v4068 = vpop.f32.mrf.mxu0
    %v4069 = vadd.f32 0.0, %v4068
    %4070 = vmatmul.f32.gmra.mxu0 %v3860
    %v4071 = vpop.f32.mrf.mxu0
    %v4072 = vadd.f32 0.0, %v4071
    %4073 = vmatmul.f32.gmra.mxu0 %v3863
    %v4074 = vpop.f32.mrf.mxu0
    %v4075 = vadd.f32 0.0, %v4074
    %4076 = vmatmul.f32.gmra.mxu0 %v3866
    %v4077 = vpop.f32.mrf.mxu0
    %v4078 = vadd.f32 0.0, %v4077
    %4079 = vmatmul.f32.gmra.mxu0 %v3869
    %v4080 = vpop.f32.mrf.mxu0
    %v4081 = vadd.f32 0.0, %v4080
    %4082 = vmatmul.f32.gmra.mxu0 %v3872
    %v4083 = vpop.f32.mrf.mxu0
    %v4084 = vadd.f32 0.0, %v4083
    %4085 = vmatmul.f32.gmra.mxu0 %v3875
    %v4086 = vpop.f32.mrf.mxu0
    %v4087 = vadd.f32 0.0, %v4086
    %4088 = vmatmul.f32.gmra.mxu0 %v3878
    %v4089 = vpop.f32.mrf.mxu0
    %v4090 = vadd.f32 0.0, %v4089
    %4091 = vmatmul.f32.gmra.mxu0 %v3881
    %v4092 = vpop.f32.mrf.mxu0
    %v4093 = vadd.f32 0.0, %v4092
    %4094 = vmatmul.f32.gmra.mxu0 %v3884
    %v4095 = vpop.f32.mrf.mxu0
    %v4096 = vadd.f32 0.0, %v4095
    %4097 = vmatmul.f32.gmra.mxu0 %v3887
    %v4098 = vpop.f32.mrf.mxu0
    %v4099 = vadd.f32 0.0, %v4098
    %4100 = vmatmul.f32.gmra.mxu0 %v3890
    %v4101 = vpop.f32.mrf.mxu0
    %v4102 = vadd.f32 0.0, %v4101
    %4103 = vmatmul.f32.gmra.mxu0 %v3893
    %v4104 = vpop.f32.mrf.mxu0
    %v4105 = vadd.f32 0.0, %v4104
    %4106 = vmatmul.f32.gmra.mxu0 %v3896
    %v4107 = vpop.f32.mrf.mxu0
    %v4108 = vadd.f32 0.0, %v4107
    %4109 = vmatmul.f32.gmra.mxu0 %v3899
    %v4110 = vpop.f32.mrf.mxu0
    %v4111 = vadd.f32 0.0, %v4110
    %4112 = vmatmul.f32.gmra.mxu0 %v3902
    %v4113 = vpop.f32.mrf.mxu0
    %v4114 = vadd.f32 0.0, %v4113
    %4115 = vmatmul.f32.gmra.mxu0 %v3905
    %v4116 = vpop.f32.mrf.mxu0
    %v4117 = vadd.f32 0.0, %v4116
    %4118 = vmatmul.f32.gmra.mxu0 %v3908
    %v4119 = vpop.f32.mrf.mxu0
    %v4120 = vadd.f32 0.0, %v4119
    %4121 = vdwg.mxu0
    %v4122 = vadd.f32 %v3588, %v3931
    %v4123 = vadd.f32 %v3589, %v3934
    %v4124 = vadd.f32 %v3590, %v3937
    %v4125 = vadd.f32 %v3591, %v3940
    %v4126 = vadd.f32 %v3592, %v3943
    %v4127 = vadd.f32 %v3593, %v3946
    %v4128 = vadd.f32 %v3594, %v3949
    %v4129 = vadd.f32 %v3595, %v3952
    %v4130 = vadd.f32 %v3596, %v3955
    %v4131 = vadd.f32 %v3597, %v3958
    %v4132 = vadd.f32 %v3598, %v3961
    %v4133 = vadd.f32 %v3599, %v3964
    %v4134 = vadd.f32 %v3600, %v3967
    %v4135 = vadd.f32 %v3601, %v3970
    %v4136 = vadd.f32 %v3602, %v3973
    %v4137 = vadd.f32 %v3603, %v3976
    %v4138 = vadd.f32 %v3604, %v3979
    %v4139 = vadd.f32 %v3605, %v3982
    %v4140 = vadd.f32 %v3606, %v3985
    %v4141 = vadd.f32 %v3607, %v3988
    %v4142 = vadd.f32 %v3608, %v3991
    %v4143 = vadd.f32 %v3609, %v3994
    %v4144 = vadd.f32 %v3610, %v3997
    %v4145 = vadd.f32 %v3611, %v4000
    %v4146 = vadd.f32 %v3612, %v4003
    %v4147 = vadd.f32 %v3613, %v4006
    %v4148 = vadd.f32 %v3614, %v4009
    %v4149 = vadd.f32 %v3615, %v4012
    %v4150 = vadd.f32 %v3616, %v4015
    %v4151 = vadd.f32 %v3617, %v4018
    %v4152 = vadd.f32 %v3618, %v4021
    %v4153 = vadd.f32 %v3619, %v4024
    %v4154 = vadd.f32 %v3620, %v4027
    %v4155 = vadd.f32 %v3621, %v4030
    %v4156 = vadd.f32 %v3622, %v4033
    %v4157 = vadd.f32 %v3623, %v4036
    %v4158 = vadd.f32 %v3624, %v4039
    %v4159 = vadd.f32 %v3625, %v4042
    %v4160 = vadd.f32 %v3626, %v4045
    %v4161 = vadd.f32 %v3627, %v4048
    %v4162 = vadd.f32 %v3628, %v4051
    %v4163 = vadd.f32 %v3629, %v4054
    %v4164 = vadd.f32 %v3630, %v4057
    %v4165 = vadd.f32 %v3631, %v4060
    %v4166 = vadd.f32 %v3632, %v4063
    %v4167 = vadd.f32 %v3633, %v4066
    %v4168 = vadd.f32 %v3634, %v4069
    %v4169 = vadd.f32 %v3635, %v4072
    %v4170 = vadd.f32 %v3636, %v4075
    %v4171 = vadd.f32 %v3637, %v4078
    %v4172 = vadd.f32 %v3638, %v4081
    %v4173 = vadd.f32 %v3639, %v4084
    %v4174 = vadd.f32 %v3640, %v4087
    %v4175 = vadd.f32 %v3641, %v4090
    %v4176 = vadd.f32 %v3642, %v4093
    %v4177 = vadd.f32 %v3643, %v4096
    %v4178 = vadd.f32 %v3644, %v4099
    %v4179 = vadd.f32 %v3645, %v4102
    %v4180 = vadd.f32 %v3646, %v4105
    %v4181 = vadd.f32 %v3647, %v4108
    %v4182 = vadd.f32 %v3648, %v4111
    %v4183 = vadd.f32 %v3649, %v4114
    %v4184 = vadd.f32 %v3650, %v4117
    %v4185 = vadd.f32 %v3651, %v4120
    %v4186 = vld [vmem:[%s3117 + $0x2] sm:$0xff]
    %v4187 = vld [vmem:[%s3117 + $0xa] sm:$0xff]
    %v4188 = vld [vmem:[%s3117 + $0x1a] sm:$0xff]
    %v4189 = vld [vmem:[%s3117 + $0x22] sm:$0xff]
    %v4190 = vld [vmem:[%s3117 + $0x32] sm:$0xff]
    %v4191 = vld [vmem:[%s3117 + $0x3a] sm:$0xff]
    %v4192 = vld [vmem:[%s3117 + $0x4a] sm:$0xff]
    %v4193 = vld [vmem:[%s3117 + $0x52] sm:$0xff]
    %v4194 = vld [vmem:[%s3117 + $0x62] sm:$0xff]
    %v4195 = vld [vmem:[%s3117 + $0x6a] sm:$0xff]
    %v4196 = vld [vmem:[%s3117 + $0x7a] sm:$0xff]
    %v4197 = vld [vmem:[%s3117 + $0x82] sm:$0xff]
    %v4198 = vld [vmem:[%s3117 + $0x92] sm:$0xff]
    %v4199 = vld [vmem:[%s3117 + $0x9a] sm:$0xff]
    %v4200 = vld [vmem:[%s3117 + $0xaa] sm:$0xff]
    %v4201 = vld [vmem:[%s3117 + $0xb2] sm:$0xff]
    %v4202 = vld [vmem:[%s3117 + $0xc2] sm:$0xff]
    %v4203 = vld [vmem:[%s3117 + $0xca] sm:$0xff]
    %v4204 = vld [vmem:[%s3117 + $0xda] sm:$0xff]
    %v4205 = vld [vmem:[%s3117 + $0xe2] sm:$0xff]
    %v4206 = vld [vmem:[%s3117 + $0xf2] sm:$0xff]
    %v4207 = vld [vmem:[%s3117 + $0xfa] sm:$0xff]
    %v4208 = vld [vmem:[%s3117 + $0x10a] sm:$0xff]
    %v4209 = vld [vmem:[%s3117 + $0x112] sm:$0xff]
    %v4210 = vld [vmem:[%s3117 + $0x122] sm:$0xff]
    %v4211 = vld [vmem:[%s3117 + $0x12a] sm:$0xff]
    %v4212 = vld [vmem:[%s3117 + $0x13a] sm:$0xff]
    %v4213 = vld [vmem:[%s3117 + $0x142] sm:$0xff]
    %v4214 = vld [vmem:[%s3117 + $0x152] sm:$0xff]
    %v4215 = vld [vmem:[%s3117 + $0x15a] sm:$0xff]
    %v4216 = vld [vmem:[%s3117 + $0x16a] sm:$0xff]
    %v4217 = vld [vmem:[%s3117 + $0x172] sm:$0xff]
    %v4218 = vld [vmem:[%s3117 + $0x1b2] sm:$0xff]
    %v4219 = vld [vmem:[%s3117 + $0x1ba] sm:$0xff]
    %v4220 = vld [vmem:[%s3117 + $0x1ca] sm:$0xff]
    %v4221 = vld [vmem:[%s3117 + $0x1d2] sm:$0xff]
    %v4222 = vld [vmem:[%s3117 + $0x1e2] sm:$0xff]
    %v4223 = vld [vmem:[%s3117 + $0x1ea] sm:$0xff]
    %v4224 = vld [vmem:[%s3117 + $0x1fa] sm:$0xff]
    %v4225 = vld [vmem:[%s3117 + $0x202] sm:$0xff]
    %v4226 = vld [vmem:[%s3117 + $0x212] sm:$0xff]
    %v4227 = vld [vmem:[%s3117 + $0x21a] sm:$0xff]
    %v4228 = vld [vmem:[%s3117 + $0x22a] sm:$0xff]
    %v4229 = vld [vmem:[%s3117 + $0x232] sm:$0xff]
    %v4230 = vld [vmem:[%s3117 + $0x242] sm:$0xff]
    %v4231 = vld [vmem:[%s3117 + $0x24a] sm:$0xff]
    %v4232 = vld [vmem:[%s3117 + $0x25a] sm:$0xff]
    %v4233 = vld [vmem:[%s3117 + $0x262] sm:$0xff]
    %v4234 = vld [vmem:[%s3117 + $0x272] sm:$0xff]
    %v4235 = vld [vmem:[%s3117 + $0x27a] sm:$0xff]
    %v4236 = vld [vmem:[%s3117 + $0x28a] sm:$0xff]
    %v4237 = vld [vmem:[%s3117 + $0x292] sm:$0xff]
    %v4238 = vld [vmem:[%s3117 + $0x2a2] sm:$0xff]
    %v4239 = vld [vmem:[%s3117 + $0x2aa] sm:$0xff]
    %v4240 = vld [vmem:[%s3117 + $0x2ba] sm:$0xff]
    %v4241 = vld [vmem:[%s3117 + $0x2c2] sm:$0xff]
    %v4242 = vld [vmem:[%s3117 + $0x2d2] sm:$0xff]
    %v4243 = vld [vmem:[%s3117 + $0x2da] sm:$0xff]
    %v4244 = vld [vmem:[%s3117 + $0x2ea] sm:$0xff]
    %v4245 = vld [vmem:[%s3117 + $0x2f2] sm:$0xff]
    %v4246 = vld [vmem:[%s3117 + $0x302] sm:$0xff]
    %v4247 = vld [vmem:[%s3117 + $0x30a] sm:$0xff]
    %v4248 = vld [vmem:[%s3117 + $0x31a] sm:$0xff]
    %v4249 = vld [vmem:[%s3117 + $0x322] sm:$0xff]
    %s4250 = scalar_lea.vmem %s1, 32
    %v4251 = vld [vmem:[%s4250] sm:$0x7]
    %v4253 = vsel %vm170, %v4186, 0
    %v4256 = vsel %vm170, %v4187, 0
    %v4259 = vsel %vm170, %v4188, 0
    %v4262 = vsel %vm170, %v4189, 0
    %v4265 = vsel %vm170, %v4190, 0
    %v4268 = vsel %vm170, %v4191, 0
    %v4271 = vsel %vm170, %v4192, 0
    %v4274 = vsel %vm170, %v4193, 0
    %v4277 = vsel %vm170, %v4194, 0
    %v4280 = vsel %vm170, %v4195, 0
    %v4283 = vsel %vm170, %v4196, 0
    %v4286 = vsel %vm170, %v4197, 0
    %v4289 = vsel %vm170, %v4198, 0
    %v4292 = vsel %vm170, %v4199, 0
    %v4295 = vsel %vm170, %v4200, 0
    %v4298 = vsel %vm170, %v4201, 0
    %v4301 = vsel %vm170, %v4202, 0
    %v4304 = vsel %vm170, %v4203, 0
    %v4307 = vsel %vm170, %v4204, 0
    %v4310 = vsel %vm170, %v4205, 0
    %v4313 = vsel %vm170, %v4206, 0
    %v4316 = vsel %vm170, %v4207, 0
    %v4319 = vsel %vm170, %v4208, 0
    %v4322 = vsel %vm170, %v4209, 0
    %v4325 = vsel %vm170, %v4210, 0
    %v4328 = vsel %vm170, %v4211, 0
    %v4331 = vsel %vm170, %v4212, 0
    %v4334 = vsel %vm170, %v4213, 0
    %v4337 = vsel %vm170, %v4214, 0
    %v4340 = vsel %vm170, %v4215, 0
    %v4343 = vsel %vm170, %v4216, 0
    %v4346 = vsel %vm170, %v4217, 0
    %v4349 = vsel %vm170, %v4218, 0
    %v4352 = vsel %vm170, %v4219, 0
    %v4355 = vsel %vm170, %v4220, 0
    %v4358 = vsel %vm170, %v4221, 0
    %v4361 = vsel %vm170, %v4222, 0
    %v4364 = vsel %vm170, %v4223, 0
    %v4367 = vsel %vm170, %v4224, 0
    %v4370 = vsel %vm170, %v4225, 0
    %v4373 = vsel %vm170, %v4226, 0
    %v4376 = vsel %vm170, %v4227, 0
    %v4379 = vsel %vm170, %v4228, 0
    %v4382 = vsel %vm170, %v4229, 0
    %v4385 = vsel %vm170, %v4230, 0
    %v4388 = vsel %vm170, %v4231, 0
    %v4391 = vsel %vm170, %v4232, 0
    %v4394 = vsel %vm170, %v4233, 0
    %v4397 = vsel %vm170, %v4234, 0
    %v4400 = vsel %vm170, %v4235, 0
    %v4403 = vsel %vm170, %v4236, 0
    %v4406 = vsel %vm170, %v4237, 0
    %v4409 = vsel %vm170, %v4238, 0
    %v4412 = vsel %vm170, %v4239, 0
    %v4415 = vsel %vm170, %v4240, 0
    %v4418 = vsel %vm170, %v4241, 0
    %v4421 = vsel %vm170, %v4242, 0
    %v4424 = vsel %vm170, %v4243, 0
    %v4427 = vsel %vm170, %v4244, 0
    %v4430 = vsel %vm170, %v4245, 0
    %v4433 = vsel %vm170, %v4246, 0
    %v4436 = vsel %vm170, %v4247, 0
    %v4439 = vsel %vm170, %v4248, 0
    %v4442 = vsel %vm170, %v4249, 0
    %v4445 = vsel %vm363, %v4251, 0
    %4447 = vmatpush.msra.mxu0 0.0
    %4448 = vmatpush.msra.mxu0 0.0
    %4449 = vmatpush.msra.mxu0 0.0
    %4450 = vmatpush.msra.mxu0 0.0
    %4451 = vmatpush.msra.mxu0 0.0
    %4452 = vmatpush.msra.mxu0 0.0
    %4453 = vmatpush.msra.mxu0 0.0
    %4454 = vmatpush.msra.mxu0 0.0
    %4455 = vmatpush.msra.mxu0 0.0
    %4456 = vmatpush.msra.mxu0 0.0
    %4457 = vmatpush.msra.mxu0 0.0
    %4458 = vmatpush.msra.mxu0 0.0
    %4459 = vmatpush.msra.mxu0 0.0
    %4460 = vmatpush.msra.mxu0 0.0
    %4461 = vmatpush.msra.mxu0 0.0
    %4462 = vmatpush.msra.mxu0 %v4445
    %4463 = vmatmul.f32.gmra.mxu0 %v4253
    %v4464 = vpop.f32.mrf.mxu0
    %v4465 = vadd.f32 0.0, %v4464
    %4466 = vmatmul.f32.gmra.mxu0 %v4256
    %v4467 = vpop.f32.mrf.mxu0
    %v4468 = vadd.f32 0.0, %v4467
    %4469 = vmatmul.f32.gmra.mxu0 %v4259
    %v4470 = vpop.f32.mrf.mxu0
    %v4471 = vadd.f32 0.0, %v4470
    %4472 = vmatmul.f32.gmra.mxu0 %v4262
    %v4473 = vpop.f32.mrf.mxu0
    %v4474 = vadd.f32 0.0, %v4473
    %4475 = vmatmul.f32.gmra.mxu0 %v4265
    %v4476 = vpop.f32.mrf.mxu0
    %v4477 = vadd.f32 0.0, %v4476
    %4478 = vmatmul.f32.gmra.mxu0 %v4268
    %v4479 = vpop.f32.mrf.mxu0
    %v4480 = vadd.f32 0.0, %v4479
    %4481 = vmatmul.f32.gmra.mxu0 %v4271
    %v4482 = vpop.f32.mrf.mxu0
    %v4483 = vadd.f32 0.0, %v4482
    %4484 = vmatmul.f32.gmra.mxu0 %v4274
    %v4485 = vpop.f32.mrf.mxu0
    %v4486 = vadd.f32 0.0, %v4485
    %4487 = vmatmul.f32.gmra.mxu0 %v4277
    %v4488 = vpop.f32.mrf.mxu0
    %v4489 = vadd.f32 0.0, %v4488
    %4490 = vmatmul.f32.gmra.mxu0 %v4280
    %v4491 = vpop.f32.mrf.mxu0
    %v4492 = vadd.f32 0.0, %v4491
    %4493 = vmatmul.f32.gmra.mxu0 %v4283
    %v4494 = vpop.f32.mrf.mxu0
    %v4495 = vadd.f32 0.0, %v4494
    %4496 = vmatmul.f32.gmra.mxu0 %v4286
    %v4497 = vpop.f32.mrf.mxu0
    %v4498 = vadd.f32 0.0, %v4497
    %4499 = vmatmul.f32.gmra.mxu0 %v4289
    %v4500 = vpop.f32.mrf.mxu0
    %v4501 = vadd.f32 0.0, %v4500
    %4502 = vmatmul.f32.gmra.mxu0 %v4292
    %v4503 = vpop.f32.mrf.mxu0
    %v4504 = vadd.f32 0.0, %v4503
    %4505 = vmatmul.f32.gmra.mxu0 %v4295
    %v4506 = vpop.f32.mrf.mxu0
    %v4507 = vadd.f32 0.0, %v4506
    %4508 = vmatmul.f32.gmra.mxu0 %v4298
    %v4509 = vpop.f32.mrf.mxu0
    %v4510 = vadd.f32 0.0, %v4509
    %4511 = vmatmul.f32.gmra.mxu0 %v4301
    %v4512 = vpop.f32.mrf.mxu0
    %v4513 = vadd.f32 0.0, %v4512
    %4514 = vmatmul.f32.gmra.mxu0 %v4304
    %v4515 = vpop.f32.mrf.mxu0
    %v4516 = vadd.f32 0.0, %v4515
    %4517 = vmatmul.f32.gmra.mxu0 %v4307
    %v4518 = vpop.f32.mrf.mxu0
    %v4519 = vadd.f32 0.0, %v4518
    %4520 = vmatmul.f32.gmra.mxu0 %v4310
    %v4521 = vpop.f32.mrf.mxu0
    %v4522 = vadd.f32 0.0, %v4521
    %4523 = vmatmul.f32.gmra.mxu0 %v4313
    %v4524 = vpop.f32.mrf.mxu0
    %v4525 = vadd.f32 0.0, %v4524
    %4526 = vmatmul.f32.gmra.mxu0 %v4316
    %v4527 = vpop.f32.mrf.mxu0
    %v4528 = vadd.f32 0.0, %v4527
    %4529 = vmatmul.f32.gmra.mxu0 %v4319
    %v4530 = vpop.f32.mrf.mxu0
    %v4531 = vadd.f32 0.0, %v4530
    %4532 = vmatmul.f32.gmra.mxu0 %v4322
    %v4533 = vpop.f32.mrf.mxu0
    %v4534 = vadd.f32 0.0, %v4533
    %4535 = vmatmul.f32.gmra.mxu0 %v4325
    %v4536 = vpop.f32.mrf.mxu0
    %v4537 = vadd.f32 0.0, %v4536
    %4538 = vmatmul.f32.gmra.mxu0 %v4328
    %v4539 = vpop.f32.mrf.mxu0
    %v4540 = vadd.f32 0.0, %v4539
    %4541 = vmatmul.f32.gmra.mxu0 %v4331
    %v4542 = vpop.f32.mrf.mxu0
    %v4543 = vadd.f32 0.0, %v4542
    %4544 = vmatmul.f32.gmra.mxu0 %v4334
    %v4545 = vpop.f32.mrf.mxu0
    %v4546 = vadd.f32 0.0, %v4545
    %4547 = vmatmul.f32.gmra.mxu0 %v4337
    %v4548 = vpop.f32.mrf.mxu0
    %v4549 = vadd.f32 0.0, %v4548
    %4550 = vmatmul.f32.gmra.mxu0 %v4340
    %v4551 = vpop.f32.mrf.mxu0
    %v4552 = vadd.f32 0.0, %v4551
    %4553 = vmatmul.f32.gmra.mxu0 %v4343
    %v4554 = vpop.f32.mrf.mxu0
    %v4555 = vadd.f32 0.0, %v4554
    %4556 = vmatmul.f32.gmra.mxu0 %v4346
    %v4557 = vpop.f32.mrf.mxu0
    %v4558 = vadd.f32 0.0, %v4557
    %4559 = vmatmul.f32.gmra.mxu0 %v4349
    %v4560 = vpop.f32.mrf.mxu0
    %v4561 = vadd.f32 0.0, %v4560
    %4562 = vmatmul.f32.gmra.mxu0 %v4352
    %v4563 = vpop.f32.mrf.mxu0
    %v4564 = vadd.f32 0.0, %v4563
    %4565 = vmatmul.f32.gmra.mxu0 %v4355
    %v4566 = vpop.f32.mrf.mxu0
    %v4567 = vadd.f32 0.0, %v4566
    %4568 = vmatmul.f32.gmra.mxu0 %v4358
    %v4569 = vpop.f32.mrf.mxu0
    %v4570 = vadd.f32 0.0, %v4569
    %4571 = vmatmul.f32.gmra.mxu0 %v4361
    %v4572 = vpop.f32.mrf.mxu0
    %v4573 = vadd.f32 0.0, %v4572
    %4574 = vmatmul.f32.gmra.mxu0 %v4364
    %v4575 = vpop.f32.mrf.mxu0
    %v4576 = vadd.f32 0.0, %v4575
    %4577 = vmatmul.f32.gmra.mxu0 %v4367
    %v4578 = vpop.f32.mrf.mxu0
    %v4579 = vadd.f32 0.0, %v4578
    %4580 = vmatmul.f32.gmra.mxu0 %v4370
    %v4581 = vpop.f32.mrf.mxu0
    %v4582 = vadd.f32 0.0, %v4581
    %4583 = vmatmul.f32.gmra.mxu0 %v4373
    %v4584 = vpop.f32.mrf.mxu0
    %v4585 = vadd.f32 0.0, %v4584
    %4586 = vmatmul.f32.gmra.mxu0 %v4376
    %v4587 = vpop.f32.mrf.mxu0
    %v4588 = vadd.f32 0.0, %v4587
    %4589 = vmatmul.f32.gmra.mxu0 %v4379
    %v4590 = vpop.f32.mrf.mxu0
    %v4591 = vadd.f32 0.0, %v4590
    %4592 = vmatmul.f32.gmra.mxu0 %v4382
    %v4593 = vpop.f32.mrf.mxu0
    %v4594 = vadd.f32 0.0, %v4593
    %4595 = vmatmul.f32.gmra.mxu0 %v4385
    %v4596 = vpop.f32.mrf.mxu0
    %v4597 = vadd.f32 0.0, %v4596
    %4598 = vmatmul.f32.gmra.mxu0 %v4388
    %v4599 = vpop.f32.mrf.mxu0
    %v4600 = vadd.f32 0.0, %v4599
    %4601 = vmatmul.f32.gmra.mxu0 %v4391
    %v4602 = vpop.f32.mrf.mxu0
    %v4603 = vadd.f32 0.0, %v4602
    %4604 = vmatmul.f32.gmra.mxu0 %v4394
    %v4605 = vpop.f32.mrf.mxu0
    %v4606 = vadd.f32 0.0, %v4605
    %4607 = vmatmul.f32.gmra.mxu0 %v4397
    %v4608 = vpop.f32.mrf.mxu0
    %v4609 = vadd.f32 0.0, %v4608
    %4610 = vmatmul.f32.gmra.mxu0 %v4400
    %v4611 = vpop.f32.mrf.mxu0
    %v4612 = vadd.f32 0.0, %v4611
    %4613 = vmatmul.f32.gmra.mxu0 %v4403
    %v4614 = vpop.f32.mrf.mxu0
    %v4615 = vadd.f32 0.0, %v4614
    %4616 = vmatmul.f32.gmra.mxu0 %v4406
    %v4617 = vpop.f32.mrf.mxu0
    %v4618 = vadd.f32 0.0, %v4617
    %4619 = vmatmul.f32.gmra.mxu0 %v4409
    %v4620 = vpop.f32.mrf.mxu0
    %v4621 = vadd.f32 0.0, %v4620
    %4622 = vmatmul.f32.gmra.mxu0 %v4412
    %v4623 = vpop.f32.mrf.mxu0
    %v4624 = vadd.f32 0.0, %v4623
    %4625 = vmatmul.f32.gmra.mxu0 %v4415
    %v4626 = vpop.f32.mrf.mxu0
    %v4627 = vadd.f32 0.0, %v4626
    %4628 = vmatmul.f32.gmra.mxu0 %v4418
    %v4629 = vpop.f32.mrf.mxu0
    %v4630 = vadd.f32 0.0, %v4629
    %4631 = vmatmul.f32.gmra.mxu0 %v4421
    %v4632 = vpop.f32.mrf.mxu0
    %v4633 = vadd.f32 0.0, %v4632
    %4634 = vmatmul.f32.gmra.mxu0 %v4424
    %v4635 = vpop.f32.mrf.mxu0
    %v4636 = vadd.f32 0.0, %v4635
    %4637 = vmatmul.f32.gmra.mxu0 %v4427
    %v4638 = vpop.f32.mrf.mxu0
    %v4639 = vadd.f32 0.0, %v4638
    %4640 = vmatmul.f32.gmra.mxu0 %v4430
    %v4641 = vpop.f32.mrf.mxu0
    %v4642 = vadd.f32 0.0, %v4641
    %4643 = vmatmul.f32.gmra.mxu0 %v4433
    %v4644 = vpop.f32.mrf.mxu0
    %v4645 = vadd.f32 0.0, %v4644
    %4646 = vmatmul.f32.gmra.mxu0 %v4436
    %v4647 = vpop.f32.mrf.mxu0
    %v4648 = vadd.f32 0.0, %v4647
    %4649 = vmatmul.f32.gmra.mxu0 %v4439
    %v4650 = vpop.f32.mrf.mxu0
    %v4651 = vadd.f32 0.0, %v4650
    %4652 = vmatmul.f32.gmra.mxu0 %v4442
    %v4653 = vpop.f32.mrf.mxu0
    %v4654 = vadd.f32 0.0, %v4653
    %4655 = vdwg.mxu0
    %v4656 = vadd.f32 %v4122, %v4465
    %v4657 = vadd.f32 %v4123, %v4468
    %v4658 = vadd.f32 %v4124, %v4471
    %v4659 = vadd.f32 %v4125, %v4474
    %v4660 = vadd.f32 %v4126, %v4477
    %v4661 = vadd.f32 %v4127, %v4480
    %v4662 = vadd.f32 %v4128, %v4483
    %v4663 = vadd.f32 %v4129, %v4486
    %v4664 = vadd.f32 %v4130, %v4489
    %v4665 = vadd.f32 %v4131, %v4492
    %v4666 = vadd.f32 %v4132, %v4495
    %v4667 = vadd.f32 %v4133, %v4498
    %v4668 = vadd.f32 %v4134, %v4501
    %v4669 = vadd.f32 %v4135, %v4504
    %v4670 = vadd.f32 %v4136, %v4507
    %v4671 = vadd.f32 %v4137, %v4510
    %v4672 = vadd.f32 %v4138, %v4513
    %v4673 = vadd.f32 %v4139, %v4516
    %v4674 = vadd.f32 %v4140, %v4519
    %v4675 = vadd.f32 %v4141, %v4522
    %v4676 = vadd.f32 %v4142, %v4525
    %v4677 = vadd.f32 %v4143, %v4528
    %v4678 = vadd.f32 %v4144, %v4531
    %v4679 = vadd.f32 %v4145, %v4534
    %v4680 = vadd.f32 %v4146, %v4537
    %v4681 = vadd.f32 %v4147, %v4540
    %v4682 = vadd.f32 %v4148, %v4543
    %v4683 = vadd.f32 %v4149, %v4546
    %v4684 = vadd.f32 %v4150, %v4549
    %v4685 = vadd.f32 %v4151, %v4552
    %v4686 = vadd.f32 %v4152, %v4555
    %v4687 = vadd.f32 %v4153, %v4558
    %v4688 = vadd.f32 %v4154, %v4561
    %v4689 = vadd.f32 %v4155, %v4564
    %v4690 = vadd.f32 %v4156, %v4567
    %v4691 = vadd.f32 %v4157, %v4570
    %v4692 = vadd.f32 %v4158, %v4573
    %v4693 = vadd.f32 %v4159, %v4576
    %v4694 = vadd.f32 %v4160, %v4579
    %v4695 = vadd.f32 %v4161, %v4582
    %v4696 = vadd.f32 %v4162, %v4585
    %v4697 = vadd.f32 %v4163, %v4588
    %v4698 = vadd.f32 %v4164, %v4591
    %v4699 = vadd.f32 %v4165, %v4594
    %v4700 = vadd.f32 %v4166, %v4597
    %v4701 = vadd.f32 %v4167, %v4600
    %v4702 = vadd.f32 %v4168, %v4603
    %v4703 = vadd.f32 %v4169, %v4606
    %v4704 = vadd.f32 %v4170, %v4609
    %v4705 = vadd.f32 %v4171, %v4612
    %v4706 = vadd.f32 %v4172, %v4615
    %v4707 = vadd.f32 %v4173, %v4618
    %v4708 = vadd.f32 %v4174, %v4621
    %v4709 = vadd.f32 %v4175, %v4624
    %v4710 = vadd.f32 %v4176, %v4627
    %v4711 = vadd.f32 %v4177, %v4630
    %v4712 = vadd.f32 %v4178, %v4633
    %v4713 = vadd.f32 %v4179, %v4636
    %v4714 = vadd.f32 %v4180, %v4639
    %v4715 = vadd.f32 %v4181, %v4642
    %v4716 = vadd.f32 %v4182, %v4645
    %v4717 = vadd.f32 %v4183, %v4648
    %v4718 = vadd.f32 %v4184, %v4651
    %v4719 = vadd.f32 %v4185, %v4654
    %v4720 = vld [vmem:[%s2] sm:$0x1]
    %v4722 = vperm.slane %v4720, 0
    %v4724 = vadd.f32 %v4656, %v4722
    %v4725 = vadd.f32 %v4657, %v4722
    %v4726 = vadd.f32 %v4658, %v4722
    %v4727 = vadd.f32 %v4659, %v4722
    %v4728 = vadd.f32 %v4660, %v4722
    %v4729 = vadd.f32 %v4661, %v4722
    %v4730 = vadd.f32 %v4662, %v4722
    %v4731 = vadd.f32 %v4663, %v4722
    %v4732 = vadd.f32 %v4664, %v4722
    %v4733 = vadd.f32 %v4665, %v4722
    %v4734 = vadd.f32 %v4666, %v4722
    %v4735 = vadd.f32 %v4667, %v4722
    %v4736 = vadd.f32 %v4668, %v4722
    %v4737 = vadd.f32 %v4669, %v4722
    %v4738 = vadd.f32 %v4670, %v4722
    %v4739 = vadd.f32 %v4671, %v4722
    %v4740 = vadd.f32 %v4672, %v4722
    %v4741 = vadd.f32 %v4673, %v4722
    %v4742 = vadd.f32 %v4674, %v4722
    %v4743 = vadd.f32 %v4675, %v4722
    %v4744 = vadd.f32 %v4676, %v4722
    %v4745 = vadd.f32 %v4677, %v4722
    %v4746 = vadd.f32 %v4678, %v4722
    %v4747 = vadd.f32 %v4679, %v4722
    %v4748 = vadd.f32 %v4680, %v4722
    %v4749 = vadd.f32 %v4681, %v4722
    %v4750 = vadd.f32 %v4682, %v4722
    %v4751 = vadd.f32 %v4683, %v4722
    %v4752 = vadd.f32 %v4684, %v4722
    %v4753 = vadd.f32 %v4685, %v4722
    %v4754 = vadd.f32 %v4686, %v4722
    %v4755 = vadd.f32 %v4687, %v4722
    %v4756 = vadd.f32 %v4688, %v4722
    %v4757 = vadd.f32 %v4689, %v4722
    %v4758 = vadd.f32 %v4690, %v4722
    %v4759 = vadd.f32 %v4691, %v4722
    %v4760 = vadd.f32 %v4692, %v4722
    %v4761 = vadd.f32 %v4693, %v4722
    %v4762 = vadd.f32 %v4694, %v4722
    %v4763 = vadd.f32 %v4695, %v4722
    %v4764 = vadd.f32 %v4696, %v4722
    %v4765 = vadd.f32 %v4697, %v4722
    %v4766 = vadd.f32 %v4698, %v4722
    %v4767 = vadd.f32 %v4699, %v4722
    %v4768 = vadd.f32 %v4700, %v4722
    %v4769 = vadd.f32 %v4701, %v4722
    %v4770 = vadd.f32 %v4702, %v4722
    %v4771 = vadd.f32 %v4703, %v4722
    %v4772 = vadd.f32 %v4704, %v4722
    %v4773 = vadd.f32 %v4705, %v4722
    %v4774 = vadd.f32 %v4706, %v4722
    %v4775 = vadd.f32 %v4707, %v4722
    %v4776 = vadd.f32 %v4708, %v4722
    %v4777 = vadd.f32 %v4709, %v4722
    %v4778 = vadd.f32 %v4710, %v4722
    %v4779 = vadd.f32 %v4711, %v4722
    %v4780 = vadd.f32 %v4712, %v4722
    %v4781 = vadd.f32 %v4713, %v4722
    %v4782 = vadd.f32 %v4714, %v4722
    %v4783 = vadd.f32 %v4715, %v4722
    %v4784 = vadd.f32 %v4716, %v4722
    %v4785 = vadd.f32 %v4717, %v4722
    %v4786 = vadd.f32 %v4718, %v4722
    %v4787 = vadd.f32 %v4719, %v4722
    %v4788 = vmax.f32 %v4724, 0.0
    %v4789 = vmax.f32 %v4725, 0.0
    %v4790 = vmax.f32 %v4726, 0.0
    %v4791 = vmax.f32 %v4727, 0.0
    %v4792 = vmax.f32 %v4728, 0.0
    %v4793 = vmax.f32 %v4729, 0.0
    %v4794 = vmax.f32 %v4730, 0.0
    %v4795 = vmax.f32 %v4731, 0.0
    %v4796 = vmax.f32 %v4732, 0.0
    %v4797 = vmax.f32 %v4733, 0.0
    %v4798 = vmax.f32 %v4734, 0.0
    %v4799 = vmax.f32 %v4735, 0.0
    %v4800 = vmax.f32 %v4736, 0.0
    %v4801 = vmax.f32 %v4737, 0.0
    %v4802 = vmax.f32 %v4738, 0.0
    %v4803 = vmax.f32 %v4739, 0.0
    %v4804 = vmax.f32 %v4740, 0.0
    %v4805 = vmax.f32 %v4741, 0.0
    %v4806 = vmax.f32 %v4742, 0.0
    %v4807 = vmax.f32 %v4743, 0.0
    %v4808 = vmax.f32 %v4744, 0.0
    %v4809 = vmax.f32 %v4745, 0.0
    %v4810 = vmax.f32 %v4746, 0.0
    %v4811 = vmax.f32 %v4747, 0.0
    %v4812 = vmax.f32 %v4748, 0.0
    %v4813 = vmax.f32 %v4749, 0.0
    %v4814 = vmax.f32 %v4750, 0.0
    %v4815 = vmax.f32 %v4751, 0.0
    %v4816 = vmax.f32 %v4752, 0.0
    %v4817 = vmax.f32 %v4753, 0.0
    %v4818 = vmax.f32 %v4754, 0.0
    %v4819 = vmax.f32 %v4755, 0.0
    %v4820 = vmax.f32 %v4756, 0.0
    %v4821 = vmax.f32 %v4757, 0.0
    %v4822 = vmax.f32 %v4758, 0.0
    %v4823 = vmax.f32 %v4759, 0.0
    %v4824 = vmax.f32 %v4760, 0.0
    %v4825 = vmax.f32 %v4761, 0.0
    %v4826 = vmax.f32 %v4762, 0.0
    %v4827 = vmax.f32 %v4763, 0.0
    %v4828 = vmax.f32 %v4764, 0.0
    %v4829 = vmax.f32 %v4765, 0.0
    %v4830 = vmax.f32 %v4766, 0.0
    %v4831 = vmax.f32 %v4767, 0.0
    %v4832 = vmax.f32 %v4768, 0.0
    %v4833 = vmax.f32 %v4769, 0.0
    %v4834 = vmax.f32 %v4770, 0.0
    %v4835 = vmax.f32 %v4771, 0.0
    %v4836 = vmax.f32 %v4772, 0.0
    %v4837 = vmax.f32 %v4773, 0.0
    %v4838 = vmax.f32 %v4774, 0.0
    %v4839 = vmax.f32 %v4775, 0.0
    %v4840 = vmax.f32 %v4776, 0.0
    %v4841 = vmax.f32 %v4777, 0.0
    %v4842 = vmax.f32 %v4778, 0.0
    %v4843 = vmax.f32 %v4779, 0.0
    %v4844 = vmax.f32 %v4780, 0.0
    %v4845 = vmax.f32 %v4781, 0.0
    %v4846 = vmax.f32 %v4782, 0.0
    %v4847 = vmax.f32 %v4783, 0.0
    %v4848 = vmax.f32 %v4784, 0.0
    %v4849 = vmax.f32 %v4785, 0.0
    %v4850 = vmax.f32 %v4786, 0.0
    %v4851 = vmax.f32 %v4787, 0.0
    %v4916 = vrot.slane %v4788, 2
    %v4917 = vrot.slane %v4788, 4
    %v4918 = vrot.slane %v4788, 6
    %v4919 = vrot.slane %v4789, 2
    %v4920 = vrot.slane %v4789, 4
    %v4921 = vrot.slane %v4789, 6
    %v4922 = vrot.slane %v4790, 2
    %v4923 = vrot.slane %v4790, 4
    %v4924 = vrot.slane %v4790, 6
    %v4925 = vrot.slane %v4791, 2
    %v4926 = vrot.slane %v4791, 4
    %v4927 = vrot.slane %v4791, 6
    %v4928 = vrot.slane %v4792, 2
    %v4929 = vrot.slane %v4792, 4
    %v4930 = vrot.slane %v4792, 6
    %v4931 = vrot.slane %v4793, 2
    %v4932 = vrot.slane %v4793, 4
    %v4933 = vrot.slane %v4793, 6
    %v4934 = vrot.slane %v4794, 2
    %v4935 = vrot.slane %v4794, 4
    %v4936 = vrot.slane %v4794, 6
    %v4937 = vrot.slane %v4795, 2
    %v4938 = vrot.slane %v4795, 4
    %v4939 = vrot.slane %v4795, 6
    %v4940 = vrot.slane %v4796, 2
    %v4941 = vrot.slane %v4796, 4
    %v4942 = vrot.slane %v4796, 6
    %v4943 = vrot.slane %v4797, 2
    %v4944 = vrot.slane %v4797, 4
    %v4945 = vrot.slane %v4797, 6
    %v4946 = vrot.slane %v4798, 2
    %v4947 = vrot.slane %v4798, 4
    %v4948 = vrot.slane %v4798, 6
    %v4949 = vrot.slane %v4799, 2
    %v4950 = vrot.slane %v4799, 4
    %v4951 = vrot.slane %v4799, 6
    %v4952 = vrot.slane %v4800, 2
    %v4953 = vrot.slane %v4800, 4
    %v4954 = vrot.slane %v4800, 6
    %v4955 = vrot.slane %v4801, 2
    %v4956 = vrot.slane %v4801, 4
    %v4957 = vrot.slane %v4801, 6
    %v4958 = vrot.slane %v4802, 2
    %v4959 = vrot.slane %v4802, 4
    %v4960 = vrot.slane %v4802, 6
    %v4961 = vrot.slane %v4803, 2
    %v4962 = vrot.slane %v4803, 4
    %v4963 = vrot.slane %v4803, 6
    %v4964 = vrot.slane %v4804, 2
    %v4965 = vrot.slane %v4804, 4
    %v4966 = vrot.slane %v4804, 6
    %v4967 = vrot.slane %v4805, 2
    %v4968 = vrot.slane %v4805, 4
    %v4969 = vrot.slane %v4805, 6
    %v4970 = vrot.slane %v4806, 2
    %v4971 = vrot.slane %v4806, 4
    %v4972 = vrot.slane %v4806, 6
    %v4973 = vrot.slane %v4807, 2
    %v4974 = vrot.slane %v4807, 4
    %v4975 = vrot.slane %v4807, 6
    %v4976 = vrot.slane %v4808, 2
    %v4977 = vrot.slane %v4808, 4
    %v4978 = vrot.slane %v4808, 6
    %v4979 = vrot.slane %v4809, 2
    %v4980 = vrot.slane %v4809, 4
    %v4981 = vrot.slane %v4809, 6
    %v4982 = vrot.slane %v4810, 2
    %v4983 = vrot.slane %v4810, 4
    %v4984 = vrot.slane %v4810, 6
    %v4985 = vrot.slane %v4811, 2
    %v4986 = vrot.slane %v4811, 4
    %v4987 = vrot.slane %v4811, 6
    %v4988 = vrot.slane %v4812, 2
    %v4989 = vrot.slane %v4812, 4
    %v4990 = vrot.slane %v4812, 6
    %v4991 = vrot.slane %v4813, 2
    %v4992 = vrot.slane %v4813, 4
    %v4993 = vrot.slane %v4813, 6
    %v4994 = vrot.slane %v4814, 2
    %v4995 = vrot.slane %v4814, 4
    %v4996 = vrot.slane %v4814, 6
    %v4997 = vrot.slane %v4815, 2
    %v4998 = vrot.slane %v4815, 4
    %v4999 = vrot.slane %v4815, 6
    %v5000 = vrot.slane %v4816, 2
    %v5001 = vrot.slane %v4816, 4
    %v5002 = vrot.slane %v4816, 6
    %v5003 = vrot.slane %v4817, 2
    %v5004 = vrot.slane %v4817, 4
    %v5005 = vrot.slane %v4817, 6
    %v5006 = vrot.slane %v4818, 2
    %v5007 = vrot.slane %v4818, 4
    %v5008 = vrot.slane %v4818, 6
    %v5009 = vrot.slane %v4819, 2
    %v5010 = vrot.slane %v4819, 4
    %v5011 = vrot.slane %v4819, 6
    %v5012 = vrot.slane %v4820, 2
    %v5013 = vrot.slane %v4820, 4
    %v5014 = vrot.slane %v4820, 6
    %v5015 = vrot.slane %v4821, 2
    %v5016 = vrot.slane %v4821, 4
    %v5017 = vrot.slane %v4821, 6
    %v5018 = vrot.slane %v4822, 2
    %v5019 = vrot.slane %v4822, 4
    %v5020 = vrot.slane %v4822, 6
    %v5021 = vrot.slane %v4823, 2
    %v5022 = vrot.slane %v4823, 4
    %v5023 = vrot.slane %v4823, 6
    %v5024 = vrot.slane %v4824, 2
    %v5025 = vrot.slane %v4824, 4
    %v5026 = vrot.slane %v4824, 6
    %v5027 = vrot.slane %v4825, 2
    %v5028 = vrot.slane %v4825, 4
    %v5029 = vrot.slane %v4825, 6
    %v5030 = vrot.slane %v4826, 2
    %v5031 = vrot.slane %v4826, 4
    %v5032 = vrot.slane %v4826, 6
    %v5033 = vrot.slane %v4827, 2
    %v5034 = vrot.slane %v4827, 4
    %v5035 = vrot.slane %v4827, 6
    %v5036 = vrot.slane %v4828, 2
    %v5037 = vrot.slane %v4828, 4
    %v5038 = vrot.slane %v4828, 6
    %v5039 = vrot.slane %v4829, 2
    %v5040 = vrot.slane %v4829, 4
    %v5041 = vrot.slane %v4829, 6
    %v5042 = vrot.slane %v4830, 2
    %v5043 = vrot.slane %v4830, 4
    %v5044 = vrot.slane %v4830, 6
    %v5045 = vrot.slane %v4831, 2
    %v5046 = vrot.slane %v4831, 4
    %v5047 = vrot.slane %v4831, 6
    %v5048 = vrot.slane %v4832, 2
    %v5049 = vrot.slane %v4832, 4
    %v5050 = vrot.slane %v4832, 6
    %v5051 = vrot.slane %v4833, 2
    %v5052 = vrot.slane %v4833, 4
    %v5053 = vrot.slane %v4833, 6
    %v5054 = vrot.slane %v4834, 2
    %v5055 = vrot.slane %v4834, 4
    %v5056 = vrot.slane %v4834, 6
    %v5057 = vrot.slane %v4835, 2
    %v5058 = vrot.slane %v4835, 4
    %v5059 = vrot.slane %v4835, 6
    %v5060 = vrot.slane %v4836, 2
    %v5061 = vrot.slane %v4836, 4
    %v5062 = vrot.slane %v4836, 6
    %v5063 = vrot.slane %v4837, 2
    %v5064 = vrot.slane %v4837, 4
    %v5065 = vrot.slane %v4837, 6
    %v5066 = vrot.slane %v4838, 2
    %v5067 = vrot.slane %v4838, 4
    %v5068 = vrot.slane %v4838, 6
    %v5069 = vrot.slane %v4839, 2
    %v5070 = vrot.slane %v4839, 4
    %v5071 = vrot.slane %v4839, 6
    %v5072 = vrot.slane %v4840, 2
    %v5073 = vrot.slane %v4840, 4
    %v5074 = vrot.slane %v4840, 6
    %v5075 = vrot.slane %v4841, 2
    %v5076 = vrot.slane %v4841, 4
    %v5077 = vrot.slane %v4841, 6
    %v5078 = vrot.slane %v4842, 2
    %v5079 = vrot.slane %v4842, 4
    %v5080 = vrot.slane %v4842, 6
    %v5081 = vrot.slane %v4843, 2
    %v5082 = vrot.slane %v4843, 4
    %v5083 = vrot.slane %v4843, 6
    %v5084 = vrot.slane %v4844, 2
    %v5085 = vrot.slane %v4844, 4
    %v5086 = vrot.slane %v4844, 6
    %v5087 = vrot.slane %v4845, 2
    %v5088 = vrot.slane %v4845, 4
    %v5089 = vrot.slane %v4845, 6
    %v5090 = vrot.slane %v4846, 2
    %v5091 = vrot.slane %v4846, 4
    %v5092 = vrot.slane %v4846, 6
    %v5093 = vrot.slane %v4847, 2
    %v5094 = vrot.slane %v4847, 4
    %v5095 = vrot.slane %v4847, 6
    %v5096 = vrot.slane %v4848, 2
    %v5097 = vrot.slane %v4848, 4
    %v5098 = vrot.slane %v4848, 6
    %v5099 = vrot.slane %v4849, 2
    %v5100 = vrot.slane %v4849, 4
    %v5101 = vrot.slane %v4849, 6
    %v5102 = vrot.slane %v4850, 2
    %v5103 = vrot.slane %v4850, 4
    %v5104 = vrot.slane %v4850, 6
    %v5105 = vrot.slane %v4851, 2
    %v5106 = vrot.slane %v4851, 4
    %v5107 = vrot.slane %v4851, 6
    %vm5300 = vcmask 123904
    %v5301 = vsel %vm5300, %v4788, -inf
    %v5302 = vrot.slane %v5301, 4
    %v5303 = vmax.f32 %v5301, %v5302
    %v5304 = vrot.slane %v5303, 2
    %v5305 = vmax.f32 %v5303, %v5304
    %v5306 = vrot.slane %v5305, 1
    %v5307 = vmax.f32 %v5305, %v5306
    %v5308 = vsel %vm5300, %v4916, -inf
    %v5309 = vrot.slane %v5308, 4
    %v5310 = vmax.f32 %v5308, %v5309
    %v5311 = vrot.slane %v5310, 2
    %v5312 = vmax.f32 %v5310, %v5311
    %v5313 = vrot.slane %v5312, 1
    %v5314 = vmax.f32 %v5312, %v5313
    %v5315 = vsel %vm5300, %v4917, -inf
    %v5316 = vrot.slane %v5315, 4
    %v5317 = vmax.f32 %v5315, %v5316
    %v5318 = vrot.slane %v5317, 2
    %v5319 = vmax.f32 %v5317, %v5318
    %v5320 = vrot.slane %v5319, 1
    %v5321 = vmax.f32 %v5319, %v5320
    %v5322 = vsel %vm5300, %v4918, -inf
    %v5323 = vrot.slane %v5322, 4
    %v5324 = vmax.f32 %v5322, %v5323
    %v5325 = vrot.slane %v5324, 2
    %v5326 = vmax.f32 %v5324, %v5325
    %v5327 = vrot.slane %v5326, 1
    %v5328 = vmax.f32 %v5326, %v5327
    %v5329 = vsel %vm5300, %v4789, -inf
    %v5330 = vrot.slane %v5329, 4
    %v5331 = vmax.f32 %v5329, %v5330
    %v5332 = vrot.slane %v5331, 2
    %v5333 = vmax.f32 %v5331, %v5332
    %v5334 = vrot.slane %v5333, 1
    %v5335 = vmax.f32 %v5333, %v5334
    %v5336 = vsel %vm5300, %v4919, -inf
    %v5337 = vrot.slane %v5336, 4
    %v5338 = vmax.f32 %v5336, %v5337
    %v5339 = vrot.slane %v5338, 2
    %v5340 = vmax.f32 %v5338, %v5339
    %v5341 = vrot.slane %v5340, 1
    %v5342 = vmax.f32 %v5340, %v5341
    %v5343 = vsel %vm5300, %v4920, -inf
    %v5344 = vrot.slane %v5343, 4
    %v5345 = vmax.f32 %v5343, %v5344
    %v5346 = vrot.slane %v5345, 2
    %v5347 = vmax.f32 %v5345, %v5346
    %v5348 = vrot.slane %v5347, 1
    %v5349 = vmax.f32 %v5347, %v5348
    %v5350 = vsel %vm5300, %v4921, -inf
    %v5351 = vrot.slane %v5350, 4
    %v5352 = vmax.f32 %v5350, %v5351
    %v5353 = vrot.slane %v5352, 2
    %v5354 = vmax.f32 %v5352, %v5353
    %v5355 = vrot.slane %v5354, 1
    %v5356 = vmax.f32 %v5354, %v5355
    %v5357 = vsel %vm5300, %v4790, -inf
    %v5358 = vrot.slane %v5357, 4
    %v5359 = vmax.f32 %v5357, %v5358
    %v5360 = vrot.slane %v5359, 2
    %v5361 = vmax.f32 %v5359, %v5360
    %v5362 = vrot.slane %v5361, 1
    %v5363 = vmax.f32 %v5361, %v5362
    %v5364 = vsel %vm5300, %v4922, -inf
    %v5365 = vrot.slane %v5364, 4
    %v5366 = vmax.f32 %v5364, %v5365
    %v5367 = vrot.slane %v5366, 2
    %v5368 = vmax.f32 %v5366, %v5367
    %v5369 = vrot.slane %v5368, 1
    %v5370 = vmax.f32 %v5368, %v5369
    %v5371 = vsel %vm5300, %v4923, -inf
    %v5372 = vrot.slane %v5371, 4
    %v5373 = vmax.f32 %v5371, %v5372
    %v5374 = vrot.slane %v5373, 2
    %v5375 = vmax.f32 %v5373, %v5374
    %v5376 = vrot.slane %v5375, 1
    %v5377 = vmax.f32 %v5375, %v5376
    %v5378 = vsel %vm5300, %v4924, -inf
    %v5379 = vrot.slane %v5378, 4
    %v5380 = vmax.f32 %v5378, %v5379
    %v5381 = vrot.slane %v5380, 2
    %v5382 = vmax.f32 %v5380, %v5381
    %v5383 = vrot.slane %v5382, 1
    %v5384 = vmax.f32 %v5382, %v5383
    %v5385 = vsel %vm5300, %v4791, -inf
    %v5386 = vrot.slane %v5385, 4
    %v5387 = vmax.f32 %v5385, %v5386
    %v5388 = vrot.slane %v5387, 2
    %v5389 = vmax.f32 %v5387, %v5388
    %v5390 = vrot.slane %v5389, 1
    %v5391 = vmax.f32 %v5389, %v5390
    %v5392 = vsel %vm5300, %v4925, -inf
    %v5393 = vrot.slane %v5392, 4
    %v5394 = vmax.f32 %v5392, %v5393
    %v5395 = vrot.slane %v5394, 2
    %v5396 = vmax.f32 %v5394, %v5395
    %v5397 = vrot.slane %v5396, 1
    %v5398 = vmax.f32 %v5396, %v5397
    %v5399 = vsel %vm5300, %v4926, -inf
    %v5400 = vrot.slane %v5399, 4
    %v5401 = vmax.f32 %v5399, %v5400
    %v5402 = vrot.slane %v5401, 2
    %v5403 = vmax.f32 %v5401, %v5402
    %v5404 = vrot.slane %v5403, 1
    %v5405 = vmax.f32 %v5403, %v5404
    %v5406 = vsel %vm5300, %v4927, -inf
    %v5407 = vrot.slane %v5406, 4
    %v5408 = vmax.f32 %v5406, %v5407
    %v5409 = vrot.slane %v5408, 2
    %v5410 = vmax.f32 %v5408, %v5409
    %v5411 = vrot.slane %v5410, 1
    %v5412 = vmax.f32 %v5410, %v5411
    %v5413 = vsel %vm5300, %v4792, -inf
    %v5414 = vrot.slane %v5413, 4
    %v5415 = vmax.f32 %v5413, %v5414
    %v5416 = vrot.slane %v5415, 2
    %v5417 = vmax.f32 %v5415, %v5416
    %v5418 = vrot.slane %v5417, 1
    %v5419 = vmax.f32 %v5417, %v5418
    %v5420 = vsel %vm5300, %v4928, -inf
    %v5421 = vrot.slane %v5420, 4
    %v5422 = vmax.f32 %v5420, %v5421
    %v5423 = vrot.slane %v5422, 2
    %v5424 = vmax.f32 %v5422, %v5423
    %v5425 = vrot.slane %v5424, 1
    %v5426 = vmax.f32 %v5424, %v5425
    %v5427 = vsel %vm5300, %v4929, -inf
    %v5428 = vrot.slane %v5427, 4
    %v5429 = vmax.f32 %v5427, %v5428
    %v5430 = vrot.slane %v5429, 2
    %v5431 = vmax.f32 %v5429, %v5430
    %v5432 = vrot.slane %v5431, 1
    %v5433 = vmax.f32 %v5431, %v5432
    %v5434 = vsel %vm5300, %v4930, -inf
    %v5435 = vrot.slane %v5434, 4
    %v5436 = vmax.f32 %v5434, %v5435
    %v5437 = vrot.slane %v5436, 2
    %v5438 = vmax.f32 %v5436, %v5437
    %v5439 = vrot.slane %v5438, 1
    %v5440 = vmax.f32 %v5438, %v5439
    %v5441 = vsel %vm5300, %v4793, -inf
    %v5442 = vrot.slane %v5441, 4
    %v5443 = vmax.f32 %v5441, %v5442
    %v5444 = vrot.slane %v5443, 2
    %v5445 = vmax.f32 %v5443, %v5444
    %v5446 = vrot.slane %v5445, 1
    %v5447 = vmax.f32 %v5445, %v5446
    %v5448 = vsel %vm5300, %v4931, -inf
    %v5449 = vrot.slane %v5448, 4
    %v5450 = vmax.f32 %v5448, %v5449
    %v5451 = vrot.slane %v5450, 2
    %v5452 = vmax.f32 %v5450, %v5451
    %v5453 = vrot.slane %v5452, 1
    %v5454 = vmax.f32 %v5452, %v5453
    %v5455 = vsel %vm5300, %v4932, -inf
    %v5456 = vrot.slane %v5455, 4
    %v5457 = vmax.f32 %v5455, %v5456
    %v5458 = vrot.slane %v5457, 2
    %v5459 = vmax.f32 %v5457, %v5458
    %v5460 = vrot.slane %v5459, 1
    %v5461 = vmax.f32 %v5459, %v5460
    %v5462 = vsel %vm5300, %v4933, -inf
    %v5463 = vrot.slane %v5462, 4
    %v5464 = vmax.f32 %v5462, %v5463
    %v5465 = vrot.slane %v5464, 2
    %v5466 = vmax.f32 %v5464, %v5465
    %v5467 = vrot.slane %v5466, 1
    %v5468 = vmax.f32 %v5466, %v5467
    %v5469 = vsel %vm5300, %v4794, -inf
    %v5470 = vrot.slane %v5469, 4
    %v5471 = vmax.f32 %v5469, %v5470
    %v5472 = vrot.slane %v5471, 2
    %v5473 = vmax.f32 %v5471, %v5472
    %v5474 = vrot.slane %v5473, 1
    %v5475 = vmax.f32 %v5473, %v5474
    %v5476 = vsel %vm5300, %v4934, -inf
    %v5477 = vrot.slane %v5476, 4
    %v5478 = vmax.f32 %v5476, %v5477
    %v5479 = vrot.slane %v5478, 2
    %v5480 = vmax.f32 %v5478, %v5479
    %v5481 = vrot.slane %v5480, 1
    %v5482 = vmax.f32 %v5480, %v5481
    %v5483 = vsel %vm5300, %v4935, -inf
    %v5484 = vrot.slane %v5483, 4
    %v5485 = vmax.f32 %v5483, %v5484
    %v5486 = vrot.slane %v5485, 2
    %v5487 = vmax.f32 %v5485, %v5486
    %v5488 = vrot.slane %v5487, 1
    %v5489 = vmax.f32 %v5487, %v5488
    %v5490 = vsel %vm5300, %v4936, -inf
    %v5491 = vrot.slane %v5490, 4
    %v5492 = vmax.f32 %v5490, %v5491
    %v5493 = vrot.slane %v5492, 2
    %v5494 = vmax.f32 %v5492, %v5493
    %v5495 = vrot.slane %v5494, 1
    %v5496 = vmax.f32 %v5494, %v5495
    %v5497 = vsel %vm5300, %v4795, -inf
    %v5498 = vrot.slane %v5497, 4
    %v5499 = vmax.f32 %v5497, %v5498
    %v5500 = vrot.slane %v5499, 2
    %v5501 = vmax.f32 %v5499, %v5500
    %v5502 = vrot.slane %v5501, 1
    %v5503 = vmax.f32 %v5501, %v5502
    %v5504 = vsel %vm5300, %v4937, -inf
    %v5505 = vrot.slane %v5504, 4
    %v5506 = vmax.f32 %v5504, %v5505
    %v5507 = vrot.slane %v5506, 2
    %v5508 = vmax.f32 %v5506, %v5507
    %v5509 = vrot.slane %v5508, 1
    %v5510 = vmax.f32 %v5508, %v5509
    %v5511 = vsel %vm5300, %v4938, -inf
    %v5512 = vrot.slane %v5511, 4
    %v5513 = vmax.f32 %v5511, %v5512
    %v5514 = vrot.slane %v5513, 2
    %v5515 = vmax.f32 %v5513, %v5514
    %v5516 = vrot.slane %v5515, 1
    %v5517 = vmax.f32 %v5515, %v5516
    %v5518 = vsel %vm5300, %v4939, -inf
    %v5519 = vrot.slane %v5518, 4
    %v5520 = vmax.f32 %v5518, %v5519
    %v5521 = vrot.slane %v5520, 2
    %v5522 = vmax.f32 %v5520, %v5521
    %v5523 = vrot.slane %v5522, 1
    %v5524 = vmax.f32 %v5522, %v5523
    %v5525 = vsel %vm5300, %v4796, -inf
    %v5526 = vrot.slane %v5525, 4
    %v5527 = vmax.f32 %v5525, %v5526
    %v5528 = vrot.slane %v5527, 2
    %v5529 = vmax.f32 %v5527, %v5528
    %v5530 = vrot.slane %v5529, 1
    %v5531 = vmax.f32 %v5529, %v5530
    %v5532 = vsel %vm5300, %v4940, -inf
    %v5533 = vrot.slane %v5532, 4
    %v5534 = vmax.f32 %v5532, %v5533
    %v5535 = vrot.slane %v5534, 2
    %v5536 = vmax.f32 %v5534, %v5535
    %v5537 = vrot.slane %v5536, 1
    %v5538 = vmax.f32 %v5536, %v5537
    %v5539 = vsel %vm5300, %v4941, -inf
    %v5540 = vrot.slane %v5539, 4
    %v5541 = vmax.f32 %v5539, %v5540
    %v5542 = vrot.slane %v5541, 2
    %v5543 = vmax.f32 %v5541, %v5542
    %v5544 = vrot.slane %v5543, 1
    %v5545 = vmax.f32 %v5543, %v5544
    %v5546 = vsel %vm5300, %v4942, -inf
    %v5547 = vrot.slane %v5546, 4
    %v5548 = vmax.f32 %v5546, %v5547
    %v5549 = vrot.slane %v5548, 2
    %v5550 = vmax.f32 %v5548, %v5549
    %v5551 = vrot.slane %v5550, 1
    %v5552 = vmax.f32 %v5550, %v5551
    %v5553 = vsel %vm5300, %v4797, -inf
    %v5554 = vrot.slane %v5553, 4
    %v5555 = vmax.f32 %v5553, %v5554
    %v5556 = vrot.slane %v5555, 2
    %v5557 = vmax.f32 %v5555, %v5556
    %v5558 = vrot.slane %v5557, 1
    %v5559 = vmax.f32 %v5557, %v5558
    %v5560 = vsel %vm5300, %v4943, -inf
    %v5561 = vrot.slane %v5560, 4
    %v5562 = vmax.f32 %v5560, %v5561
    %v5563 = vrot.slane %v5562, 2
    %v5564 = vmax.f32 %v5562, %v5563
    %v5565 = vrot.slane %v5564, 1
    %v5566 = vmax.f32 %v5564, %v5565
    %v5567 = vsel %vm5300, %v4944, -inf
    %v5568 = vrot.slane %v5567, 4
    %v5569 = vmax.f32 %v5567, %v5568
    %v5570 = vrot.slane %v5569, 2
    %v5571 = vmax.f32 %v5569, %v5570
    %v5572 = vrot.slane %v5571, 1
    %v5573 = vmax.f32 %v5571, %v5572
    %v5574 = vsel %vm5300, %v4945, -inf
    %v5575 = vrot.slane %v5574, 4
    %v5576 = vmax.f32 %v5574, %v5575
    %v5577 = vrot.slane %v5576, 2
    %v5578 = vmax.f32 %v5576, %v5577
    %v5579 = vrot.slane %v5578, 1
    %v5580 = vmax.f32 %v5578, %v5579
    %v5581 = vsel %vm5300, %v4798, -inf
    %v5582 = vrot.slane %v5581, 4
    %v5583 = vmax.f32 %v5581, %v5582
    %v5584 = vrot.slane %v5583, 2
    %v5585 = vmax.f32 %v5583, %v5584
    %v5586 = vrot.slane %v5585, 1
    %v5587 = vmax.f32 %v5585, %v5586
    %v5588 = vsel %vm5300, %v4946, -inf
    %v5589 = vrot.slane %v5588, 4
    %v5590 = vmax.f32 %v5588, %v5589
    %v5591 = vrot.slane %v5590, 2
    %v5592 = vmax.f32 %v5590, %v5591
    %v5593 = vrot.slane %v5592, 1
    %v5594 = vmax.f32 %v5592, %v5593
    %v5595 = vsel %vm5300, %v4947, -inf
    %v5596 = vrot.slane %v5595, 4
    %v5597 = vmax.f32 %v5595, %v5596
    %v5598 = vrot.slane %v5597, 2
    %v5599 = vmax.f32 %v5597, %v5598
    %v5600 = vrot.slane %v5599, 1
    %v5601 = vmax.f32 %v5599, %v5600
    %v5602 = vsel %vm5300, %v4948, -inf
    %v5603 = vrot.slane %v5602, 4
    %v5604 = vmax.f32 %v5602, %v5603
    %v5605 = vrot.slane %v5604, 2
    %v5606 = vmax.f32 %v5604, %v5605
    %v5607 = vrot.slane %v5606, 1
    %v5608 = vmax.f32 %v5606, %v5607
    %v5609 = vsel %vm5300, %v4799, -inf
    %v5610 = vrot.slane %v5609, 4
    %v5611 = vmax.f32 %v5609, %v5610
    %v5612 = vrot.slane %v5611, 2
    %v5613 = vmax.f32 %v5611, %v5612
    %v5614 = vrot.slane %v5613, 1
    %v5615 = vmax.f32 %v5613, %v5614
    %v5616 = vsel %vm5300, %v4949, -inf
    %v5617 = vrot.slane %v5616, 4
    %v5618 = vmax.f32 %v5616, %v5617
    %v5619 = vrot.slane %v5618, 2
    %v5620 = vmax.f32 %v5618, %v5619
    %v5621 = vrot.slane %v5620, 1
    %v5622 = vmax.f32 %v5620, %v5621
    %v5623 = vsel %vm5300, %v4950, -inf
    %v5624 = vrot.slane %v5623, 4
    %v5625 = vmax.f32 %v5623, %v5624
    %v5626 = vrot.slane %v5625, 2
    %v5627 = vmax.f32 %v5625, %v5626
    %v5628 = vrot.slane %v5627, 1
    %v5629 = vmax.f32 %v5627, %v5628
    %v5630 = vsel %vm5300, %v4951, -inf
    %v5631 = vrot.slane %v5630, 4
    %v5632 = vmax.f32 %v5630, %v5631
    %v5633 = vrot.slane %v5632, 2
    %v5634 = vmax.f32 %v5632, %v5633
    %v5635 = vrot.slane %v5634, 1
    %v5636 = vmax.f32 %v5634, %v5635
    %v5637 = vsel %vm5300, %v4800, -inf
    %v5638 = vrot.slane %v5637, 4
    %v5639 = vmax.f32 %v5637, %v5638
    %v5640 = vrot.slane %v5639, 2
    %v5641 = vmax.f32 %v5639, %v5640
    %v5642 = vrot.slane %v5641, 1
    %v5643 = vmax.f32 %v5641, %v5642
    %v5644 = vsel %vm5300, %v4952, -inf
    %v5645 = vrot.slane %v5644, 4
    %v5646 = vmax.f32 %v5644, %v5645
    %v5647 = vrot.slane %v5646, 2
    %v5648 = vmax.f32 %v5646, %v5647
    %v5649 = vrot.slane %v5648, 1
    %v5650 = vmax.f32 %v5648, %v5649
    %v5651 = vsel %vm5300, %v4953, -inf
    %v5652 = vrot.slane %v5651, 4
    %v5653 = vmax.f32 %v5651, %v5652
    %v5654 = vrot.slane %v5653, 2
    %v5655 = vmax.f32 %v5653, %v5654
    %v5656 = vrot.slane %v5655, 1
    %v5657 = vmax.f32 %v5655, %v5656
    %v5658 = vsel %vm5300, %v4954, -inf
    %v5659 = vrot.slane %v5658, 4
    %v5660 = vmax.f32 %v5658, %v5659
    %v5661 = vrot.slane %v5660, 2
    %v5662 = vmax.f32 %v5660, %v5661
    %v5663 = vrot.slane %v5662, 1
    %v5664 = vmax.f32 %v5662, %v5663
    %v5665 = vsel %vm5300, %v4801, -inf
    %v5666 = vrot.slane %v5665, 4
    %v5667 = vmax.f32 %v5665, %v5666
    %v5668 = vrot.slane %v5667, 2
    %v5669 = vmax.f32 %v5667, %v5668
    %v5670 = vrot.slane %v5669, 1
    %v5671 = vmax.f32 %v5669, %v5670
    %v5672 = vsel %vm5300, %v4955, -inf
    %v5673 = vrot.slane %v5672, 4
    %v5674 = vmax.f32 %v5672, %v5673
    %v5675 = vrot.slane %v5674, 2
    %v5676 = vmax.f32 %v5674, %v5675
    %v5677 = vrot.slane %v5676, 1
    %v5678 = vmax.f32 %v5676, %v5677
    %v5679 = vsel %vm5300, %v4956, -inf
    %v5680 = vrot.slane %v5679, 4
    %v5681 = vmax.f32 %v5679, %v5680
    %v5682 = vrot.slane %v5681, 2
    %v5683 = vmax.f32 %v5681, %v5682
    %v5684 = vrot.slane %v5683, 1
    %v5685 = vmax.f32 %v5683, %v5684
    %v5686 = vsel %vm5300, %v4957, -inf
    %v5687 = vrot.slane %v5686, 4
    %v5688 = vmax.f32 %v5686, %v5687
    %v5689 = vrot.slane %v5688, 2
    %v5690 = vmax.f32 %v5688, %v5689
    %v5691 = vrot.slane %v5690, 1
    %v5692 = vmax.f32 %v5690, %v5691
    %v5693 = vsel %vm5300, %v4802, -inf
    %v5694 = vrot.slane %v5693, 4
    %v5695 = vmax.f32 %v5693, %v5694
    %v5696 = vrot.slane %v5695, 2
    %v5697 = vmax.f32 %v5695, %v5696
    %v5698 = vrot.slane %v5697, 1
    %v5699 = vmax.f32 %v5697, %v5698
    %v5700 = vsel %vm5300, %v4958, -inf
    %v5701 = vrot.slane %v5700, 4
    %v5702 = vmax.f32 %v5700, %v5701
    %v5703 = vrot.slane %v5702, 2
    %v5704 = vmax.f32 %v5702, %v5703
    %v5705 = vrot.slane %v5704, 1
    %v5706 = vmax.f32 %v5704, %v5705
    %v5707 = vsel %vm5300, %v4959, -inf
    %v5708 = vrot.slane %v5707, 4
    %v5709 = vmax.f32 %v5707, %v5708
    %v5710 = vrot.slane %v5709, 2
    %v5711 = vmax.f32 %v5709, %v5710
    %v5712 = vrot.slane %v5711, 1
    %v5713 = vmax.f32 %v5711, %v5712
    %v5714 = vsel %vm5300, %v4960, -inf
    %v5715 = vrot.slane %v5714, 4
    %v5716 = vmax.f32 %v5714, %v5715
    %v5717 = vrot.slane %v5716, 2
    %v5718 = vmax.f32 %v5716, %v5717
    %v5719 = vrot.slane %v5718, 1
    %v5720 = vmax.f32 %v5718, %v5719
    %v5721 = vsel %vm5300, %v4803, -inf
    %v5722 = vrot.slane %v5721, 4
    %v5723 = vmax.f32 %v5721, %v5722
    %v5724 = vrot.slane %v5723, 2
    %v5725 = vmax.f32 %v5723, %v5724
    %v5726 = vrot.slane %v5725, 1
    %v5727 = vmax.f32 %v5725, %v5726
    %v5728 = vsel %vm5300, %v4961, -inf
    %v5729 = vrot.slane %v5728, 4
    %v5730 = vmax.f32 %v5728, %v5729
    %v5731 = vrot.slane %v5730, 2
    %v5732 = vmax.f32 %v5730, %v5731
    %v5733 = vrot.slane %v5732, 1
    %v5734 = vmax.f32 %v5732, %v5733
    %v5735 = vsel %vm5300, %v4962, -inf
    %v5736 = vrot.slane %v5735, 4
    %v5737 = vmax.f32 %v5735, %v5736
    %v5738 = vrot.slane %v5737, 2
    %v5739 = vmax.f32 %v5737, %v5738
    %v5740 = vrot.slane %v5739, 1
    %v5741 = vmax.f32 %v5739, %v5740
    %v5742 = vsel %vm5300, %v4963, -inf
    %v5743 = vrot.slane %v5742, 4
    %v5744 = vmax.f32 %v5742, %v5743
    %v5745 = vrot.slane %v5744, 2
    %v5746 = vmax.f32 %v5744, %v5745
    %v5747 = vrot.slane %v5746, 1
    %v5748 = vmax.f32 %v5746, %v5747
    %v5749 = vsel %vm5300, %v4804, -inf
    %v5750 = vrot.slane %v5749, 4
    %v5751 = vmax.f32 %v5749, %v5750
    %v5752 = vrot.slane %v5751, 2
    %v5753 = vmax.f32 %v5751, %v5752
    %v5754 = vrot.slane %v5753, 1
    %v5755 = vmax.f32 %v5753, %v5754
    %v5756 = vsel %vm5300, %v4964, -inf
    %v5757 = vrot.slane %v5756, 4
    %v5758 = vmax.f32 %v5756, %v5757
    %v5759 = vrot.slane %v5758, 2
    %v5760 = vmax.f32 %v5758, %v5759
    %v5761 = vrot.slane %v5760, 1
    %v5762 = vmax.f32 %v5760, %v5761
    %v5763 = vsel %vm5300, %v4965, -inf
    %v5764 = vrot.slane %v5763, 4
    %v5765 = vmax.f32 %v5763, %v5764
    %v5766 = vrot.slane %v5765, 2
    %v5767 = vmax.f32 %v5765, %v5766
    %v5768 = vrot.slane %v5767, 1
    %v5769 = vmax.f32 %v5767, %v5768
    %v5770 = vsel %vm5300, %v4966, -inf
    %v5771 = vrot.slane %v5770, 4
    %v5772 = vmax.f32 %v5770, %v5771
    %v5773 = vrot.slane %v5772, 2
    %v5774 = vmax.f32 %v5772, %v5773
    %v5775 = vrot.slane %v5774, 1
    %v5776 = vmax.f32 %v5774, %v5775
    %v5777 = vsel %vm5300, %v4805, -inf
    %v5778 = vrot.slane %v5777, 4
    %v5779 = vmax.f32 %v5777, %v5778
    %v5780 = vrot.slane %v5779, 2
    %v5781 = vmax.f32 %v5779, %v5780
    %v5782 = vrot.slane %v5781, 1
    %v5783 = vmax.f32 %v5781, %v5782
    %v5784 = vsel %vm5300, %v4967, -inf
    %v5785 = vrot.slane %v5784, 4
    %v5786 = vmax.f32 %v5784, %v5785
    %v5787 = vrot.slane %v5786, 2
    %v5788 = vmax.f32 %v5786, %v5787
    %v5789 = vrot.slane %v5788, 1
    %v5790 = vmax.f32 %v5788, %v5789
    %v5791 = vsel %vm5300, %v4968, -inf
    %v5792 = vrot.slane %v5791, 4
    %v5793 = vmax.f32 %v5791, %v5792
    %v5794 = vrot.slane %v5793, 2
    %v5795 = vmax.f32 %v5793, %v5794
    %v5796 = vrot.slane %v5795, 1
    %v5797 = vmax.f32 %v5795, %v5796
    %v5798 = vsel %vm5300, %v4969, -inf
    %v5799 = vrot.slane %v5798, 4
    %v5800 = vmax.f32 %v5798, %v5799
    %v5801 = vrot.slane %v5800, 2
    %v5802 = vmax.f32 %v5800, %v5801
    %v5803 = vrot.slane %v5802, 1
    %v5804 = vmax.f32 %v5802, %v5803
    %v5805 = vsel %vm5300, %v4806, -inf
    %v5806 = vrot.slane %v5805, 4
    %v5807 = vmax.f32 %v5805, %v5806
    %v5808 = vrot.slane %v5807, 2
    %v5809 = vmax.f32 %v5807, %v5808
    %v5810 = vrot.slane %v5809, 1
    %v5811 = vmax.f32 %v5809, %v5810
    %v5812 = vsel %vm5300, %v4970, -inf
    %v5813 = vrot.slane %v5812, 4
    %v5814 = vmax.f32 %v5812, %v5813
    %v5815 = vrot.slane %v5814, 2
    %v5816 = vmax.f32 %v5814, %v5815
    %v5817 = vrot.slane %v5816, 1
    %v5818 = vmax.f32 %v5816, %v5817
    %v5819 = vsel %vm5300, %v4971, -inf
    %v5820 = vrot.slane %v5819, 4
    %v5821 = vmax.f32 %v5819, %v5820
    %v5822 = vrot.slane %v5821, 2
    %v5823 = vmax.f32 %v5821, %v5822
    %v5824 = vrot.slane %v5823, 1
    %v5825 = vmax.f32 %v5823, %v5824
    %v5826 = vsel %vm5300, %v4972, -inf
    %v5827 = vrot.slane %v5826, 4
    %v5828 = vmax.f32 %v5826, %v5827
    %v5829 = vrot.slane %v5828, 2
    %v5830 = vmax.f32 %v5828, %v5829
    %v5831 = vrot.slane %v5830, 1
    %v5832 = vmax.f32 %v5830, %v5831
    %v5833 = vsel %vm5300, %v4807, -inf
    %v5834 = vrot.slane %v5833, 4
    %v5835 = vmax.f32 %v5833, %v5834
    %v5836 = vrot.slane %v5835, 2
    %v5837 = vmax.f32 %v5835, %v5836
    %v5838 = vrot.slane %v5837, 1
    %v5839 = vmax.f32 %v5837, %v5838
    %v5840 = vsel %vm5300, %v4973, -inf
    %v5841 = vrot.slane %v5840, 4
    %v5842 = vmax.f32 %v5840, %v5841
    %v5843 = vrot.slane %v5842, 2
    %v5844 = vmax.f32 %v5842, %v5843
    %v5845 = vrot.slane %v5844, 1
    %v5846 = vmax.f32 %v5844, %v5845
    %v5847 = vsel %vm5300, %v4974, -inf
    %v5848 = vrot.slane %v5847, 4
    %v5849 = vmax.f32 %v5847, %v5848
    %v5850 = vrot.slane %v5849, 2
    %v5851 = vmax.f32 %v5849, %v5850
    %v5852 = vrot.slane %v5851, 1
    %v5853 = vmax.f32 %v5851, %v5852
    %v5854 = vsel %vm5300, %v4975, -inf
    %v5855 = vrot.slane %v5854, 4
    %v5856 = vmax.f32 %v5854, %v5855
    %v5857 = vrot.slane %v5856, 2
    %v5858 = vmax.f32 %v5856, %v5857
    %v5859 = vrot.slane %v5858, 1
    %v5860 = vmax.f32 %v5858, %v5859
    %v5861 = vsel %vm5300, %v4808, -inf
    %v5862 = vrot.slane %v5861, 4
    %v5863 = vmax.f32 %v5861, %v5862
    %v5864 = vrot.slane %v5863, 2
    %v5865 = vmax.f32 %v5863, %v5864
    %v5866 = vrot.slane %v5865, 1
    %v5867 = vmax.f32 %v5865, %v5866
    %v5868 = vsel %vm5300, %v4976, -inf
    %v5869 = vrot.slane %v5868, 4
    %v5870 = vmax.f32 %v5868, %v5869
    %v5871 = vrot.slane %v5870, 2
    %v5872 = vmax.f32 %v5870, %v5871
    %v5873 = vrot.slane %v5872, 1
    %v5874 = vmax.f32 %v5872, %v5873
    %v5875 = vsel %vm5300, %v4977, -inf
    %v5876 = vrot.slane %v5875, 4
    %v5877 = vmax.f32 %v5875, %v5876
    %v5878 = vrot.slane %v5877, 2
    %v5879 = vmax.f32 %v5877, %v5878
    %v5880 = vrot.slane %v5879, 1
    %v5881 = vmax.f32 %v5879, %v5880
    %v5882 = vsel %vm5300, %v4978, -inf
    %v5883 = vrot.slane %v5882, 4
    %v5884 = vmax.f32 %v5882, %v5883
    %v5885 = vrot.slane %v5884, 2
    %v5886 = vmax.f32 %v5884, %v5885
    %v5887 = vrot.slane %v5886, 1
    %v5888 = vmax.f32 %v5886, %v5887
    %v5889 = vsel %vm5300, %v4809, -inf
    %v5890 = vrot.slane %v5889, 4
    %v5891 = vmax.f32 %v5889, %v5890
    %v5892 = vrot.slane %v5891, 2
    %v5893 = vmax.f32 %v5891, %v5892
    %v5894 = vrot.slane %v5893, 1
    %v5895 = vmax.f32 %v5893, %v5894
    %v5896 = vsel %vm5300, %v4979, -inf
    %v5897 = vrot.slane %v5896, 4
    %v5898 = vmax.f32 %v5896, %v5897
    %v5899 = vrot.slane %v5898, 2
    %v5900 = vmax.f32 %v5898, %v5899
    %v5901 = vrot.slane %v5900, 1
    %v5902 = vmax.f32 %v5900, %v5901
    %v5903 = vsel %vm5300, %v4980, -inf
    %v5904 = vrot.slane %v5903, 4
    %v5905 = vmax.f32 %v5903, %v5904
    %v5906 = vrot.slane %v5905, 2
    %v5907 = vmax.f32 %v5905, %v5906
    %v5908 = vrot.slane %v5907, 1
    %v5909 = vmax.f32 %v5907, %v5908
    %v5910 = vsel %vm5300, %v4981, -inf
    %v5911 = vrot.slane %v5910, 4
    %v5912 = vmax.f32 %v5910, %v5911
    %v5913 = vrot.slane %v5912, 2
    %v5914 = vmax.f32 %v5912, %v5913
    %v5915 = vrot.slane %v5914, 1
    %v5916 = vmax.f32 %v5914, %v5915
    %v5917 = vsel %vm5300, %v4810, -inf
    %v5918 = vrot.slane %v5917, 4
    %v5919 = vmax.f32 %v5917, %v5918
    %v5920 = vrot.slane %v5919, 2
    %v5921 = vmax.f32 %v5919, %v5920
    %v5922 = vrot.slane %v5921, 1
    %v5923 = vmax.f32 %v5921, %v5922
    %v5924 = vsel %vm5300, %v4982, -inf
    %v5925 = vrot.slane %v5924, 4
    %v5926 = vmax.f32 %v5924, %v5925
    %v5927 = vrot.slane %v5926, 2
    %v5928 = vmax.f32 %v5926, %v5927
    %v5929 = vrot.slane %v5928, 1
    %v5930 = vmax.f32 %v5928, %v5929
    %v5931 = vsel %vm5300, %v4983, -inf
    %v5932 = vrot.slane %v5931, 4
    %v5933 = vmax.f32 %v5931, %v5932
    %v5934 = vrot.slane %v5933, 2
    %v5935 = vmax.f32 %v5933, %v5934
    %v5936 = vrot.slane %v5935, 1
    %v5937 = vmax.f32 %v5935, %v5936
    %v5938 = vsel %vm5300, %v4984, -inf
    %v5939 = vrot.slane %v5938, 4
    %v5940 = vmax.f32 %v5938, %v5939
    %v5941 = vrot.slane %v5940, 2
    %v5942 = vmax.f32 %v5940, %v5941
    %v5943 = vrot.slane %v5942, 1
    %v5944 = vmax.f32 %v5942, %v5943
    %v5945 = vsel %vm5300, %v4811, -inf
    %v5946 = vrot.slane %v5945, 4
    %v5947 = vmax.f32 %v5945, %v5946
    %v5948 = vrot.slane %v5947, 2
    %v5949 = vmax.f32 %v5947, %v5948
    %v5950 = vrot.slane %v5949, 1
    %v5951 = vmax.f32 %v5949, %v5950
    %v5952 = vsel %vm5300, %v4985, -inf
    %v5953 = vrot.slane %v5952, 4
    %v5954 = vmax.f32 %v5952, %v5953
    %v5955 = vrot.slane %v5954, 2
    %v5956 = vmax.f32 %v5954, %v5955
    %v5957 = vrot.slane %v5956, 1
    %v5958 = vmax.f32 %v5956, %v5957
    %v5959 = vsel %vm5300, %v4986, -inf
    %v5960 = vrot.slane %v5959, 4
    %v5961 = vmax.f32 %v5959, %v5960
    %v5962 = vrot.slane %v5961, 2
    %v5963 = vmax.f32 %v5961, %v5962
    %v5964 = vrot.slane %v5963, 1
    %v5965 = vmax.f32 %v5963, %v5964
    %v5966 = vsel %vm5300, %v4987, -inf
    %v5967 = vrot.slane %v5966, 4
    %v5968 = vmax.f32 %v5966, %v5967
    %v5969 = vrot.slane %v5968, 2
    %v5970 = vmax.f32 %v5968, %v5969
    %v5971 = vrot.slane %v5970, 1
    %v5972 = vmax.f32 %v5970, %v5971
    %v5973 = vsel %vm5300, %v4812, -inf
    %v5974 = vrot.slane %v5973, 4
    %v5975 = vmax.f32 %v5973, %v5974
    %v5976 = vrot.slane %v5975, 2
    %v5977 = vmax.f32 %v5975, %v5976
    %v5978 = vrot.slane %v5977, 1
    %v5979 = vmax.f32 %v5977, %v5978
    %v5980 = vsel %vm5300, %v4988, -inf
    %v5981 = vrot.slane %v5980, 4
    %v5982 = vmax.f32 %v5980, %v5981
    %v5983 = vrot.slane %v5982, 2
    %v5984 = vmax.f32 %v5982, %v5983
    %v5985 = vrot.slane %v5984, 1
    %v5986 = vmax.f32 %v5984, %v5985
    %v5987 = vsel %vm5300, %v4989, -inf
    %v5988 = vrot.slane %v5987, 4
    %v5989 = vmax.f32 %v5987, %v5988
    %v5990 = vrot.slane %v5989, 2
    %v5991 = vmax.f32 %v5989, %v5990
    %v5992 = vrot.slane %v5991, 1
    %v5993 = vmax.f32 %v5991, %v5992
    %v5994 = vsel %vm5300, %v4990, -inf
    %v5995 = vrot.slane %v5994, 4
    %v5996 = vmax.f32 %v5994, %v5995
    %v5997 = vrot.slane %v5996, 2
    %v5998 = vmax.f32 %v5996, %v5997
    %v5999 = vrot.slane %v5998, 1
    %v6000 = vmax.f32 %v5998, %v5999
    %v6001 = vsel %vm5300, %v4813, -inf
    %v6002 = vrot.slane %v6001, 4
    %v6003 = vmax.f32 %v6001, %v6002
    %v6004 = vrot.slane %v6003, 2
    %v6005 = vmax.f32 %v6003, %v6004
    %v6006 = vrot.slane %v6005, 1
    %v6007 = vmax.f32 %v6005, %v6006
    %v6008 = vsel %vm5300, %v4991, -inf
    %v6009 = vrot.slane %v6008, 4
    %v6010 = vmax.f32 %v6008, %v6009
    %v6011 = vrot.slane %v6010, 2
    %v6012 = vmax.f32 %v6010, %v6011
    %v6013 = vrot.slane %v6012, 1
    %v6014 = vmax.f32 %v6012, %v6013
    %v6015 = vsel %vm5300, %v4992, -inf
    %v6016 = vrot.slane %v6015, 4
    %v6017 = vmax.f32 %v6015, %v6016
    %v6018 = vrot.slane %v6017, 2
    %v6019 = vmax.f32 %v6017, %v6018
    %v6020 = vrot.slane %v6019, 1
    %v6021 = vmax.f32 %v6019, %v6020
    %v6022 = vsel %vm5300, %v4993, -inf
    %v6023 = vrot.slane %v6022, 4
    %v6024 = vmax.f32 %v6022, %v6023
    %v6025 = vrot.slane %v6024, 2
    %v6026 = vmax.f32 %v6024, %v6025
    %v6027 = vrot.slane %v6026, 1
    %v6028 = vmax.f32 %v6026, %v6027
    %v6029 = vsel %vm5300, %v4814, -inf
    %v6030 = vrot.slane %v6029, 4
    %v6031 = vmax.f32 %v6029, %v6030
    %v6032 = vrot.slane %v6031, 2
    %v6033 = vmax.f32 %v6031, %v6032
    %v6034 = vrot.slane %v6033, 1
    %v6035 = vmax.f32 %v6033, %v6034
    %v6036 = vsel %vm5300, %v4994, -inf
    %v6037 = vrot.slane %v6036, 4
    %v6038 = vmax.f32 %v6036, %v6037
    %v6039 = vrot.slane %v6038, 2
    %v6040 = vmax.f32 %v6038, %v6039
    %v6041 = vrot.slane %v6040, 1
    %v6042 = vmax.f32 %v6040, %v6041
    %v6043 = vsel %vm5300, %v4995, -inf
    %v6044 = vrot.slane %v6043, 4
    %v6045 = vmax.f32 %v6043, %v6044
    %v6046 = vrot.slane %v6045, 2
    %v6047 = vmax.f32 %v6045, %v6046
    %v6048 = vrot.slane %v6047, 1
    %v6049 = vmax.f32 %v6047, %v6048
    %v6050 = vsel %vm5300, %v4996, -inf
    %v6051 = vrot.slane %v6050, 4
    %v6052 = vmax.f32 %v6050, %v6051
    %v6053 = vrot.slane %v6052, 2
    %v6054 = vmax.f32 %v6052, %v6053
    %v6055 = vrot.slane %v6054, 1
    %v6056 = vmax.f32 %v6054, %v6055
    %v6057 = vsel %vm5300, %v4815, -inf
    %v6058 = vrot.slane %v6057, 4
    %v6059 = vmax.f32 %v6057, %v6058
    %v6060 = vrot.slane %v6059, 2
    %v6061 = vmax.f32 %v6059, %v6060
    %v6062 = vrot.slane %v6061, 1
    %v6063 = vmax.f32 %v6061, %v6062
    %v6064 = vsel %vm5300, %v4997, -inf
    %v6065 = vrot.slane %v6064, 4
    %v6066 = vmax.f32 %v6064, %v6065
    %v6067 = vrot.slane %v6066, 2
    %v6068 = vmax.f32 %v6066, %v6067
    %v6069 = vrot.slane %v6068, 1
    %v6070 = vmax.f32 %v6068, %v6069
    %v6071 = vsel %vm5300, %v4998, -inf
    %v6072 = vrot.slane %v6071, 4
    %v6073 = vmax.f32 %v6071, %v6072
    %v6074 = vrot.slane %v6073, 2
    %v6075 = vmax.f32 %v6073, %v6074
    %v6076 = vrot.slane %v6075, 1
    %v6077 = vmax.f32 %v6075, %v6076
    %v6078 = vsel %vm5300, %v4999, -inf
    %v6079 = vrot.slane %v6078, 4
    %v6080 = vmax.f32 %v6078, %v6079
    %v6081 = vrot.slane %v6080, 2
    %v6082 = vmax.f32 %v6080, %v6081
    %v6083 = vrot.slane %v6082, 1
    %v6084 = vmax.f32 %v6082, %v6083
    %v6085 = vsel %vm5300, %v4816, -inf
    %v6086 = vrot.slane %v6085, 4
    %v6087 = vmax.f32 %v6085, %v6086
    %v6088 = vrot.slane %v6087, 2
    %v6089 = vmax.f32 %v6087, %v6088
    %v6090 = vrot.slane %v6089, 1
    %v6091 = vmax.f32 %v6089, %v6090
    %v6092 = vsel %vm5300, %v5000, -inf
    %v6093 = vrot.slane %v6092, 4
    %v6094 = vmax.f32 %v6092, %v6093
    %v6095 = vrot.slane %v6094, 2
    %v6096 = vmax.f32 %v6094, %v6095
    %v6097 = vrot.slane %v6096, 1
    %v6098 = vmax.f32 %v6096, %v6097
    %v6099 = vsel %vm5300, %v5001, -inf
    %v6100 = vrot.slane %v6099, 4
    %v6101 = vmax.f32 %v6099, %v6100
    %v6102 = vrot.slane %v6101, 2
    %v6103 = vmax.f32 %v6101, %v6102
    %v6104 = vrot.slane %v6103, 1
    %v6105 = vmax.f32 %v6103, %v6104
    %v6106 = vsel %vm5300, %v5002, -inf
    %v6107 = vrot.slane %v6106, 4
    %v6108 = vmax.f32 %v6106, %v6107
    %v6109 = vrot.slane %v6108, 2
    %v6110 = vmax.f32 %v6108, %v6109
    %v6111 = vrot.slane %v6110, 1
    %v6112 = vmax.f32 %v6110, %v6111
    %v6113 = vsel %vm5300, %v4817, -inf
    %v6114 = vrot.slane %v6113, 4
    %v6115 = vmax.f32 %v6113, %v6114
    %v6116 = vrot.slane %v6115, 2
    %v6117 = vmax.f32 %v6115, %v6116
    %v6118 = vrot.slane %v6117, 1
    %v6119 = vmax.f32 %v6117, %v6118
    %v6120 = vsel %vm5300, %v5003, -inf
    %v6121 = vrot.slane %v6120, 4
    %v6122 = vmax.f32 %v6120, %v6121
    %v6123 = vrot.slane %v6122, 2
    %v6124 = vmax.f32 %v6122, %v6123
    %v6125 = vrot.slane %v6124, 1
    %v6126 = vmax.f32 %v6124, %v6125
    %v6127 = vsel %vm5300, %v5004, -inf
    %v6128 = vrot.slane %v6127, 4
    %v6129 = vmax.f32 %v6127, %v6128
    %v6130 = vrot.slane %v6129, 2
    %v6131 = vmax.f32 %v6129, %v6130
    %v6132 = vrot.slane %v6131, 1
    %v6133 = vmax.f32 %v6131, %v6132
    %v6134 = vsel %vm5300, %v5005, -inf
    %v6135 = vrot.slane %v6134, 4
    %v6136 = vmax.f32 %v6134, %v6135
    %v6137 = vrot.slane %v6136, 2
    %v6138 = vmax.f32 %v6136, %v6137
    %v6139 = vrot.slane %v6138, 1
    %v6140 = vmax.f32 %v6138, %v6139
    %v6141 = vsel %vm5300, %v4818, -inf
    %v6142 = vrot.slane %v6141, 4
    %v6143 = vmax.f32 %v6141, %v6142
    %v6144 = vrot.slane %v6143, 2
    %v6145 = vmax.f32 %v6143, %v6144
    %v6146 = vrot.slane %v6145, 1
    %v6147 = vmax.f32 %v6145, %v6146
    %v6148 = vsel %vm5300, %v5006, -inf
    %v6149 = vrot.slane %v6148, 4
    %v6150 = vmax.f32 %v6148, %v6149
    %v6151 = vrot.slane %v6150, 2
    %v6152 = vmax.f32 %v6150, %v6151
    %v6153 = vrot.slane %v6152, 1
    %v6154 = vmax.f32 %v6152, %v6153
    %v6155 = vsel %vm5300, %v5007, -inf
    %v6156 = vrot.slane %v6155, 4
    %v6157 = vmax.f32 %v6155, %v6156
    %v6158 = vrot.slane %v6157, 2
    %v6159 = vmax.f32 %v6157, %v6158
    %v6160 = vrot.slane %v6159, 1
    %v6161 = vmax.f32 %v6159, %v6160
    %v6162 = vsel %vm5300, %v5008, -inf
    %v6163 = vrot.slane %v6162, 4
    %v6164 = vmax.f32 %v6162, %v6163
    %v6165 = vrot.slane %v6164, 2
    %v6166 = vmax.f32 %v6164, %v6165
    %v6167 = vrot.slane %v6166, 1
    %v6168 = vmax.f32 %v6166, %v6167
    %v6169 = vsel %vm5300, %v4819, -inf
    %v6170 = vrot.slane %v6169, 4
    %v6171 = vmax.f32 %v6169, %v6170
    %v6172 = vrot.slane %v6171, 2
    %v6173 = vmax.f32 %v6171, %v6172
    %v6174 = vrot.slane %v6173, 1
    %v6175 = vmax.f32 %v6173, %v6174
    %v6176 = vsel %vm5300, %v5009, -inf
    %v6177 = vrot.slane %v6176, 4
    %v6178 = vmax.f32 %v6176, %v6177
    %v6179 = vrot.slane %v6178, 2
    %v6180 = vmax.f32 %v6178, %v6179
    %v6181 = vrot.slane %v6180, 1
    %v6182 = vmax.f32 %v6180, %v6181
    %v6183 = vsel %vm5300, %v5010, -inf
    %v6184 = vrot.slane %v6183, 4
    %v6185 = vmax.f32 %v6183, %v6184
    %v6186 = vrot.slane %v6185, 2
    %v6187 = vmax.f32 %v6185, %v6186
    %v6188 = vrot.slane %v6187, 1
    %v6189 = vmax.f32 %v6187, %v6188
    %v6190 = vsel %vm5300, %v5011, -inf
    %v6191 = vrot.slane %v6190, 4
    %v6192 = vmax.f32 %v6190, %v6191
    %v6193 = vrot.slane %v6192, 2
    %v6194 = vmax.f32 %v6192, %v6193
    %v6195 = vrot.slane %v6194, 1
    %v6196 = vmax.f32 %v6194, %v6195
    %v6197 = vsel %vm5300, %v4820, -inf
    %v6198 = vrot.slane %v6197, 4
    %v6199 = vmax.f32 %v6197, %v6198
    %v6200 = vrot.slane %v6199, 2
    %v6201 = vmax.f32 %v6199, %v6200
    %v6202 = vrot.slane %v6201, 1
    %v6203 = vmax.f32 %v6201, %v6202
    %v6204 = vsel %vm5300, %v5012, -inf
    %v6205 = vrot.slane %v6204, 4
    %v6206 = vmax.f32 %v6204, %v6205
    %v6207 = vrot.slane %v6206, 2
    %v6208 = vmax.f32 %v6206, %v6207
    %v6209 = vrot.slane %v6208, 1
    %v6210 = vmax.f32 %v6208, %v6209
    %v6211 = vsel %vm5300, %v5013, -inf
    %v6212 = vrot.slane %v6211, 4
    %v6213 = vmax.f32 %v6211, %v6212
    %v6214 = vrot.slane %v6213, 2
    %v6215 = vmax.f32 %v6213, %v6214
    %v6216 = vrot.slane %v6215, 1
    %v6217 = vmax.f32 %v6215, %v6216
    %v6218 = vsel %vm5300, %v5014, -inf
    %v6219 = vrot.slane %v6218, 4
    %v6220 = vmax.f32 %v6218, %v6219
    %v6221 = vrot.slane %v6220, 2
    %v6222 = vmax.f32 %v6220, %v6221
    %v6223 = vrot.slane %v6222, 1
    %v6224 = vmax.f32 %v6222, %v6223
    %v6225 = vsel %vm5300, %v4821, -inf
    %v6226 = vrot.slane %v6225, 4
    %v6227 = vmax.f32 %v6225, %v6226
    %v6228 = vrot.slane %v6227, 2
    %v6229 = vmax.f32 %v6227, %v6228
    %v6230 = vrot.slane %v6229, 1
    %v6231 = vmax.f32 %v6229, %v6230
    %v6232 = vsel %vm5300, %v5015, -inf
    %v6233 = vrot.slane %v6232, 4
    %v6234 = vmax.f32 %v6232, %v6233
    %v6235 = vrot.slane %v6234, 2
    %v6236 = vmax.f32 %v6234, %v6235
    %v6237 = vrot.slane %v6236, 1
    %v6238 = vmax.f32 %v6236, %v6237
    %v6239 = vsel %vm5300, %v5016, -inf
    %v6240 = vrot.slane %v6239, 4
    %v6241 = vmax.f32 %v6239, %v6240
    %v6242 = vrot.slane %v6241, 2
    %v6243 = vmax.f32 %v6241, %v6242
    %v6244 = vrot.slane %v6243, 1
    %v6245 = vmax.f32 %v6243, %v6244
    %v6246 = vsel %vm5300, %v5017, -inf
    %v6247 = vrot.slane %v6246, 4
    %v6248 = vmax.f32 %v6246, %v6247
    %v6249 = vrot.slane %v6248, 2
    %v6250 = vmax.f32 %v6248, %v6249
    %v6251 = vrot.slane %v6250, 1
    %v6252 = vmax.f32 %v6250, %v6251
    %v6253 = vsel %vm5300, %v4822, -inf
    %v6254 = vrot.slane %v6253, 4
    %v6255 = vmax.f32 %v6253, %v6254
    %v6256 = vrot.slane %v6255, 2
    %v6257 = vmax.f32 %v6255, %v6256
    %v6258 = vrot.slane %v6257, 1
    %v6259 = vmax.f32 %v6257, %v6258
    %v6260 = vsel %vm5300, %v5018, -inf
    %v6261 = vrot.slane %v6260, 4
    %v6262 = vmax.f32 %v6260, %v6261
    %v6263 = vrot.slane %v6262, 2
    %v6264 = vmax.f32 %v6262, %v6263
    %v6265 = vrot.slane %v6264, 1
    %v6266 = vmax.f32 %v6264, %v6265
    %v6267 = vsel %vm5300, %v5019, -inf
    %v6268 = vrot.slane %v6267, 4
    %v6269 = vmax.f32 %v6267, %v6268
    %v6270 = vrot.slane %v6269, 2
    %v6271 = vmax.f32 %v6269, %v6270
    %v6272 = vrot.slane %v6271, 1
    %v6273 = vmax.f32 %v6271, %v6272
    %v6274 = vsel %vm5300, %v5020, -inf
    %v6275 = vrot.slane %v6274, 4
    %v6276 = vmax.f32 %v6274, %v6275
    %v6277 = vrot.slane %v6276, 2
    %v6278 = vmax.f32 %v6276, %v6277
    %v6279 = vrot.slane %v6278, 1
    %v6280 = vmax.f32 %v6278, %v6279
    %v6281 = vsel %vm5300, %v4823, -inf
    %v6282 = vrot.slane %v6281, 4
    %v6283 = vmax.f32 %v6281, %v6282
    %v6284 = vrot.slane %v6283, 2
    %v6285 = vmax.f32 %v6283, %v6284
    %v6286 = vrot.slane %v6285, 1
    %v6287 = vmax.f32 %v6285, %v6286
    %v6288 = vsel %vm5300, %v5021, -inf
    %v6289 = vrot.slane %v6288, 4
    %v6290 = vmax.f32 %v6288, %v6289
    %v6291 = vrot.slane %v6290, 2
    %v6292 = vmax.f32 %v6290, %v6291
    %v6293 = vrot.slane %v6292, 1
    %v6294 = vmax.f32 %v6292, %v6293
    %v6295 = vsel %vm5300, %v5022, -inf
    %v6296 = vrot.slane %v6295, 4
    %v6297 = vmax.f32 %v6295, %v6296
    %v6298 = vrot.slane %v6297, 2
    %v6299 = vmax.f32 %v6297, %v6298
    %v6300 = vrot.slane %v6299, 1
    %v6301 = vmax.f32 %v6299, %v6300
    %v6302 = vsel %vm5300, %v5023, -inf
    %v6303 = vrot.slane %v6302, 4
    %v6304 = vmax.f32 %v6302, %v6303
    %v6305 = vrot.slane %v6304, 2
    %v6306 = vmax.f32 %v6304, %v6305
    %v6307 = vrot.slane %v6306, 1
    %v6308 = vmax.f32 %v6306, %v6307
    %v6309 = vsel %vm5300, %v4824, -inf
    %v6310 = vrot.slane %v6309, 4
    %v6311 = vmax.f32 %v6309, %v6310
    %v6312 = vrot.slane %v6311, 2
    %v6313 = vmax.f32 %v6311, %v6312
    %v6314 = vrot.slane %v6313, 1
    %v6315 = vmax.f32 %v6313, %v6314
    %v6316 = vsel %vm5300, %v5024, -inf
    %v6317 = vrot.slane %v6316, 4
    %v6318 = vmax.f32 %v6316, %v6317
    %v6319 = vrot.slane %v6318, 2
    %v6320 = vmax.f32 %v6318, %v6319
    %v6321 = vrot.slane %v6320, 1
    %v6322 = vmax.f32 %v6320, %v6321
    %v6323 = vsel %vm5300, %v5025, -inf
    %v6324 = vrot.slane %v6323, 4
    %v6325 = vmax.f32 %v6323, %v6324
    %v6326 = vrot.slane %v6325, 2
    %v6327 = vmax.f32 %v6325, %v6326
    %v6328 = vrot.slane %v6327, 1
    %v6329 = vmax.f32 %v6327, %v6328
    %v6330 = vsel %vm5300, %v5026, -inf
    %v6331 = vrot.slane %v6330, 4
    %v6332 = vmax.f32 %v6330, %v6331
    %v6333 = vrot.slane %v6332, 2
    %v6334 = vmax.f32 %v6332, %v6333
    %v6335 = vrot.slane %v6334, 1
    %v6336 = vmax.f32 %v6334, %v6335
    %v6337 = vsel %vm5300, %v4825, -inf
    %v6338 = vrot.slane %v6337, 4
    %v6339 = vmax.f32 %v6337, %v6338
    %v6340 = vrot.slane %v6339, 2
    %v6341 = vmax.f32 %v6339, %v6340
    %v6342 = vrot.slane %v6341, 1
    %v6343 = vmax.f32 %v6341, %v6342
    %v6344 = vsel %vm5300, %v5027, -inf
    %v6345 = vrot.slane %v6344, 4
    %v6346 = vmax.f32 %v6344, %v6345
    %v6347 = vrot.slane %v6346, 2
    %v6348 = vmax.f32 %v6346, %v6347
    %v6349 = vrot.slane %v6348, 1
    %v6350 = vmax.f32 %v6348, %v6349
    %v6351 = vsel %vm5300, %v5028, -inf
    %v6352 = vrot.slane %v6351, 4
    %v6353 = vmax.f32 %v6351, %v6352
    %v6354 = vrot.slane %v6353, 2
    %v6355 = vmax.f32 %v6353, %v6354
    %v6356 = vrot.slane %v6355, 1
    %v6357 = vmax.f32 %v6355, %v6356
    %v6358 = vsel %vm5300, %v5029, -inf
    %v6359 = vrot.slane %v6358, 4
    %v6360 = vmax.f32 %v6358, %v6359
    %v6361 = vrot.slane %v6360, 2
    %v6362 = vmax.f32 %v6360, %v6361
    %v6363 = vrot.slane %v6362, 1
    %v6364 = vmax.f32 %v6362, %v6363
    %v6365 = vsel %vm5300, %v4826, -inf
    %v6366 = vrot.slane %v6365, 4
    %v6367 = vmax.f32 %v6365, %v6366
    %v6368 = vrot.slane %v6367, 2
    %v6369 = vmax.f32 %v6367, %v6368
    %v6370 = vrot.slane %v6369, 1
    %v6371 = vmax.f32 %v6369, %v6370
    %v6372 = vsel %vm5300, %v5030, -inf
    %v6373 = vrot.slane %v6372, 4
    %v6374 = vmax.f32 %v6372, %v6373
    %v6375 = vrot.slane %v6374, 2
    %v6376 = vmax.f32 %v6374, %v6375
    %v6377 = vrot.slane %v6376, 1
    %v6378 = vmax.f32 %v6376, %v6377
    %v6379 = vsel %vm5300, %v5031, -inf
    %v6380 = vrot.slane %v6379, 4
    %v6381 = vmax.f32 %v6379, %v6380
    %v6382 = vrot.slane %v6381, 2
    %v6383 = vmax.f32 %v6381, %v6382
    %v6384 = vrot.slane %v6383, 1
    %v6385 = vmax.f32 %v6383, %v6384
    %v6386 = vsel %vm5300, %v5032, -inf
    %v6387 = vrot.slane %v6386, 4
    %v6388 = vmax.f32 %v6386, %v6387
    %v6389 = vrot.slane %v6388, 2
    %v6390 = vmax.f32 %v6388, %v6389
    %v6391 = vrot.slane %v6390, 1
    %v6392 = vmax.f32 %v6390, %v6391
    %v6393 = vsel %vm5300, %v4827, -inf
    %v6394 = vrot.slane %v6393, 4
    %v6395 = vmax.f32 %v6393, %v6394
    %v6396 = vrot.slane %v6395, 2
    %v6397 = vmax.f32 %v6395, %v6396
    %v6398 = vrot.slane %v6397, 1
    %v6399 = vmax.f32 %v6397, %v6398
    %v6400 = vsel %vm5300, %v5033, -inf
    %v6401 = vrot.slane %v6400, 4
    %v6402 = vmax.f32 %v6400, %v6401
    %v6403 = vrot.slane %v6402, 2
    %v6404 = vmax.f32 %v6402, %v6403
    %v6405 = vrot.slane %v6404, 1
    %v6406 = vmax.f32 %v6404, %v6405
    %v6407 = vsel %vm5300, %v5034, -inf
    %v6408 = vrot.slane %v6407, 4
    %v6409 = vmax.f32 %v6407, %v6408
    %v6410 = vrot.slane %v6409, 2
    %v6411 = vmax.f32 %v6409, %v6410
    %v6412 = vrot.slane %v6411, 1
    %v6413 = vmax.f32 %v6411, %v6412
    %v6414 = vsel %vm5300, %v5035, -inf
    %v6415 = vrot.slane %v6414, 4
    %v6416 = vmax.f32 %v6414, %v6415
    %v6417 = vrot.slane %v6416, 2
    %v6418 = vmax.f32 %v6416, %v6417
    %v6419 = vrot.slane %v6418, 1
    %v6420 = vmax.f32 %v6418, %v6419
    %v6421 = vsel %vm5300, %v4828, -inf
    %v6422 = vrot.slane %v6421, 4
    %v6423 = vmax.f32 %v6421, %v6422
    %v6424 = vrot.slane %v6423, 2
    %v6425 = vmax.f32 %v6423, %v6424
    %v6426 = vrot.slane %v6425, 1
    %v6427 = vmax.f32 %v6425, %v6426
    %v6428 = vsel %vm5300, %v5036, -inf
    %v6429 = vrot.slane %v6428, 4
    %v6430 = vmax.f32 %v6428, %v6429
    %v6431 = vrot.slane %v6430, 2
    %v6432 = vmax.f32 %v6430, %v6431
    %v6433 = vrot.slane %v6432, 1
    %v6434 = vmax.f32 %v6432, %v6433
    %v6435 = vsel %vm5300, %v5037, -inf
    %v6436 = vrot.slane %v6435, 4
    %v6437 = vmax.f32 %v6435, %v6436
    %v6438 = vrot.slane %v6437, 2
    %v6439 = vmax.f32 %v6437, %v6438
    %v6440 = vrot.slane %v6439, 1
    %v6441 = vmax.f32 %v6439, %v6440
    %v6442 = vsel %vm5300, %v5038, -inf
    %v6443 = vrot.slane %v6442, 4
    %v6444 = vmax.f32 %v6442, %v6443
    %v6445 = vrot.slane %v6444, 2
    %v6446 = vmax.f32 %v6444, %v6445
    %v6447 = vrot.slane %v6446, 1
    %v6448 = vmax.f32 %v6446, %v6447
    %v6449 = vsel %vm5300, %v4829, -inf
    %v6450 = vrot.slane %v6449, 4
    %v6451 = vmax.f32 %v6449, %v6450
    %v6452 = vrot.slane %v6451, 2
    %v6453 = vmax.f32 %v6451, %v6452
    %v6454 = vrot.slane %v6453, 1
    %v6455 = vmax.f32 %v6453, %v6454
    %v6456 = vsel %vm5300, %v5039, -inf
    %v6457 = vrot.slane %v6456, 4
    %v6458 = vmax.f32 %v6456, %v6457
    %v6459 = vrot.slane %v6458, 2
    %v6460 = vmax.f32 %v6458, %v6459
    %v6461 = vrot.slane %v6460, 1
    %v6462 = vmax.f32 %v6460, %v6461
    %v6463 = vsel %vm5300, %v5040, -inf
    %v6464 = vrot.slane %v6463, 4
    %v6465 = vmax.f32 %v6463, %v6464
    %v6466 = vrot.slane %v6465, 2
    %v6467 = vmax.f32 %v6465, %v6466
    %v6468 = vrot.slane %v6467, 1
    %v6469 = vmax.f32 %v6467, %v6468
    %v6470 = vsel %vm5300, %v5041, -inf
    %v6471 = vrot.slane %v6470, 4
    %v6472 = vmax.f32 %v6470, %v6471
    %v6473 = vrot.slane %v6472, 2
    %v6474 = vmax.f32 %v6472, %v6473
    %v6475 = vrot.slane %v6474, 1
    %v6476 = vmax.f32 %v6474, %v6475
    %v6477 = vsel %vm5300, %v4830, -inf
    %v6478 = vrot.slane %v6477, 4
    %v6479 = vmax.f32 %v6477, %v6478
    %v6480 = vrot.slane %v6479, 2
    %v6481 = vmax.f32 %v6479, %v6480
    %v6482 = vrot.slane %v6481, 1
    %v6483 = vmax.f32 %v6481, %v6482
    %v6484 = vsel %vm5300, %v5042, -inf
    %v6485 = vrot.slane %v6484, 4
    %v6486 = vmax.f32 %v6484, %v6485
    %v6487 = vrot.slane %v6486, 2
    %v6488 = vmax.f32 %v6486, %v6487
    %v6489 = vrot.slane %v6488, 1
    %v6490 = vmax.f32 %v6488, %v6489
    %v6491 = vsel %vm5300, %v5043, -inf
    %v6492 = vrot.slane %v6491, 4
    %v6493 = vmax.f32 %v6491, %v6492
    %v6494 = vrot.slane %v6493, 2
    %v6495 = vmax.f32 %v6493, %v6494
    %v6496 = vrot.slane %v6495, 1
    %v6497 = vmax.f32 %v6495, %v6496
    %v6498 = vsel %vm5300, %v5044, -inf
    %v6499 = vrot.slane %v6498, 4
    %v6500 = vmax.f32 %v6498, %v6499
    %v6501 = vrot.slane %v6500, 2
    %v6502 = vmax.f32 %v6500, %v6501
    %v6503 = vrot.slane %v6502, 1
    %v6504 = vmax.f32 %v6502, %v6503
    %v6505 = vsel %vm5300, %v4831, -inf
    %v6506 = vrot.slane %v6505, 4
    %v6507 = vmax.f32 %v6505, %v6506
    %v6508 = vrot.slane %v6507, 2
    %v6509 = vmax.f32 %v6507, %v6508
    %v6510 = vrot.slane %v6509, 1
    %v6511 = vmax.f32 %v6509, %v6510
    %v6512 = vsel %vm5300, %v5045, -inf
    %v6513 = vrot.slane %v6512, 4
    %v6514 = vmax.f32 %v6512, %v6513
    %v6515 = vrot.slane %v6514, 2
    %v6516 = vmax.f32 %v6514, %v6515
    %v6517 = vrot.slane %v6516, 1
    %v6518 = vmax.f32 %v6516, %v6517
    %v6519 = vsel %vm5300, %v5046, -inf
    %v6520 = vrot.slane %v6519, 4
    %v6521 = vmax.f32 %v6519, %v6520
    %v6522 = vrot.slane %v6521, 2
    %v6523 = vmax.f32 %v6521, %v6522
    %v6524 = vrot.slane %v6523, 1
    %v6525 = vmax.f32 %v6523, %v6524
    %v6526 = vsel %vm5300, %v5047, -inf
    %v6527 = vrot.slane %v6526, 4
    %v6528 = vmax.f32 %v6526, %v6527
    %v6529 = vrot.slane %v6528, 2
    %v6530 = vmax.f32 %v6528, %v6529
    %v6531 = vrot.slane %v6530, 1
    %v6532 = vmax.f32 %v6530, %v6531
    %v6533 = vsel %vm5300, %v4832, -inf
    %v6534 = vrot.slane %v6533, 4
    %v6535 = vmax.f32 %v6533, %v6534
    %v6536 = vrot.slane %v6535, 2
    %v6537 = vmax.f32 %v6535, %v6536
    %v6538 = vrot.slane %v6537, 1
    %v6539 = vmax.f32 %v6537, %v6538
    %v6540 = vsel %vm5300, %v5048, -inf
    %v6541 = vrot.slane %v6540, 4
    %v6542 = vmax.f32 %v6540, %v6541
    %v6543 = vrot.slane %v6542, 2
    %v6544 = vmax.f32 %v6542, %v6543
    %v6545 = vrot.slane %v6544, 1
    %v6546 = vmax.f32 %v6544, %v6545
    %v6547 = vsel %vm5300, %v5049, -inf
    %v6548 = vrot.slane %v6547, 4
    %v6549 = vmax.f32 %v6547, %v6548
    %v6550 = vrot.slane %v6549, 2
    %v6551 = vmax.f32 %v6549, %v6550
    %v6552 = vrot.slane %v6551, 1
    %v6553 = vmax.f32 %v6551, %v6552
    %v6554 = vsel %vm5300, %v5050, -inf
    %v6555 = vrot.slane %v6554, 4
    %v6556 = vmax.f32 %v6554, %v6555
    %v6557 = vrot.slane %v6556, 2
    %v6558 = vmax.f32 %v6556, %v6557
    %v6559 = vrot.slane %v6558, 1
    %v6560 = vmax.f32 %v6558, %v6559
    %v6561 = vsel %vm5300, %v4833, -inf
    %v6562 = vrot.slane %v6561, 4
    %v6563 = vmax.f32 %v6561, %v6562
    %v6564 = vrot.slane %v6563, 2
    %v6565 = vmax.f32 %v6563, %v6564
    %v6566 = vrot.slane %v6565, 1
    %v6567 = vmax.f32 %v6565, %v6566
    %v6568 = vsel %vm5300, %v5051, -inf
    %v6569 = vrot.slane %v6568, 4
    %v6570 = vmax.f32 %v6568, %v6569
    %v6571 = vrot.slane %v6570, 2
    %v6572 = vmax.f32 %v6570, %v6571
    %v6573 = vrot.slane %v6572, 1
    %v6574 = vmax.f32 %v6572, %v6573
    %v6575 = vsel %vm5300, %v5052, -inf
    %v6576 = vrot.slane %v6575, 4
    %v6577 = vmax.f32 %v6575, %v6576
    %v6578 = vrot.slane %v6577, 2
    %v6579 = vmax.f32 %v6577, %v6578
    %v6580 = vrot.slane %v6579, 1
    %v6581 = vmax.f32 %v6579, %v6580
    %v6582 = vsel %vm5300, %v5053, -inf
    %v6583 = vrot.slane %v6582, 4
    %v6584 = vmax.f32 %v6582, %v6583
    %v6585 = vrot.slane %v6584, 2
    %v6586 = vmax.f32 %v6584, %v6585
    %v6587 = vrot.slane %v6586, 1
    %v6588 = vmax.f32 %v6586, %v6587
    %v6589 = vsel %vm5300, %v4834, -inf
    %v6590 = vrot.slane %v6589, 4
    %v6591 = vmax.f32 %v6589, %v6590
    %v6592 = vrot.slane %v6591, 2
    %v6593 = vmax.f32 %v6591, %v6592
    %v6594 = vrot.slane %v6593, 1
    %v6595 = vmax.f32 %v6593, %v6594
    %v6596 = vsel %vm5300, %v5054, -inf
    %v6597 = vrot.slane %v6596, 4
    %v6598 = vmax.f32 %v6596, %v6597
    %v6599 = vrot.slane %v6598, 2
    %v6600 = vmax.f32 %v6598, %v6599
    %v6601 = vrot.slane %v6600, 1
    %v6602 = vmax.f32 %v6600, %v6601
    %v6603 = vsel %vm5300, %v5055, -inf
    %v6604 = vrot.slane %v6603, 4
    %v6605 = vmax.f32 %v6603, %v6604
    %v6606 = vrot.slane %v6605, 2
    %v6607 = vmax.f32 %v6605, %v6606
    %v6608 = vrot.slane %v6607, 1
    %v6609 = vmax.f32 %v6607, %v6608
    %v6610 = vsel %vm5300, %v5056, -inf
    %v6611 = vrot.slane %v6610, 4
    %v6612 = vmax.f32 %v6610, %v6611
    %v6613 = vrot.slane %v6612, 2
    %v6614 = vmax.f32 %v6612, %v6613
    %v6615 = vrot.slane %v6614, 1
    %v6616 = vmax.f32 %v6614, %v6615
    %v6617 = vsel %vm5300, %v4835, -inf
    %v6618 = vrot.slane %v6617, 4
    %v6619 = vmax.f32 %v6617, %v6618
    %v6620 = vrot.slane %v6619, 2
    %v6621 = vmax.f32 %v6619, %v6620
    %v6622 = vrot.slane %v6621, 1
    %v6623 = vmax.f32 %v6621, %v6622
    %v6624 = vsel %vm5300, %v5057, -inf
    %v6625 = vrot.slane %v6624, 4
    %v6626 = vmax.f32 %v6624, %v6625
    %v6627 = vrot.slane %v6626, 2
    %v6628 = vmax.f32 %v6626, %v6627
    %v6629 = vrot.slane %v6628, 1
    %v6630 = vmax.f32 %v6628, %v6629
    %v6631 = vsel %vm5300, %v5058, -inf
    %v6632 = vrot.slane %v6631, 4
    %v6633 = vmax.f32 %v6631, %v6632
    %v6634 = vrot.slane %v6633, 2
    %v6635 = vmax.f32 %v6633, %v6634
    %v6636 = vrot.slane %v6635, 1
    %v6637 = vmax.f32 %v6635, %v6636
    %v6638 = vsel %vm5300, %v5059, -inf
    %v6639 = vrot.slane %v6638, 4
    %v6640 = vmax.f32 %v6638, %v6639
    %v6641 = vrot.slane %v6640, 2
    %v6642 = vmax.f32 %v6640, %v6641
    %v6643 = vrot.slane %v6642, 1
    %v6644 = vmax.f32 %v6642, %v6643
    %v6645 = vsel %vm5300, %v4836, -inf
    %v6646 = vrot.slane %v6645, 4
    %v6647 = vmax.f32 %v6645, %v6646
    %v6648 = vrot.slane %v6647, 2
    %v6649 = vmax.f32 %v6647, %v6648
    %v6650 = vrot.slane %v6649, 1
    %v6651 = vmax.f32 %v6649, %v6650
    %v6652 = vsel %vm5300, %v5060, -inf
    %v6653 = vrot.slane %v6652, 4
    %v6654 = vmax.f32 %v6652, %v6653
    %v6655 = vrot.slane %v6654, 2
    %v6656 = vmax.f32 %v6654, %v6655
    %v6657 = vrot.slane %v6656, 1
    %v6658 = vmax.f32 %v6656, %v6657
    %v6659 = vsel %vm5300, %v5061, -inf
    %v6660 = vrot.slane %v6659, 4
    %v6661 = vmax.f32 %v6659, %v6660
    %v6662 = vrot.slane %v6661, 2
    %v6663 = vmax.f32 %v6661, %v6662
    %v6664 = vrot.slane %v6663, 1
    %v6665 = vmax.f32 %v6663, %v6664
    %v6666 = vsel %vm5300, %v5062, -inf
    %v6667 = vrot.slane %v6666, 4
    %v6668 = vmax.f32 %v6666, %v6667
    %v6669 = vrot.slane %v6668, 2
    %v6670 = vmax.f32 %v6668, %v6669
    %v6671 = vrot.slane %v6670, 1
    %v6672 = vmax.f32 %v6670, %v6671
    %v6673 = vsel %vm5300, %v4837, -inf
    %v6674 = vrot.slane %v6673, 4
    %v6675 = vmax.f32 %v6673, %v6674
    %v6676 = vrot.slane %v6675, 2
    %v6677 = vmax.f32 %v6675, %v6676
    %v6678 = vrot.slane %v6677, 1
    %v6679 = vmax.f32 %v6677, %v6678
    %v6680 = vsel %vm5300, %v5063, -inf
    %v6681 = vrot.slane %v6680, 4
    %v6682 = vmax.f32 %v6680, %v6681
    %v6683 = vrot.slane %v6682, 2
    %v6684 = vmax.f32 %v6682, %v6683
    %v6685 = vrot.slane %v6684, 1
    %v6686 = vmax.f32 %v6684, %v6685
    %v6687 = vsel %vm5300, %v5064, -inf
    %v6688 = vrot.slane %v6687, 4
    %v6689 = vmax.f32 %v6687, %v6688
    %v6690 = vrot.slane %v6689, 2
    %v6691 = vmax.f32 %v6689, %v6690
    %v6692 = vrot.slane %v6691, 1
    %v6693 = vmax.f32 %v6691, %v6692
    %v6694 = vsel %vm5300, %v5065, -inf
    %v6695 = vrot.slane %v6694, 4
    %v6696 = vmax.f32 %v6694, %v6695
    %v6697 = vrot.slane %v6696, 2
    %v6698 = vmax.f32 %v6696, %v6697
    %v6699 = vrot.slane %v6698, 1
    %v6700 = vmax.f32 %v6698, %v6699
    %v6701 = vsel %vm5300, %v4838, -inf
    %v6702 = vrot.slane %v6701, 4
    %v6703 = vmax.f32 %v6701, %v6702
    %v6704 = vrot.slane %v6703, 2
    %v6705 = vmax.f32 %v6703, %v6704
    %v6706 = vrot.slane %v6705, 1
    %v6707 = vmax.f32 %v6705, %v6706
    %v6708 = vsel %vm5300, %v5066, -inf
    %v6709 = vrot.slane %v6708, 4
    %v6710 = vmax.f32 %v6708, %v6709
    %v6711 = vrot.slane %v6710, 2
    %v6712 = vmax.f32 %v6710, %v6711
    %v6713 = vrot.slane %v6712, 1
    %v6714 = vmax.f32 %v6712, %v6713
    %v6715 = vsel %vm5300, %v5067, -inf
    %v6716 = vrot.slane %v6715, 4
    %v6717 = vmax.f32 %v6715, %v6716
    %v6718 = vrot.slane %v6717, 2
    %v6719 = vmax.f32 %v6717, %v6718
    %v6720 = vrot.slane %v6719, 1
    %v6721 = vmax.f32 %v6719, %v6720
    %v6722 = vsel %vm5300, %v5068, -inf
    %v6723 = vrot.slane %v6722, 4
    %v6724 = vmax.f32 %v6722, %v6723
    %v6725 = vrot.slane %v6724, 2
    %v6726 = vmax.f32 %v6724, %v6725
    %v6727 = vrot.slane %v6726, 1
    %v6728 = vmax.f32 %v6726, %v6727
    %v6729 = vsel %vm5300, %v4839, -inf
    %v6730 = vrot.slane %v6729, 4
    %v6731 = vmax.f32 %v6729, %v6730
    %v6732 = vrot.slane %v6731, 2
    %v6733 = vmax.f32 %v6731, %v6732
    %v6734 = vrot.slane %v6733, 1
    %v6735 = vmax.f32 %v6733, %v6734
    %v6736 = vsel %vm5300, %v5069, -inf
    %v6737 = vrot.slane %v6736, 4
    %v6738 = vmax.f32 %v6736, %v6737
    %v6739 = vrot.slane %v6738, 2
    %v6740 = vmax.f32 %v6738, %v6739
    %v6741 = vrot.slane %v6740, 1
    %v6742 = vmax.f32 %v6740, %v6741
    %v6743 = vsel %vm5300, %v5070, -inf
    %v6744 = vrot.slane %v6743, 4
    %v6745 = vmax.f32 %v6743, %v6744
    %v6746 = vrot.slane %v6745, 2
    %v6747 = vmax.f32 %v6745, %v6746
    %v6748 = vrot.slane %v6747, 1
    %v6749 = vmax.f32 %v6747, %v6748
    %v6750 = vsel %vm5300, %v5071, -inf
    %v6751 = vrot.slane %v6750, 4
    %v6752 = vmax.f32 %v6750, %v6751
    %v6753 = vrot.slane %v6752, 2
    %v6754 = vmax.f32 %v6752, %v6753
    %v6755 = vrot.slane %v6754, 1
    %v6756 = vmax.f32 %v6754, %v6755
    %v6757 = vsel %vm5300, %v4840, -inf
    %v6758 = vrot.slane %v6757, 4
    %v6759 = vmax.f32 %v6757, %v6758
    %v6760 = vrot.slane %v6759, 2
    %v6761 = vmax.f32 %v6759, %v6760
    %v6762 = vrot.slane %v6761, 1
    %v6763 = vmax.f32 %v6761, %v6762
    %v6764 = vsel %vm5300, %v5072, -inf
    %v6765 = vrot.slane %v6764, 4
    %v6766 = vmax.f32 %v6764, %v6765
    %v6767 = vrot.slane %v6766, 2
    %v6768 = vmax.f32 %v6766, %v6767
    %v6769 = vrot.slane %v6768, 1
    %v6770 = vmax.f32 %v6768, %v6769
    %v6771 = vsel %vm5300, %v5073, -inf
    %v6772 = vrot.slane %v6771, 4
    %v6773 = vmax.f32 %v6771, %v6772
    %v6774 = vrot.slane %v6773, 2
    %v6775 = vmax.f32 %v6773, %v6774
    %v6776 = vrot.slane %v6775, 1
    %v6777 = vmax.f32 %v6775, %v6776
    %v6778 = vsel %vm5300, %v5074, -inf
    %v6779 = vrot.slane %v6778, 4
    %v6780 = vmax.f32 %v6778, %v6779
    %v6781 = vrot.slane %v6780, 2
    %v6782 = vmax.f32 %v6780, %v6781
    %v6783 = vrot.slane %v6782, 1
    %v6784 = vmax.f32 %v6782, %v6783
    %v6785 = vsel %vm5300, %v4841, -inf
    %v6786 = vrot.slane %v6785, 4
    %v6787 = vmax.f32 %v6785, %v6786
    %v6788 = vrot.slane %v6787, 2
    %v6789 = vmax.f32 %v6787, %v6788
    %v6790 = vrot.slane %v6789, 1
    %v6791 = vmax.f32 %v6789, %v6790
    %v6792 = vsel %vm5300, %v5075, -inf
    %v6793 = vrot.slane %v6792, 4
    %v6794 = vmax.f32 %v6792, %v6793
    %v6795 = vrot.slane %v6794, 2
    %v6796 = vmax.f32 %v6794, %v6795
    %v6797 = vrot.slane %v6796, 1
    %v6798 = vmax.f32 %v6796, %v6797
    %v6799 = vsel %vm5300, %v5076, -inf
    %v6800 = vrot.slane %v6799, 4
    %v6801 = vmax.f32 %v6799, %v6800
    %v6802 = vrot.slane %v6801, 2
    %v6803 = vmax.f32 %v6801, %v6802
    %v6804 = vrot.slane %v6803, 1
    %v6805 = vmax.f32 %v6803, %v6804
    %v6806 = vsel %vm5300, %v5077, -inf
    %v6807 = vrot.slane %v6806, 4
    %v6808 = vmax.f32 %v6806, %v6807
    %v6809 = vrot.slane %v6808, 2
    %v6810 = vmax.f32 %v6808, %v6809
    %v6811 = vrot.slane %v6810, 1
    %v6812 = vmax.f32 %v6810, %v6811
    %v6813 = vsel %vm5300, %v4842, -inf
    %v6814 = vrot.slane %v6813, 4
    %v6815 = vmax.f32 %v6813, %v6814
    %v6816 = vrot.slane %v6815, 2
    %v6817 = vmax.f32 %v6815, %v6816
    %v6818 = vrot.slane %v6817, 1
    %v6819 = vmax.f32 %v6817, %v6818
    %v6820 = vsel %vm5300, %v5078, -inf
    %v6821 = vrot.slane %v6820, 4
    %v6822 = vmax.f32 %v6820, %v6821
    %v6823 = vrot.slane %v6822, 2
    %v6824 = vmax.f32 %v6822, %v6823
    %v6825 = vrot.slane %v6824, 1
    %v6826 = vmax.f32 %v6824, %v6825
    %v6827 = vsel %vm5300, %v5079, -inf
    %v6828 = vrot.slane %v6827, 4
    %v6829 = vmax.f32 %v6827, %v6828
    %v6830 = vrot.slane %v6829, 2
    %v6831 = vmax.f32 %v6829, %v6830
    %v6832 = vrot.slane %v6831, 1
    %v6833 = vmax.f32 %v6831, %v6832
    %v6834 = vsel %vm5300, %v5080, -inf
    %v6835 = vrot.slane %v6834, 4
    %v6836 = vmax.f32 %v6834, %v6835
    %v6837 = vrot.slane %v6836, 2
    %v6838 = vmax.f32 %v6836, %v6837
    %v6839 = vrot.slane %v6838, 1
    %v6840 = vmax.f32 %v6838, %v6839
    %v6841 = vsel %vm5300, %v4843, -inf
    %v6842 = vrot.slane %v6841, 4
    %v6843 = vmax.f32 %v6841, %v6842
    %v6844 = vrot.slane %v6843, 2
    %v6845 = vmax.f32 %v6843, %v6844
    %v6846 = vrot.slane %v6845, 1
    %v6847 = vmax.f32 %v6845, %v6846
    %v6848 = vsel %vm5300, %v5081, -inf
    %v6849 = vrot.slane %v6848, 4
    %v6850 = vmax.f32 %v6848, %v6849
    %v6851 = vrot.slane %v6850, 2
    %v6852 = vmax.f32 %v6850, %v6851
    %v6853 = vrot.slane %v6852, 1
    %v6854 = vmax.f32 %v6852, %v6853
    %v6855 = vsel %vm5300, %v5082, -inf
    %v6856 = vrot.slane %v6855, 4
    %v6857 = vmax.f32 %v6855, %v6856
    %v6858 = vrot.slane %v6857, 2
    %v6859 = vmax.f32 %v6857, %v6858
    %v6860 = vrot.slane %v6859, 1
    %v6861 = vmax.f32 %v6859, %v6860
    %v6862 = vsel %vm5300, %v5083, -inf
    %v6863 = vrot.slane %v6862, 4
    %v6864 = vmax.f32 %v6862, %v6863
    %v6865 = vrot.slane %v6864, 2
    %v6866 = vmax.f32 %v6864, %v6865
    %v6867 = vrot.slane %v6866, 1
    %v6868 = vmax.f32 %v6866, %v6867
    %v6869 = vsel %vm5300, %v4844, -inf
    %v6870 = vrot.slane %v6869, 4
    %v6871 = vmax.f32 %v6869, %v6870
    %v6872 = vrot.slane %v6871, 2
    %v6873 = vmax.f32 %v6871, %v6872
    %v6874 = vrot.slane %v6873, 1
    %v6875 = vmax.f32 %v6873, %v6874
    %v6876 = vsel %vm5300, %v5084, -inf
    %v6877 = vrot.slane %v6876, 4
    %v6878 = vmax.f32 %v6876, %v6877
    %v6879 = vrot.slane %v6878, 2
    %v6880 = vmax.f32 %v6878, %v6879
    %v6881 = vrot.slane %v6880, 1
    %v6882 = vmax.f32 %v6880, %v6881
    %v6883 = vsel %vm5300, %v5085, -inf
    %v6884 = vrot.slane %v6883, 4
    %v6885 = vmax.f32 %v6883, %v6884
    %v6886 = vrot.slane %v6885, 2
    %v6887 = vmax.f32 %v6885, %v6886
    %v6888 = vrot.slane %v6887, 1
    %v6889 = vmax.f32 %v6887, %v6888
    %v6890 = vsel %vm5300, %v5086, -inf
    %v6891 = vrot.slane %v6890, 4
    %v6892 = vmax.f32 %v6890, %v6891
    %v6893 = vrot.slane %v6892, 2
    %v6894 = vmax.f32 %v6892, %v6893
    %v6895 = vrot.slane %v6894, 1
    %v6896 = vmax.f32 %v6894, %v6895
    %v6897 = vsel %vm5300, %v4845, -inf
    %v6898 = vrot.slane %v6897, 4
    %v6899 = vmax.f32 %v6897, %v6898
    %v6900 = vrot.slane %v6899, 2
    %v6901 = vmax.f32 %v6899, %v6900
    %v6902 = vrot.slane %v6901, 1
    %v6903 = vmax.f32 %v6901, %v6902
    %v6904 = vsel %vm5300, %v5087, -inf
    %v6905 = vrot.slane %v6904, 4
    %v6906 = vmax.f32 %v6904, %v6905
    %v6907 = vrot.slane %v6906, 2
    %v6908 = vmax.f32 %v6906, %v6907
    %v6909 = vrot.slane %v6908, 1
    %v6910 = vmax.f32 %v6908, %v6909
    %v6911 = vsel %vm5300, %v5088, -inf
    %v6912 = vrot.slane %v6911, 4
    %v6913 = vmax.f32 %v6911, %v6912
    %v6914 = vrot.slane %v6913, 2
    %v6915 = vmax.f32 %v6913, %v6914
    %v6916 = vrot.slane %v6915, 1
    %v6917 = vmax.f32 %v6915, %v6916
    %v6918 = vsel %vm5300, %v5089, -inf
    %v6919 = vrot.slane %v6918, 4
    %v6920 = vmax.f32 %v6918, %v6919
    %v6921 = vrot.slane %v6920, 2
    %v6922 = vmax.f32 %v6920, %v6921
    %v6923 = vrot.slane %v6922, 1
    %v6924 = vmax.f32 %v6922, %v6923
    %v6925 = vsel %vm5300, %v4846, -inf
    %v6926 = vrot.slane %v6925, 4
    %v6927 = vmax.f32 %v6925, %v6926
    %v6928 = vrot.slane %v6927, 2
    %v6929 = vmax.f32 %v6927, %v6928
    %v6930 = vrot.slane %v6929, 1
    %v6931 = vmax.f32 %v6929, %v6930
    %v6932 = vsel %vm5300, %v5090, -inf
    %v6933 = vrot.slane %v6932, 4
    %v6934 = vmax.f32 %v6932, %v6933
    %v6935 = vrot.slane %v6934, 2
    %v6936 = vmax.f32 %v6934, %v6935
    %v6937 = vrot.slane %v6936, 1
    %v6938 = vmax.f32 %v6936, %v6937
    %v6939 = vsel %vm5300, %v5091, -inf
    %v6940 = vrot.slane %v6939, 4
    %v6941 = vmax.f32 %v6939, %v6940
    %v6942 = vrot.slane %v6941, 2
    %v6943 = vmax.f32 %v6941, %v6942
    %v6944 = vrot.slane %v6943, 1
    %v6945 = vmax.f32 %v6943, %v6944
    %v6946 = vsel %vm5300, %v5092, -inf
    %v6947 = vrot.slane %v6946, 4
    %v6948 = vmax.f32 %v6946, %v6947
    %v6949 = vrot.slane %v6948, 2
    %v6950 = vmax.f32 %v6948, %v6949
    %v6951 = vrot.slane %v6950, 1
    %v6952 = vmax.f32 %v6950, %v6951
    %v6953 = vsel %vm5300, %v4847, -inf
    %v6954 = vrot.slane %v6953, 4
    %v6955 = vmax.f32 %v6953, %v6954
    %v6956 = vrot.slane %v6955, 2
    %v6957 = vmax.f32 %v6955, %v6956
    %v6958 = vrot.slane %v6957, 1
    %v6959 = vmax.f32 %v6957, %v6958
    %v6960 = vsel %vm5300, %v5093, -inf
    %v6961 = vrot.slane %v6960, 4
    %v6962 = vmax.f32 %v6960, %v6961
    %v6963 = vrot.slane %v6962, 2
    %v6964 = vmax.f32 %v6962, %v6963
    %v6965 = vrot.slane %v6964, 1
    %v6966 = vmax.f32 %v6964, %v6965
    %v6967 = vsel %vm5300, %v5094, -inf
    %v6968 = vrot.slane %v6967, 4
    %v6969 = vmax.f32 %v6967, %v6968
    %v6970 = vrot.slane %v6969, 2
    %v6971 = vmax.f32 %v6969, %v6970
    %v6972 = vrot.slane %v6971, 1
    %v6973 = vmax.f32 %v6971, %v6972
    %v6974 = vsel %vm5300, %v5095, -inf
    %v6975 = vrot.slane %v6974, 4
    %v6976 = vmax.f32 %v6974, %v6975
    %v6977 = vrot.slane %v6976, 2
    %v6978 = vmax.f32 %v6976, %v6977
    %v6979 = vrot.slane %v6978, 1
    %v6980 = vmax.f32 %v6978, %v6979
    %v6981 = vsel %vm5300, %v4848, -inf
    %v6982 = vrot.slane %v6981, 4
    %v6983 = vmax.f32 %v6981, %v6982
    %v6984 = vrot.slane %v6983, 2
    %v6985 = vmax.f32 %v6983, %v6984
    %v6986 = vrot.slane %v6985, 1
    %v6987 = vmax.f32 %v6985, %v6986
    %v6988 = vsel %vm5300, %v5096, -inf
    %v6989 = vrot.slane %v6988, 4
    %v6990 = vmax.f32 %v6988, %v6989
    %v6991 = vrot.slane %v6990, 2
    %v6992 = vmax.f32 %v6990, %v6991
    %v6993 = vrot.slane %v6992, 1
    %v6994 = vmax.f32 %v6992, %v6993
    %v6995 = vsel %vm5300, %v5097, -inf
    %v6996 = vrot.slane %v6995, 4
    %v6997 = vmax.f32 %v6995, %v6996
    %v6998 = vrot.slane %v6997, 2
    %v6999 = vmax.f32 %v6997, %v6998
    %v7000 = vrot.slane %v6999, 1
    %v7001 = vmax.f32 %v6999, %v7000
    %v7002 = vsel %vm5300, %v5098, -inf
    %v7003 = vrot.slane %v7002, 4
    %v7004 = vmax.f32 %v7002, %v7003
    %v7005 = vrot.slane %v7004, 2
    %v7006 = vmax.f32 %v7004, %v7005
    %v7007 = vrot.slane %v7006, 1
    %v7008 = vmax.f32 %v7006, %v7007
    %v7009 = vsel %vm5300, %v4849, -inf
    %v7010 = vrot.slane %v7009, 4
    %v7011 = vmax.f32 %v7009, %v7010
    %v7012 = vrot.slane %v7011, 2
    %v7013 = vmax.f32 %v7011, %v7012
    %v7014 = vrot.slane %v7013, 1
    %v7015 = vmax.f32 %v7013, %v7014
    %v7016 = vsel %vm5300, %v5099, -inf
    %v7017 = vrot.slane %v7016, 4
    %v7018 = vmax.f32 %v7016, %v7017
    %v7019 = vrot.slane %v7018, 2
    %v7020 = vmax.f32 %v7018, %v7019
    %v7021 = vrot.slane %v7020, 1
    %v7022 = vmax.f32 %v7020, %v7021
    %v7023 = vsel %vm5300, %v5100, -inf
    %v7024 = vrot.slane %v7023, 4
    %v7025 = vmax.f32 %v7023, %v7024
    %v7026 = vrot.slane %v7025, 2
    %v7027 = vmax.f32 %v7025, %v7026
    %v7028 = vrot.slane %v7027, 1
    %v7029 = vmax.f32 %v7027, %v7028
    %v7030 = vsel %vm5300, %v5101, -inf
    %v7031 = vrot.slane %v7030, 4
    %v7032 = vmax.f32 %v7030, %v7031
    %v7033 = vrot.slane %v7032, 2
    %v7034 = vmax.f32 %v7032, %v7033
    %v7035 = vrot.slane %v7034, 1
    %v7036 = vmax.f32 %v7034, %v7035
    %v7037 = vsel %vm5300, %v4850, -inf
    %v7038 = vrot.slane %v7037, 4
    %v7039 = vmax.f32 %v7037, %v7038
    %v7040 = vrot.slane %v7039, 2
    %v7041 = vmax.f32 %v7039, %v7040
    %v7042 = vrot.slane %v7041, 1
    %v7043 = vmax.f32 %v7041, %v7042
    %v7044 = vsel %vm5300, %v5102, -inf
    %v7045 = vrot.slane %v7044, 4
    %v7046 = vmax.f32 %v7044, %v7045
    %v7047 = vrot.slane %v7046, 2
    %v7048 = vmax.f32 %v7046, %v7047
    %v7049 = vrot.slane %v7048, 1
    %v7050 = vmax.f32 %v7048, %v7049
    %v7051 = vsel %vm5300, %v5103, -inf
    %v7052 = vrot.slane %v7051, 4
    %v7053 = vmax.f32 %v7051, %v7052
    %v7054 = vrot.slane %v7053, 2
    %v7055 = vmax.f32 %v7053, %v7054
    %v7056 = vrot.slane %v7055, 1
    %v7057 = vmax.f32 %v7055, %v7056
    %v7058 = vsel %vm5300, %v5104, -inf
    %v7059 = vrot.slane %v7058, 4
    %v7060 = vmax.f32 %v7058, %v7059
    %v7061 = vrot.slane %v7060, 2
    %v7062 = vmax.f32 %v7060, %v7061
    %v7063 = vrot.slane %v7062, 1
    %v7064 = vmax.f32 %v7062, %v7063
    %v7065 = vsel %vm5300, %v4851, -inf
    %v7066 = vrot.slane %v7065, 4
    %v7067 = vmax.f32 %v7065, %v7066
    %v7068 = vrot.slane %v7067, 2
    %v7069 = vmax.f32 %v7067, %v7068
    %v7070 = vrot.slane %v7069, 1
    %v7071 = vmax.f32 %v7069, %v7070
    %v7072 = vsel %vm5300, %v5105, -inf
    %v7073 = vrot.slane %v7072, 4
    %v7074 = vmax.f32 %v7072, %v7073
    %v7075 = vrot.slane %v7074, 2
    %v7076 = vmax.f32 %v7074, %v7075
    %v7077 = vrot.slane %v7076, 1
    %v7078 = vmax.f32 %v7076, %v7077
    %v7079 = vsel %vm5300, %v5106, -inf
    %v7080 = vrot.slane %v7079, 4
    %v7081 = vmax.f32 %v7079, %v7080
    %v7082 = vrot.slane %v7081, 2
    %v7083 = vmax.f32 %v7081, %v7082
    %v7084 = vrot.slane %v7083, 1
    %v7085 = vmax.f32 %v7083, %v7084
    %v7086 = vsel %vm5300, %v5107, -inf
    %v7087 = vrot.slane %v7086, 4
    %v7088 = vmax.f32 %v7086, %v7087
    %v7089 = vrot.slane %v7088, 2
    %v7090 = vmax.f32 %v7088, %v7089
    %v7091 = vrot.slane %v7090, 1
    %v7092 = vmax.f32 %v7090, %v7091
    %v7093 = vmax.f32 %v5307, %v5363
    %v7094 = vmax.f32 %v5314, %v5370
    %v7095 = vmax.f32 %v5321, %v5377
    %v7096 = vmax.f32 %v5328, %v5384
    %v7097 = vmax.f32 %v5335, %v5391
    %v7098 = vmax.f32 %v5342, %v5398
    %v7099 = vmax.f32 %v5349, %v5405
    %v7100 = vmax.f32 %v5356, %v5412
    %v7101 = vmax.f32 %v5419, %v5475
    %v7102 = vmax.f32 %v5426, %v5482
    %v7103 = vmax.f32 %v5433, %v5489
    %v7104 = vmax.f32 %v5440, %v5496
    %v7105 = vmax.f32 %v5447, %v5503
    %v7106 = vmax.f32 %v5454, %v5510
    %v7107 = vmax.f32 %v5461, %v5517
    %v7108 = vmax.f32 %v5468, %v5524
    %v7109 = vmax.f32 %v5531, %v5587
    %v7110 = vmax.f32 %v5538, %v5594
    %v7111 = vmax.f32 %v5545, %v5601
    %v7112 = vmax.f32 %v5552, %v5608
    %v7113 = vmax.f32 %v5559, %v5615
    %v7114 = vmax.f32 %v5566, %v5622
    %v7115 = vmax.f32 %v5573, %v5629
    %v7116 = vmax.f32 %v5580, %v5636
    %v7117 = vmax.f32 %v5643, %v5699
    %v7118 = vmax.f32 %v5650, %v5706
    %v7119 = vmax.f32 %v5657, %v5713
    %v7120 = vmax.f32 %v5664, %v5720
    %v7121 = vmax.f32 %v5671, %v5727
    %v7122 = vmax.f32 %v5678, %v5734
    %v7123 = vmax.f32 %v5685, %v5741
    %v7124 = vmax.f32 %v5692, %v5748
    %v7125 = vmax.f32 %v5755, %v5811
    %v7126 = vmax.f32 %v5762, %v5818
    %v7127 = vmax.f32 %v5769, %v5825
    %v7128 = vmax.f32 %v5776, %v5832
    %v7129 = vmax.f32 %v5783, %v5839
    %v7130 = vmax.f32 %v5790, %v5846
    %v7131 = vmax.f32 %v5797, %v5853
    %v7132 = vmax.f32 %v5804, %v5860
    %v7133 = vmax.f32 %v5867, %v5923
    %v7134 = vmax.f32 %v5874, %v5930
    %v7135 = vmax.f32 %v5881, %v5937
    %v7136 = vmax.f32 %v5888, %v5944
    %v7137 = vmax.f32 %v5895, %v5951
    %v7138 = vmax.f32 %v5902, %v5958
    %v7139 = vmax.f32 %v5909, %v5965
    %v7140 = vmax.f32 %v5916, %v5972
    %v7141 = vmax.f32 %v5979, %v6035
    %v7142 = vmax.f32 %v5986, %v6042
    %v7143 = vmax.f32 %v5993, %v6049
    %v7144 = vmax.f32 %v6000, %v6056
    %v7145 = vmax.f32 %v6007, %v6063
    %v7146 = vmax.f32 %v6014, %v6070
    %v7147 = vmax.f32 %v6021, %v6077
    %v7148 = vmax.f32 %v6028, %v6084
    %v7149 = vmax.f32 %v6091, %v6147
    %v7150 = vmax.f32 %v6098, %v6154
    %v7151 = vmax.f32 %v6105, %v6161
    %v7152 = vmax.f32 %v6112, %v6168
    %v7153 = vmax.f32 %v6119, %v6175
    %v7154 = vmax.f32 %v6126, %v6182
    %v7155 = vmax.f32 %v6133, %v6189
    %v7156 = vmax.f32 %v6140, %v6196
    %v7157 = vmax.f32 %v6203, %v6259
    %v7158 = vmax.f32 %v6210, %v6266
    %v7159 = vmax.f32 %v6217, %v6273
    %v7160 = vmax.f32 %v6224, %v6280
    %v7161 = vmax.f32 %v6231, %v6287
    %v7162 = vmax.f32 %v6238, %v6294
    %v7163 = vmax.f32 %v6245, %v6301
    %v7164 = vmax.f32 %v6252, %v6308
    %v7165 = vmax.f32 %v6315, %v6371
    %v7166 = vmax.f32 %v6322, %v6378
    %v7167 = vmax.f32 %v6329, %v6385
    %v7168 = vmax.f32 %v6336, %v6392
    %v7169 = vmax.f32 %v6343, %v6399
    %v7170 = vmax.f32 %v6350, %v6406
    %v7171 = vmax.f32 %v6357, %v6413
    %v7172 = vmax.f32 %v6364, %v6420
    %v7173 = vmax.f32 %v6427, %v6483
    %v7174 = vmax.f32 %v6434, %v6490
    %v7175 = vmax.f32 %v6441, %v6497
    %v7176 = vmax.f32 %v6448, %v6504
    %v7177 = vmax.f32 %v6455, %v6511
    %v7178 = vmax.f32 %v6462, %v6518
    %v7179 = vmax.f32 %v6469, %v6525
    %v7180 = vmax.f32 %v6476, %v6532
    %v7181 = vmax.f32 %v6539, %v6595
    %v7182 = vmax.f32 %v6546, %v6602
    %v7183 = vmax.f32 %v6553, %v6609
    %v7184 = vmax.f32 %v6560, %v6616
    %v7185 = vmax.f32 %v6567, %v6623
    %v7186 = vmax.f32 %v6574, %v6630
    %v7187 = vmax.f32 %v6581, %v6637
    %v7188 = vmax.f32 %v6588, %v6644
    %v7189 = vmax.f32 %v6651, %v6707
    %v7190 = vmax.f32 %v6658, %v6714
    %v7191 = vmax.f32 %v6665, %v6721
    %v7192 = vmax.f32 %v6672, %v6728
    %v7193 = vmax.f32 %v6679, %v6735
    %v7194 = vmax.f32 %v6686, %v6742
    %v7195 = vmax.f32 %v6693, %v6749
    %v7196 = vmax.f32 %v6700, %v6756
    %v7197 = vmax.f32 %v6763, %v6819
    %v7198 = vmax.f32 %v6770, %v6826
    %v7199 = vmax.f32 %v6777, %v6833
    %v7200 = vmax.f32 %v6784, %v6840
    %v7201 = vmax.f32 %v6791, %v6847
    %v7202 = vmax.f32 %v6798, %v6854
    %v7203 = vmax.f32 %v6805, %v6861
    %v7204 = vmax.f32 %v6812, %v6868
    %v7205 = vmax.f32 %v6875, %v6931
    %v7206 = vmax.f32 %v6882, %v6938
    %v7207 = vmax.f32 %v6889, %v6945
    %v7208 = vmax.f32 %v6896, %v6952
    %v7209 = vmax.f32 %v6903, %v6959
    %v7210 = vmax.f32 %v6910, %v6966
    %v7211 = vmax.f32 %v6917, %v6973
    %v7212 = vmax.f32 %v6924, %v6980
    %v7213 = vmax.f32 %v6987, %v7043
    %v7214 = vmax.f32 %v6994, %v7050
    %v7215 = vmax.f32 %v7001, %v7057
    %v7216 = vmax.f32 %v7008, %v7064
    %v7217 = vmax.f32 %v7015, %v7071
    %v7218 = vmax.f32 %v7022, %v7078
    %v7219 = vmax.f32 %v7029, %v7085
    %v7220 = vmax.f32 %v7036, %v7092
    %vm7221 = vcmask 130048
    %7222 = vst.msk [vmem:[#allocation2] sm:$0xff] %vm7221, 0.0
    %7223 = vst.msk [vmem:[#allocation2 + $0x8] sm:$0x3] %vm5300, 0.0
    %7224 = vst.msk [vmem:[#allocation2 + $0x10] sm:$0xff] %vm7221, 0.0
    %7225 = vst.msk [vmem:[#allocation2 + $0x18] sm:$0x3] %vm5300, 0.0
    %7226 = vst.msk [vmem:[#allocation2 + $0x20] sm:$0xff] %vm7221, 0.0
    %7227 = vst.msk [vmem:[#allocation2 + $0x28] sm:$0x3] %vm5300, 0.0
    %7228 = vst.msk [vmem:[#allocation2 + $0x30] sm:$0xff] %vm7221, 0.0
    %7229 = vst.msk [vmem:[#allocation2 + $0x38] sm:$0x3] %vm5300, 0.0
    %7230 = vst.msk [vmem:[#allocation2 + $0x40] sm:$0xff] %vm7221, 0.0
    %7231 = vst.msk [vmem:[#allocation2 + $0x48] sm:$0x3] %vm5300, 0.0
    %7232 = vst.msk [vmem:[#allocation2 + $0x50] sm:$0xff] %vm7221, 0.0
    %7233 = vst.msk [vmem:[#allocation2 + $0x58] sm:$0x3] %vm5300, 0.0
    %7234 = vst.msk [vmem:[#allocation2 + $0x60] sm:$0xff] %vm7221, 0.0
    %7235 = vst.msk [vmem:[#allocation2 + $0x68] sm:$0x3] %vm5300, 0.0
    %7236 = vst.msk [vmem:[#allocation2 + $0x70] sm:$0xff] %vm7221, 0.0
    %7237 = vst.msk [vmem:[#allocation2 + $0x78] sm:$0x3] %vm5300, 0.0
    %7238 = vst.msk [vmem:[#allocation2 + $0x80] sm:$0xff] %vm7221, 0.0
    %7239 = vst.msk [vmem:[#allocation2 + $0x88] sm:$0x3] %vm5300, 0.0
    %7240 = vst.msk [vmem:[#allocation2 + $0x90] sm:$0xff] %vm7221, 0.0
    %7241 = vst.msk [vmem:[#allocation2 + $0x98] sm:$0x3] %vm5300, 0.0
    %7242 = vst.msk [vmem:[#allocation2 + $0xa0] sm:$0xff] %vm7221, 0.0
    %7243 = vst.msk [vmem:[#allocation2 + $0xa8] sm:$0x3] %vm5300, 0.0
    %7244 = vst.msk [vmem:[#allocation2 + $0xb0] sm:$0xff] %vm7221, 0.0
    %7245 = vst.msk [vmem:[#allocation2 + $0xb8] sm:$0x3] %vm5300, 0.0
    %7246 = vst.msk [vmem:[#allocation2 + $0xc0] sm:$0xff] %vm7221, 0.0
    %7247 = vst.msk [vmem:[#allocation2 + $0xc8] sm:$0x3] %vm5300, 0.0
    %7248 = vst.msk [vmem:[#allocation2 + $0xd0] sm:$0xff] %vm7221, 0.0
    %7249 = vst.msk [vmem:[#allocation2 + $0xd8] sm:$0x3] %vm5300, 0.0
    %7250 = vst.msk [vmem:[#allocation2 + $0xe0] sm:$0xff] %vm7221, 0.0
    %7251 = vst.msk [vmem:[#allocation2 + $0xe8] sm:$0x3] %vm5300, 0.0
    %7252 = vst.msk [vmem:[#allocation2 + $0xf0] sm:$0xff] %vm7221, 0.0
    %7253 = vst.msk [vmem:[#allocation2 + $0xf8] sm:$0x3] %vm5300, 0.0
    %7254 = vst.msk [vmem:[#allocation2 + $0x100] sm:$0xff] %vm7221, 0.0
    %7255 = vst.msk [vmem:[#allocation2 + $0x108] sm:$0x3] %vm5300, 0.0
    %7256 = vst.msk [vmem:[#allocation2 + $0x110] sm:$0xff] %vm7221, 0.0
    %7257 = vst.msk [vmem:[#allocation2 + $0x118] sm:$0x3] %vm5300, 0.0
    %7258 = vst.msk [vmem:[#allocation2 + $0x120] sm:$0xff] %vm7221, 0.0
    %7259 = vst.msk [vmem:[#allocation2 + $0x128] sm:$0x3] %vm5300, 0.0
    %7260 = vst.msk [vmem:[#allocation2 + $0x130] sm:$0xff] %vm7221, 0.0
    %7261 = vst.msk [vmem:[#allocation2 + $0x138] sm:$0x3] %vm5300, 0.0
    %vm7390 = vcmask 1041409
    %v7391 = vsel %vm7390, %v7094, %v7093
    %vm7392 = vcmask 1042434
    %v7393 = vsel %vm7392, %v7095, %v7391
    %vm7394 = vcmask 1043459
    %v7395 = vsel %vm7394, %v7096, %v7393
    %vm7396 = vcmask 1044484
    %v7397 = vsel %vm7396, %v7097, %v7395
    %vm7398 = vcmask 1045509
    %v7399 = vsel %vm7398, %v7098, %v7397
    %vm7400 = vcmask 1046534
    %v7401 = vsel %vm7400, %v7099, %v7399
    %vm7402 = vcmask 1047559
    %v7403 = vsel %vm7402, %v7100, %v7401
    %v7404 = vsel %vm7390, %v7102, %v7101
    %v7405 = vsel %vm7392, %v7103, %v7404
    %v7406 = vsel %vm7394, %v7104, %v7405
    %v7407 = vsel %vm7396, %v7105, %v7406
    %v7408 = vsel %vm7398, %v7106, %v7407
    %v7409 = vsel %vm7400, %v7107, %v7408
    %v7410 = vsel %vm7402, %v7108, %v7409
    %v7411 = vsel %vm7390, %v7110, %v7109
    %v7412 = vsel %vm7392, %v7111, %v7411
    %v7413 = vsel %vm7394, %v7112, %v7412
    %v7414 = vsel %vm7396, %v7113, %v7413
    %v7415 = vsel %vm7398, %v7114, %v7414
    %v7416 = vsel %vm7400, %v7115, %v7415
    %v7417 = vsel %vm7402, %v7116, %v7416
    %v7418 = vsel %vm7390, %v7118, %v7117
    %v7419 = vsel %vm7392, %v7119, %v7418
    %v7420 = vsel %vm7394, %v7120, %v7419
    %v7421 = vsel %vm7396, %v7121, %v7420
    %v7422 = vsel %vm7398, %v7122, %v7421
    %v7423 = vsel %vm7400, %v7123, %v7422
    %v7424 = vsel %vm7402, %v7124, %v7423
    %v7425 = vsel %vm7390, %v7126, %v7125
    %v7426 = vsel %vm7392, %v7127, %v7425
    %v7427 = vsel %vm7394, %v7128, %v7426
    %v7428 = vsel %vm7396, %v7129, %v7427
    %v7429 = vsel %vm7398, %v7130, %v7428
    %v7430 = vsel %vm7400, %v7131, %v7429
    %v7431 = vsel %vm7402, %v7132, %v7430
    %v7432 = vsel %vm7390, %v7134, %v7133
    %v7433 = vsel %vm7392, %v7135, %v7432
    %v7434 = vsel %vm7394, %v7136, %v7433
    %v7435 = vsel %vm7396, %v7137, %v7434
    %v7436 = vsel %vm7398, %v7138, %v7435
    %v7437 = vsel %vm7400, %v7139, %v7436
    %v7438 = vsel %vm7402, %v7140, %v7437
    %v7439 = vsel %vm7390, %v7142, %v7141
    %v7440 = vsel %vm7392, %v7143, %v7439
    %v7441 = vsel %vm7394, %v7144, %v7440
    %v7442 = vsel %vm7396, %v7145, %v7441
    %v7443 = vsel %vm7398, %v7146, %v7442
    %v7444 = vsel %vm7400, %v7147, %v7443
    %v7445 = vsel %vm7402, %v7148, %v7444
    %v7446 = vsel %vm7390, %v7150, %v7149
    %v7447 = vsel %vm7392, %v7151, %v7446
    %v7448 = vsel %vm7394, %v7152, %v7447
    %v7449 = vsel %vm7396, %v7153, %v7448
    %v7450 = vsel %vm7398, %v7154, %v7449
    %v7451 = vsel %vm7400, %v7155, %v7450
    %v7452 = vsel %vm7402, %v7156, %v7451
    %v7453 = vsel %vm7390, %v7158, %v7157
    %v7454 = vsel %vm7392, %v7159, %v7453
    %v7455 = vsel %vm7394, %v7160, %v7454
    %v7456 = vsel %vm7396, %v7161, %v7455
    %v7457 = vsel %vm7398, %v7162, %v7456
    %v7458 = vsel %vm7400, %v7163, %v7457
    %v7459 = vsel %vm7402, %v7164, %v7458
    %v7460 = vsel %vm7390, %v7166, %v7165
    %v7461 = vsel %vm7392, %v7167, %v7460
    %v7462 = vsel %vm7394, %v7168, %v7461
    %v7463 = vsel %vm7396, %v7169, %v7462
    %v7464 = vsel %vm7398, %v7170, %v7463
    %v7465 = vsel %vm7400, %v7171, %v7464
    %v7466 = vsel %vm7402, %v7172, %v7465
    %v7467 = vsel %vm7390, %v7174, %v7173
    %v7468 = vsel %vm7392, %v7175, %v7467
    %v7469 = vsel %vm7394, %v7176, %v7468
    %v7470 = vsel %vm7396, %v7177, %v7469
    %v7471 = vsel %vm7398, %v7178, %v7470
    %v7472 = vsel %vm7400, %v7179, %v7471
    %v7473 = vsel %vm7402, %v7180, %v7472
    %v7474 = vsel %vm7390, %v7182, %v7181
    %v7475 = vsel %vm7392, %v7183, %v7474
    %v7476 = vsel %vm7394, %v7184, %v7475
    %v7477 = vsel %vm7396, %v7185, %v7476
    %v7478 = vsel %vm7398, %v7186, %v7477
    %v7479 = vsel %vm7400, %v7187, %v7478
    %v7480 = vsel %vm7402, %v7188, %v7479
    %v7481 = vsel %vm7390, %v7190, %v7189
    %v7482 = vsel %vm7392, %v7191, %v7481
    %v7483 = vsel %vm7394, %v7192, %v7482
    %v7484 = vsel %vm7396, %v7193, %v7483
    %v7485 = vsel %vm7398, %v7194, %v7484
    %v7486 = vsel %vm7400, %v7195, %v7485
    %v7487 = vsel %vm7402, %v7196, %v7486
    %v7488 = vsel %vm7390, %v7198, %v7197
    %v7489 = vsel %vm7392, %v7199, %v7488
    %v7490 = vsel %vm7394, %v7200, %v7489
    %v7491 = vsel %vm7396, %v7201, %v7490
    %v7492 = vsel %vm7398, %v7202, %v7491
    %v7493 = vsel %vm7400, %v7203, %v7492
    %v7494 = vsel %vm7402, %v7204, %v7493
    %v7495 = vsel %vm7390, %v7206, %v7205
    %v7496 = vsel %vm7392, %v7207, %v7495
    %v7497 = vsel %vm7394, %v7208, %v7496
    %v7498 = vsel %vm7396, %v7209, %v7497
    %v7499 = vsel %vm7398, %v7210, %v7498
    %v7500 = vsel %vm7400, %v7211, %v7499
    %v7501 = vsel %vm7402, %v7212, %v7500
    %v7502 = vsel %vm7390, %v7214, %v7213
    %v7503 = vsel %vm7392, %v7215, %v7502
    %v7504 = vsel %vm7394, %v7216, %v7503
    %v7505 = vsel %vm7396, %v7217, %v7504
    %v7506 = vsel %vm7398, %v7218, %v7505
    %v7507 = vsel %vm7400, %v7219, %v7506
    %v7508 = vsel %vm7402, %v7220, %v7507
    %s7525 = scalar_lea.vmem [#allocation2], 16
    %7526 = vst.msk [vmem:[%s7525 + $0x1] sm:$0xff] %vm7221, %v7403
    %7527 = vst.msk [vmem:[%s7525 + $0x11] sm:$0xff] %vm7221, %v7410
    %7528 = vst.msk [vmem:[%s7525 + $0x21] sm:$0xff] %vm7221, %v7417
    %7529 = vst.msk [vmem:[%s7525 + $0x31] sm:$0xff] %vm7221, %v7424
    %7530 = vst.msk [vmem:[%s7525 + $0x41] sm:$0xff] %vm7221, %v7431
    %7531 = vst.msk [vmem:[%s7525 + $0x51] sm:$0xff] %vm7221, %v7438
    %7532 = vst.msk [vmem:[%s7525 + $0x61] sm:$0xff] %vm7221, %v7445
    %7533 = vst.msk [vmem:[%s7525 + $0x71] sm:$0xff] %vm7221, %v7452
    %7534 = vst.msk [vmem:[%s7525 + $0xa1] sm:$0xff] %vm7221, %v7459
    %7535 = vst.msk [vmem:[%s7525 + $0xb1] sm:$0xff] %vm7221, %v7466
    %7536 = vst.msk [vmem:[%s7525 + $0xc1] sm:$0xff] %vm7221, %v7473
    %7537 = vst.msk [vmem:[%s7525 + $0xd1] sm:$0xff] %vm7221, %v7480
    %7538 = vst.msk [vmem:[%s7525 + $0xe1] sm:$0xff] %vm7221, %v7487
    %7539 = vst.msk [vmem:[%s7525 + $0xf1] sm:$0xff] %vm7221, %v7494
    %7540 = vst.msk [vmem:[%s7525 + $0x101] sm:$0xff] %vm7221, %v7501
    %7541 = vst.msk [vmem:[%s7525 + $0x111] sm:$0xff] %vm7221, %v7508
    %v7542 = vld [vmem:[#allocation2] sm:$0xff]
    %v7543 = vld [vmem:[#allocation2 + $0x10] sm:$0xff]
    %v7544 = vld [vmem:[#allocation2 + $0x20] sm:$0xff]
    %v7545 = vld [vmem:[#allocation2 + $0x30] sm:$0xff]
    %v7546 = vld [vmem:[#allocation2 + $0x40] sm:$0xff]
    %v7547 = vld [vmem:[#allocation2 + $0x50] sm:$0xff]
    %v7548 = vld [vmem:[#allocation2 + $0x60] sm:$0xff]
    %v7549 = vld [vmem:[#allocation2 + $0x70] sm:$0xff]
    %v7550 = vld [vmem:[#allocation2 + $0xa0] sm:$0xff]
    %v7551 = vld [vmem:[#allocation2 + $0xb0] sm:$0xff]
    %v7552 = vld [vmem:[#allocation2 + $0xc0] sm:$0xff]
    %v7553 = vld [vmem:[#allocation2 + $0xd0] sm:$0xff]
    %v7554 = vld [vmem:[#allocation2 + $0xe0] sm:$0xff]
    %v7555 = vld [vmem:[#allocation2 + $0xf0] sm:$0xff]
    %v7556 = vld [vmem:[#allocation2 + $0x100] sm:$0xff]
    %v7557 = vld [vmem:[#allocation2 + $0x110] sm:$0xff]
    %v7558 = vld [vmem:[%s3] sm:$0xff]
    %v7559 = vld [vmem:[%s3 + $0x8] sm:$0xff]
    %v7560 = vld [vmem:[#allocation2 + $0x1] sm:$0xff]
    %v7561 = vld [vmem:[#allocation2 + $0x11] sm:$0xff]
    %v7562 = vld [vmem:[#allocation2 + $0x21] sm:$0xff]
    %v7563 = vld [vmem:[#allocation2 + $0x31] sm:$0xff]
    %v7564 = vld [vmem:[#allocation2 + $0x41] sm:$0xff]
    %v7565 = vld [vmem:[#allocation2 + $0x51] sm:$0xff]
    %v7566 = vld [vmem:[#allocation2 + $0x61] sm:$0xff]
    %v7567 = vld [vmem:[#allocation2 + $0x71] sm:$0xff]
    %v7568 = vld [vmem:[#allocation2 + $0xa1] sm:$0xff]
    %v7569 = vld [vmem:[#allocation2 + $0xb1] sm:$0xff]
    %v7570 = vld [vmem:[#allocation2 + $0xc1] sm:$0xff]
    %v7571 = vld [vmem:[#allocation2 + $0xd1] sm:$0xff]
    %v7572 = vld [vmem:[#allocation2 + $0xe1] sm:$0xff]
    %v7573 = vld [vmem:[#allocation2 + $0xf1] sm:$0xff]
    %v7574 = vld [vmem:[#allocation2 + $0x101] sm:$0xff]
    %v7575 = vld [vmem:[#allocation2 + $0x111] sm:$0xff]
    %s7576 = scalar_lea.vmem %s3, 16
    %v7577 = vld [vmem:[%s7576] sm:$0xff]
    %v7578 = vld [vmem:[%s7576 + $0x8] sm:$0xff]
    %v7580 = vsel %vm7221, %v7560, 0
    %v7583 = vsel %vm7221, %v7561, 0
    %v7586 = vsel %vm7221, %v7562, 0
    %v7589 = vsel %vm7221, %v7563, 0
    %v7592 = vsel %vm7221, %v7564, 0
    %v7595 = vsel %vm7221, %v7565, 0
    %v7598 = vsel %vm7221, %v7566, 0
    %v7601 = vsel %vm7221, %v7567, 0
    %v7604 = vsel %vm7221, %v7568, 0
    %v7607 = vsel %vm7221, %v7569, 0
    %v7610 = vsel %vm7221, %v7570, 0
    %v7613 = vsel %vm7221, %v7571, 0
    %v7616 = vsel %vm7221, %v7572, 0
    %v7619 = vsel %vm7221, %v7573, 0
    %v7622 = vsel %vm7221, %v7574, 0
    %v7625 = vsel %vm7221, %v7575, 0
    %7627 = vmatpush.msra.mxu0 0.0
    %7628 = vmatpush.msra.mxu0 0.0
    %7629 = vmatpush.msra.mxu0 0.0
    %7630 = vmatpush.msra.mxu0 0.0
    %7631 = vmatpush.msra.mxu0 0.0
    %7632 = vmatpush.msra.mxu0 0.0
    %7633 = vmatpush.msra.mxu0 0.0
    %7634 = vmatpush.msra.mxu0 0.0
    %7635 = vmatpush.msra.mxu0 0.0
    %7636 = vmatpush.msra.mxu0 0.0
    %7637 = vmatpush.msra.mxu0 0.0
    %7638 = vmatpush.msra.mxu0 0.0
    %7639 = vmatpush.msra.mxu0 0.0
    %7640 = vmatpush.msra.mxu0 0.0
    %7641 = vmatpush.msra.mxu0 %v7578
    %7642 = vmatpush.msra.mxu0 %v7577
    %7643 = vmatmul.f32.gmra.mxu0 %v7580
    %v7644 = vpop.f32.mrf.mxu0
    %v7645 = vadd.f32 0.0, %v7644
    %7646 = vmatmul.f32.gmra.mxu0 %v7583
    %v7647 = vpop.f32.mrf.mxu0
    %v7648 = vadd.f32 0.0, %v7647
    %7649 = vmatmul.f32.gmra.mxu0 %v7586
    %v7650 = vpop.f32.mrf.mxu0
    %v7651 = vadd.f32 0.0, %v7650
    %7652 = vmatmul.f32.gmra.mxu0 %v7589
    %v7653 = vpop.f32.mrf.mxu0
    %v7654 = vadd.f32 0.0, %v7653
    %7655 = vmatmul.f32.gmra.mxu0 %v7592
    %v7656 = vpop.f32.mrf.mxu0
    %v7657 = vadd.f32 0.0, %v7656
    %7658 = vmatmul.f32.gmra.mxu0 %v7595
    %v7659 = vpop.f32.mrf.mxu0
    %v7660 = vadd.f32 0.0, %v7659
    %7661 = vmatmul.f32.gmra.mxu0 %v7598
    %v7662 = vpop.f32.mrf.mxu0
    %v7663 = vadd.f32 0.0, %v7662
    %7664 = vmatmul.f32.gmra.mxu0 %v7601
    %v7665 = vpop.f32.mrf.mxu0
    %v7666 = vadd.f32 0.0, %v7665
    %7667 = vmatmul.f32.gmra.mxu0 %v7604
    %v7668 = vpop.f32.mrf.mxu0
    %v7669 = vadd.f32 0.0, %v7668
    %7670 = vmatmul.f32.gmra.mxu0 %v7607
    %v7671 = vpop.f32.mrf.mxu0
    %v7672 = vadd.f32 0.0, %v7671
    %7673 = vmatmul.f32.gmra.mxu0 %v7610
    %v7674 = vpop.f32.mrf.mxu0
    %v7675 = vadd.f32 0.0, %v7674
    %7676 = vmatmul.f32.gmra.mxu0 %v7613
    %v7677 = vpop.f32.mrf.mxu0
    %v7678 = vadd.f32 0.0, %v7677
    %7679 = vmatmul.f32.gmra.mxu0 %v7616
    %v7680 = vpop.f32.mrf.mxu0
    %v7681 = vadd.f32 0.0, %v7680
    %7682 = vmatmul.f32.gmra.mxu0 %v7619
    %v7683 = vpop.f32.mrf.mxu0
    %v7684 = vadd.f32 0.0, %v7683
    %7685 = vmatmul.f32.gmra.mxu0 %v7622
    %v7686 = vpop.f32.mrf.mxu0
    %v7687 = vadd.f32 0.0, %v7686
    %7688 = vmatmul.f32.gmra.mxu0 %v7625
    %v7689 = vpop.f32.mrf.mxu0
    %v7690 = vadd.f32 0.0, %v7689
    %7691 = vdwg.mxu0
    %v7693 = vsel %vm7221, %v7542, 0
    %v7696 = vsel %vm7221, %v7543, 0
    %v7699 = vsel %vm7221, %v7544, 0
    %v7702 = vsel %vm7221, %v7545, 0
    %v7705 = vsel %vm7221, %v7546, 0
    %v7708 = vsel %vm7221, %v7547, 0
    %v7711 = vsel %vm7221, %v7548, 0
    %v7714 = vsel %vm7221, %v7549, 0
    %v7717 = vsel %vm7221, %v7550, 0
    %v7720 = vsel %vm7221, %v7551, 0
    %v7723 = vsel %vm7221, %v7552, 0
    %v7726 = vsel %vm7221, %v7553, 0
    %v7729 = vsel %vm7221, %v7554, 0
    %v7732 = vsel %vm7221, %v7555, 0
    %v7735 = vsel %vm7221, %v7556, 0
    %v7738 = vsel %vm7221, %v7557, 0
    %7740 = vmatpush.msra.mxu0 0.0
    %7741 = vmatpush.msra.mxu0 0.0
    %7742 = vmatpush.msra.mxu0 0.0
    %7743 = vmatpush.msra.mxu0 0.0
    %7744 = vmatpush.msra.mxu0 0.0
    %7745 = vmatpush.msra.mxu0 0.0
    %7746 = vmatpush.msra.mxu0 0.0
    %7747 = vmatpush.msra.mxu0 0.0
    %7748 = vmatpush.msra.mxu0 0.0
    %7749 = vmatpush.msra.mxu0 0.0
    %7750 = vmatpush.msra.mxu0 0.0
    %7751 = vmatpush.msra.mxu0 0.0
    %7752 = vmatpush.msra.mxu0 0.0
    %7753 = vmatpush.msra.mxu0 0.0
    %7754 = vmatpush.msra.mxu0 %v7559
    %7755 = vmatpush.msra.mxu0 %v7558
    %7756 = vmatmul.f32.gmra.mxu0 %v7693
    %v7757 = vpop.f32.mrf.mxu0
    %v7758 = vadd.f32 %v7645, %v7757
    %7759 = vmatmul.f32.gmra.mxu0 %v7696
    %v7760 = vpop.f32.mrf.mxu0
    %v7761 = vadd.f32 %v7648, %v7760
    %7762 = vmatmul.f32.gmra.mxu0 %v7699
    %v7763 = vpop.f32.mrf.mxu0
    %v7764 = vadd.f32 %v7651, %v7763
    %7765 = vmatmul.f32.gmra.mxu0 %v7702
    %v7766 = vpop.f32.mrf.mxu0
    %v7767 = vadd.f32 %v7654, %v7766
    %7768 = vmatmul.f32.gmra.mxu0 %v7705
    %v7769 = vpop.f32.mrf.mxu0
    %v7770 = vadd.f32 %v7657, %v7769
    %7771 = vmatmul.f32.gmra.mxu0 %v7708
    %v7772 = vpop.f32.mrf.mxu0
    %v7773 = vadd.f32 %v7660, %v7772
    %7774 = vmatmul.f32.gmra.mxu0 %v7711
    %v7775 = vpop.f32.mrf.mxu0
    %v7776 = vadd.f32 %v7663, %v7775
    %7777 = vmatmul.f32.gmra.mxu0 %v7714
    %v7778 = vpop.f32.mrf.mxu0
    %v7779 = vadd.f32 %v7666, %v7778
    %7780 = vmatmul.f32.gmra.mxu0 %v7717
    %v7781 = vpop.f32.mrf.mxu0
    %v7782 = vadd.f32 %v7669, %v7781
    %7783 = vmatmul.f32.gmra.mxu0 %v7720
    %v7784 = vpop.f32.mrf.mxu0
    %v7785 = vadd.f32 %v7672, %v7784
    %7786 = vmatmul.f32.gmra.mxu0 %v7723
    %v7787 = vpop.f32.mrf.mxu0
    %v7788 = vadd.f32 %v7675, %v7787
    %7789 = vmatmul.f32.gmra.mxu0 %v7726
    %v7790 = vpop.f32.mrf.mxu0
    %v7791 = vadd.f32 %v7678, %v7790
    %7792 = vmatmul.f32.gmra.mxu0 %v7729
    %v7793 = vpop.f32.mrf.mxu0
    %v7794 = vadd.f32 %v7681, %v7793
    %7795 = vmatmul.f32.gmra.mxu0 %v7732
    %v7796 = vpop.f32.mrf.mxu0
    %v7797 = vadd.f32 %v7684, %v7796
    %7798 = vmatmul.f32.gmra.mxu0 %v7735
    %v7799 = vpop.f32.mrf.mxu0
    %v7800 = vadd.f32 %v7687, %v7799
    %7801 = vmatmul.f32.gmra.mxu0 %v7738
    %v7802 = vpop.f32.mrf.mxu0
    %v7803 = vadd.f32 %v7690, %v7802
    %7804 = vdwg.mxu0
    %v7805 = vld [vmem:[#allocation2 + $0x2] sm:$0xff]
    %v7806 = vld [vmem:[#allocation2 + $0x12] sm:$0xff]
    %v7807 = vld [vmem:[#allocation2 + $0x22] sm:$0xff]
    %v7808 = vld [vmem:[#allocation2 + $0x32] sm:$0xff]
    %v7809 = vld [vmem:[#allocation2 + $0x42] sm:$0xff]
    %v7810 = vld [vmem:[#allocation2 + $0x52] sm:$0xff]
    %v7811 = vld [vmem:[#allocation2 + $0x62] sm:$0xff]
    %v7812 = vld [vmem:[#allocation2 + $0x72] sm:$0xff]
    %v7813 = vld [vmem:[#allocation2 + $0xa2] sm:$0xff]
    %v7814 = vld [vmem:[#allocation2 + $0xb2] sm:$0xff]
    %v7815 = vld [vmem:[#allocation2 + $0xc2] sm:$0xff]
    %v7816 = vld [vmem:[#allocation2 + $0xd2] sm:$0xff]
    %v7817 = vld [vmem:[#allocation2 + $0xe2] sm:$0xff]
    %v7818 = vld [vmem:[#allocation2 + $0xf2] sm:$0xff]
    %v7819 = vld [vmem:[#allocation2 + $0x102] sm:$0xff]
    %v7820 = vld [vmem:[#allocation2 + $0x112] sm:$0xff]
    %s7821 = scalar_lea.vmem %s3, 32
    %v7822 = vld [vmem:[%s7821] sm:$0xff]
    %v7823 = vld [vmem:[%s7821 + $0x8] sm:$0xff]
    %v7825 = vsel %vm7221, %v7805, 0
    %v7828 = vsel %vm7221, %v7806, 0
    %v7831 = vsel %vm7221, %v7807, 0
    %v7834 = vsel %vm7221, %v7808, 0
    %v7837 = vsel %vm7221, %v7809, 0
    %v7840 = vsel %vm7221, %v7810, 0
    %v7843 = vsel %vm7221, %v7811, 0
    %v7846 = vsel %vm7221, %v7812, 0
    %v7849 = vsel %vm7221, %v7813, 0
    %v7852 = vsel %vm7221, %v7814, 0
    %v7855 = vsel %vm7221, %v7815, 0
    %v7858 = vsel %vm7221, %v7816, 0
    %v7861 = vsel %vm7221, %v7817, 0
    %v7864 = vsel %vm7221, %v7818, 0
    %v7867 = vsel %vm7221, %v7819, 0
    %v7870 = vsel %vm7221, %v7820, 0
    %7872 = vmatpush.msra.mxu0 0.0
    %7873 = vmatpush.msra.mxu0 0.0
    %7874 = vmatpush.msra.mxu0 0.0
    %7875 = vmatpush.msra.mxu0 0.0
    %7876 = vmatpush.msra.mxu0 0.0
    %7877 = vmatpush.msra.mxu0 0.0
    %7878 = vmatpush.msra.mxu0 0.0
    %7879 = vmatpush.msra.mxu0 0.0
    %7880 = vmatpush.msra.mxu0 0.0
    %7881 = vmatpush.msra.mxu0 0.0
    %7882 = vmatpush.msra.mxu0 0.0
    %7883 = vmatpush.msra.mxu0 0.0
    %7884 = vmatpush.msra.mxu0 0.0
    %7885 = vmatpush.msra.mxu0 0.0
    %7886 = vmatpush.msra.mxu0 %v7823
    %7887 = vmatpush.msra.mxu0 %v7822
    %7888 = vmatmul.f32.gmra.mxu0 %v7825
    %v7889 = vpop.f32.mrf.mxu0
    %v7890 = vadd.f32 0.0, %v7889
    %7891 = vmatmul.f32.gmra.mxu0 %v7828
    %v7892 = vpop.f32.mrf.mxu0
    %v7893 = vadd.f32 0.0, %v7892
    %7894 = vmatmul.f32.gmra.mxu0 %v7831
    %v7895 = vpop.f32.mrf.mxu0
    %v7896 = vadd.f32 0.0, %v7895
    %7897 = vmatmul.f32.gmra.mxu0 %v7834
    %v7898 = vpop.f32.mrf.mxu0
    %v7899 = vadd.f32 0.0, %v7898
    %7900 = vmatmul.f32.gmra.mxu0 %v7837
    %v7901 = vpop.f32.mrf.mxu0
    %v7902 = vadd.f32 0.0, %v7901
    %7903 = vmatmul.f32.gmra.mxu0 %v7840
    %v7904 = vpop.f32.mrf.mxu0
    %v7905 = vadd.f32 0.0, %v7904
    %7906 = vmatmul.f32.gmra.mxu0 %v7843
    %v7907 = vpop.f32.mrf.mxu0
    %v7908 = vadd.f32 0.0, %v7907
    %7909 = vmatmul.f32.gmra.mxu0 %v7846
    %v7910 = vpop.f32.mrf.mxu0
    %v7911 = vadd.f32 0.0, %v7910
    %7912 = vmatmul.f32.gmra.mxu0 %v7849
    %v7913 = vpop.f32.mrf.mxu0
    %v7914 = vadd.f32 0.0, %v7913
    %7915 = vmatmul.f32.gmra.mxu0 %v7852
    %v7916 = vpop.f32.mrf.mxu0
    %v7917 = vadd.f32 0.0, %v7916
    %7918 = vmatmul.f32.gmra.mxu0 %v7855
    %v7919 = vpop.f32.mrf.mxu0
    %v7920 = vadd.f32 0.0, %v7919
    %7921 = vmatmul.f32.gmra.mxu0 %v7858
    %v7922 = vpop.f32.mrf.mxu0
    %v7923 = vadd.f32 0.0, %v7922
    %7924 = vmatmul.f32.gmra.mxu0 %v7861
    %v7925 = vpop.f32.mrf.mxu0
    %v7926 = vadd.f32 0.0, %v7925
    %7927 = vmatmul.f32.gmra.mxu0 %v7864
    %v7928 = vpop.f32.mrf.mxu0
    %v7929 = vadd.f32 0.0, %v7928
    %7930 = vmatmul.f32.gmra.mxu0 %v7867
    %v7931 = vpop.f32.mrf.mxu0
    %v7932 = vadd.f32 0.0, %v7931
    %7933 = vmatmul.f32.gmra.mxu0 %v7870
    %v7934 = vpop.f32.mrf.mxu0
    %v7935 = vadd.f32 0.0, %v7934
    %7936 = vdwg.mxu0
    %v7937 = vadd.f32 %v7758, %v7890
    %v7938 = vadd.f32 %v7761, %v7893
    %v7939 = vadd.f32 %v7764, %v7896
    %v7940 = vadd.f32 %v7767, %v7899
    %v7941 = vadd.f32 %v7770, %v7902
    %v7942 = vadd.f32 %v7773, %v7905
    %v7943 = vadd.f32 %v7776, %v7908
    %v7944 = vadd.f32 %v7779, %v7911
    %v7945 = vadd.f32 %v7782, %v7914
    %v7946 = vadd.f32 %v7785, %v7917
    %v7947 = vadd.f32 %v7788, %v7920
    %v7948 = vadd.f32 %v7791, %v7923
    %v7949 = vadd.f32 %v7794, %v7926
    %v7950 = vadd.f32 %v7797, %v7929
    %v7951 = vadd.f32 %v7800, %v7932
    %v7952 = vadd.f32 %v7803, %v7935
    %v7953 = vld [vmem:[%s7525] sm:$0xff]
    %v7954 = vld [vmem:[%s7525 + $0x10] sm:$0xff]
    %v7955 = vld [vmem:[%s7525 + $0x20] sm:$0xff]
    %v7956 = vld [vmem:[%s7525 + $0x30] sm:$0xff]
    %v7957 = vld [vmem:[%s7525 + $0x40] sm:$0xff]
    %v7958 = vld [vmem:[%s7525 + $0x50] sm:$0xff]
    %v7959 = vld [vmem:[%s7525 + $0x60] sm:$0xff]
    %v7960 = vld [vmem:[%s7525 + $0x70] sm:$0xff]
    %v7961 = vld [vmem:[%s7525 + $0xa0] sm:$0xff]
    %v7962 = vld [vmem:[%s7525 + $0xb0] sm:$0xff]
    %v7963 = vld [vmem:[%s7525 + $0xc0] sm:$0xff]
    %v7964 = vld [vmem:[%s7525 + $0xd0] sm:$0xff]
    %v7965 = vld [vmem:[%s7525 + $0xe0] sm:$0xff]
    %v7966 = vld [vmem:[%s7525 + $0xf0] sm:$0xff]
    %v7967 = vld [vmem:[%s7525 + $0x100] sm:$0xff]
    %v7968 = vld [vmem:[%s7525 + $0x110] sm:$0xff]
    %s7969 = scalar_lea.vmem %s3, 48
    %v7970 = vld [vmem:[%s7969] sm:$0xff]
    %v7971 = vld [vmem:[%s7969 + $0x8] sm:$0xff]
    %v7973 = vsel %vm7221, %v7953, 0
    %v7976 = vsel %vm7221, %v7954, 0
    %v7979 = vsel %vm7221, %v7955, 0
    %v7982 = vsel %vm7221, %v7956, 0
    %v7985 = vsel %vm7221, %v7957, 0
    %v7988 = vsel %vm7221, %v7958, 0
    %v7991 = vsel %vm7221, %v7959, 0
    %v7994 = vsel %vm7221, %v7960, 0
    %v7997 = vsel %vm7221, %v7961, 0
    %v8000 = vsel %vm7221, %v7962, 0
    %v8003 = vsel %vm7221, %v7963, 0
    %v8006 = vsel %vm7221, %v7964, 0
    %v8009 = vsel %vm7221, %v7965, 0
    %v8012 = vsel %vm7221, %v7966, 0
    %v8015 = vsel %vm7221, %v7967, 0
    %v8018 = vsel %vm7221, %v7968, 0
    %8020 = vmatpush.msra.mxu0 0.0
    %8021 = vmatpush.msra.mxu0 0.0
    %8022 = vmatpush.msra.mxu0 0.0
    %8023 = vmatpush.msra.mxu0 0.0
    %8024 = vmatpush.msra.mxu0 0.0
    %8025 = vmatpush.msra.mxu0 0.0
    %8026 = vmatpush.msra.mxu0 0.0
    %8027 = vmatpush.msra.mxu0 0.0
    %8028 = vmatpush.msra.mxu0 0.0
    %8029 = vmatpush.msra.mxu0 0.0
    %8030 = vmatpush.msra.mxu0 0.0
    %8031 = vmatpush.msra.mxu0 0.0
    %8032 = vmatpush.msra.mxu0 0.0
    %8033 = vmatpush.msra.mxu0 0.0
    %8034 = vmatpush.msra.mxu0 %v7971
    %8035 = vmatpush.msra.mxu0 %v7970
    %8036 = vmatmul.f32.gmra.mxu0 %v7973
    %v8037 = vpop.f32.mrf.mxu0
    %v8038 = vadd.f32 0.0, %v8037
    %8039 = vmatmul.f32.gmra.mxu0 %v7976
    %v8040 = vpop.f32.mrf.mxu0
    %v8041 = vadd.f32 0.0, %v8040
    %8042 = vmatmul.f32.gmra.mxu0 %v7979
    %v8043 = vpop.f32.mrf.mxu0
    %v8044 = vadd.f32 0.0, %v8043
    %8045 = vmatmul.f32.gmra.mxu0 %v7982
    %v8046 = vpop.f32.mrf.mxu0
    %v8047 = vadd.f32 0.0, %v8046
    %8048 = vmatmul.f32.gmra.mxu0 %v7985
    %v8049 = vpop.f32.mrf.mxu0
    %v8050 = vadd.f32 0.0, %v8049
    %8051 = vmatmul.f32.gmra.mxu0 %v7988
    %v8052 = vpop.f32.mrf.mxu0
    %v8053 = vadd.f32 0.0, %v8052
    %8054 = vmatmul.f32.gmra.mxu0 %v7991
    %v8055 = vpop.f32.mrf.mxu0
    %v8056 = vadd.f32 0.0, %v8055
    %8057 = vmatmul.f32.gmra.mxu0 %v7994
    %v8058 = vpop.f32.mrf.mxu0
    %v8059 = vadd.f32 0.0, %v8058
    %8060 = vmatmul.f32.gmra.mxu0 %v7997
    %v8061 = vpop.f32.mrf.mxu0
    %v8062 = vadd.f32 0.0, %v8061
    %8063 = vmatmul.f32.gmra.mxu0 %v8000
    %v8064 = vpop.f32.mrf.mxu0
    %v8065 = vadd.f32 0.0, %v8064
    %8066 = vmatmul.f32.gmra.mxu0 %v8003
    %v8067 = vpop.f32.mrf.mxu0
    %v8068 = vadd.f32 0.0, %v8067
    %8069 = vmatmul.f32.gmra.mxu0 %v8006
    %v8070 = vpop.f32.mrf.mxu0
    %v8071 = vadd.f32 0.0, %v8070
    %8072 = vmatmul.f32.gmra.mxu0 %v8009
    %v8073 = vpop.f32.mrf.mxu0
    %v8074 = vadd.f32 0.0, %v8073
    %8075 = vmatmul.f32.gmra.mxu0 %v8012
    %v8076 = vpop.f32.mrf.mxu0
    %v8077 = vadd.f32 0.0, %v8076
    %8078 = vmatmul.f32.gmra.mxu0 %v8015
    %v8079 = vpop.f32.mrf.mxu0
    %v8080 = vadd.f32 0.0, %v8079
    %8081 = vmatmul.f32.gmra.mxu0 %v8018
    %v8082 = vpop.f32.mrf.mxu0
    %v8083 = vadd.f32 0.0, %v8082
    %8084 = vdwg.mxu0
    %v8085 = vadd.f32 %v7937, %v8038
    %v8086 = vadd.f32 %v7938, %v8041
    %v8087 = vadd.f32 %v7939, %v8044
    %v8088 = vadd.f32 %v7940, %v8047
    %v8089 = vadd.f32 %v7941, %v8050
    %v8090 = vadd.f32 %v7942, %v8053
    %v8091 = vadd.f32 %v7943, %v8056
    %v8092 = vadd.f32 %v7944, %v8059
    %v8093 = vadd.f32 %v7945, %v8062
    %v8094 = vadd.f32 %v7946, %v8065
    %v8095 = vadd.f32 %v7947, %v8068
    %v8096 = vadd.f32 %v7948, %v8071
    %v8097 = vadd.f32 %v7949, %v8074
    %v8098 = vadd.f32 %v7950, %v8077
    %v8099 = vadd.f32 %v7951, %v8080
    %v8100 = vadd.f32 %v7952, %v8083
    %v8101 = vld [vmem:[%s7525 + $0x1] sm:$0xff]
    %v8102 = vld [vmem:[%s7525 + $0x11] sm:$0xff]
    %v8103 = vld [vmem:[%s7525 + $0x21] sm:$0xff]
    %v8104 = vld [vmem:[%s7525 + $0x31] sm:$0xff]
    %v8105 = vld [vmem:[%s7525 + $0x41] sm:$0xff]
    %v8106 = vld [vmem:[%s7525 + $0x51] sm:$0xff]
    %v8107 = vld [vmem:[%s7525 + $0x61] sm:$0xff]
    %v8108 = vld [vmem:[%s7525 + $0x71] sm:$0xff]
    %v8109 = vld [vmem:[%s7525 + $0xa1] sm:$0xff]
    %v8110 = vld [vmem:[%s7525 + $0xb1] sm:$0xff]
    %v8111 = vld [vmem:[%s7525 + $0xc1] sm:$0xff]
    %v8112 = vld [vmem:[%s7525 + $0xd1] sm:$0xff]
    %v8113 = vld [vmem:[%s7525 + $0xe1] sm:$0xff]
    %v8114 = vld [vmem:[%s7525 + $0xf1] sm:$0xff]
    %v8115 = vld [vmem:[%s7525 + $0x101] sm:$0xff]
    %v8116 = vld [vmem:[%s7525 + $0x111] sm:$0xff]
    %s8117 = scalar_lea.vmem %s3, 64
    %v8118 = vld [vmem:[%s8117] sm:$0xff]
    %v8119 = vld [vmem:[%s8117 + $0x8] sm:$0xff]
    %v8121 = vsel %vm7221, %v8101, 0
    %v8124 = vsel %vm7221, %v8102, 0
    %v8127 = vsel %vm7221, %v8103, 0
    %v8130 = vsel %vm7221, %v8104, 0
    %v8133 = vsel %vm7221, %v8105, 0
    %v8136 = vsel %vm7221, %v8106, 0
    %v8139 = vsel %vm7221, %v8107, 0
    %v8142 = vsel %vm7221, %v8108, 0
    %v8145 = vsel %vm7221, %v8109, 0
    %v8148 = vsel %vm7221, %v8110, 0
    %v8151 = vsel %vm7221, %v8111, 0
    %v8154 = vsel %vm7221, %v8112, 0
    %v8157 = vsel %vm7221, %v8113, 0
    %v8160 = vsel %vm7221, %v8114, 0
    %v8163 = vsel %vm7221, %v8115, 0
    %v8166 = vsel %vm7221, %v8116, 0
    %8168 = vmatpush.msra.mxu0 0.0
    %8169 = vmatpush.msra.mxu0 0.0
    %8170 = vmatpush.msra.mxu0 0.0
    %8171 = vmatpush.msra.mxu0 0.0
    %8172 = vmatpush.msra.mxu0 0.0
    %8173 = vmatpush.msra.mxu0 0.0
    %8174 = vmatpush.msra.mxu0 0.0
    %8175 = vmatpush.msra.mxu0 0.0
    %8176 = vmatpush.msra.mxu0 0.0
    %8177 = vmatpush.msra.mxu0 0.0
    %8178 = vmatpush.msra.mxu0 0.0
    %8179 = vmatpush.msra.mxu0 0.0
    %8180 = vmatpush.msra.mxu0 0.0
    %8181 = vmatpush.msra.mxu0 0.0
    %8182 = vmatpush.msra.mxu0 %v8119
    %8183 = vmatpush.msra.mxu0 %v8118
    %8184 = vmatmul.f32.gmra.mxu0 %v8121
    %v8185 = vpop.f32.mrf.mxu0
    %v8186 = vadd.f32 0.0, %v8185
    %8187 = vmatmul.f32.gmra.mxu0 %v8124
    %v8188 = vpop.f32.mrf.mxu0
    %v8189 = vadd.f32 0.0, %v8188
    %8190 = vmatmul.f32.gmra.mxu0 %v8127
    %v8191 = vpop.f32.mrf.mxu0
    %v8192 = vadd.f32 0.0, %v8191
    %8193 = vmatmul.f32.gmra.mxu0 %v8130
    %v8194 = vpop.f32.mrf.mxu0
    %v8195 = vadd.f32 0.0, %v8194
    %8196 = vmatmul.f32.gmra.mxu0 %v8133
    %v8197 = vpop.f32.mrf.mxu0
    %v8198 = vadd.f32 0.0, %v8197
    %8199 = vmatmul.f32.gmra.mxu0 %v8136
    %v8200 = vpop.f32.mrf.mxu0
    %v8201 = vadd.f32 0.0, %v8200
    %8202 = vmatmul.f32.gmra.mxu0 %v8139
    %v8203 = vpop.f32.mrf.mxu0
    %v8204 = vadd.f32 0.0, %v8203
    %8205 = vmatmul.f32.gmra.mxu0 %v8142
    %v8206 = vpop.f32.mrf.mxu0
    %v8207 = vadd.f32 0.0, %v8206
    %8208 = vmatmul.f32.gmra.mxu0 %v8145
    %v8209 = vpop.f32.mrf.mxu0
    %v8210 = vadd.f32 0.0, %v8209
    %8211 = vmatmul.f32.gmra.mxu0 %v8148
    %v8212 = vpop.f32.mrf.mxu0
    %v8213 = vadd.f32 0.0, %v8212
    %8214 = vmatmul.f32.gmra.mxu0 %v8151
    %v8215 = vpop.f32.mrf.mxu0
    %v8216 = vadd.f32 0.0, %v8215
    %8217 = vmatmul.f32.gmra.mxu0 %v8154
    %v8218 = vpop.f32.mrf.mxu0
    %v8219 = vadd.f32 0.0, %v8218
    %8220 = vmatmul.f32.gmra.mxu0 %v8157
    %v8221 = vpop.f32.mrf.mxu0
    %v8222 = vadd.f32 0.0, %v8221
    %8223 = vmatmul.f32.gmra.mxu0 %v8160
    %v8224 = vpop.f32.mrf.mxu0
    %v8225 = vadd.f32 0.0, %v8224
    %8226 = vmatmul.f32.gmra.mxu0 %v8163
    %v8227 = vpop.f32.mrf.mxu0
    %v8228 = vadd.f32 0.0, %v8227
    %8229 = vmatmul.f32.gmra.mxu0 %v8166
    %v8230 = vpop.f32.mrf.mxu0
    %v8231 = vadd.f32 0.0, %v8230
    %8232 = vdwg.mxu0
    %v8233 = vadd.f32 %v8085, %v8186
    %v8234 = vadd.f32 %v8086, %v8189
    %v8235 = vadd.f32 %v8087, %v8192
    %v8236 = vadd.f32 %v8088, %v8195
    %v8237 = vadd.f32 %v8089, %v8198
    %v8238 = vadd.f32 %v8090, %v8201
    %v8239 = vadd.f32 %v8091, %v8204
    %v8240 = vadd.f32 %v8092, %v8207
    %v8241 = vadd.f32 %v8093, %v8210
    %v8242 = vadd.f32 %v8094, %v8213
    %v8243 = vadd.f32 %v8095, %v8216
    %v8244 = vadd.f32 %v8096, %v8219
    %v8245 = vadd.f32 %v8097, %v8222
    %v8246 = vadd.f32 %v8098, %v8225
    %v8247 = vadd.f32 %v8099, %v8228
    %v8248 = vadd.f32 %v8100, %v8231
    %v8249 = vld [vmem:[%s7525 + $0x2] sm:$0xff]
    %v8250 = vld [vmem:[%s7525 + $0x12] sm:$0xff]
    %v8251 = vld [vmem:[%s7525 + $0x22] sm:$0xff]
    %v8252 = vld [vmem:[%s7525 + $0x32] sm:$0xff]
    %v8253 = vld [vmem:[%s7525 + $0x42] sm:$0xff]
    %v8254 = vld [vmem:[%s7525 + $0x52] sm:$0xff]
    %v8255 = vld [vmem:[%s7525 + $0x62] sm:$0xff]
    %v8256 = vld [vmem:[%s7525 + $0x72] sm:$0xff]
    %v8257 = vld [vmem:[%s7525 + $0xa2] sm:$0xff]
    %v8258 = vld [vmem:[%s7525 + $0xb2] sm:$0xff]
    %v8259 = vld [vmem:[%s7525 + $0xc2] sm:$0xff]
    %v8260 = vld [vmem:[%s7525 + $0xd2] sm:$0xff]
    %v8261 = vld [vmem:[%s7525 + $0xe2] sm:$0xff]
    %v8262 = vld [vmem:[%s7525 + $0xf2] sm:$0xff]
    %v8263 = vld [vmem:[%s7525 + $0x102] sm:$0xff]
    %v8264 = vld [vmem:[%s7525 + $0x112] sm:$0xff]
    %s8265 = scalar_lea.vmem %s3, 80
    %v8266 = vld [vmem:[%s8265] sm:$0xff]
    %v8267 = vld [vmem:[%s8265 + $0x8] sm:$0xff]
    %v8269 = vsel %vm7221, %v8249, 0
    %v8272 = vsel %vm7221, %v8250, 0
    %v8275 = vsel %vm7221, %v8251, 0
    %v8278 = vsel %vm7221, %v8252, 0
    %v8281 = vsel %vm7221, %v8253, 0
    %v8284 = vsel %vm7221, %v8254, 0
    %v8287 = vsel %vm7221, %v8255, 0
    %v8290 = vsel %vm7221, %v8256, 0
    %v8293 = vsel %vm7221, %v8257, 0
    %v8296 = vsel %vm7221, %v8258, 0
    %v8299 = vsel %vm7221, %v8259, 0
    %v8302 = vsel %vm7221, %v8260, 0
    %v8305 = vsel %vm7221, %v8261, 0
    %v8308 = vsel %vm7221, %v8262, 0
    %v8311 = vsel %vm7221, %v8263, 0
    %v8314 = vsel %vm7221, %v8264, 0
    %8316 = vmatpush.msra.mxu0 0.0
    %8317 = vmatpush.msra.mxu0 0.0
    %8318 = vmatpush.msra.mxu0 0.0
    %8319 = vmatpush.msra.mxu0 0.0
    %8320 = vmatpush.msra.mxu0 0.0
    %8321 = vmatpush.msra.mxu0 0.0
    %8322 = vmatpush.msra.mxu0 0.0
    %8323 = vmatpush.msra.mxu0 0.0
    %8324 = vmatpush.msra.mxu0 0.0
    %8325 = vmatpush.msra.mxu0 0.0
    %8326 = vmatpush.msra.mxu0 0.0
    %8327 = vmatpush.msra.mxu0 0.0
    %8328 = vmatpush.msra.mxu0 0.0
    %8329 = vmatpush.msra.mxu0 0.0
    %8330 = vmatpush.msra.mxu0 %v8267
    %8331 = vmatpush.msra.mxu0 %v8266
    %8332 = vmatmul.f32.gmra.mxu0 %v8269
    %v8333 = vpop.f32.mrf.mxu0
    %v8334 = vadd.f32 0.0, %v8333
    %8335 = vmatmul.f32.gmra.mxu0 %v8272
    %v8336 = vpop.f32.mrf.mxu0
    %v8337 = vadd.f32 0.0, %v8336
    %8338 = vmatmul.f32.gmra.mxu0 %v8275
    %v8339 = vpop.f32.mrf.mxu0
    %v8340 = vadd.f32 0.0, %v8339
    %8341 = vmatmul.f32.gmra.mxu0 %v8278
    %v8342 = vpop.f32.mrf.mxu0
    %v8343 = vadd.f32 0.0, %v8342
    %8344 = vmatmul.f32.gmra.mxu0 %v8281
    %v8345 = vpop.f32.mrf.mxu0
    %v8346 = vadd.f32 0.0, %v8345
    %8347 = vmatmul.f32.gmra.mxu0 %v8284
    %v8348 = vpop.f32.mrf.mxu0
    %v8349 = vadd.f32 0.0, %v8348
    %8350 = vmatmul.f32.gmra.mxu0 %v8287
    %v8351 = vpop.f32.mrf.mxu0
    %v8352 = vadd.f32 0.0, %v8351
    %8353 = vmatmul.f32.gmra.mxu0 %v8290
    %v8354 = vpop.f32.mrf.mxu0
    %v8355 = vadd.f32 0.0, %v8354
    %8356 = vmatmul.f32.gmra.mxu0 %v8293
    %v8357 = vpop.f32.mrf.mxu0
    %v8358 = vadd.f32 0.0, %v8357
    %8359 = vmatmul.f32.gmra.mxu0 %v8296
    %v8360 = vpop.f32.mrf.mxu0
    %v8361 = vadd.f32 0.0, %v8360
    %8362 = vmatmul.f32.gmra.mxu0 %v8299
    %v8363 = vpop.f32.mrf.mxu0
    %v8364 = vadd.f32 0.0, %v8363
    %8365 = vmatmul.f32.gmra.mxu0 %v8302
    %v8366 = vpop.f32.mrf.mxu0
    %v8367 = vadd.f32 0.0, %v8366
    %8368 = vmatmul.f32.gmra.mxu0 %v8305
    %v8369 = vpop.f32.mrf.mxu0
    %v8370 = vadd.f32 0.0, %v8369
    %8371 = vmatmul.f32.gmra.mxu0 %v8308
    %v8372 = vpop.f32.mrf.mxu0
    %v8373 = vadd.f32 0.0, %v8372
    %8374 = vmatmul.f32.gmra.mxu0 %v8311
    %v8375 = vpop.f32.mrf.mxu0
    %v8376 = vadd.f32 0.0, %v8375
    %8377 = vmatmul.f32.gmra.mxu0 %v8314
    %v8378 = vpop.f32.mrf.mxu0
    %v8379 = vadd.f32 0.0, %v8378
    %8380 = vdwg.mxu0
    %v8381 = vadd.f32 %v8233, %v8334
    %v8382 = vadd.f32 %v8234, %v8337
    %v8383 = vadd.f32 %v8235, %v8340
    %v8384 = vadd.f32 %v8236, %v8343
    %v8385 = vadd.f32 %v8237, %v8346
    %v8386 = vadd.f32 %v8238, %v8349
    %v8387 = vadd.f32 %v8239, %v8352
    %v8388 = vadd.f32 %v8240, %v8355
    %v8389 = vadd.f32 %v8241, %v8358
    %v8390 = vadd.f32 %v8242, %v8361
    %v8391 = vadd.f32 %v8243, %v8364
    %v8392 = vadd.f32 %v8244, %v8367
    %v8393 = vadd.f32 %v8245, %v8370
    %v8394 = vadd.f32 %v8246, %v8373
    %v8395 = vadd.f32 %v8247, %v8376
    %v8396 = vadd.f32 %v8248, %v8379
    %s8397 = scalar_lea.vmem [#allocation2], 32
    %v8398 = vld [vmem:[%s8397] sm:$0xff]
    %v8399 = vld [vmem:[%s8397 + $0x10] sm:$0xff]
    %v8400 = vld [vmem:[%s8397 + $0x20] sm:$0xff]
    %v8401 = vld [vmem:[%s8397 + $0x30] sm:$0xff]
    %v8402 = vld [vmem:[%s8397 + $0x40] sm:$0xff]
    %v8403 = vld [vmem:[%s8397 + $0x50] sm:$0xff]
    %v8404 = vld [vmem:[%s8397 + $0x60] sm:$0xff]
    %v8405 = vld [vmem:[%s8397 + $0x70] sm:$0xff]
    %v8406 = vld [vmem:[%s8397 + $0xa0] sm:$0xff]
    %v8407 = vld [vmem:[%s8397 + $0xb0] sm:$0xff]
    %v8408 = vld [vmem:[%s8397 + $0xc0] sm:$0xff]
    %v8409 = vld [vmem:[%s8397 + $0xd0] sm:$0xff]
    %v8410 = vld [vmem:[%s8397 + $0xe0] sm:$0xff]
    %v8411 = vld [vmem:[%s8397 + $0xf0] sm:$0xff]
    %v8412 = vld [vmem:[%s8397 + $0x100] sm:$0xff]
    %v8413 = vld [vmem:[%s8397 + $0x110] sm:$0xff]
    %s8414 = scalar_lea.vmem %s3, 96
    %v8415 = vld [vmem:[%s8414] sm:$0xff]
    %v8416 = vld [vmem:[%s8414 + $0x8] sm:$0xff]
    %v8418 = vsel %vm7221, %v8398, 0
    %v8421 = vsel %vm7221, %v8399, 0
    %v8424 = vsel %vm7221, %v8400, 0
    %v8427 = vsel %vm7221, %v8401, 0
    %v8430 = vsel %vm7221, %v8402, 0
    %v8433 = vsel %vm7221, %v8403, 0
    %v8436 = vsel %vm7221, %v8404, 0
    %v8439 = vsel %vm7221, %v8405, 0
    %v8442 = vsel %vm7221, %v8406, 0
    %v8445 = vsel %vm7221, %v8407, 0
    %v8448 = vsel %vm7221, %v8408, 0
    %v8451 = vsel %vm7221, %v8409, 0
    %v8454 = vsel %vm7221, %v8410, 0
    %v8457 = vsel %vm7221, %v8411, 0
    %v8460 = vsel %vm7221, %v8412, 0
    %v8463 = vsel %vm7221, %v8413, 0
    %8465 = vmatpush.msra.mxu0 0.0
    %8466 = vmatpush.msra.mxu0 0.0
    %8467 = vmatpush.msra.mxu0 0.0
    %8468 = vmatpush.msra.mxu0 0.0
    %8469 = vmatpush.msra.mxu0 0.0
    %8470 = vmatpush.msra.mxu0 0.0
    %8471 = vmatpush.msra.mxu0 0.0
    %8472 = vmatpush.msra.mxu0 0.0
    %8473 = vmatpush.msra.mxu0 0.0
    %8474 = vmatpush.msra.mxu0 0.0
    %8475 = vmatpush.msra.mxu0 0.0
    %8476 = vmatpush.msra.mxu0 0.0
    %8477 = vmatpush.msra.mxu0 0.0
    %8478 = vmatpush.msra.mxu0 0.0
    %8479 = vmatpush.msra.mxu0 %v8416
    %8480 = vmatpush.msra.mxu0 %v8415
    %8481 = vmatmul.f32.gmra.mxu0 %v8418
    %v8482 = vpop.f32.mrf.mxu0
    %v8483 = vadd.f32 0.0, %v8482
    %8484 = vmatmul.f32.gmra.mxu0 %v8421
    %v8485 = vpop.f32.mrf.mxu0
    %v8486 = vadd.f32 0.0, %v8485
    %8487 = vmatmul.f32.gmra.mxu0 %v8424
    %v8488 = vpop.f32.mrf.mxu0
    %v8489 = vadd.f32 0.0, %v8488
    %8490 = vmatmul.f32.gmra.mxu0 %v8427
    %v8491 = vpop.f32.mrf.mxu0
    %v8492 = vadd.f32 0.0, %v8491
    %8493 = vmatmul.f32.gmra.mxu0 %v8430
    %v8494 = vpop.f32.mrf.mxu0
    %v8495 = vadd.f32 0.0, %v8494
    %8496 = vmatmul.f32.gmra.mxu0 %v8433
    %v8497 = vpop.f32.mrf.mxu0
    %v8498 = vadd.f32 0.0, %v8497
    %8499 = vmatmul.f32.gmra.mxu0 %v8436
    %v8500 = vpop.f32.mrf.mxu0
    %v8501 = vadd.f32 0.0, %v8500
    %8502 = vmatmul.f32.gmra.mxu0 %v8439
    %v8503 = vpop.f32.mrf.mxu0
    %v8504 = vadd.f32 0.0, %v8503
    %8505 = vmatmul.f32.gmra.mxu0 %v8442
    %v8506 = vpop.f32.mrf.mxu0
    %v8507 = vadd.f32 0.0, %v8506
    %8508 = vmatmul.f32.gmra.mxu0 %v8445
    %v8509 = vpop.f32.mrf.mxu0
    %v8510 = vadd.f32 0.0, %v8509
    %8511 = vmatmul.f32.gmra.mxu0 %v8448
    %v8512 = vpop.f32.mrf.mxu0
    %v8513 = vadd.f32 0.0, %v8512
    %8514 = vmatmul.f32.gmra.mxu0 %v8451
    %v8515 = vpop.f32.mrf.mxu0
    %v8516 = vadd.f32 0.0, %v8515
    %8517 = vmatmul.f32.gmra.mxu0 %v8454
    %v8518 = vpop.f32.mrf.mxu0
    %v8519 = vadd.f32 0.0, %v8518
    %8520 = vmatmul.f32.gmra.mxu0 %v8457
    %v8521 = vpop.f32.mrf.mxu0
    %v8522 = vadd.f32 0.0, %v8521
    %8523 = vmatmul.f32.gmra.mxu0 %v8460
    %v8524 = vpop.f32.mrf.mxu0
    %v8525 = vadd.f32 0.0, %v8524
    %8526 = vmatmul.f32.gmra.mxu0 %v8463
    %v8527 = vpop.f32.mrf.mxu0
    %v8528 = vadd.f32 0.0, %v8527
    %8529 = vdwg.mxu0
    %v8530 = vadd.f32 %v8381, %v8483
    %v8531 = vadd.f32 %v8382, %v8486
    %v8532 = vadd.f32 %v8383, %v8489
    %v8533 = vadd.f32 %v8384, %v8492
    %v8534 = vadd.f32 %v8385, %v8495
    %v8535 = vadd.f32 %v8386, %v8498
    %v8536 = vadd.f32 %v8387, %v8501
    %v8537 = vadd.f32 %v8388, %v8504
    %v8538 = vadd.f32 %v8389, %v8507
    %v8539 = vadd.f32 %v8390, %v8510
    %v8540 = vadd.f32 %v8391, %v8513
    %v8541 = vadd.f32 %v8392, %v8516
    %v8542 = vadd.f32 %v8393, %v8519
    %v8543 = vadd.f32 %v8394, %v8522
    %v8544 = vadd.f32 %v8395, %v8525
    %v8545 = vadd.f32 %v8396, %v8528
    %v8546 = vld [vmem:[%s8397 + $0x1] sm:$0xff]
    %v8547 = vld [vmem:[%s8397 + $0x11] sm:$0xff]
    %v8548 = vld [vmem:[%s8397 + $0x21] sm:$0xff]
    %v8549 = vld [vmem:[%s8397 + $0x31] sm:$0xff]
    %v8550 = vld [vmem:[%s8397 + $0x41] sm:$0xff]
    %v8551 = vld [vmem:[%s8397 + $0x51] sm:$0xff]
    %v8552 = vld [vmem:[%s8397 + $0x61] sm:$0xff]
    %v8553 = vld [vmem:[%s8397 + $0x71] sm:$0xff]
    %v8554 = vld [vmem:[%s8397 + $0xa1] sm:$0xff]
    %v8555 = vld [vmem:[%s8397 + $0xb1] sm:$0xff]
    %v8556 = vld [vmem:[%s8397 + $0xc1] sm:$0xff]
    %v8557 = vld [vmem:[%s8397 + $0xd1] sm:$0xff]
    %v8558 = vld [vmem:[%s8397 + $0xe1] sm:$0xff]
    %v8559 = vld [vmem:[%s8397 + $0xf1] sm:$0xff]
    %v8560 = vld [vmem:[%s8397 + $0x101] sm:$0xff]
    %v8561 = vld [vmem:[%s8397 + $0x111] sm:$0xff]
    %s8562 = scalar_lea.vmem %s3, 112
    %v8563 = vld [vmem:[%s8562] sm:$0xff]
    %v8564 = vld [vmem:[%s8562 + $0x8] sm:$0xff]
    %v8566 = vsel %vm7221, %v8546, 0
    %v8569 = vsel %vm7221, %v8547, 0
    %v8572 = vsel %vm7221, %v8548, 0
    %v8575 = vsel %vm7221, %v8549, 0
    %v8578 = vsel %vm7221, %v8550, 0
    %v8581 = vsel %vm7221, %v8551, 0
    %v8584 = vsel %vm7221, %v8552, 0
    %v8587 = vsel %vm7221, %v8553, 0
    %v8590 = vsel %vm7221, %v8554, 0
    %v8593 = vsel %vm7221, %v8555, 0
    %v8596 = vsel %vm7221, %v8556, 0
    %v8599 = vsel %vm7221, %v8557, 0
    %v8602 = vsel %vm7221, %v8558, 0
    %v8605 = vsel %vm7221, %v8559, 0
    %v8608 = vsel %vm7221, %v8560, 0
    %v8611 = vsel %vm7221, %v8561, 0
    %8613 = vmatpush.msra.mxu0 0.0
    %8614 = vmatpush.msra.mxu0 0.0
    %8615 = vmatpush.msra.mxu0 0.0
    %8616 = vmatpush.msra.mxu0 0.0
    %8617 = vmatpush.msra.mxu0 0.0
    %8618 = vmatpush.msra.mxu0 0.0
    %8619 = vmatpush.msra.mxu0 0.0
    %8620 = vmatpush.msra.mxu0 0.0
    %8621 = vmatpush.msra.mxu0 0.0
    %8622 = vmatpush.msra.mxu0 0.0
    %8623 = vmatpush.msra.mxu0 0.0
    %8624 = vmatpush.msra.mxu0 0.0
    %8625 = vmatpush.msra.mxu0 0.0
    %8626 = vmatpush.msra.mxu0 0.0
    %8627 = vmatpush.msra.mxu0 %v8564
    %8628 = vmatpush.msra.mxu0 %v8563
    %8629 = vmatmul.f32.gmra.mxu0 %v8566
    %v8630 = vpop.f32.mrf.mxu0
    %v8631 = vadd.f32 0.0, %v8630
    %8632 = vmatmul.f32.gmra.mxu0 %v8569
    %v8633 = vpop.f32.mrf.mxu0
    %v8634 = vadd.f32 0.0, %v8633
    %8635 = vmatmul.f32.gmra.mxu0 %v8572
    %v8636 = vpop.f32.mrf.mxu0
    %v8637 = vadd.f32 0.0, %v8636
    %8638 = vmatmul.f32.gmra.mxu0 %v8575
    %v8639 = vpop.f32.mrf.mxu0
    %v8640 = vadd.f32 0.0, %v8639
    %8641 = vmatmul.f32.gmra.mxu0 %v8578
    %v8642 = vpop.f32.mrf.mxu0
    %v8643 = vadd.f32 0.0, %v8642
    %8644 = vmatmul.f32.gmra.mxu0 %v8581
    %v8645 = vpop.f32.mrf.mxu0
    %v8646 = vadd.f32 0.0, %v8645
    %8647 = vmatmul.f32.gmra.mxu0 %v8584
    %v8648 = vpop.f32.mrf.mxu0
    %v8649 = vadd.f32 0.0, %v8648
    %8650 = vmatmul.f32.gmra.mxu0 %v8587
    %v8651 = vpop.f32.mrf.mxu0
    %v8652 = vadd.f32 0.0, %v8651
    %8653 = vmatmul.f32.gmra.mxu0 %v8590
    %v8654 = vpop.f32.mrf.mxu0
    %v8655 = vadd.f32 0.0, %v8654
    %8656 = vmatmul.f32.gmra.mxu0 %v8593
    %v8657 = vpop.f32.mrf.mxu0
    %v8658 = vadd.f32 0.0, %v8657
    %8659 = vmatmul.f32.gmra.mxu0 %v8596
    %v8660 = vpop.f32.mrf.mxu0
    %v8661 = vadd.f32 0.0, %v8660
    %8662 = vmatmul.f32.gmra.mxu0 %v8599
    %v8663 = vpop.f32.mrf.mxu0
    %v8664 = vadd.f32 0.0, %v8663
    %8665 = vmatmul.f32.gmra.mxu0 %v8602
    %v8666 = vpop.f32.mrf.mxu0
    %v8667 = vadd.f32 0.0, %v8666
    %8668 = vmatmul.f32.gmra.mxu0 %v8605
    %v8669 = vpop.f32.mrf.mxu0
    %v8670 = vadd.f32 0.0, %v8669
    %8671 = vmatmul.f32.gmra.mxu0 %v8608
    %v8672 = vpop.f32.mrf.mxu0
    %v8673 = vadd.f32 0.0, %v8672
    %8674 = vmatmul.f32.gmra.mxu0 %v8611
    %v8675 = vpop.f32.mrf.mxu0
    %v8676 = vadd.f32 0.0, %v8675
    %8677 = vdwg.mxu0
    %v8678 = vadd.f32 %v8530, %v8631
    %v8679 = vadd.f32 %v8531, %v8634
    %v8680 = vadd.f32 %v8532, %v8637
    %v8681 = vadd.f32 %v8533, %v8640
    %v8682 = vadd.f32 %v8534, %v8643
    %v8683 = vadd.f32 %v8535, %v8646
    %v8684 = vadd.f32 %v8536, %v8649
    %v8685 = vadd.f32 %v8537, %v8652
    %v8686 = vadd.f32 %v8538, %v8655
    %v8687 = vadd.f32 %v8539, %v8658
    %v8688 = vadd.f32 %v8540, %v8661
    %v8689 = vadd.f32 %v8541, %v8664
    %v8690 = vadd.f32 %v8542, %v8667
    %v8691 = vadd.f32 %v8543, %v8670
    %v8692 = vadd.f32 %v8544, %v8673
    %v8693 = vadd.f32 %v8545, %v8676
    %v8694 = vld [vmem:[%s8397 + $0x2] sm:$0xff]
    %v8695 = vld [vmem:[%s8397 + $0x12] sm:$0xff]
    %v8696 = vld [vmem:[%s8397 + $0x22] sm:$0xff]
    %v8697 = vld [vmem:[%s8397 + $0x32] sm:$0xff]
    %v8698 = vld [vmem:[%s8397 + $0x42] sm:$0xff]
    %v8699 = vld [vmem:[%s8397 + $0x52] sm:$0xff]
    %v8700 = vld [vmem:[%s8397 + $0x62] sm:$0xff]
    %v8701 = vld [vmem:[%s8397 + $0x72] sm:$0xff]
    %v8702 = vld [vmem:[%s8397 + $0xa2] sm:$0xff]
    %v8703 = vld [vmem:[%s8397 + $0xb2] sm:$0xff]
    %v8704 = vld [vmem:[%s8397 + $0xc2] sm:$0xff]
    %v8705 = vld [vmem:[%s8397 + $0xd2] sm:$0xff]
    %v8706 = vld [vmem:[%s8397 + $0xe2] sm:$0xff]
    %v8707 = vld [vmem:[%s8397 + $0xf2] sm:$0xff]
    %v8708 = vld [vmem:[%s8397 + $0x102] sm:$0xff]
    %v8709 = vld [vmem:[%s8397 + $0x112] sm:$0xff]
    %s8710 = scalar_lea.vmem %s3, 128
    %v8711 = vld [vmem:[%s8710] sm:$0xff]
    %v8712 = vld [vmem:[%s8710 + $0x8] sm:$0xff]
    %v8714 = vsel %vm7221, %v8694, 0
    %v8717 = vsel %vm7221, %v8695, 0
    %v8720 = vsel %vm7221, %v8696, 0
    %v8723 = vsel %vm7221, %v8697, 0
    %v8726 = vsel %vm7221, %v8698, 0
    %v8729 = vsel %vm7221, %v8699, 0
    %v8732 = vsel %vm7221, %v8700, 0
    %v8735 = vsel %vm7221, %v8701, 0
    %v8738 = vsel %vm7221, %v8702, 0
    %v8741 = vsel %vm7221, %v8703, 0
    %v8744 = vsel %vm7221, %v8704, 0
    %v8747 = vsel %vm7221, %v8705, 0
    %v8750 = vsel %vm7221, %v8706, 0
    %v8753 = vsel %vm7221, %v8707, 0
    %v8756 = vsel %vm7221, %v8708, 0
    %v8759 = vsel %vm7221, %v8709, 0
    %8761 = vmatpush.msra.mxu0 0.0
    %8762 = vmatpush.msra.mxu0 0.0
    %8763 = vmatpush.msra.mxu0 0.0
    %8764 = vmatpush.msra.mxu0 0.0
    %8765 = vmatpush.msra.mxu0 0.0
    %8766 = vmatpush.msra.mxu0 0.0
    %8767 = vmatpush.msra.mxu0 0.0
    %8768 = vmatpush.msra.mxu0 0.0
    %8769 = vmatpush.msra.mxu0 0.0
    %8770 = vmatpush.msra.mxu0 0.0
    %8771 = vmatpush.msra.mxu0 0.0
    %8772 = vmatpush.msra.mxu0 0.0
    %8773 = vmatpush.msra.mxu0 0.0
    %8774 = vmatpush.msra.mxu0 0.0
    %8775 = vmatpush.msra.mxu0 %v8712
    %8776 = vmatpush.msra.mxu0 %v8711
    %8777 = vmatmul.f32.gmra.mxu0 %v8714
    %v8778 = vpop.f32.mrf.mxu0
    %v8779 = vadd.f32 0.0, %v8778
    %8780 = vmatmul.f32.gmra.mxu0 %v8717
    %v8781 = vpop.f32.mrf.mxu0
    %v8782 = vadd.f32 0.0, %v8781
    %8783 = vmatmul.f32.gmra.mxu0 %v8720
    %v8784 = vpop.f32.mrf.mxu0
    %v8785 = vadd.f32 0.0, %v8784
    %8786 = vmatmul.f32.gmra.mxu0 %v8723
    %v8787 = vpop.f32.mrf.mxu0
    %v8788 = vadd.f32 0.0, %v8787
    %8789 = vmatmul.f32.gmra.mxu0 %v8726
    %v8790 = vpop.f32.mrf.mxu0
    %v8791 = vadd.f32 0.0, %v8790
    %8792 = vmatmul.f32.gmra.mxu0 %v8729
    %v8793 = vpop.f32.mrf.mxu0
    %v8794 = vadd.f32 0.0, %v8793
    %8795 = vmatmul.f32.gmra.mxu0 %v8732
    %v8796 = vpop.f32.mrf.mxu0
    %v8797 = vadd.f32 0.0, %v8796
    %8798 = vmatmul.f32.gmra.mxu0 %v8735
    %v8799 = vpop.f32.mrf.mxu0
    %v8800 = vadd.f32 0.0, %v8799
    %8801 = vmatmul.f32.gmra.mxu0 %v8738
    %v8802 = vpop.f32.mrf.mxu0
    %v8803 = vadd.f32 0.0, %v8802
    %8804 = vmatmul.f32.gmra.mxu0 %v8741
    %v8805 = vpop.f32.mrf.mxu0
    %v8806 = vadd.f32 0.0, %v8805
    %8807 = vmatmul.f32.gmra.mxu0 %v8744
    %v8808 = vpop.f32.mrf.mxu0
    %v8809 = vadd.f32 0.0, %v8808
    %8810 = vmatmul.f32.gmra.mxu0 %v8747
    %v8811 = vpop.f32.mrf.mxu0
    %v8812 = vadd.f32 0.0, %v8811
    %8813 = vmatmul.f32.gmra.mxu0 %v8750
    %v8814 = vpop.f32.mrf.mxu0
    %v8815 = vadd.f32 0.0, %v8814
    %8816 = vmatmul.f32.gmra.mxu0 %v8753
    %v8817 = vpop.f32.mrf.mxu0
    %v8818 = vadd.f32 0.0, %v8817
    %8819 = vmatmul.f32.gmra.mxu0 %v8756
    %v8820 = vpop.f32.mrf.mxu0
    %v8821 = vadd.f32 0.0, %v8820
    %8822 = vmatmul.f32.gmra.mxu0 %v8759
    %v8823 = vpop.f32.mrf.mxu0
    %v8824 = vadd.f32 0.0, %v8823
    %8825 = vdwg.mxu0
    %v8826 = vadd.f32 %v8678, %v8779
    %v8827 = vadd.f32 %v8679, %v8782
    %v8828 = vadd.f32 %v8680, %v8785
    %v8829 = vadd.f32 %v8681, %v8788
    %v8830 = vadd.f32 %v8682, %v8791
    %v8831 = vadd.f32 %v8683, %v8794
    %v8832 = vadd.f32 %v8684, %v8797
    %v8833 = vadd.f32 %v8685, %v8800
    %v8834 = vadd.f32 %v8686, %v8803
    %v8835 = vadd.f32 %v8687, %v8806
    %v8836 = vadd.f32 %v8688, %v8809
    %v8837 = vadd.f32 %v8689, %v8812
    %v8838 = vadd.f32 %v8690, %v8815
    %v8839 = vadd.f32 %v8691, %v8818
    %v8840 = vadd.f32 %v8692, %v8821
    %v8841 = vadd.f32 %v8693, %v8824
    %v8842 = vld [vmem:[%s4] sm:$0x1]
    %v8844 = vperm.slane %v8842, 0
    %v8846 = vadd.f32 %v8826, %v8844
    %v8847 = vadd.f32 %v8827, %v8844
    %v8848 = vadd.f32 %v8828, %v8844
    %v8849 = vadd.f32 %v8829, %v8844
    %v8850 = vadd.f32 %v8830, %v8844
    %v8851 = vadd.f32 %v8831, %v8844
    %v8852 = vadd.f32 %v8832, %v8844
    %v8853 = vadd.f32 %v8833, %v8844
    %v8854 = vadd.f32 %v8834, %v8844
    %v8855 = vadd.f32 %v8835, %v8844
    %v8856 = vadd.f32 %v8836, %v8844
    %v8857 = vadd.f32 %v8837, %v8844
    %v8858 = vadd.f32 %v8838, %v8844
    %v8859 = vadd.f32 %v8839, %v8844
    %v8860 = vadd.f32 %v8840, %v8844
    %v8861 = vadd.f32 %v8841, %v8844
    %v8862 = vmax.f32 %v8846, 0.0
    %v8863 = vmax.f32 %v8847, 0.0
    %v8864 = vmax.f32 %v8848, 0.0
    %v8865 = vmax.f32 %v8849, 0.0
    %v8866 = vmax.f32 %v8850, 0.0
    %v8867 = vmax.f32 %v8851, 0.0
    %v8868 = vmax.f32 %v8852, 0.0
    %v8869 = vmax.f32 %v8853, 0.0
    %v8870 = vmax.f32 %v8854, 0.0
    %v8871 = vmax.f32 %v8855, 0.0
    %v8872 = vmax.f32 %v8856, 0.0
    %v8873 = vmax.f32 %v8857, 0.0
    %v8874 = vmax.f32 %v8858, 0.0
    %v8875 = vmax.f32 %v8859, 0.0
    %v8876 = vmax.f32 %v8860, 0.0
    %v8877 = vmax.f32 %v8861, 0.0
    %v8894 = vrot.slane %v8862, 2
    %v8895 = vrot.slane %v8862, 4
    %v8896 = vrot.slane %v8862, 6
    %v8897 = vrot.slane %v8863, 2
    %v8898 = vrot.slane %v8863, 4
    %v8899 = vrot.slane %v8863, 6
    %v8900 = vrot.slane %v8864, 2
    %v8901 = vrot.slane %v8864, 4
    %v8902 = vrot.slane %v8864, 6
    %v8903 = vrot.slane %v8865, 2
    %v8904 = vrot.slane %v8865, 4
    %v8905 = vrot.slane %v8865, 6
    %v8906 = vrot.slane %v8866, 2
    %v8907 = vrot.slane %v8866, 4
    %v8908 = vrot.slane %v8866, 6
    %v8909 = vrot.slane %v8867, 2
    %v8910 = vrot.slane %v8867, 4
    %v8911 = vrot.slane %v8867, 6
    %v8912 = vrot.slane %v8868, 2
    %v8913 = vrot.slane %v8868, 4
    %v8914 = vrot.slane %v8868, 6
    %v8915 = vrot.slane %v8869, 2
    %v8916 = vrot.slane %v8869, 4
    %v8917 = vrot.slane %v8869, 6
    %v8918 = vrot.slane %v8870, 2
    %v8919 = vrot.slane %v8870, 4
    %v8920 = vrot.slane %v8870, 6
    %v8921 = vrot.slane %v8871, 2
    %v8922 = vrot.slane %v8871, 4
    %v8923 = vrot.slane %v8871, 6
    %v8924 = vrot.slane %v8872, 2
    %v8925 = vrot.slane %v8872, 4
    %v8926 = vrot.slane %v8872, 6
    %v8927 = vrot.slane %v8873, 2
    %v8928 = vrot.slane %v8873, 4
    %v8929 = vrot.slane %v8873, 6
    %v8930 = vrot.slane %v8874, 2
    %v8931 = vrot.slane %v8874, 4
    %v8932 = vrot.slane %v8874, 6
    %v8933 = vrot.slane %v8875, 2
    %v8934 = vrot.slane %v8875, 4
    %v8935 = vrot.slane %v8875, 6
    %v8936 = vrot.slane %v8876, 2
    %v8937 = vrot.slane %v8876, 4
    %v8938 = vrot.slane %v8876, 6
    %v8939 = vrot.slane %v8877, 2
    %v8940 = vrot.slane %v8877, 4
    %v8941 = vrot.slane %v8877, 6
    %vm8990 = vcmask 254976
    %v8991 = vsel %vm8990, %v8862, -inf
    %v8992 = vrot.slane %v8991, 4
    %v8993 = vmax.f32 %v8991, %v8992
    %v8994 = vrot.slane %v8993, 2
    %v8995 = vmax.f32 %v8993, %v8994
    %v8996 = vrot.slane %v8995, 1
    %v8997 = vmax.f32 %v8995, %v8996
    %v8998 = vsel %vm8990, %v8894, -inf
    %v8999 = vrot.slane %v8998, 4
    %v9000 = vmax.f32 %v8998, %v8999
    %v9001 = vrot.slane %v9000, 2
    %v9002 = vmax.f32 %v9000, %v9001
    %v9003 = vrot.slane %v9002, 1
    %v9004 = vmax.f32 %v9002, %v9003
    %v9005 = vsel %vm8990, %v8895, -inf
    %v9006 = vrot.slane %v9005, 4
    %v9007 = vmax.f32 %v9005, %v9006
    %v9008 = vrot.slane %v9007, 2
    %v9009 = vmax.f32 %v9007, %v9008
    %v9010 = vrot.slane %v9009, 1
    %v9011 = vmax.f32 %v9009, %v9010
    %v9012 = vsel %vm8990, %v8896, -inf
    %v9013 = vrot.slane %v9012, 4
    %v9014 = vmax.f32 %v9012, %v9013
    %v9015 = vrot.slane %v9014, 2
    %v9016 = vmax.f32 %v9014, %v9015
    %v9017 = vrot.slane %v9016, 1
    %v9018 = vmax.f32 %v9016, %v9017
    %v9019 = vsel %vm8990, %v8863, -inf
    %v9020 = vrot.slane %v9019, 4
    %v9021 = vmax.f32 %v9019, %v9020
    %v9022 = vrot.slane %v9021, 2
    %v9023 = vmax.f32 %v9021, %v9022
    %v9024 = vrot.slane %v9023, 1
    %v9025 = vmax.f32 %v9023, %v9024
    %v9026 = vsel %vm8990, %v8897, -inf
    %v9027 = vrot.slane %v9026, 4
    %v9028 = vmax.f32 %v9026, %v9027
    %v9029 = vrot.slane %v9028, 2
    %v9030 = vmax.f32 %v9028, %v9029
    %v9031 = vrot.slane %v9030, 1
    %v9032 = vmax.f32 %v9030, %v9031
    %v9033 = vsel %vm8990, %v8898, -inf
    %v9034 = vrot.slane %v9033, 4
    %v9035 = vmax.f32 %v9033, %v9034
    %v9036 = vrot.slane %v9035, 2
    %v9037 = vmax.f32 %v9035, %v9036
    %v9038 = vrot.slane %v9037, 1
    %v9039 = vmax.f32 %v9037, %v9038
    %v9040 = vsel %vm8990, %v8899, -inf
    %v9041 = vrot.slane %v9040, 4
    %v9042 = vmax.f32 %v9040, %v9041
    %v9043 = vrot.slane %v9042, 2
    %v9044 = vmax.f32 %v9042, %v9043
    %v9045 = vrot.slane %v9044, 1
    %v9046 = vmax.f32 %v9044, %v9045
    %v9047 = vsel %vm8990, %v8864, -inf
    %v9048 = vrot.slane %v9047, 4
    %v9049 = vmax.f32 %v9047, %v9048
    %v9050 = vrot.slane %v9049, 2
    %v9051 = vmax.f32 %v9049, %v9050
    %v9052 = vrot.slane %v9051, 1
    %v9053 = vmax.f32 %v9051, %v9052
    %v9054 = vsel %vm8990, %v8900, -inf
    %v9055 = vrot.slane %v9054, 4
    %v9056 = vmax.f32 %v9054, %v9055
    %v9057 = vrot.slane %v9056, 2
    %v9058 = vmax.f32 %v9056, %v9057
    %v9059 = vrot.slane %v9058, 1
    %v9060 = vmax.f32 %v9058, %v9059
    %v9061 = vsel %vm8990, %v8901, -inf
    %v9062 = vrot.slane %v9061, 4
    %v9063 = vmax.f32 %v9061, %v9062
    %v9064 = vrot.slane %v9063, 2
    %v9065 = vmax.f32 %v9063, %v9064
    %v9066 = vrot.slane %v9065, 1
    %v9067 = vmax.f32 %v9065, %v9066
    %v9068 = vsel %vm8990, %v8902, -inf
    %v9069 = vrot.slane %v9068, 4
    %v9070 = vmax.f32 %v9068, %v9069
    %v9071 = vrot.slane %v9070, 2
    %v9072 = vmax.f32 %v9070, %v9071
    %v9073 = vrot.slane %v9072, 1
    %v9074 = vmax.f32 %v9072, %v9073
    %v9075 = vsel %vm8990, %v8865, -inf
    %v9076 = vrot.slane %v9075, 4
    %v9077 = vmax.f32 %v9075, %v9076
    %v9078 = vrot.slane %v9077, 2
    %v9079 = vmax.f32 %v9077, %v9078
    %v9080 = vrot.slane %v9079, 1
    %v9081 = vmax.f32 %v9079, %v9080
    %v9082 = vsel %vm8990, %v8903, -inf
    %v9083 = vrot.slane %v9082, 4
    %v9084 = vmax.f32 %v9082, %v9083
    %v9085 = vrot.slane %v9084, 2
    %v9086 = vmax.f32 %v9084, %v9085
    %v9087 = vrot.slane %v9086, 1
    %v9088 = vmax.f32 %v9086, %v9087
    %v9089 = vsel %vm8990, %v8904, -inf
    %v9090 = vrot.slane %v9089, 4
    %v9091 = vmax.f32 %v9089, %v9090
    %v9092 = vrot.slane %v9091, 2
    %v9093 = vmax.f32 %v9091, %v9092
    %v9094 = vrot.slane %v9093, 1
    %v9095 = vmax.f32 %v9093, %v9094
    %v9096 = vsel %vm8990, %v8905, -inf
    %v9097 = vrot.slane %v9096, 4
    %v9098 = vmax.f32 %v9096, %v9097
    %v9099 = vrot.slane %v9098, 2
    %v9100 = vmax.f32 %v9098, %v9099
    %v9101 = vrot.slane %v9100, 1
    %v9102 = vmax.f32 %v9100, %v9101
    %v9103 = vsel %vm8990, %v8866, -inf
    %v9104 = vrot.slane %v9103, 4
    %v9105 = vmax.f32 %v9103, %v9104
    %v9106 = vrot.slane %v9105, 2
    %v9107 = vmax.f32 %v9105, %v9106
    %v9108 = vrot.slane %v9107, 1
    %v9109 = vmax.f32 %v9107, %v9108
    %v9110 = vsel %vm8990, %v8906, -inf
    %v9111 = vrot.slane %v9110, 4
    %v9112 = vmax.f32 %v9110, %v9111
    %v9113 = vrot.slane %v9112, 2
    %v9114 = vmax.f32 %v9112, %v9113
    %v9115 = vrot.slane %v9114, 1
    %v9116 = vmax.f32 %v9114, %v9115
    %v9117 = vsel %vm8990, %v8907, -inf
    %v9118 = vrot.slane %v9117, 4
    %v9119 = vmax.f32 %v9117, %v9118
    %v9120 = vrot.slane %v9119, 2
    %v9121 = vmax.f32 %v9119, %v9120
    %v9122 = vrot.slane %v9121, 1
    %v9123 = vmax.f32 %v9121, %v9122
    %v9124 = vsel %vm8990, %v8908, -inf
    %v9125 = vrot.slane %v9124, 4
    %v9126 = vmax.f32 %v9124, %v9125
    %v9127 = vrot.slane %v9126, 2
    %v9128 = vmax.f32 %v9126, %v9127
    %v9129 = vrot.slane %v9128, 1
    %v9130 = vmax.f32 %v9128, %v9129
    %v9131 = vsel %vm8990, %v8867, -inf
    %v9132 = vrot.slane %v9131, 4
    %v9133 = vmax.f32 %v9131, %v9132
    %v9134 = vrot.slane %v9133, 2
    %v9135 = vmax.f32 %v9133, %v9134
    %v9136 = vrot.slane %v9135, 1
    %v9137 = vmax.f32 %v9135, %v9136
    %v9138 = vsel %vm8990, %v8909, -inf
    %v9139 = vrot.slane %v9138, 4
    %v9140 = vmax.f32 %v9138, %v9139
    %v9141 = vrot.slane %v9140, 2
    %v9142 = vmax.f32 %v9140, %v9141
    %v9143 = vrot.slane %v9142, 1
    %v9144 = vmax.f32 %v9142, %v9143
    %v9145 = vsel %vm8990, %v8910, -inf
    %v9146 = vrot.slane %v9145, 4
    %v9147 = vmax.f32 %v9145, %v9146
    %v9148 = vrot.slane %v9147, 2
    %v9149 = vmax.f32 %v9147, %v9148
    %v9150 = vrot.slane %v9149, 1
    %v9151 = vmax.f32 %v9149, %v9150
    %v9152 = vsel %vm8990, %v8911, -inf
    %v9153 = vrot.slane %v9152, 4
    %v9154 = vmax.f32 %v9152, %v9153
    %v9155 = vrot.slane %v9154, 2
    %v9156 = vmax.f32 %v9154, %v9155
    %v9157 = vrot.slane %v9156, 1
    %v9158 = vmax.f32 %v9156, %v9157
    %v9159 = vsel %vm8990, %v8868, -inf
    %v9160 = vrot.slane %v9159, 4
    %v9161 = vmax.f32 %v9159, %v9160
    %v9162 = vrot.slane %v9161, 2
    %v9163 = vmax.f32 %v9161, %v9162
    %v9164 = vrot.slane %v9163, 1
    %v9165 = vmax.f32 %v9163, %v9164
    %v9166 = vsel %vm8990, %v8912, -inf
    %v9167 = vrot.slane %v9166, 4
    %v9168 = vmax.f32 %v9166, %v9167
    %v9169 = vrot.slane %v9168, 2
    %v9170 = vmax.f32 %v9168, %v9169
    %v9171 = vrot.slane %v9170, 1
    %v9172 = vmax.f32 %v9170, %v9171
    %v9173 = vsel %vm8990, %v8913, -inf
    %v9174 = vrot.slane %v9173, 4
    %v9175 = vmax.f32 %v9173, %v9174
    %v9176 = vrot.slane %v9175, 2
    %v9177 = vmax.f32 %v9175, %v9176
    %v9178 = vrot.slane %v9177, 1
    %v9179 = vmax.f32 %v9177, %v9178
    %v9180 = vsel %vm8990, %v8914, -inf
    %v9181 = vrot.slane %v9180, 4
    %v9182 = vmax.f32 %v9180, %v9181
    %v9183 = vrot.slane %v9182, 2
    %v9184 = vmax.f32 %v9182, %v9183
    %v9185 = vrot.slane %v9184, 1
    %v9186 = vmax.f32 %v9184, %v9185
    %v9187 = vsel %vm8990, %v8869, -inf
    %v9188 = vrot.slane %v9187, 4
    %v9189 = vmax.f32 %v9187, %v9188
    %v9190 = vrot.slane %v9189, 2
    %v9191 = vmax.f32 %v9189, %v9190
    %v9192 = vrot.slane %v9191, 1
    %v9193 = vmax.f32 %v9191, %v9192
    %v9194 = vsel %vm8990, %v8915, -inf
    %v9195 = vrot.slane %v9194, 4
    %v9196 = vmax.f32 %v9194, %v9195
    %v9197 = vrot.slane %v9196, 2
    %v9198 = vmax.f32 %v9196, %v9197
    %v9199 = vrot.slane %v9198, 1
    %v9200 = vmax.f32 %v9198, %v9199
    %v9201 = vsel %vm8990, %v8916, -inf
    %v9202 = vrot.slane %v9201, 4
    %v9203 = vmax.f32 %v9201, %v9202
    %v9204 = vrot.slane %v9203, 2
    %v9205 = vmax.f32 %v9203, %v9204
    %v9206 = vrot.slane %v9205, 1
    %v9207 = vmax.f32 %v9205, %v9206
    %v9208 = vsel %vm8990, %v8917, -inf
    %v9209 = vrot.slane %v9208, 4
    %v9210 = vmax.f32 %v9208, %v9209
    %v9211 = vrot.slane %v9210, 2
    %v9212 = vmax.f32 %v9210, %v9211
    %v9213 = vrot.slane %v9212, 1
    %v9214 = vmax.f32 %v9212, %v9213
    %v9215 = vsel %vm8990, %v8870, -inf
    %v9216 = vrot.slane %v9215, 4
    %v9217 = vmax.f32 %v9215, %v9216
    %v9218 = vrot.slane %v9217, 2
    %v9219 = vmax.f32 %v9217, %v9218
    %v9220 = vrot.slane %v9219, 1
    %v9221 = vmax.f32 %v9219, %v9220
    %v9222 = vsel %vm8990, %v8918, -inf
    %v9223 = vrot.slane %v9222, 4
    %v9224 = vmax.f32 %v9222, %v9223
    %v9225 = vrot.slane %v9224, 2
    %v9226 = vmax.f32 %v9224, %v9225
    %v9227 = vrot.slane %v9226, 1
    %v9228 = vmax.f32 %v9226, %v9227
    %v9229 = vsel %vm8990, %v8919, -inf
    %v9230 = vrot.slane %v9229, 4
    %v9231 = vmax.f32 %v9229, %v9230
    %v9232 = vrot.slane %v9231, 2
    %v9233 = vmax.f32 %v9231, %v9232
    %v9234 = vrot.slane %v9233, 1
    %v9235 = vmax.f32 %v9233, %v9234
    %v9236 = vsel %vm8990, %v8920, -inf
    %v9237 = vrot.slane %v9236, 4
    %v9238 = vmax.f32 %v9236, %v9237
    %v9239 = vrot.slane %v9238, 2
    %v9240 = vmax.f32 %v9238, %v9239
    %v9241 = vrot.slane %v9240, 1
    %v9242 = vmax.f32 %v9240, %v9241
    %v9243 = vsel %vm8990, %v8871, -inf
    %v9244 = vrot.slane %v9243, 4
    %v9245 = vmax.f32 %v9243, %v9244
    %v9246 = vrot.slane %v9245, 2
    %v9247 = vmax.f32 %v9245, %v9246
    %v9248 = vrot.slane %v9247, 1
    %v9249 = vmax.f32 %v9247, %v9248
    %v9250 = vsel %vm8990, %v8921, -inf
    %v9251 = vrot.slane %v9250, 4
    %v9252 = vmax.f32 %v9250, %v9251
    %v9253 = vrot.slane %v9252, 2
    %v9254 = vmax.f32 %v9252, %v9253
    %v9255 = vrot.slane %v9254, 1
    %v9256 = vmax.f32 %v9254, %v9255
    %v9257 = vsel %vm8990, %v8922, -inf
    %v9258 = vrot.slane %v9257, 4
    %v9259 = vmax.f32 %v9257, %v9258
    %v9260 = vrot.slane %v9259, 2
    %v9261 = vmax.f32 %v9259, %v9260
    %v9262 = vrot.slane %v9261, 1
    %v9263 = vmax.f32 %v9261, %v9262
    %v9264 = vsel %vm8990, %v8923, -inf
    %v9265 = vrot.slane %v9264, 4
    %v9266 = vmax.f32 %v9264, %v9265
    %v9267 = vrot.slane %v9266, 2
    %v9268 = vmax.f32 %v9266, %v9267
    %v9269 = vrot.slane %v9268, 1
    %v9270 = vmax.f32 %v9268, %v9269
    %v9271 = vsel %vm8990, %v8872, -inf
    %v9272 = vrot.slane %v9271, 4
    %v9273 = vmax.f32 %v9271, %v9272
    %v9274 = vrot.slane %v9273, 2
    %v9275 = vmax.f32 %v9273, %v9274
    %v9276 = vrot.slane %v9275, 1
    %v9277 = vmax.f32 %v9275, %v9276
    %v9278 = vsel %vm8990, %v8924, -inf
    %v9279 = vrot.slane %v9278, 4
    %v9280 = vmax.f32 %v9278, %v9279
    %v9281 = vrot.slane %v9280, 2
    %v9282 = vmax.f32 %v9280, %v9281
    %v9283 = vrot.slane %v9282, 1
    %v9284 = vmax.f32 %v9282, %v9283
    %v9285 = vsel %vm8990, %v8925, -inf
    %v9286 = vrot.slane %v9285, 4
    %v9287 = vmax.f32 %v9285, %v9286
    %v9288 = vrot.slane %v9287, 2
    %v9289 = vmax.f32 %v9287, %v9288
    %v9290 = vrot.slane %v9289, 1
    %v9291 = vmax.f32 %v9289, %v9290
    %v9292 = vsel %vm8990, %v8926, -inf
    %v9293 = vrot.slane %v9292, 4
    %v9294 = vmax.f32 %v9292, %v9293
    %v9295 = vrot.slane %v9294, 2
    %v9296 = vmax.f32 %v9294, %v9295
    %v9297 = vrot.slane %v9296, 1
    %v9298 = vmax.f32 %v9296, %v9297
    %v9299 = vsel %vm8990, %v8873, -inf
    %v9300 = vrot.slane %v9299, 4
    %v9301 = vmax.f32 %v9299, %v9300
    %v9302 = vrot.slane %v9301, 2
    %v9303 = vmax.f32 %v9301, %v9302
    %v9304 = vrot.slane %v9303, 1
    %v9305 = vmax.f32 %v9303, %v9304
    %v9306 = vsel %vm8990, %v8927, -inf
    %v9307 = vrot.slane %v9306, 4
    %v9308 = vmax.f32 %v9306, %v9307
    %v9309 = vrot.slane %v9308, 2
    %v9310 = vmax.f32 %v9308, %v9309
    %v9311 = vrot.slane %v9310, 1
    %v9312 = vmax.f32 %v9310, %v9311
    %v9313 = vsel %vm8990, %v8928, -inf
    %v9314 = vrot.slane %v9313, 4
    %v9315 = vmax.f32 %v9313, %v9314
    %v9316 = vrot.slane %v9315, 2
    %v9317 = vmax.f32 %v9315, %v9316
    %v9318 = vrot.slane %v9317, 1
    %v9319 = vmax.f32 %v9317, %v9318
    %v9320 = vsel %vm8990, %v8929, -inf
    %v9321 = vrot.slane %v9320, 4
    %v9322 = vmax.f32 %v9320, %v9321
    %v9323 = vrot.slane %v9322, 2
    %v9324 = vmax.f32 %v9322, %v9323
    %v9325 = vrot.slane %v9324, 1
    %v9326 = vmax.f32 %v9324, %v9325
    %v9327 = vsel %vm8990, %v8874, -inf
    %v9328 = vrot.slane %v9327, 4
    %v9329 = vmax.f32 %v9327, %v9328
    %v9330 = vrot.slane %v9329, 2
    %v9331 = vmax.f32 %v9329, %v9330
    %v9332 = vrot.slane %v9331, 1
    %v9333 = vmax.f32 %v9331, %v9332
    %v9334 = vsel %vm8990, %v8930, -inf
    %v9335 = vrot.slane %v9334, 4
    %v9336 = vmax.f32 %v9334, %v9335
    %v9337 = vrot.slane %v9336, 2
    %v9338 = vmax.f32 %v9336, %v9337
    %v9339 = vrot.slane %v9338, 1
    %v9340 = vmax.f32 %v9338, %v9339
    %v9341 = vsel %vm8990, %v8931, -inf
    %v9342 = vrot.slane %v9341, 4
    %v9343 = vmax.f32 %v9341, %v9342
    %v9344 = vrot.slane %v9343, 2
    %v9345 = vmax.f32 %v9343, %v9344
    %v9346 = vrot.slane %v9345, 1
    %v9347 = vmax.f32 %v9345, %v9346
    %v9348 = vsel %vm8990, %v8932, -inf
    %v9349 = vrot.slane %v9348, 4
    %v9350 = vmax.f32 %v9348, %v9349
    %v9351 = vrot.slane %v9350, 2
    %v9352 = vmax.f32 %v9350, %v9351
    %v9353 = vrot.slane %v9352, 1
    %v9354 = vmax.f32 %v9352, %v9353
    %v9355 = vsel %vm8990, %v8875, -inf
    %v9356 = vrot.slane %v9355, 4
    %v9357 = vmax.f32 %v9355, %v9356
    %v9358 = vrot.slane %v9357, 2
    %v9359 = vmax.f32 %v9357, %v9358
    %v9360 = vrot.slane %v9359, 1
    %v9361 = vmax.f32 %v9359, %v9360
    %v9362 = vsel %vm8990, %v8933, -inf
    %v9363 = vrot.slane %v9362, 4
    %v9364 = vmax.f32 %v9362, %v9363
    %v9365 = vrot.slane %v9364, 2
    %v9366 = vmax.f32 %v9364, %v9365
    %v9367 = vrot.slane %v9366, 1
    %v9368 = vmax.f32 %v9366, %v9367
    %v9369 = vsel %vm8990, %v8934, -inf
    %v9370 = vrot.slane %v9369, 4
    %v9371 = vmax.f32 %v9369, %v9370
    %v9372 = vrot.slane %v9371, 2
    %v9373 = vmax.f32 %v9371, %v9372
    %v9374 = vrot.slane %v9373, 1
    %v9375 = vmax.f32 %v9373, %v9374
    %v9376 = vsel %vm8990, %v8935, -inf
    %v9377 = vrot.slane %v9376, 4
    %v9378 = vmax.f32 %v9376, %v9377
    %v9379 = vrot.slane %v9378, 2
    %v9380 = vmax.f32 %v9378, %v9379
    %v9381 = vrot.slane %v9380, 1
    %v9382 = vmax.f32 %v9380, %v9381
    %v9383 = vsel %vm8990, %v8876, -inf
    %v9384 = vrot.slane %v9383, 4
    %v9385 = vmax.f32 %v9383, %v9384
    %v9386 = vrot.slane %v9385, 2
    %v9387 = vmax.f32 %v9385, %v9386
    %v9388 = vrot.slane %v9387, 1
    %v9389 = vmax.f32 %v9387, %v9388
    %v9390 = vsel %vm8990, %v8936, -inf
    %v9391 = vrot.slane %v9390, 4
    %v9392 = vmax.f32 %v9390, %v9391
    %v9393 = vrot.slane %v9392, 2
    %v9394 = vmax.f32 %v9392, %v9393
    %v9395 = vrot.slane %v9394, 1
    %v9396 = vmax.f32 %v9394, %v9395
    %v9397 = vsel %vm8990, %v8937, -inf
    %v9398 = vrot.slane %v9397, 4
    %v9399 = vmax.f32 %v9397, %v9398
    %v9400 = vrot.slane %v9399, 2
    %v9401 = vmax.f32 %v9399, %v9400
    %v9402 = vrot.slane %v9401, 1
    %v9403 = vmax.f32 %v9401, %v9402
    %v9404 = vsel %vm8990, %v8938, -inf
    %v9405 = vrot.slane %v9404, 4
    %v9406 = vmax.f32 %v9404, %v9405
    %v9407 = vrot.slane %v9406, 2
    %v9408 = vmax.f32 %v9406, %v9407
    %v9409 = vrot.slane %v9408, 1
    %v9410 = vmax.f32 %v9408, %v9409
    %v9411 = vsel %vm8990, %v8877, -inf
    %v9412 = vrot.slane %v9411, 4
    %v9413 = vmax.f32 %v9411, %v9412
    %v9414 = vrot.slane %v9413, 2
    %v9415 = vmax.f32 %v9413, %v9414
    %v9416 = vrot.slane %v9415, 1
    %v9417 = vmax.f32 %v9415, %v9416
    %v9418 = vsel %vm8990, %v8939, -inf
    %v9419 = vrot.slane %v9418, 4
    %v9420 = vmax.f32 %v9418, %v9419
    %v9421 = vrot.slane %v9420, 2
    %v9422 = vmax.f32 %v9420, %v9421
    %v9423 = vrot.slane %v9422, 1
    %v9424 = vmax.f32 %v9422, %v9423
    %v9425 = vsel %vm8990, %v8940, -inf
    %v9426 = vrot.slane %v9425, 4
    %v9427 = vmax.f32 %v9425, %v9426
    %v9428 = vrot.slane %v9427, 2
    %v9429 = vmax.f32 %v9427, %v9428
    %v9430 = vrot.slane %v9429, 1
    %v9431 = vmax.f32 %v9429, %v9430
    %v9432 = vsel %vm8990, %v8941, -inf
    %v9433 = vrot.slane %v9432, 4
    %v9434 = vmax.f32 %v9432, %v9433
    %v9435 = vrot.slane %v9434, 2
    %v9436 = vmax.f32 %v9434, %v9435
    %v9437 = vrot.slane %v9436, 1
    %v9438 = vmax.f32 %v9436, %v9437
    %v9439 = vmax.f32 %v8997, %v9025
    %v9440 = vmax.f32 %v9004, %v9032
    %v9441 = vmax.f32 %v9011, %v9039
    %v9442 = vmax.f32 %v9018, %v9046
    %v9443 = vmax.f32 %v9053, %v9081
    %v9444 = vmax.f32 %v9060, %v9088
    %v9445 = vmax.f32 %v9067, %v9095
    %v9446 = vmax.f32 %v9074, %v9102
    %v9447 = vmax.f32 %v9109, %v9137
    %v9448 = vmax.f32 %v9116, %v9144
    %v9449 = vmax.f32 %v9123, %v9151
    %v9450 = vmax.f32 %v9130, %v9158
    %v9451 = vmax.f32 %v9165, %v9193
    %v9452 = vmax.f32 %v9172, %v9200
    %v9453 = vmax.f32 %v9179, %v9207
    %v9454 = vmax.f32 %v9186, %v9214
    %v9455 = vmax.f32 %v9221, %v9249
    %v9456 = vmax.f32 %v9228, %v9256
    %v9457 = vmax.f32 %v9235, %v9263
    %v9458 = vmax.f32 %v9242, %v9270
    %v9459 = vmax.f32 %v9277, %v9305
    %v9460 = vmax.f32 %v9284, %v9312
    %v9461 = vmax.f32 %v9291, %v9319
    %v9462 = vmax.f32 %v9298, %v9326
    %v9463 = vmax.f32 %v9333, %v9361
    %v9464 = vmax.f32 %v9340, %v9368
    %v9465 = vmax.f32 %v9347, %v9375
    %v9466 = vmax.f32 %v9354, %v9382
    %v9467 = vmax.f32 %v9389, %v9417
    %v9468 = vmax.f32 %v9396, %v9424
    %v9469 = vmax.f32 %v9403, %v9431
    %v9470 = vmax.f32 %v9410, %v9438
    %vm9471 = vcmask 259072
    %9472 = vst.msk [vmem:[#allocation3] sm:$0x3f] %vm9471, 0.0
    %9473 = vst.msk [vmem:[#allocation3 + $0x8] sm:$0x3f] %vm9471, 0.0
    %9474 = vst.msk [vmem:[#allocation3 + $0x10] sm:$0x3f] %vm9471, 0.0
    %9475 = vst.msk [vmem:[#allocation3 + $0x18] sm:$0x3f] %vm9471, 0.0
    %9476 = vst.msk [vmem:[#allocation3 + $0x20] sm:$0x3f] %vm9471, 0.0
    %9477 = vst.msk [vmem:[#allocation3 + $0x28] sm:$0x3f] %vm9471, 0.0
    %9478 = vst.msk [vmem:[#allocation3 + $0x30] sm:$0x3f] %vm9471, 0.0
    %9479 = vst.msk [vmem:[#allocation3 + $0x38] sm:$0x3f] %vm9471, 0.0
    %9480 = vst.msk [vmem:[#allocation3 + $0x40] sm:$0x3f] %vm9471, 0.0
    %9481 = vst.msk [vmem:[#allocation3 + $0x48] sm:$0x3f] %vm9471, 0.0
    %9482 = vst.msk [vmem:[#allocation3 + $0x50] sm:$0x3f] %vm9471, 0.0
    %9483 = vst.msk [vmem:[#allocation3 + $0x58] sm:$0x3f] %vm9471, 0.0
    %v9516 = vsel %vm7390, %v9440, %v9439
    %v9517 = vsel %vm7392, %v9441, %v9516
    %v9518 = vsel %vm7394, %v9442, %v9517
    %v9519 = vsel %vm7390, %v9444, %v9443
    %v9520 = vsel %vm7392, %v9445, %v9519
    %v9521 = vsel %vm7394, %v9446, %v9520
    %v9522 = vsel %vm7390, %v9448, %v9447
    %v9523 = vsel %vm7392, %v9449, %v9522
    %v9524 = vsel %vm7394, %v9450, %v9523
    %v9525 = vsel %vm7390, %v9452, %v9451
    %v9526 = vsel %vm7392, %v9453, %v9525
    %v9527 = vsel %vm7394, %v9454, %v9526
    %v9528 = vsel %vm7390, %v9456, %v9455
    %v9529 = vsel %vm7392, %v9457, %v9528
    %v9530 = vsel %vm7394, %v9458, %v9529
    %v9531 = vsel %vm7390, %v9460, %v9459
    %v9532 = vsel %vm7392, %v9461, %v9531
    %v9533 = vsel %vm7394, %v9462, %v9532
    %v9534 = vsel %vm7390, %v9464, %v9463
    %v9535 = vsel %vm7392, %v9465, %v9534
    %v9536 = vsel %vm7394, %v9466, %v9535
    %v9537 = vsel %vm7390, %v9468, %v9467
    %v9538 = vsel %vm7392, %v9469, %v9537
    %v9539 = vsel %vm7394, %v9470, %v9538
    %s9548 = scalar_lea.vmem [#allocation3], 8
    %vm9549 = vcmask 257024
    %9550 = vst.msk [vmem:[%s9548 + $0x1] sm:$0xf] %vm9549, %v9518
    %9551 = vst.msk [vmem:[%s9548 + $0x9] sm:$0xf] %vm9549, %v9521
    %9552 = vst.msk [vmem:[%s9548 + $0x11] sm:$0xf] %vm9549, %v9524
    %9553 = vst.msk [vmem:[%s9548 + $0x19] sm:$0xf] %vm9549, %v9527
    %9554 = vst.msk [vmem:[%s9548 + $0x31] sm:$0xf] %vm9549, %v9530
    %9555 = vst.msk [vmem:[%s9548 + $0x39] sm:$0xf] %vm9549, %v9533
    %9556 = vst.msk [vmem:[%s9548 + $0x41] sm:$0xf] %vm9549, %v9536
    %9557 = vst.msk [vmem:[%s9548 + $0x49] sm:$0xf] %vm9549, %v9539
    %v9558 = vld [vmem:[#allocation3] sm:$0xf]
    %v9559 = vld [vmem:[#allocation3 + $0x8] sm:$0xf]
    %v9560 = vld [vmem:[#allocation3 + $0x10] sm:$0xf]
    %v9561 = vld [vmem:[#allocation3 + $0x18] sm:$0xf]
    %v9562 = vld [vmem:[#allocation3 + $0x30] sm:$0xf]
    %v9563 = vld [vmem:[#allocation3 + $0x38] sm:$0xf]
    %v9564 = vld [vmem:[#allocation3 + $0x40] sm:$0xf]
    %v9565 = vld [vmem:[#allocation3 + $0x48] sm:$0xf]
    %v9566 = vld [vmem:[%s5] sm:$0xff]
    %v9567 = vld [vmem:[%s5 + $0x8] sm:$0xff]
    %v9568 = vld [vmem:[%s5 + $0x10] sm:$0xff]
    %v9569 = vld [vmem:[%s5 + $0x18] sm:$0xff]
    %v9570 = vld [vmem:[#allocation3 + $0x1] sm:$0xf]
    %v9571 = vld [vmem:[#allocation3 + $0x9] sm:$0xf]
    %v9572 = vld [vmem:[#allocation3 + $0x11] sm:$0xf]
    %v9573 = vld [vmem:[#allocation3 + $0x19] sm:$0xf]
    %v9574 = vld [vmem:[#allocation3 + $0x31] sm:$0xf]
    %v9575 = vld [vmem:[#allocation3 + $0x39] sm:$0xf]
    %v9576 = vld [vmem:[#allocation3 + $0x41] sm:$0xf]
    %v9577 = vld [vmem:[#allocation3 + $0x49] sm:$0xf]
    %s9578 = scalar_lea.vmem %s5, 32
    %v9579 = vld [vmem:[%s9578] sm:$0xff]
    %v9580 = vld [vmem:[%s9578 + $0x8] sm:$0xff]
    %v9581 = vld [vmem:[%s9578 + $0x10] sm:$0xff]
    %v9582 = vld [vmem:[%s9578 + $0x18] sm:$0xff]
    %9591 = vst [vmem:[#allocation1] ss:$2 sm:$0xff] %v9570
    %s9592 = scalar_lea.vmem [#allocation1], 1
    %9593 = vst [vmem:[%s9592] ss:$2 sm:$0xff] %v9571
    %s9594 = scalar_lea.vmem [#allocation1], 16
    %9595 = vst [vmem:[%s9594] ss:$2 sm:$0xff] %v9572
    %s9596 = scalar_lea.vmem [#allocation1], 17
    %9597 = vst [vmem:[%s9596] ss:$2 sm:$0xff] %v9573
    %s9598 = scalar_lea.vmem [#allocation1], 32
    %9599 = vst [vmem:[%s9598] ss:$2 sm:$0xff] %v9574
    %s9600 = scalar_lea.vmem [#allocation1], 33
    %9601 = vst [vmem:[%s9600] ss:$2 sm:$0xff] %v9575
    %s9602 = scalar_lea.vmem [#allocation1], 48
    %9603 = vst [vmem:[%s9602] ss:$2 sm:$0xff] %v9576
    %s9604 = scalar_lea.vmem [#allocation1], 49
    %9605 = vst [vmem:[%s9604] ss:$2 sm:$0xff] %v9577
    %v9606 = vld.sshfl [vmem:[#allocation1] sm:$0xff pattern:$0x75316420]
    %v9607 = vld.sshfl [vmem:[#allocation1 + $0x10] sm:$0xff pattern:$0x75316420]
    %v9608 = vld.sshfl [vmem:[#allocation1 + $0x20] sm:$0xff pattern:$0x75316420]
    %v9609 = vld.sshfl [vmem:[#allocation1 + $0x30] sm:$0xff pattern:$0x75316420]
    %vm9610 = vcmask 261120
    %v9611 = vsel %vm9610, %v9606, 0
    %v9613 = vsel %vm9610, %v9607, 0
    %v9615 = vsel %vm9610, %v9608, 0
    %v9617 = vsel %vm9610, %v9609, 0
    %9619 = vmatpush.msra.mxu0 0.0
    %9620 = vmatpush.msra.mxu0 0.0
    %9621 = vmatpush.msra.mxu0 0.0
    %9622 = vmatpush.msra.mxu0 0.0
    %9623 = vmatpush.msra.mxu0 0.0
    %9624 = vmatpush.msra.mxu0 0.0
    %9625 = vmatpush.msra.mxu0 0.0
    %9626 = vmatpush.msra.mxu0 0.0
    %9627 = vmatpush.msra.mxu0 0.0
    %9628 = vmatpush.msra.mxu0 0.0
    %9629 = vmatpush.msra.mxu0 0.0
    %9630 = vmatpush.msra.mxu0 0.0
    %9631 = vmatpush.msra.mxu0 %v9582
    %9632 = vmatpush.msra.mxu0 %v9581
    %9633 = vmatpush.msra.mxu0 %v9580
    %9634 = vmatpush.msra.mxu0 %v9579
    %9635 = vmatmul.f32.gmra.mxu0 %v9611
    %v9636 = vpop.f32.mrf.mxu0
    %v9637 = vadd.f32 0.0, %v9636
    %9638 = vmatmul.f32.gmra.mxu0 %v9613
    %v9639 = vpop.f32.mrf.mxu0
    %v9640 = vadd.f32 0.0, %v9639
    %9641 = vmatmul.f32.gmra.mxu0 %v9615
    %v9642 = vpop.f32.mrf.mxu0
    %v9643 = vadd.f32 0.0, %v9642
    %9644 = vmatmul.f32.gmra.mxu0 %v9617
    %v9645 = vpop.f32.mrf.mxu0
    %v9646 = vadd.f32 0.0, %v9645
    %9647 = vdwg.mxu0
    %9656 = vst [vmem:[#allocation1] ss:$2 sm:$0xff] %v9558
    %s9657 = scalar_lea.vmem [#allocation1], 1
    %9658 = vst [vmem:[%s9657] ss:$2 sm:$0xff] %v9559
    %s9659 = scalar_lea.vmem [#allocation1], 16
    %9660 = vst [vmem:[%s9659] ss:$2 sm:$0xff] %v9560
    %s9661 = scalar_lea.vmem [#allocation1], 17
    %9662 = vst [vmem:[%s9661] ss:$2 sm:$0xff] %v9561
    %s9663 = scalar_lea.vmem [#allocation1], 32
    %9664 = vst [vmem:[%s9663] ss:$2 sm:$0xff] %v9562
    %s9665 = scalar_lea.vmem [#allocation1], 33
    %9666 = vst [vmem:[%s9665] ss:$2 sm:$0xff] %v9563
    %s9667 = scalar_lea.vmem [#allocation1], 48
    %9668 = vst [vmem:[%s9667] ss:$2 sm:$0xff] %v9564
    %s9669 = scalar_lea.vmem [#allocation1], 49
    %9670 = vst [vmem:[%s9669] ss:$2 sm:$0xff] %v9565
    %v9671 = vld.sshfl [vmem:[#allocation1] sm:$0xff pattern:$0x75316420]
    %v9672 = vld.sshfl [vmem:[#allocation1 + $0x10] sm:$0xff pattern:$0x75316420]
    %v9673 = vld.sshfl [vmem:[#allocation1 + $0x20] sm:$0xff pattern:$0x75316420]
    %v9674 = vld.sshfl [vmem:[#allocation1 + $0x30] sm:$0xff pattern:$0x75316420]
    %v9675 = vsel %vm9610, %v9671, 0
    %v9677 = vsel %vm9610, %v9672, 0
    %v9679 = vsel %vm9610, %v9673, 0
    %v9681 = vsel %vm9610, %v9674, 0
    %9683 = vmatpush.msra.mxu0 0.0
    %9684 = vmatpush.msra.mxu0 0.0
    %9685 = vmatpush.msra.mxu0 0.0
    %9686 = vmatpush.msra.mxu0 0.0
    %9687 = vmatpush.msra.mxu0 0.0
    %9688 = vmatpush.msra.mxu0 0.0
    %9689 = vmatpush.msra.mxu0 0.0
    %9690 = vmatpush.msra.mxu0 0.0
    %9691 = vmatpush.msra.mxu0 0.0
    %9692 = vmatpush.msra.mxu0 0.0
    %9693 = vmatpush.msra.mxu0 0.0
    %9694 = vmatpush.msra.mxu0 0.0
    %9695 = vmatpush.msra.mxu0 %v9569
    %9696 = vmatpush.msra.mxu0 %v9568
    %9697 = vmatpush.msra.mxu0 %v9567
    %9698 = vmatpush.msra.mxu0 %v9566
    %9699 = vmatmul.f32.gmra.mxu0 %v9675
    %v9700 = vpop.f32.mrf.mxu0
    %v9701 = vadd.f32 %v9637, %v9700
    %9702 = vmatmul.f32.gmra.mxu0 %v9677
    %v9703 = vpop.f32.mrf.mxu0
    %v9704 = vadd.f32 %v9640, %v9703
    %9705 = vmatmul.f32.gmra.mxu0 %v9679
    %v9706 = vpop.f32.mrf.mxu0
    %v9707 = vadd.f32 %v9643, %v9706
    %9708 = vmatmul.f32.gmra.mxu0 %v9681
    %v9709 = vpop.f32.mrf.mxu0
    %v9710 = vadd.f32 %v9646, %v9709
    %9711 = vdwg.mxu0
    %v9712 = vld [vmem:[#allocation3 + $0x2] sm:$0xf]
    %v9713 = vld [vmem:[#allocation3 + $0xa] sm:$0xf]
    %v9714 = vld [vmem:[#allocation3 + $0x12] sm:$0xf]
    %v9715 = vld [vmem:[#allocation3 + $0x1a] sm:$0xf]
    %v9716 = vld [vmem:[#allocation3 + $0x32] sm:$0xf]
    %v9717 = vld [vmem:[#allocation3 + $0x3a] sm:$0xf]
    %v9718 = vld [vmem:[#allocation3 + $0x42] sm:$0xf]
    %v9719 = vld [vmem:[#allocation3 + $0x4a] sm:$0xf]
    %s9720 = scalar_lea.vmem %s5, 64
    %v9721 = vld [vmem:[%s9720] sm:$0xff]
    %v9722 = vld [vmem:[%s9720 + $0x8] sm:$0xff]
    %v9723 = vld [vmem:[%s9720 + $0x10] sm:$0xff]
    %v9724 = vld [vmem:[%s9720 + $0x18] sm:$0xff]
    %9733 = vst [vmem:[#allocation1] ss:$2 sm:$0xff] %v9712
    %s9734 = scalar_lea.vmem [#allocation1], 1
    %9735 = vst [vmem:[%s9734] ss:$2 sm:$0xff] %v9713
    %s9736 = scalar_lea.vmem [#allocation1], 16
    %9737 = vst [vmem:[%s9736] ss:$2 sm:$0xff] %v9714
    %s9738 = scalar_lea.vmem [#allocation1], 17
    %9739 = vst [vmem:[%s9738] ss:$2 sm:$0xff] %v9715
    %s9740 = scalar_lea.vmem [#allocation1], 32
    %9741 = vst [vmem:[%s9740] ss:$2 sm:$0xff] %v9716
    %s9742 = scalar_lea.vmem [#allocation1], 33
    %9743 = vst [vmem:[%s9742] ss:$2 sm:$0xff] %v9717
    %s9744 = scalar_lea.vmem [#allocation1], 48
    %9745 = vst [vmem:[%s9744] ss:$2 sm:$0xff] %v9718
    %s9746 = scalar_lea.vmem [#allocation1], 49
    %9747 = vst [vmem:[%s9746] ss:$2 sm:$0xff] %v9719
    %v9748 = vld.sshfl [vmem:[#allocation1] sm:$0xff pattern:$0x75316420]
    %v9749 = vld.sshfl [vmem:[#allocation1 + $0x10] sm:$0xff pattern:$0x75316420]
    %v9750 = vld.sshfl [vmem:[#allocation1 + $0x20] sm:$0xff pattern:$0x75316420]
    %v9751 = vld.sshfl [vmem:[#allocation1 + $0x30] sm:$0xff pattern:$0x75316420]
    %v9752 = vsel %vm9610, %v9748, 0
    %v9754 = vsel %vm9610, %v9749, 0
    %v9756 = vsel %vm9610, %v9750, 0
    %v9758 = vsel %vm9610, %v9751, 0
    %9760 = vmatpush.msra.mxu0 0.0
    %9761 = vmatpush.msra.mxu0 0.0
    %9762 = vmatpush.msra.mxu0 0.0
    %9763 = vmatpush.msra.mxu0 0.0
    %9764 = vmatpush.msra.mxu0 0.0
    %9765 = vmatpush.msra.mxu0 0.0
    %9766 = vmatpush.msra.mxu0 0.0
    %9767 = vmatpush.msra.mxu0 0.0
    %9768 = vmatpush.msra.mxu0 0.0
    %9769 = vmatpush.msra.mxu0 0.0
    %9770 = vmatpush.msra.mxu0 0.0
    %9771 = vmatpush.msra.mxu0 0.0
    %9772 = vmatpush.msra.mxu0 %v9724
    %9773 = vmatpush.msra.mxu0 %v9723
    %9774 = vmatpush.msra.mxu0 %v9722
    %9775 = vmatpush.msra.mxu0 %v9721
    %9776 = vmatmul.f32.gmra.mxu0 %v9752
    %v9777 = vpop.f32.mrf.mxu0
    %v9778 = vadd.f32 0.0, %v9777
    %9779 = vmatmul.f32.gmra.mxu0 %v9754
    %v9780 = vpop.f32.mrf.mxu0
    %v9781 = vadd.f32 0.0, %v9780
    %9782 = vmatmul.f32.gmra.mxu0 %v9756
    %v9783 = vpop.f32.mrf.mxu0
    %v9784 = vadd.f32 0.0, %v9783
    %9785 = vmatmul.f32.gmra.mxu0 %v9758
    %v9786 = vpop.f32.mrf.mxu0
    %v9787 = vadd.f32 0.0, %v9786
    %9788 = vdwg.mxu0
    %v9789 = vadd.f32 %v9701, %v9778
    %v9790 = vadd.f32 %v9704, %v9781
    %v9791 = vadd.f32 %v9707, %v9784
    %v9792 = vadd.f32 %v9710, %v9787
    %v9793 = vld [vmem:[%s9548] sm:$0xf]
    %v9794 = vld [vmem:[%s9548 + $0x8] sm:$0xf]
    %v9795 = vld [vmem:[%s9548 + $0x10] sm:$0xf]
    %v9796 = vld [vmem:[%s9548 + $0x18] sm:$0xf]
    %v9797 = vld [vmem:[%s9548 + $0x30] sm:$0xf]
    %v9798 = vld [vmem:[%s9548 + $0x38] sm:$0xf]
    %v9799 = vld [vmem:[%s9548 + $0x40] sm:$0xf]
    %v9800 = vld [vmem:[%s9548 + $0x48] sm:$0xf]
    %s9801 = scalar_lea.vmem %s5, 96
    %v9802 = vld [vmem:[%s9801] sm:$0xff]
    %v9803 = vld [vmem:[%s9801 + $0x8] sm:$0xff]
    %v9804 = vld [vmem:[%s9801 + $0x10] sm:$0xff]
    %v9805 = vld [vmem:[%s9801 + $0x18] sm:$0xff]
    %9814 = vst [vmem:[#allocation1] ss:$2 sm:$0xff] %v9793
    %s9815 = scalar_lea.vmem [#allocation1], 1
    %9816 = vst [vmem:[%s9815] ss:$2 sm:$0xff] %v9794
    %s9817 = scalar_lea.vmem [#allocation1], 16
    %9818 = vst [vmem:[%s9817] ss:$2 sm:$0xff] %v9795
    %s9819 = scalar_lea.vmem [#allocation1], 17
    %9820 = vst [vmem:[%s9819] ss:$2 sm:$0xff] %v9796
    %s9821 = scalar_lea.vmem [#allocation1], 32
    %9822 = vst [vmem:[%s9821] ss:$2 sm:$0xff] %v9797
    %s9823 = scalar_lea.vmem [#allocation1], 33
    %9824 = vst [vmem:[%s9823] ss:$2 sm:$0xff] %v9798
    %s9825 = scalar_lea.vmem [#allocation1], 48
    %9826 = vst [vmem:[%s9825] ss:$2 sm:$0xff] %v9799
    %s9827 = scalar_lea.vmem [#allocation1], 49
    %9828 = vst [vmem:[%s9827] ss:$2 sm:$0xff] %v9800
    %v9829 = vld.sshfl [vmem:[#allocation1] sm:$0xff pattern:$0x75316420]
    %v9830 = vld.sshfl [vmem:[#allocation1 + $0x10] sm:$0xff pattern:$0x75316420]
    %v9831 = vld.sshfl [vmem:[#allocation1 + $0x20] sm:$0xff pattern:$0x75316420]
    %v9832 = vld.sshfl [vmem:[#allocation1 + $0x30] sm:$0xff pattern:$0x75316420]
    %v9833 = vsel %vm9610, %v9829, 0
    %v9835 = vsel %vm9610, %v9830, 0
    %v9837 = vsel %vm9610, %v9831, 0
    %v9839 = vsel %vm9610, %v9832, 0
    %9841 = vmatpush.msra.mxu0 0.0
    %9842 = vmatpush.msra.mxu0 0.0
    %9843 = vmatpush.msra.mxu0 0.0
    %9844 = vmatpush.msra.mxu0 0.0
    %9845 = vmatpush.msra.mxu0 0.0
    %9846 = vmatpush.msra.mxu0 0.0
    %9847 = vmatpush.msra.mxu0 0.0
    %9848 = vmatpush.msra.mxu0 0.0
    %9849 = vmatpush.msra.mxu0 0.0
    %9850 = vmatpush.msra.mxu0 0.0
    %9851 = vmatpush.msra.mxu0 0.0
    %9852 = vmatpush.msra.mxu0 0.0
    %9853 = vmatpush.msra.mxu0 %v9805
    %9854 = vmatpush.msra.mxu0 %v9804
    %9855 = vmatpush.msra.mxu0 %v9803
    %9856 = vmatpush.msra.mxu0 %v9802
    %9857 = vmatmul.f32.gmra.mxu0 %v9833
    %v9858 = vpop.f32.mrf.mxu0
    %v9859 = vadd.f32 0.0, %v9858
    %9860 = vmatmul.f32.gmra.mxu0 %v9835
    %v9861 = vpop.f32.mrf.mxu0
    %v9862 = vadd.f32 0.0, %v9861
    %9863 = vmatmul.f32.gmra.mxu0 %v9837
    %v9864 = vpop.f32.mrf.mxu0
    %v9865 = vadd.f32 0.0, %v9864
    %9866 = vmatmul.f32.gmra.mxu0 %v9839
    %v9867 = vpop.f32.mrf.mxu0
    %v9868 = vadd.f32 0.0, %v9867
    %9869 = vdwg.mxu0
    %v9870 = vadd.f32 %v9789, %v9859
    %v9871 = vadd.f32 %v9790, %v9862
    %v9872 = vadd.f32 %v9791, %v9865
    %v9873 = vadd.f32 %v9792, %v9868
    %v9874 = vld [vmem:[%s9548 + $0x1] sm:$0xf]
    %v9875 = vld [vmem:[%s9548 + $0x9] sm:$0xf]
    %v9876 = vld [vmem:[%s9548 + $0x11] sm:$0xf]
    %v9877 = vld [vmem:[%s9548 + $0x19] sm:$0xf]
    %v9878 = vld [vmem:[%s9548 + $0x31] sm:$0xf]
    %v9879 = vld [vmem:[%s9548 + $0x39] sm:$0xf]
    %v9880 = vld [vmem:[%s9548 + $0x41] sm:$0xf]
    %v9881 = vld [vmem:[%s9548 + $0x49] sm:$0xf]
    %s9882 = scalar_lea.vmem %s5, 128
    %v9883 = vld [vmem:[%s9882] sm:$0xff]
    %v9884 = vld [vmem:[%s9882 + $0x8] sm:$0xff]
    %v9885 = vld [vmem:[%s9882 + $0x10] sm:$0xff]
    %v9886 = vld [vmem:[%s9882 + $0x18] sm:$0xff]
    %9895 = vst [vmem:[#allocation1] ss:$2 sm:$0xff] %v9874
    %s9896 = scalar_lea.vmem [#allocation1], 1
    %9897 = vst [vmem:[%s9896] ss:$2 sm:$0xff] %v9875
    %s9898 = scalar_lea.vmem [#allocation1], 16
    %9899 = vst [vmem:[%s9898] ss:$2 sm:$0xff] %v9876
    %s9900 = scalar_lea.vmem [#allocation1], 17
    %9901 = vst [vmem:[%s9900] ss:$2 sm:$0xff] %v9877
    %s9902 = scalar_lea.vmem [#allocation1], 32
    %9903 = vst [vmem:[%s9902] ss:$2 sm:$0xff] %v9878
    %s9904 = scalar_lea.vmem [#allocation1], 33
    %9905 = vst [vmem:[%s9904] ss:$2 sm:$0xff] %v9879
    %s9906 = scalar_lea.vmem [#allocation1], 48
    %9907 = vst [vmem:[%s9906] ss:$2 sm:$0xff] %v9880
    %s9908 = scalar_lea.vmem [#allocation1], 49
    %9909 = vst [vmem:[%s9908] ss:$2 sm:$0xff] %v9881
    %v9910 = vld.sshfl [vmem:[#allocation1] sm:$0xff pattern:$0x75316420]
    %v9911 = vld.sshfl [vmem:[#allocation1 + $0x10] sm:$0xff pattern:$0x75316420]
    %v9912 = vld.sshfl [vmem:[#allocation1 + $0x20] sm:$0xff pattern:$0x75316420]
    %v9913 = vld.sshfl [vmem:[#allocation1 + $0x30] sm:$0xff pattern:$0x75316420]
    %v9914 = vsel %vm9610, %v9910, 0
    %v9916 = vsel %vm9610, %v9911, 0
    %v9918 = vsel %vm9610, %v9912, 0
    %v9920 = vsel %vm9610, %v9913, 0
    %9922 = vmatpush.msra.mxu0 0.0
    %9923 = vmatpush.msra.mxu0 0.0
    %9924 = vmatpush.msra.mxu0 0.0
    %9925 = vmatpush.msra.mxu0 0.0
    %9926 = vmatpush.msra.mxu0 0.0
    %9927 = vmatpush.msra.mxu0 0.0
    %9928 = vmatpush.msra.mxu0 0.0
    %9929 = vmatpush.msra.mxu0 0.0
    %9930 = vmatpush.msra.mxu0 0.0
    %9931 = vmatpush.msra.mxu0 0.0
    %9932 = vmatpush.msra.mxu0 0.0
    %9933 = vmatpush.msra.mxu0 0.0
    %9934 = vmatpush.msra.mxu0 %v9886
    %9935 = vmatpush.msra.mxu0 %v9885
    %9936 = vmatpush.msra.mxu0 %v9884
    %9937 = vmatpush.msra.mxu0 %v9883
    %9938 = vmatmul.f32.gmra.mxu0 %v9914
    %v9939 = vpop.f32.mrf.mxu0
    %v9940 = vadd.f32 0.0, %v9939
    %9941 = vmatmul.f32.gmra.mxu0 %v9916
    %v9942 = vpop.f32.mrf.mxu0
    %v9943 = vadd.f32 0.0, %v9942
    %9944 = vmatmul.f32.gmra.mxu0 %v9918
    %v9945 = vpop.f32.mrf.mxu0
    %v9946 = vadd.f32 0.0, %v9945
    %9947 = vmatmul.f32.gmra.mxu0 %v9920
    %v9948 = vpop.f32.mrf.mxu0
    %v9949 = vadd.f32 0.0, %v9948
    %9950 = vdwg.mxu0
    %v9951 = vadd.f32 %v9870, %v9940
    %v9952 = vadd.f32 %v9871, %v9943
    %v9953 = vadd.f32 %v9872, %v9946
    %v9954 = vadd.f32 %v9873, %v9949
    %v9955 = vld [vmem:[%s9548 + $0x2] sm:$0xf]
    %v9956 = vld [vmem:[%s9548 + $0xa] sm:$0xf]
    %v9957 = vld [vmem:[%s9548 + $0x12] sm:$0xf]
    %v9958 = vld [vmem:[%s9548 + $0x1a] sm:$0xf]
    %v9959 = vld [vmem:[%s9548 + $0x32] sm:$0xf]
    %v9960 = vld [vmem:[%s9548 + $0x3a] sm:$0xf]
    %v9961 = vld [vmem:[%s9548 + $0x42] sm:$0xf]
    %v9962 = vld [vmem:[%s9548 + $0x4a] sm:$0xf]
    %s9963 = scalar_lea.vmem %s5, 160
    %v9964 = vld [vmem:[%s9963] sm:$0xff]
    %v9965 = vld [vmem:[%s9963 + $0x8] sm:$0xff]
    %v9966 = vld [vmem:[%s9963 + $0x10] sm:$0xff]
    %v9967 = vld [vmem:[%s9963 + $0x18] sm:$0xff]
    %9976 = vst [vmem:[#allocation1] ss:$2 sm:$0xff] %v9955
    %s9977 = scalar_lea.vmem [#allocation1], 1
    %9978 = vst [vmem:[%s9977] ss:$2 sm:$0xff] %v9956
    %s9979 = scalar_lea.vmem [#allocation1], 16
    %9980 = vst [vmem:[%s9979] ss:$2 sm:$0xff] %v9957
    %s9981 = scalar_lea.vmem [#allocation1], 17
    %9982 = vst [vmem:[%s9981] ss:$2 sm:$0xff] %v9958
    %s9983 = scalar_lea.vmem [#allocation1], 32
    %9984 = vst [vmem:[%s9983] ss:$2 sm:$0xff] %v9959
    %s9985 = scalar_lea.vmem [#allocation1], 33
    %9986 = vst [vmem:[%s9985] ss:$2 sm:$0xff] %v9960
    %s9987 = scalar_lea.vmem [#allocation1], 48
    %9988 = vst [vmem:[%s9987] ss:$2 sm:$0xff] %v9961
    %s9989 = scalar_lea.vmem [#allocation1], 49
    %9990 = vst [vmem:[%s9989] ss:$2 sm:$0xff] %v9962
    %v9991 = vld.sshfl [vmem:[#allocation1] sm:$0xff pattern:$0x75316420]
    %v9992 = vld.sshfl [vmem:[#allocation1 + $0x10] sm:$0xff pattern:$0x75316420]
    %v9993 = vld.sshfl [vmem:[#allocation1 + $0x20] sm:$0xff pattern:$0x75316420]
    %v9994 = vld.sshfl [vmem:[#allocation1 + $0x30] sm:$0xff pattern:$0x75316420]
    %v9995 = vsel %vm9610, %v9991, 0
    %v9997 = vsel %vm9610, %v9992, 0
    %v9999 = vsel %vm9610, %v9993, 0
    %v10001 = vsel %vm9610, %v9994, 0
    %10003 = vmatpush.msra.mxu0 0.0
    %10004 = vmatpush.msra.mxu0 0.0
    %10005 = vmatpush.msra.mxu0 0.0
    %10006 = vmatpush.msra.mxu0 0.0
    %10007 = vmatpush.msra.mxu0 0.0
    %10008 = vmatpush.msra.mxu0 0.0
    %10009 = vmatpush.msra.mxu0 0.0
    %10010 = vmatpush.msra.mxu0 0.0
    %10011 = vmatpush.msra.mxu0 0.0
    %10012 = vmatpush.msra.mxu0 0.0
    %10013 = vmatpush.msra.mxu0 0.0
    %10014 = vmatpush.msra.mxu0 0.0
    %10015 = vmatpush.msra.mxu0 %v9967
    %10016 = vmatpush.msra.mxu0 %v9966
    %10017 = vmatpush.msra.mxu0 %v9965
    %10018 = vmatpush.msra.mxu0 %v9964
    %10019 = vmatmul.f32.gmra.mxu0 %v9995
    %v10020 = vpop.f32.mrf.mxu0
    %v10021 = vadd.f32 0.0, %v10020
    %10022 = vmatmul.f32.gmra.mxu0 %v9997
    %v10023 = vpop.f32.mrf.mxu0
    %v10024 = vadd.f32 0.0, %v10023
    %10025 = vmatmul.f32.gmra.mxu0 %v9999
    %v10026 = vpop.f32.mrf.mxu0
    %v10027 = vadd.f32 0.0, %v10026
    %10028 = vmatmul.f32.gmra.mxu0 %v10001
    %v10029 = vpop.f32.mrf.mxu0
    %v10030 = vadd.f32 0.0, %v10029
    %10031 = vdwg.mxu0
    %v10032 = vadd.f32 %v9951, %v10021
    %v10033 = vadd.f32 %v9952, %v10024
    %v10034 = vadd.f32 %v9953, %v10027
    %v10035 = vadd.f32 %v9954, %v10030
    %s10036 = scalar_lea.vmem [#allocation3], 16
    %v10037 = vld [vmem:[%s10036] sm:$0xf]
    %v10038 = vld [vmem:[%s10036 + $0x8] sm:$0xf]
    %v10039 = vld [vmem:[%s10036 + $0x10] sm:$0xf]
    %v10040 = vld [vmem:[%s10036 + $0x18] sm:$0xf]
    %v10041 = vld [vmem:[%s10036 + $0x30] sm:$0xf]
    %v10042 = vld [vmem:[%s10036 + $0x38] sm:$0xf]
    %v10043 = vld [vmem:[%s10036 + $0x40] sm:$0xf]
    %v10044 = vld [vmem:[%s10036 + $0x48] sm:$0xf]
    %s10045 = scalar_lea.vmem %s5, 192
    %v10046 = vld [vmem:[%s10045] sm:$0xff]
    %v10047 = vld [vmem:[%s10045 + $0x8] sm:$0xff]
    %v10048 = vld [vmem:[%s10045 + $0x10] sm:$0xff]
    %v10049 = vld [vmem:[%s10045 + $0x18] sm:$0xff]
    %10058 = vst [vmem:[#allocation1] ss:$2 sm:$0xff] %v10037
    %s10059 = scalar_lea.vmem [#allocation1], 1
    %10060 = vst [vmem:[%s10059] ss:$2 sm:$0xff] %v10038
    %s10061 = scalar_lea.vmem [#allocation1], 16
    %10062 = vst [vmem:[%s10061] ss:$2 sm:$0xff] %v10039
    %s10063 = scalar_lea.vmem [#allocation1], 17
    %10064 = vst [vmem:[%s10063] ss:$2 sm:$0xff] %v10040
    %s10065 = scalar_lea.vmem [#allocation1], 32
    %10066 = vst [vmem:[%s10065] ss:$2 sm:$0xff] %v10041
    %s10067 = scalar_lea.vmem [#allocation1], 33
    %10068 = vst [vmem:[%s10067] ss:$2 sm:$0xff] %v10042
    %s10069 = scalar_lea.vmem [#allocation1], 48
    %10070 = vst [vmem:[%s10069] ss:$2 sm:$0xff] %v10043
    %s10071 = scalar_lea.vmem [#allocation1], 49
    %10072 = vst [vmem:[%s10071] ss:$2 sm:$0xff] %v10044
    %v10073 = vld.sshfl [vmem:[#allocation1] sm:$0xff pattern:$0x75316420]
    %v10074 = vld.sshfl [vmem:[#allocation1 + $0x10] sm:$0xff pattern:$0x75316420]
    %v10075 = vld.sshfl [vmem:[#allocation1 + $0x20] sm:$0xff pattern:$0x75316420]
    %v10076 = vld.sshfl [vmem:[#allocation1 + $0x30] sm:$0xff pattern:$0x75316420]
    %v10077 = vsel %vm9610, %v10073, 0
    %v10079 = vsel %vm9610, %v10074, 0
    %v10081 = vsel %vm9610, %v10075, 0
    %v10083 = vsel %vm9610, %v10076, 0
    %10085 = vmatpush.msra.mxu0 0.0
    %10086 = vmatpush.msra.mxu0 0.0
    %10087 = vmatpush.msra.mxu0 0.0
    %10088 = vmatpush.msra.mxu0 0.0
    %10089 = vmatpush.msra.mxu0 0.0
    %10090 = vmatpush.msra.mxu0 0.0
    %10091 = vmatpush.msra.mxu0 0.0
    %10092 = vmatpush.msra.mxu0 0.0
    %10093 = vmatpush.msra.mxu0 0.0
    %10094 = vmatpush.msra.mxu0 0.0
    %10095 = vmatpush.msra.mxu0 0.0
    %10096 = vmatpush.msra.mxu0 0.0
    %10097 = vmatpush.msra.mxu0 %v10049
    %10098 = vmatpush.msra.mxu0 %v10048
    %10099 = vmatpush.msra.mxu0 %v10047
    %10100 = vmatpush.msra.mxu0 %v10046
    %10101 = vmatmul.f32.gmra.mxu0 %v10077
    %v10102 = vpop.f32.mrf.mxu0
    %v10103 = vadd.f32 0.0, %v10102
    %10104 = vmatmul.f32.gmra.mxu0 %v10079
    %v10105 = vpop.f32.mrf.mxu0
    %v10106 = vadd.f32 0.0, %v10105
    %10107 = vmatmul.f32.gmra.mxu0 %v10081
    %v10108 = vpop.f32.mrf.mxu0
    %v10109 = vadd.f32 0.0, %v10108
    %10110 = vmatmul.f32.gmra.mxu0 %v10083
    %v10111 = vpop.f32.mrf.mxu0
    %v10112 = vadd.f32 0.0, %v10111
    %10113 = vdwg.mxu0
    %v10114 = vadd.f32 %v10032, %v10103
    %v10115 = vadd.f32 %v10033, %v10106
    %v10116 = vadd.f32 %v10034, %v10109
    %v10117 = vadd.f32 %v10035, %v10112
    %v10118 = vld [vmem:[%s10036 + $0x1] sm:$0xf]
    %v10119 = vld [vmem:[%s10036 + $0x9] sm:$0xf]
    %v10120 = vld [vmem:[%s10036 + $0x11] sm:$0xf]
    %v10121 = vld [vmem:[%s10036 + $0x19] sm:$0xf]
    %v10122 = vld [vmem:[%s10036 + $0x31] sm:$0xf]
    %v10123 = vld [vmem:[%s10036 + $0x39] sm:$0xf]
    %v10124 = vld [vmem:[%s10036 + $0x41] sm:$0xf]
    %v10125 = vld [vmem:[%s10036 + $0x49] sm:$0xf]
    %s10126 = scalar_lea.vmem %s5, 224
    %v10127 = vld [vmem:[%s10126] sm:$0xff]
    %v10128 = vld [vmem:[%s10126 + $0x8] sm:$0xff]
    %v10129 = vld [vmem:[%s10126 + $0x10] sm:$0xff]
    %v10130 = vld [vmem:[%s10126 + $0x18] sm:$0xff]
    %10139 = vst [vmem:[#allocation1] ss:$2 sm:$0xff] %v10118
    %s10140 = scalar_lea.vmem [#allocation1], 1
    %10141 = vst [vmem:[%s10140] ss:$2 sm:$0xff] %v10119
    %s10142 = scalar_lea.vmem [#allocation1], 16
    %10143 = vst [vmem:[%s10142] ss:$2 sm:$0xff] %v10120
    %s10144 = scalar_lea.vmem [#allocation1], 17
    %10145 = vst [vmem:[%s10144] ss:$2 sm:$0xff] %v10121
    %s10146 = scalar_lea.vmem [#allocation1], 32
    %10147 = vst [vmem:[%s10146] ss:$2 sm:$0xff] %v10122
    %s10148 = scalar_lea.vmem [#allocation1], 33
    %10149 = vst [vmem:[%s10148] ss:$2 sm:$0xff] %v10123
    %s10150 = scalar_lea.vmem [#allocation1], 48
    %10151 = vst [vmem:[%s10150] ss:$2 sm:$0xff] %v10124
    %s10152 = scalar_lea.vmem [#allocation1], 49
    %10153 = vst [vmem:[%s10152] ss:$2 sm:$0xff] %v10125
    %v10154 = vld.sshfl [vmem:[#allocation1] sm:$0xff pattern:$0x75316420]
    %v10155 = vld.sshfl [vmem:[#allocation1 + $0x10] sm:$0xff pattern:$0x75316420]
    %v10156 = vld.sshfl [vmem:[#allocation1 + $0x20] sm:$0xff pattern:$0x75316420]
    %v10157 = vld.sshfl [vmem:[#allocation1 + $0x30] sm:$0xff pattern:$0x75316420]
    %v10158 = vsel %vm9610, %v10154, 0
    %v10160 = vsel %vm9610, %v10155, 0
    %v10162 = vsel %vm9610, %v10156, 0
    %v10164 = vsel %vm9610, %v10157, 0
    %10166 = vmatpush.msra.mxu0 0.0
    %10167 = vmatpush.msra.mxu0 0.0
    %10168 = vmatpush.msra.mxu0 0.0
    %10169 = vmatpush.msra.mxu0 0.0
    %10170 = vmatpush.msra.mxu0 0.0
    %10171 = vmatpush.msra.mxu0 0.0
    %10172 = vmatpush.msra.mxu0 0.0
    %10173 = vmatpush.msra.mxu0 0.0
    %10174 = vmatpush.msra.mxu0 0.0
    %10175 = vmatpush.msra.mxu0 0.0
    %10176 = vmatpush.msra.mxu0 0.0
    %10177 = vmatpush.msra.mxu0 0.0
    %10178 = vmatpush.msra.mxu0 %v10130
    %10179 = vmatpush.msra.mxu0 %v10129
    %10180 = vmatpush.msra.mxu0 %v10128
    %10181 = vmatpush.msra.mxu0 %v10127
    %10182 = vmatmul.f32.gmra.mxu0 %v10158
    %v10183 = vpop.f32.mrf.mxu0
    %v10184 = vadd.f32 0.0, %v10183
    %10185 = vmatmul.f32.gmra.mxu0 %v10160
    %v10186 = vpop.f32.mrf.mxu0
    %v10187 = vadd.f32 0.0, %v10186
    %10188 = vmatmul.f32.gmra.mxu0 %v10162
    %v10189 = vpop.f32.mrf.mxu0
    %v10190 = vadd.f32 0.0, %v10189
    %10191 = vmatmul.f32.gmra.mxu0 %v10164
    %v10192 = vpop.f32.mrf.mxu0
    %v10193 = vadd.f32 0.0, %v10192
    %10194 = vdwg.mxu0
    %v10195 = vadd.f32 %v10114, %v10184
    %v10196 = vadd.f32 %v10115, %v10187
    %v10197 = vadd.f32 %v10116, %v10190
    %v10198 = vadd.f32 %v10117, %v10193
    %v10199 = vld [vmem:[%s10036 + $0x2] sm:$0xf]
    %v10200 = vld [vmem:[%s10036 + $0xa] sm:$0xf]
    %v10201 = vld [vmem:[%s10036 + $0x12] sm:$0xf]
    %v10202 = vld [vmem:[%s10036 + $0x1a] sm:$0xf]
    %v10203 = vld [vmem:[%s10036 + $0x32] sm:$0xf]
    %v10204 = vld [vmem:[%s10036 + $0x3a] sm:$0xf]
    %v10205 = vld [vmem:[%s10036 + $0x42] sm:$0xf]
    %v10206 = vld [vmem:[%s10036 + $0x4a] sm:$0xf]
    %s10207 = scalar_lea.vmem %s5, 256
    %v10208 = vld [vmem:[%s10207] sm:$0xff]
    %v10209 = vld [vmem:[%s10207 + $0x8] sm:$0xff]
    %v10210 = vld [vmem:[%s10207 + $0x10] sm:$0xff]
    %v10211 = vld [vmem:[%s10207 + $0x18] sm:$0xff]
    %10220 = vst [vmem:[#allocation1] ss:$2 sm:$0xff] %v10199
    %s10221 = scalar_lea.vmem [#allocation1], 1
    %10222 = vst [vmem:[%s10221] ss:$2 sm:$0xff] %v10200
    %s10223 = scalar_lea.vmem [#allocation1], 16
    %10224 = vst [vmem:[%s10223] ss:$2 sm:$0xff] %v10201
    %s10225 = scalar_lea.vmem [#allocation1], 17
    %10226 = vst [vmem:[%s10225] ss:$2 sm:$0xff] %v10202
    %s10227 = scalar_lea.vmem [#allocation1], 32
    %10228 = vst [vmem:[%s10227] ss:$2 sm:$0xff] %v10203
    %s10229 = scalar_lea.vmem [#allocation1], 33
    %10230 = vst [vmem:[%s10229] ss:$2 sm:$0xff] %v10204
    %s10231 = scalar_lea.vmem [#allocation1], 48
    %10232 = vst [vmem:[%s10231] ss:$2 sm:$0xff] %v10205
    %s10233 = scalar_lea.vmem [#allocation1], 49
    %10234 = vst [vmem:[%s10233] ss:$2 sm:$0xff] %v10206
    %v10235 = vld.sshfl [vmem:[#allocation1] sm:$0xff pattern:$0x75316420]
    %v10236 = vld.sshfl [vmem:[#allocation1 + $0x10] sm:$0xff pattern:$0x75316420]
    %v10237 = vld.sshfl [vmem:[#allocation1 + $0x20] sm:$0xff pattern:$0x75316420]
    %v10238 = vld.sshfl [vmem:[#allocation1 + $0x30] sm:$0xff pattern:$0x75316420]
    %v10239 = vsel %vm9610, %v10235, 0
    %v10241 = vsel %vm9610, %v10236, 0
    %v10243 = vsel %vm9610, %v10237, 0
    %v10245 = vsel %vm9610, %v10238, 0
    %10247 = vmatpush.msra.mxu0 0.0
    %10248 = vmatpush.msra.mxu0 0.0
    %10249 = vmatpush.msra.mxu0 0.0
    %10250 = vmatpush.msra.mxu0 0.0
    %10251 = vmatpush.msra.mxu0 0.0
    %10252 = vmatpush.msra.mxu0 0.0
    %10253 = vmatpush.msra.mxu0 0.0
    %10254 = vmatpush.msra.mxu0 0.0
    %10255 = vmatpush.msra.mxu0 0.0
    %10256 = vmatpush.msra.mxu0 0.0
    %10257 = vmatpush.msra.mxu0 0.0
    %10258 = vmatpush.msra.mxu0 0.0
    %10259 = vmatpush.msra.mxu0 %v10211
    %10260 = vmatpush.msra.mxu0 %v10210
    %10261 = vmatpush.msra.mxu0 %v10209
    %10262 = vmatpush.msra.mxu0 %v10208
    %10263 = vmatmul.f32.gmra.mxu0 %v10239
    %v10264 = vpop.f32.mrf.mxu0
    %v10265 = vadd.f32 0.0, %v10264
    %10266 = vmatmul.f32.gmra.mxu0 %v10241
    %v10267 = vpop.f32.mrf.mxu0
    %v10268 = vadd.f32 0.0, %v10267
    %10269 = vmatmul.f32.gmra.mxu0 %v10243
    %v10270 = vpop.f32.mrf.mxu0
    %v10271 = vadd.f32 0.0, %v10270
    %10272 = vmatmul.f32.gmra.mxu0 %v10245
    %v10273 = vpop.f32.mrf.mxu0
    %v10274 = vadd.f32 0.0, %v10273
    %10275 = vdwg.mxu0
    %v10276 = vadd.f32 %v10195, %v10265
    %v10277 = vadd.f32 %v10196, %v10268
    %v10278 = vadd.f32 %v10197, %v10271
    %v10279 = vadd.f32 %v10198, %v10274
    %v10280 = vld [vmem:[%s6] sm:$0x1]
    %v10282 = vperm.slane %v10280, 0
    %v10284 = vadd.f32 %v10276, %v10282
    %v10285 = vadd.f32 %v10277, %v10282
    %v10286 = vadd.f32 %v10278, %v10282
    %v10287 = vadd.f32 %v10279, %v10282
    %v10288 = vmax.f32 %v10284, 0.0
    %v10289 = vmax.f32 %v10285, 0.0
    %v10290 = vmax.f32 %v10286, 0.0
    %v10291 = vmax.f32 %v10287, 0.0
    %v10296 = vrot.slane %v10288, 2
    %v10297 = vrot.slane %v10288, 4
    %v10298 = vrot.slane %v10288, 6
    %v10299 = vrot.slane %v10289, 2
    %v10300 = vrot.slane %v10289, 4
    %v10301 = vrot.slane %v10289, 6
    %v10302 = vrot.slane %v10290, 2
    %v10303 = vrot.slane %v10290, 4
    %v10304 = vrot.slane %v10290, 6
    %v10305 = vrot.slane %v10291, 2
    %v10306 = vrot.slane %v10291, 4
    %v10307 = vrot.slane %v10291, 6
    %vm10320 = vcmask 517120
    %v10321 = vsel %vm10320, %v10288, -inf
    %v10322 = vrot.slane %v10321, 4
    %v10323 = vmax.f32 %v10321, %v10322
    %v10324 = vrot.slane %v10323, 2
    %v10325 = vmax.f32 %v10323, %v10324
    %v10326 = vrot.slane %v10325, 1
    %v10327 = vmax.f32 %v10325, %v10326
    %v10328 = vsel %vm10320, %v10296, -inf
    %v10329 = vrot.slane %v10328, 4
    %v10330 = vmax.f32 %v10328, %v10329
    %v10331 = vrot.slane %v10330, 2
    %v10332 = vmax.f32 %v10330, %v10331
    %v10333 = vrot.slane %v10332, 1
    %v10334 = vmax.f32 %v10332, %v10333
    %v10335 = vsel %vm10320, %v10297, -inf
    %v10336 = vrot.slane %v10335, 4
    %v10337 = vmax.f32 %v10335, %v10336
    %v10338 = vrot.slane %v10337, 2
    %v10339 = vmax.f32 %v10337, %v10338
    %v10340 = vrot.slane %v10339, 1
    %v10341 = vmax.f32 %v10339, %v10340
    %v10342 = vsel %vm10320, %v10298, -inf
    %v10343 = vrot.slane %v10342, 4
    %v10344 = vmax.f32 %v10342, %v10343
    %v10345 = vrot.slane %v10344, 2
    %v10346 = vmax.f32 %v10344, %v10345
    %v10347 = vrot.slane %v10346, 1
    %v10348 = vmax.f32 %v10346, %v10347
    %v10349 = vsel %vm10320, %v10289, -inf
    %v10350 = vrot.slane %v10349, 4
    %v10351 = vmax.f32 %v10349, %v10350
    %v10352 = vrot.slane %v10351, 2
    %v10353 = vmax.f32 %v10351, %v10352
    %v10354 = vrot.slane %v10353, 1
    %v10355 = vmax.f32 %v10353, %v10354
    %v10356 = vsel %vm10320, %v10299, -inf
    %v10357 = vrot.slane %v10356, 4
    %v10358 = vmax.f32 %v10356, %v10357
    %v10359 = vrot.slane %v10358, 2
    %v10360 = vmax.f32 %v10358, %v10359
    %v10361 = vrot.slane %v10360, 1
    %v10362 = vmax.f32 %v10360, %v10361
    %v10363 = vsel %vm10320, %v10300, -inf
    %v10364 = vrot.slane %v10363, 4
    %v10365 = vmax.f32 %v10363, %v10364
    %v10366 = vrot.slane %v10365, 2
    %v10367 = vmax.f32 %v10365, %v10366
    %v10368 = vrot.slane %v10367, 1
    %v10369 = vmax.f32 %v10367, %v10368
    %v10370 = vsel %vm10320, %v10301, -inf
    %v10371 = vrot.slane %v10370, 4
    %v10372 = vmax.f32 %v10370, %v10371
    %v10373 = vrot.slane %v10372, 2
    %v10374 = vmax.f32 %v10372, %v10373
    %v10375 = vrot.slane %v10374, 1
    %v10376 = vmax.f32 %v10374, %v10375
    %v10377 = vsel %vm10320, %v10290, -inf
    %v10378 = vrot.slane %v10377, 4
    %v10379 = vmax.f32 %v10377, %v10378
    %v10380 = vrot.slane %v10379, 2
    %v10381 = vmax.f32 %v10379, %v10380
    %v10382 = vrot.slane %v10381, 1
    %v10383 = vmax.f32 %v10381, %v10382
    %v10384 = vsel %vm10320, %v10302, -inf
    %v10385 = vrot.slane %v10384, 4
    %v10386 = vmax.f32 %v10384, %v10385
    %v10387 = vrot.slane %v10386, 2
    %v10388 = vmax.f32 %v10386, %v10387
    %v10389 = vrot.slane %v10388, 1
    %v10390 = vmax.f32 %v10388, %v10389
    %v10391 = vsel %vm10320, %v10303, -inf
    %v10392 = vrot.slane %v10391, 4
    %v10393 = vmax.f32 %v10391, %v10392
    %v10394 = vrot.slane %v10393, 2
    %v10395 = vmax.f32 %v10393, %v10394
    %v10396 = vrot.slane %v10395, 1
    %v10397 = vmax.f32 %v10395, %v10396
    %v10398 = vsel %vm10320, %v10304, -inf
    %v10399 = vrot.slane %v10398, 4
    %v10400 = vmax.f32 %v10398, %v10399
    %v10401 = vrot.slane %v10400, 2
    %v10402 = vmax.f32 %v10400, %v10401
    %v10403 = vrot.slane %v10402, 1
    %v10404 = vmax.f32 %v10402, %v10403
    %v10405 = vsel %vm10320, %v10291, -inf
    %v10406 = vrot.slane %v10405, 4
    %v10407 = vmax.f32 %v10405, %v10406
    %v10408 = vrot.slane %v10407, 2
    %v10409 = vmax.f32 %v10407, %v10408
    %v10410 = vrot.slane %v10409, 1
    %v10411 = vmax.f32 %v10409, %v10410
    %v10412 = vsel %vm10320, %v10305, -inf
    %v10413 = vrot.slane %v10412, 4
    %v10414 = vmax.f32 %v10412, %v10413
    %v10415 = vrot.slane %v10414, 2
    %v10416 = vmax.f32 %v10414, %v10415
    %v10417 = vrot.slane %v10416, 1
    %v10418 = vmax.f32 %v10416, %v10417
    %v10419 = vsel %vm10320, %v10306, -inf
    %v10420 = vrot.slane %v10419, 4
    %v10421 = vmax.f32 %v10419, %v10420
    %v10422 = vrot.slane %v10421, 2
    %v10423 = vmax.f32 %v10421, %v10422
    %v10424 = vrot.slane %v10423, 1
    %v10425 = vmax.f32 %v10423, %v10424
    %v10426 = vsel %vm10320, %v10307, -inf
    %v10427 = vrot.slane %v10426, 4
    %v10428 = vmax.f32 %v10426, %v10427
    %v10429 = vrot.slane %v10428, 2
    %v10430 = vmax.f32 %v10428, %v10429
    %v10431 = vrot.slane %v10430, 1
    %v10432 = vmax.f32 %v10430, %v10431
    %v10433 = vmax.f32 %v10327, %v10341
    %v10434 = vmax.f32 %v10334, %v10348
    %v10435 = vmax.f32 %v10355, %v10369
    %v10436 = vmax.f32 %v10362, %v10376
    %v10437 = vmax.f32 %v10383, %v10397
    %v10438 = vmax.f32 %v10390, %v10404
    %v10439 = vmax.f32 %v10411, %v10425
    %v10440 = vmax.f32 %v10418, %v10432
    %vm10441 = vcmask 519168
    %10442 = vst.msk [vmem:[#allocation4] sm:$0xf] %vm10441, 0.0
    %10443 = vst.msk [vmem:[#allocation4 + $0x4] sm:$0xf] %vm10441, 0.0
    %10444 = vst.msk [vmem:[#allocation4 + $0x8] sm:$0xf] %vm10441, 0.0
    %10445 = vst.msk [vmem:[#allocation4 + $0xc] sm:$0xf] %vm10441, 0.0
    %10446 = vst.msk [vmem:[#allocation4 + $0x10] sm:$0xf] %vm10441, 0.0
    %10447 = vst.msk [vmem:[#allocation4 + $0x14] sm:$0xf] %vm10441, 0.0
    %10448 = vst.msk [vmem:[#allocation4 + $0x18] sm:$0xf] %vm10441, 0.0
    %10449 = vst.msk [vmem:[#allocation4 + $0x1c] sm:$0xf] %vm10441, 0.0
    %v10458 = vsel %vm7390, %v10434, %v10433
    %v10459 = vsel %vm7390, %v10436, %v10435
    %v10460 = vsel %vm7390, %v10438, %v10437
    %v10461 = vsel %vm7390, %v10440, %v10439
    %s10466 = scalar_lea.vmem [#allocation4], 4
    %10467 = vst.msk [vmem:[%s10466 + $0x1] sm:$0x3] %vm10320, %v10458
    %10468 = vst.msk [vmem:[%s10466 + $0x5] sm:$0x3] %vm10320, %v10459
    %10469 = vst.msk [vmem:[%s10466 + $0x11] sm:$0x3] %vm10320, %v10460
    %10470 = vst.msk [vmem:[%s10466 + $0x15] sm:$0x3] %vm10320, %v10461
    %v10471 = vld [vmem:[#allocation4] sm:$0x3]
    %v10472 = vld [vmem:[#allocation4 + $0x4] sm:$0x3]
    %v10473 = vld [vmem:[#allocation4 + $0x10] sm:$0x3]
    %v10474 = vld [vmem:[#allocation4 + $0x14] sm:$0x3]
    %v10475 = vld [vmem:[%s7] sm:$0xff]
    %v10476 = vld [vmem:[%s7 + $0x8] sm:$0xff]
    %v10477 = vld [vmem:[%s7 + $0x10] sm:$0xff]
    %v10478 = vld [vmem:[%s7 + $0x18] sm:$0xff]
    %v10479 = vld [vmem:[%s7 + $0x20] sm:$0xff]
    %v10480 = vld [vmem:[%s7 + $0x28] sm:$0xff]
    %v10481 = vld [vmem:[%s7 + $0x30] sm:$0xff]
    %v10482 = vld [vmem:[%s7 + $0x38] sm:$0xff]
    %v10483 = vld [vmem:[#allocation4 + $0x1] sm:$0x3]
    %v10484 = vld [vmem:[#allocation4 + $0x5] sm:$0x3]
    %v10485 = vld [vmem:[#allocation4 + $0x11] sm:$0x3]
    %v10486 = vld [vmem:[#allocation4 + $0x15] sm:$0x3]
    %s10487 = scalar_lea.vmem %s7, 64
    %v10488 = vld [vmem:[%s10487] sm:$0xff]
    %v10489 = vld [vmem:[%s10487 + $0x8] sm:$0xff]
    %v10490 = vld [vmem:[%s10487 + $0x10] sm:$0xff]
    %v10491 = vld [vmem:[%s10487 + $0x18] sm:$0xff]
    %v10492 = vld [vmem:[%s10487 + $0x20] sm:$0xff]
    %v10493 = vld [vmem:[%s10487 + $0x28] sm:$0xff]
    %v10494 = vld [vmem:[%s10487 + $0x30] sm:$0xff]
    %v10495 = vld [vmem:[%s10487 + $0x38] sm:$0xff]
    %10500 = vst [vmem:[#allocation1] ss:$4 sm:$0xff] %v10483
    %s10501 = scalar_lea.vmem [#allocation1], 1
    %10502 = vst [vmem:[%s10501] ss:$4 sm:$0xff] %v10484
    %s10503 = scalar_lea.vmem [#allocation1], 2
    %10504 = vst [vmem:[%s10503] ss:$4 sm:$0xff] %v10485
    %s10505 = scalar_lea.vmem [#allocation1], 3
    %10506 = vst [vmem:[%s10505] ss:$4 sm:$0xff] %v10486
    %v10507 = vld.sshfl [vmem:[#allocation1] sm:$0xff pattern:$0x73625140]
    %vm10508 = vcmask 523264
    %v10509 = vsel %vm10508, %v10507, 0
    %10511 = vmatpush.msra.mxu0 0.0
    %10512 = vmatpush.msra.mxu0 0.0
    %10513 = vmatpush.msra.mxu0 0.0
    %10514 = vmatpush.msra.mxu0 0.0
    %10515 = vmatpush.msra.mxu0 0.0
    %10516 = vmatpush.msra.mxu0 0.0
    %10517 = vmatpush.msra.mxu0 0.0
    %10518 = vmatpush.msra.mxu0 0.0
    %10519 = vmatpush.msra.mxu0 %v10495
    %10520 = vmatpush.msra.mxu0 %v10494
    %10521 = vmatpush.msra.mxu0 %v10493
    %10522 = vmatpush.msra.mxu0 %v10492
    %10523 = vmatpush.msra.mxu0 %v10491
    %10524 = vmatpush.msra.mxu0 %v10490
    %10525 = vmatpush.msra.mxu0 %v10489
    %10526 = vmatpush.msra.mxu0 %v10488
    %10527 = vmatmul.f32.gmra.mxu0 %v10509
    %v10528 = vpop.f32.mrf.mxu0
    %v10529 = vadd.f32 0.0, %v10528
    %10530 = vdwg.mxu0
    %10535 = vst [vmem:[#allocation1] ss:$4 sm:$0xff] %v10471
    %s10536 = scalar_lea.vmem [#allocation1], 1
    %10537 = vst [vmem:[%s10536] ss:$4 sm:$0xff] %v10472
    %s10538 = scalar_lea.vmem [#allocation1], 2
    %10539 = vst [vmem:[%s10538] ss:$4 sm:$0xff] %v10473
    %s10540 = scalar_lea.vmem [#allocation1], 3
    %10541 = vst [vmem:[%s10540] ss:$4 sm:$0xff] %v10474
    %v10542 = vld.sshfl [vmem:[#allocation1] sm:$0xff pattern:$0x73625140]
    %v10543 = vsel %vm10508, %v10542, 0
    %10545 = vmatpush.msra.mxu0 0.0
    %10546 = vmatpush.msra.mxu0 0.0
    %10547 = vmatpush.msra.mxu0 0.0
    %10548 = vmatpush.msra.mxu0 0.0
    %10549 = vmatpush.msra.mxu0 0.0
    %10550 = vmatpush.msra.mxu0 0.0
    %10551 = vmatpush.msra.mxu0 0.0
    %10552 = vmatpush.msra.mxu0 0.0
    %10553 = vmatpush.msra.mxu0 %v10482
    %10554 = vmatpush.msra.mxu0 %v10481
    %10555 = vmatpush.msra.mxu0 %v10480
    %10556 = vmatpush.msra.mxu0 %v10479
    %10557 = vmatpush.msra.mxu0 %v10478
    %10558 = vmatpush.msra.mxu0 %v10477
    %10559 = vmatpush.msra.mxu0 %v10476
    %10560 = vmatpush.msra.mxu0 %v10475
    %10561 = vmatmul.f32.gmra.mxu0 %v10543
    %v10562 = vpop.f32.mrf.mxu0
    %v10563 = vadd.f32 %v10529, %v10562
    %10564 = vdwg.mxu0
    %v10565 = vld [vmem:[#allocation4 + $0x2] sm:$0x3]
    %v10566 = vld [vmem:[#allocation4 + $0x6] sm:$0x3]
    %v10567 = vld [vmem:[#allocation4 + $0x12] sm:$0x3]
    %v10568 = vld [vmem:[#allocation4 + $0x16] sm:$0x3]
    %s10569 = scalar_lea.vmem %s7, 128
    %v10570 = vld [vmem:[%s10569] sm:$0xff]
    %v10571 = vld [vmem:[%s10569 + $0x8] sm:$0xff]
    %v10572 = vld [vmem:[%s10569 + $0x10] sm:$0xff]
    %v10573 = vld [vmem:[%s10569 + $0x18] sm:$0xff]
    %v10574 = vld [vmem:[%s10569 + $0x20] sm:$0xff]
    %v10575 = vld [vmem:[%s10569 + $0x28] sm:$0xff]
    %v10576 = vld [vmem:[%s10569 + $0x30] sm:$0xff]
    %v10577 = vld [vmem:[%s10569 + $0x38] sm:$0xff]
    %10582 = vst [vmem:[#allocation1] ss:$4 sm:$0xff] %v10565
    %s10583 = scalar_lea.vmem [#allocation1], 1
    %10584 = vst [vmem:[%s10583] ss:$4 sm:$0xff] %v10566
    %s10585 = scalar_lea.vmem [#allocation1], 2
    %10586 = vst [vmem:[%s10585] ss:$4 sm:$0xff] %v10567
    %s10587 = scalar_lea.vmem [#allocation1], 3
    %10588 = vst [vmem:[%s10587] ss:$4 sm:$0xff] %v10568
    %v10589 = vld.sshfl [vmem:[#allocation1] sm:$0xff pattern:$0x73625140]
    %v10590 = vsel %vm10508, %v10589, 0
    %10592 = vmatpush.msra.mxu0 0.0
    %10593 = vmatpush.msra.mxu0 0.0
    %10594 = vmatpush.msra.mxu0 0.0
    %10595 = vmatpush.msra.mxu0 0.0
    %10596 = vmatpush.msra.mxu0 0.0
    %10597 = vmatpush.msra.mxu0 0.0
    %10598 = vmatpush.msra.mxu0 0.0
    %10599 = vmatpush.msra.mxu0 0.0
    %10600 = vmatpush.msra.mxu0 %v10577
    %10601 = vmatpush.msra.mxu0 %v10576
    %10602 = vmatpush.msra.mxu0 %v10575
    %10603 = vmatpush.msra.mxu0 %v10574
    %10604 = vmatpush.msra.mxu0 %v10573
    %10605 = vmatpush.msra.mxu0 %v10572
    %10606 = vmatpush.msra.mxu0 %v10571
    %10607 = vmatpush.msra.mxu0 %v10570
    %10608 = vmatmul.f32.gmra.mxu0 %v10590
    %v10609 = vpop.f32.mrf.mxu0
    %v10610 = vadd.f32 0.0, %v10609
    %10611 = vdwg.mxu0
    %v10612 = vadd.f32 %v10563, %v10610
    %v10613 = vld [vmem:[%s10466] sm:$0x3]
    %v10614 = vld [vmem:[%s10466 + $0x4] sm:$0x3]
    %v10615 = vld [vmem:[%s10466 + $0x10] sm:$0x3]
    %v10616 = vld [vmem:[%s10466 + $0x14] sm:$0x3]
    %s10617 = scalar_lea.vmem %s7, 192
    %v10618 = vld [vmem:[%s10617] sm:$0xff]
    %v10619 = vld [vmem:[%s10617 + $0x8] sm:$0xff]
    %v10620 = vld [vmem:[%s10617 + $0x10] sm:$0xff]
    %v10621 = vld [vmem:[%s10617 + $0x18] sm:$0xff]
    %v10622 = vld [vmem:[%s10617 + $0x20] sm:$0xff]
    %v10623 = vld [vmem:[%s10617 + $0x28] sm:$0xff]
    %v10624 = vld [vmem:[%s10617 + $0x30] sm:$0xff]
    %v10625 = vld [vmem:[%s10617 + $0x38] sm:$0xff]
    %10630 = vst [vmem:[#allocation1] ss:$4 sm:$0xff] %v10613
    %s10631 = scalar_lea.vmem [#allocation1], 1
    %10632 = vst [vmem:[%s10631] ss:$4 sm:$0xff] %v10614
    %s10633 = scalar_lea.vmem [#allocation1], 2
    %10634 = vst [vmem:[%s10633] ss:$4 sm:$0xff] %v10615
    %s10635 = scalar_lea.vmem [#allocation1], 3
    %10636 = vst [vmem:[%s10635] ss:$4 sm:$0xff] %v10616
    %v10637 = vld.sshfl [vmem:[#allocation1] sm:$0xff pattern:$0x73625140]
    %v10638 = vsel %vm10508, %v10637, 0
    %10640 = vmatpush.msra.mxu0 0.0
    %10641 = vmatpush.msra.mxu0 0.0
    %10642 = vmatpush.msra.mxu0 0.0
    %10643 = vmatpush.msra.mxu0 0.0
    %10644 = vmatpush.msra.mxu0 0.0
    %10645 = vmatpush.msra.mxu0 0.0
    %10646 = vmatpush.msra.mxu0 0.0
    %10647 = vmatpush.msra.mxu0 0.0
    %10648 = vmatpush.msra.mxu0 %v10625
    %10649 = vmatpush.msra.mxu0 %v10624
    %10650 = vmatpush.msra.mxu0 %v10623
    %10651 = vmatpush.msra.mxu0 %v10622
    %10652 = vmatpush.msra.mxu0 %v10621
    %10653 = vmatpush.msra.mxu0 %v10620
    %10654 = vmatpush.msra.mxu0 %v10619
    %10655 = vmatpush.msra.mxu0 %v10618
    %10656 = vmatmul.f32.gmra.mxu0 %v10638
    %v10657 = vpop.f32.mrf.mxu0
    %v10658 = vadd.f32 0.0, %v10657
    %10659 = vdwg.mxu0
    %v10660 = vadd.f32 %v10612, %v10658
    %v10661 = vld [vmem:[%s10466 + $0x1] sm:$0x3]
    %v10662 = vld [vmem:[%s10466 + $0x5] sm:$0x3]
    %v10663 = vld [vmem:[%s10466 + $0x11] sm:$0x3]
    %v10664 = vld [vmem:[%s10466 + $0x15] sm:$0x3]
    %s10665 = scalar_lea.vmem %s7, 256
    %v10666 = vld [vmem:[%s10665] sm:$0xff]
    %v10667 = vld [vmem:[%s10665 + $0x8] sm:$0xff]
    %v10668 = vld [vmem:[%s10665 + $0x10] sm:$0xff]
    %v10669 = vld [vmem:[%s10665 + $0x18] sm:$0xff]
    %v10670 = vld [vmem:[%s10665 + $0x20] sm:$0xff]
    %v10671 = vld [vmem:[%s10665 + $0x28] sm:$0xff]
    %v10672 = vld [vmem:[%s10665 + $0x30] sm:$0xff]
    %v10673 = vld [vmem:[%s10665 + $0x38] sm:$0xff]
    %10678 = vst [vmem:[#allocation1] ss:$4 sm:$0xff] %v10661
    %s10679 = scalar_lea.vmem [#allocation1], 1
    %10680 = vst [vmem:[%s10679] ss:$4 sm:$0xff] %v10662
    %s10681 = scalar_lea.vmem [#allocation1], 2
    %10682 = vst [vmem:[%s10681] ss:$4 sm:$0xff] %v10663
    %s10683 = scalar_lea.vmem [#allocation1], 3
    %10684 = vst [vmem:[%s10683] ss:$4 sm:$0xff] %v10664
    %v10685 = vld.sshfl [vmem:[#allocation1] sm:$0xff pattern:$0x73625140]
    %v10686 = vsel %vm10508, %v10685, 0
    %10688 = vmatpush.msra.mxu0 0.0
    %10689 = vmatpush.msra.mxu0 0.0
    %10690 = vmatpush.msra.mxu0 0.0
    %10691 = vmatpush.msra.mxu0 0.0
    %10692 = vmatpush.msra.mxu0 0.0
    %10693 = vmatpush.msra.mxu0 0.0
    %10694 = vmatpush.msra.mxu0 0.0
    %10695 = vmatpush.msra.mxu0 0.0
    %10696 = vmatpush.msra.mxu0 %v10673
    %10697 = vmatpush.msra.mxu0 %v10672
    %10698 = vmatpush.msra.mxu0 %v10671
    %10699 = vmatpush.msra.mxu0 %v10670
    %10700 = vmatpush.msra.mxu0 %v10669
    %10701 = vmatpush.msra.mxu0 %v10668
    %10702 = vmatpush.msra.mxu0 %v10667
    %10703 = vmatpush.msra.mxu0 %v10666
    %10704 = vmatmul.f32.gmra.mxu0 %v10686
    %v10705 = vpop.f32.mrf.mxu0
    %v10706 = vadd.f32 0.0, %v10705
    %10707 = vdwg.mxu0
    %v10708 = vadd.f32 %v10660, %v10706
    %v10709 = vld [vmem:[%s10466 + $0x2] sm:$0x3]
    %v10710 = vld [vmem:[%s10466 + $0x6] sm:$0x3]
    %v10711 = vld [vmem:[%s10466 + $0x12] sm:$0x3]
    %v10712 = vld [vmem:[%s10466 + $0x16] sm:$0x3]
    %s10713 = scalar_lea.vmem %s7, 320
    %v10714 = vld [vmem:[%s10713] sm:$0xff]
    %v10715 = vld [vmem:[%s10713 + $0x8] sm:$0xff]
    %v10716 = vld [vmem:[%s10713 + $0x10] sm:$0xff]
    %v10717 = vld [vmem:[%s10713 + $0x18] sm:$0xff]
    %v10718 = vld [vmem:[%s10713 + $0x20] sm:$0xff]
    %v10719 = vld [vmem:[%s10713 + $0x28] sm:$0xff]
    %v10720 = vld [vmem:[%s10713 + $0x30] sm:$0xff]
    %v10721 = vld [vmem:[%s10713 + $0x38] sm:$0xff]
    %10726 = vst [vmem:[#allocation1] ss:$4 sm:$0xff] %v10709
    %s10727 = scalar_lea.vmem [#allocation1], 1
    %10728 = vst [vmem:[%s10727] ss:$4 sm:$0xff] %v10710
    %s10729 = scalar_lea.vmem [#allocation1], 2
    %10730 = vst [vmem:[%s10729] ss:$4 sm:$0xff] %v10711
    %s10731 = scalar_lea.vmem [#allocation1], 3
    %10732 = vst [vmem:[%s10731] ss:$4 sm:$0xff] %v10712
    %v10733 = vld.sshfl [vmem:[#allocation1] sm:$0xff pattern:$0x73625140]
    %v10734 = vsel %vm10508, %v10733, 0
    %10736 = vmatpush.msra.mxu0 0.0
    %10737 = vmatpush.msra.mxu0 0.0
    %10738 = vmatpush.msra.mxu0 0.0
    %10739 = vmatpush.msra.mxu0 0.0
    %10740 = vmatpush.msra.mxu0 0.0
    %10741 = vmatpush.msra.mxu0 0.0
    %10742 = vmatpush.msra.mxu0 0.0
    %10743 = vmatpush.msra.mxu0 0.0
    %10744 = vmatpush.msra.mxu0 %v10721
    %10745 = vmatpush.msra.mxu0 %v10720
    %10746 = vmatpush.msra.mxu0 %v10719
    %10747 = vmatpush.msra.mxu0 %v10718
    %10748 = vmatpush.msra.mxu0 %v10717
    %10749 = vmatpush.msra.mxu0 %v10716
    %10750 = vmatpush.msra.mxu0 %v10715
    %10751 = vmatpush.msra.mxu0 %v10714
    %10752 = vmatmul.f32.gmra.mxu0 %v10734
    %v10753 = vpop.f32.mrf.mxu0
    %v10754 = vadd.f32 0.0, %v10753
    %10755 = vdwg.mxu0
    %v10756 = vadd.f32 %v10708, %v10754
    %s10757 = scalar_lea.vmem [#allocation4], 8
    %v10758 = vld [vmem:[%s10757] sm:$0x3]
    %v10759 = vld [vmem:[%s10757 + $0x4] sm:$0x3]
    %v10760 = vld [vmem:[%s10757 + $0x10] sm:$0x3]
    %v10761 = vld [vmem:[%s10757 + $0x14] sm:$0x3]
    %s10762 = scalar_lea.vmem %s7, 384
    %v10763 = vld [vmem:[%s10762] sm:$0xff]
    %v10764 = vld [vmem:[%s10762 + $0x8] sm:$0xff]
    %v10765 = vld [vmem:[%s10762 + $0x10] sm:$0xff]
    %v10766 = vld [vmem:[%s10762 + $0x18] sm:$0xff]
    %v10767 = vld [vmem:[%s10762 + $0x20] sm:$0xff]
    %v10768 = vld [vmem:[%s10762 + $0x28] sm:$0xff]
    %v10769 = vld [vmem:[%s10762 + $0x30] sm:$0xff]
    %v10770 = vld [vmem:[%s10762 + $0x38] sm:$0xff]
    %10775 = vst [vmem:[#allocation1] ss:$4 sm:$0xff] %v10758
    %s10776 = scalar_lea.vmem [#allocation1], 1
    %10777 = vst [vmem:[%s10776] ss:$4 sm:$0xff] %v10759
    %s10778 = scalar_lea.vmem [#allocation1], 2
    %10779 = vst [vmem:[%s10778] ss:$4 sm:$0xff] %v10760
    %s10780 = scalar_lea.vmem [#allocation1], 3
    %10781 = vst [vmem:[%s10780] ss:$4 sm:$0xff] %v10761
    %v10782 = vld.sshfl [vmem:[#allocation1] sm:$0xff pattern:$0x73625140]
    %v10783 = vsel %vm10508, %v10782, 0
    %10785 = vmatpush.msra.mxu0 0.0
    %10786 = vmatpush.msra.mxu0 0.0
    %10787 = vmatpush.msra.mxu0 0.0
    %10788 = vmatpush.msra.mxu0 0.0
    %10789 = vmatpush.msra.mxu0 0.0
    %10790 = vmatpush.msra.mxu0 0.0
    %10791 = vmatpush.msra.mxu0 0.0
    %10792 = vmatpush.msra.mxu0 0.0
    %10793 = vmatpush.msra.mxu0 %v10770
    %10794 = vmatpush.msra.mxu0 %v10769
    %10795 = vmatpush.msra.mxu0 %v10768
    %10796 = vmatpush.msra.mxu0 %v10767
    %10797 = vmatpush.msra.mxu0 %v10766
    %10798 = vmatpush.msra.mxu0 %v10765
    %10799 = vmatpush.msra.mxu0 %v10764
    %10800 = vmatpush.msra.mxu0 %v10763
    %10801 = vmatmul.f32.gmra.mxu0 %v10783
    %v10802 = vpop.f32.mrf.mxu0
    %v10803 = vadd.f32 0.0, %v10802
    %10804 = vdwg.mxu0
    %v10805 = vadd.f32 %v10756, %v10803
    %v10806 = vld [vmem:[%s10757 + $0x1] sm:$0x3]
    %v10807 = vld [vmem:[%s10757 + $0x5] sm:$0x3]
    %v10808 = vld [vmem:[%s10757 + $0x11] sm:$0x3]
    %v10809 = vld [vmem:[%s10757 + $0x15] sm:$0x3]
    %s10810 = scalar_lea.vmem %s7, 448
    %v10811 = vld [vmem:[%s10810] sm:$0xff]
    %v10812 = vld [vmem:[%s10810 + $0x8] sm:$0xff]
    %v10813 = vld [vmem:[%s10810 + $0x10] sm:$0xff]
    %v10814 = vld [vmem:[%s10810 + $0x18] sm:$0xff]
    %v10815 = vld [vmem:[%s10810 + $0x20] sm:$0xff]
    %v10816 = vld [vmem:[%s10810 + $0x28] sm:$0xff]
    %v10817 = vld [vmem:[%s10810 + $0x30] sm:$0xff]
    %v10818 = vld [vmem:[%s10810 + $0x38] sm:$0xff]
    %10823 = vst [vmem:[#allocation1] ss:$4 sm:$0xff] %v10806
    %s10824 = scalar_lea.vmem [#allocation1], 1
    %10825 = vst [vmem:[%s10824] ss:$4 sm:$0xff] %v10807
    %s10826 = scalar_lea.vmem [#allocation1], 2
    %10827 = vst [vmem:[%s10826] ss:$4 sm:$0xff] %v10808
    %s10828 = scalar_lea.vmem [#allocation1], 3
    %10829 = vst [vmem:[%s10828] ss:$4 sm:$0xff] %v10809
    %v10830 = vld.sshfl [vmem:[#allocation1] sm:$0xff pattern:$0x73625140]
    %v10831 = vsel %vm10508, %v10830, 0
    %10833 = vmatpush.msra.mxu0 0.0
    %10834 = vmatpush.msra.mxu0 0.0
    %10835 = vmatpush.msra.mxu0 0.0
    %10836 = vmatpush.msra.mxu0 0.0
    %10837 = vmatpush.msra.mxu0 0.0
    %10838 = vmatpush.msra.mxu0 0.0
    %10839 = vmatpush.msra.mxu0 0.0
    %10840 = vmatpush.msra.mxu0 0.0
    %10841 = vmatpush.msra.mxu0 %v10818
    %10842 = vmatpush.msra.mxu0 %v10817
    %10843 = vmatpush.msra.mxu0 %v10816
    %10844 = vmatpush.msra.mxu0 %v10815
    %10845 = vmatpush.msra.mxu0 %v10814
    %10846 = vmatpush.msra.mxu0 %v10813
    %10847 = vmatpush.msra.mxu0 %v10812
    %10848 = vmatpush.msra.mxu0 %v10811
    %10849 = vmatmul.f32.gmra.mxu0 %v10831
    %v10850 = vpop.f32.mrf.mxu0
    %v10851 = vadd.f32 0.0, %v10850
    %10852 = vdwg.mxu0
    %v10853 = vadd.f32 %v10805, %v10851
    %v10854 = vld [vmem:[%s10757 + $0x2] sm:$0x3]
    %v10855 = vld [vmem:[%s10757 + $0x6] sm:$0x3]
    %v10856 = vld [vmem:[%s10757 + $0x12] sm:$0x3]
    %v10857 = vld [vmem:[%s10757 + $0x16] sm:$0x3]
    %s10858 = scalar_lea.vmem %s7, 512
    %v10859 = vld [vmem:[%s10858] sm:$0xff]
    %v10860 = vld [vmem:[%s10858 + $0x8] sm:$0xff]
    %v10861 = vld [vmem:[%s10858 + $0x10] sm:$0xff]
    %v10862 = vld [vmem:[%s10858 + $0x18] sm:$0xff]
    %v10863 = vld [vmem:[%s10858 + $0x20] sm:$0xff]
    %v10864 = vld [vmem:[%s10858 + $0x28] sm:$0xff]
    %v10865 = vld [vmem:[%s10858 + $0x30] sm:$0xff]
    %v10866 = vld [vmem:[%s10858 + $0x38] sm:$0xff]
    %10871 = vst [vmem:[#allocation1] ss:$4 sm:$0xff] %v10854
    %s10872 = scalar_lea.vmem [#allocation1], 1
    %10873 = vst [vmem:[%s10872] ss:$4 sm:$0xff] %v10855
    %s10874 = scalar_lea.vmem [#allocation1], 2
    %10875 = vst [vmem:[%s10874] ss:$4 sm:$0xff] %v10856
    %s10876 = scalar_lea.vmem [#allocation1], 3
    %10877 = vst [vmem:[%s10876] ss:$4 sm:$0xff] %v10857
    %v10878 = vld.sshfl [vmem:[#allocation1] sm:$0xff pattern:$0x73625140]
    %v10879 = vsel %vm10508, %v10878, 0
    %10881 = vmatpush.msra.mxu0 0.0
    %10882 = vmatpush.msra.mxu0 0.0
    %10883 = vmatpush.msra.mxu0 0.0
    %10884 = vmatpush.msra.mxu0 0.0
    %10885 = vmatpush.msra.mxu0 0.0
    %10886 = vmatpush.msra.mxu0 0.0
    %10887 = vmatpush.msra.mxu0 0.0
    %10888 = vmatpush.msra.mxu0 0.0
    %10889 = vmatpush.msra.mxu0 %v10866
    %10890 = vmatpush.msra.mxu0 %v10865
    %10891 = vmatpush.msra.mxu0 %v10864
    %10892 = vmatpush.msra.mxu0 %v10863
    %10893 = vmatpush.msra.mxu0 %v10862
    %10894 = vmatpush.msra.mxu0 %v10861
    %10895 = vmatpush.msra.mxu0 %v10860
    %10896 = vmatpush.msra.mxu0 %v10859
    %10897 = vmatmul.f32.gmra.mxu0 %v10879
    %v10898 = vpop.f32.mrf.mxu0
    %v10899 = vadd.f32 0.0, %v10898
    %10900 = vdwg.mxu0
    %v10901 = vadd.f32 %v10853, %v10899
    %v10902 = vld [vmem:[%s8] sm:$0x1]
    %v10904 = vperm.slane %v10902, 0
    %v10906 = vadd.f32 %v10901, %v10904
    %v10907 = vmax.f32 %v10906, 0.0
    %v10909 = vrot.slane %v10907, 4
    %vm10911 = vcmask 1043456
    %v10912 = vsel %vm10911, %v10907, 0.0
    %v10913 = vrot.slane %v10912, 4
    %v10914 = vadd.f32 %v10912, %v10913
    %v10915 = vrot.slane %v10914, 2
    %v10916 = vadd.f32 %v10914, %v10915
    %v10917 = vrot.slane %v10916, 1
    %v10918 = vadd.f32 %v10916, %v10917
    %v10919 = vsel %vm10911, %v10909, 0.0
    %v10920 = vrot.slane %v10919, 4
    %v10921 = vadd.f32 %v10919, %v10920
    %v10922 = vrot.slane %v10921, 2
    %v10923 = vadd.f32 %v10921, %v10922
    %v10924 = vrot.slane %v10923, 1
    %v10925 = vadd.f32 %v10923, %v10924
    %v10926 = vmul.f32 %v10918, 0.25
    %v10927 = vmul.f32 %v10925, 0.25
    %v10928 = vld [vmem:[%s9] sm:$0xff]
    %v10929 = vld [vmem:[%s9 + $0x8] sm:$0xff]
    %v10930 = vld [vmem:[%s9 + $0x10] sm:$0xff]
    %v10931 = vld [vmem:[%s9 + $0x18] sm:$0xff]
    %v10932 = vld [vmem:[%s9 + $0x20] sm:$0xff]
    %v10933 = vld [vmem:[%s9 + $0x28] sm:$0xff]
    %v10934 = vld [vmem:[%s9 + $0x30] sm:$0xff]
    %v10935 = vld [vmem:[%s9 + $0x38] sm:$0xff]
    %v10936 = vld [vmem:[%s9 + $0x40] sm:$0xff]
    %v10937 = vld [vmem:[%s9 + $0x48] sm:$0xff]
    %v10938 = vld [vmem:[%s9 + $0x50] sm:$0xff]
    %v10939 = vld [vmem:[%s9 + $0x58] sm:$0xff]
    %v10940 = vld [vmem:[%s9 + $0x60] sm:$0xff]
    %v10941 = vld [vmem:[%s9 + $0x68] sm:$0xff]
    %v10942 = vld [vmem:[%s9 + $0x70] sm:$0xff]
    %v10943 = vld [vmem:[%s9 + $0x78] sm:$0xff]
    %v10944 = vld [vmem:[%s10] sm:$0x1]
    %v10946 = vperm.slane %v10944, 0
    %v10950 = vsel %vm7390, %v10927, %v10926
    %10952 = vmatpush.msra.mxu0 %v10943
    %10953 = vmatpush.msra.mxu0 %v10942
    %10954 = vmatpush.msra.mxu0 %v10941
    %10955 = vmatpush.msra.mxu0 %v10940
    %10956 = vmatpush.msra.mxu0 %v10939
    %10957 = vmatpush.msra.mxu0 %v10938
    %10958 = vmatpush.msra.mxu0 %v10937
    %10959 = vmatpush.msra.mxu0 %v10936
    %10960 = vmatpush.msra.mxu0 %v10935
    %10961 = vmatpush.msra.mxu0 %v10934
    %10962 = vmatpush.msra.mxu0 %v10933
    %10963 = vmatpush.msra.mxu0 %v10932
    %10964 = vmatpush.msra.mxu0 %v10931
    %10965 = vmatpush.msra.mxu0 %v10930
    %10966 = vmatpush.msra.mxu0 %v10929
    %10967 = vmatpush.msra.mxu0 %v10928
    %10968 = vmatmul.f32.gmra.mxu0 %v10950
    %v10969 = vpop.f32.mrf.mxu0
    %v10970 = vadd.f32 %v10946, %v10969
    %10971 = vdwg.mxu0
    %vm10972 = vcmask 33792
    %10973 = vst.msk [vmem:[#allocation5] sm:$0x3] %vm10972, %v10970
    // Predicated region
    $region46: #{small_scalogram_cnn.1} parent=1 // pred_check
      _
    $region47: #{small_scalogram_cnn.1} parent=1 // pred_check_branch
      %10975 = sbr.rel (0) target = $region49
    $region48: #{small_scalogram_cnn.1} parent=1 // pred_region
      %10977 = vsyncadd [#allocation6], 0
      %s10979 = sshll.u32 [#allocation5], 4
      %s10980 = int_to_ptr.vmem [resolvable:$true] %s10979
      %s10981 = sshll.u32 %s11, 4
      %s10982 = int_to_ptr.hbm [resolvable:$true] %s10981
      %10984 = dma.vmem_to_hbm [thread:$0]  %s10980, 32, %s10982, [#allocation6]
    $region49: #{small_scalogram_cnn.1} parent=1 // pred_fallthru
      _
    // Predicated region
    $region50: #{small_scalogram_cnn.1} parent=1 // pred_check
      _
    $region51: #{small_scalogram_cnn.1} parent=1 // pred_check_branch
      %10986 = sbr.rel (0) target = $region53
    $region52: #{small_scalogram_cnn.1} parent=1 // pred_region
      %10988 = dma.done [#allocation6], 32
    $region53: #{small_scalogram_cnn.1} parent=1 // pred_fallthru
      _
    %10989 = vsyncpa [#allocation6], 1

</llo_original>
